<compile_context>
chip_gen: v7x
topology: tpu7x:2x2x1
jax: 0.10.0
libtpu: 0.0.40
codegen_flags: <defaults>
</compile_context>

<pallas_src>
import functools

import jax
import jax.numpy as jnp
from jax.experimental import pallas as pl
from jax.experimental.pallas import tpu as pltpu


def _wmsa_kernel(*refs, num_heads, head_dim, n_tok, n_masks,
                 has_rpe, has_mask, bf16_exp):
    """One grid step == WB windows, all heads batched.

    Ref order: x, [rpe], [mask], wqkv, bqkv, wproj, bproj, out

    x_ref    : (WB*Np, C)        input dtype (cast to bf16 on the VPU)
    rpe_ref  : (H, Np, Np)  f32  relative position bias           (optional)
    mask_ref : (nW, Np, Np) f32  per-window additive mask (+pad)  (optional)
    wqkv_ref : (C, 3C)      bf16 qkv weight^T, q-part pre-scaled
    bqkv_ref : (1, 3C)      f32  qkv bias, q-part pre-scaled, k-part zeroed
    wproj_ref: (C, C)       bf16 proj weight^T
    bproj_ref: (1, C)       f32  proj bias
    o_ref    : (WB*Np, C)        output
    """
    it = iter(refs)
    x_ref = next(it)
    rpe_ref = next(it) if has_rpe else None
    mask_ref = next(it) if has_mask else None
    wqkv_ref = next(it)
    bqkv_ref = next(it)
    wproj_ref = next(it)
    bproj_ref = next(it)
    o_ref = next(it)

    R, C = x_ref.shape
    H, hd, Np = num_heads, head_dim, n_tok
    WB = R // Np
    HB = H * WB

    # Fused qkv projection: one full-C MXU contraction over all WB windows.
    x2 = x_ref[...].astype(jnp.bfloat16)                         # cast in-kernel
    qkv = jnp.dot(x2, wqkv_ref[...], preferred_element_type=jnp.float32)
    qkv = (qkv + bqkv_ref[...]).astype(jnp.bfloat16)             # (R, 3C), bf16 once

    # Move heads from the lane axis to a batch axis: (H*WB, Np, hd).
    def split_heads(col0):
        heads = jnp.stack(
            [qkv[:, col0 + h * hd:col0 + (h + 1) * hd] for h in range(H)],
            axis=0)                                              # (H, R, hd)
        return heads.reshape(HB, Np, hd)                         # major regroup: free

    q = split_heads(0)          # qk scale already folded into weights/bias
    k = split_heads(C)
    v = split_heads(2 * C)

    # Scores for all heads/windows in one batched MXU call: (HB, Np, Np) f32.
    s = jnp.einsum('bnd,bmd->bnm', q, k, preferred_element_type=jnp.float32)

    if has_rpe:   # broadcast over windows (major dim)
        s = (s.reshape(H, WB, Np, Np) + rpe_ref[...][:, None]
             ).reshape(HB, Np, Np)
    if has_mask:  # window index == global window id % nW  (WB % nW == 0)
        s = (s.reshape(HB // n_masks, n_masks, Np, Np) + mask_ref[...][None]
             ).reshape(HB, Np, Np)

    # Numerically-stable softmax; normalization deferred until after P@V.
    s = s - jnp.max(s, axis=-1, keepdims=True)
    if bf16_exp:  # bf16 EUP exp (v6e/v7x); pass bf16_exp=False on v5e
        p = jnp.exp(s.astype(jnp.bfloat16))
    else:
        p = jnp.exp(s).astype(jnp.bfloat16)
    denom = jnp.sum(p.astype(jnp.float32), axis=-1, keepdims=True)  # f32 stats

    o = jnp.einsum('bnm,bmd->bnd', p, v, preferred_element_type=jnp.float32)
    o = o * pl.reciprocal(denom, approx=True)                    # (HB, Np, hd)

    # Re-pack heads onto the lane axis (static lane concat) and run ONE
    # full-C-contraction projection matmul.
    o = o.astype(jnp.bfloat16)
    o = jnp.concatenate([o[h * WB:(h + 1) * WB] for h in range(H)], axis=-1)
    y = jnp.dot(o.reshape(R, C), wproj_ref[...],
                preferred_element_type=jnp.float32)
    o_ref[...] = (y + bproj_ref[...]).astype(o_ref.dtype)


def _pick_window_batch(B_, n_tok, nW, target_rows=512):
    """WB: multiple of nW, divides B_, prefers >=2 (even) grid steps so both
    v7x TensorCores get work, and picks the smallest WB with WB*n_tok >=
    target_rows (else the largest available)."""
    cands = [wb for wb in range(nW, B_ + 1, nW) if B_ % wb == 0]
    multi = [wb for wb in cands if B_ // wb >= 2]       # keep 2 TCs busy (v7x)
    if multi:
        cands = multi
    even = [wb for wb in cands if (B_ // wb) % 2 == 0]  # balanced megacore split
    pool = even if even else cands
    good = [wb for wb in pool if wb * n_tok >= target_rows]
    return min(good) if good else max(pool)


def wmsa_forward(x, params, *, num_heads, mask=None, pe=None, rpe=None,
                 qk_scale=None, target_rows=512,
                 vmem_limit_bytes=48 * 1024 * 1024,
                 bf16_exp=True, out_dtype=None):
    """Pallas-backed forward of WindowMultiheadSelfAttention.

    x: (B_, N, C);  mask: (nW, N, N) with B_ % nW == 0;  rpe: (H, N, N);
    pe: broadcastable to x (added in JAX glue before the kernel).

    Per-generation knobs: raise target_rows (~1024) and vmem_limit_bytes
    (~96 MiB) on v5e/v6e (128 MiB VMEM); keep defaults on v7x (64 MiB VMEM);
    set bf16_exp=False on v5e (no bf16 EUP).  out_dtype=jnp.bfloat16 halves
    output HBM writeback if the consumer tolerates it.
    """
    B_, N, C = x.shape
    orig_dtype = x.dtype
    assert C % num_heads == 0, "embed_dim must be divisible by num_heads"
    head_dim = C // num_heads
    scale = qk_scale if qk_scale is not None else head_dim ** (-0.5)

    if pe is not None:
        x = x + pe  # glue: cheap elementwise add outside the kernel

    nW = 1 if mask is None else mask.shape[0]
    if B_ % nW != 0:
        raise ValueError(f"B_={B_} must be a multiple of nW={nW}")

    # Pad the token dim to a multiple of 8 (sublane) via an additive key mask
    # so all in-kernel tiles are (8,128)-aligned (no implicit Mosaic padding).
    Np = -(-N // 8) * 8
    pad = Np - N
    if pad:
        x = jnp.pad(x, ((0, 0), (0, pad), (0, 0)))

    has_rpe = rpe is not None
    has_mask = (mask is not None) or (pad > 0)

    mask_p = None
    if has_mask:
        if mask is not None:
            base = jnp.pad(mask.astype(jnp.float32),
                           ((0, 0), (0, pad), (0, pad)))
        else:
            base = jnp.zeros((nW, Np, Np), jnp.float32)
        if pad:
            keymask = jnp.concatenate(
                [jnp.zeros((Np, N), jnp.float32),
                 jnp.full((Np, pad), -1e9, jnp.float32)], axis=1)
            base = base + keymask[None]
        mask_p = base                                   # (nW, Np, Np) f32
    rpe_p = None
    if has_rpe:
        rpe_p = jnp.pad(rpe.astype(jnp.float32),
                        ((0, 0), (0, pad), (0, pad)))   # (H, Np, Np) f32

    WB = _pick_window_batch(B_, Np, nW, target_rows)
    assert B_ % WB == 0 and WB % nW == 0
    R = WB * Np
    grid = (B_ // WB,)

    # Fold the qk scale into the q-part of the qkv weight/bias; zero the
    # k-part of the bias (softmax is invariant to a per-row constant shift).
    scale_vec = jnp.concatenate(
        [jnp.full((C,), scale, jnp.float32), jnp.ones((2 * C,), jnp.float32)])
    wqkv_t = params["wqkv"].astype(jnp.float32).T * scale_vec[None, :]  # (C, 3C)
    bqkv = params["bqkv"].astype(jnp.float32) * scale_vec
    bqkv = bqkv.at[C:2 * C].set(0.0)
    wproj_t = params["wproj"].astype(jnp.float32).T                     # (C, C)
    bproj = params["bproj"].astype(jnp.float32)[None, :]                # (1, C)

    # Flatten (B_, Np, C) -> (B_*Np, C): each grid step DMAs one contiguous
    # (R, C) slab and the kernel needs no entry/exit reshapes.
    # TODO(synk): for C not a multiple of 128 a (WB, Np*C) lane-dense out block
    # would avoid masked vst; it needs an in-kernel sublane->lane repack.
    x_flat = x.reshape(B_ * Np, C)          # keep caller dtype, cast on the VPU

    args = [x_flat]
    in_specs = [pl.BlockSpec((R, C), lambda i: (i, 0))]
    if has_rpe:
        args.append(rpe_p)
        in_specs.append(pl.BlockSpec((num_heads, Np, Np), lambda i: (0, 0, 0)))
    if has_mask:
        args.append(mask_p)
        in_specs.append(pl.BlockSpec((nW, Np, Np), lambda i: (0, 0, 0)))
    # Constant-block-index weights/biases: fetched once, VMEM resident.
    args += [wqkv_t.astype(jnp.bfloat16), bqkv[None, :],
             wproj_t.astype(jnp.bfloat16), bproj]
    in_specs += [
        pl.BlockSpec((C, 3 * C), lambda i: (0, 0)),
        pl.BlockSpec((1, 3 * C), lambda i: (0, 0)),
        pl.BlockSpec((C, C), lambda i: (0, 0)),
        pl.BlockSpec((1, C), lambda i: (0, 0)),
    ]

    kernel = functools.partial(
        _wmsa_kernel, num_heads=num_heads, head_dim=head_dim, n_tok=Np,
        n_masks=nW, has_rpe=has_rpe, has_mask=has_mask, bf16_exp=bf16_exp)

    out = pl.pallas_call(
        kernel,
        out_shape=jax.ShapeDtypeStruct((B_ * Np, C), out_dtype or orig_dtype),
        grid_spec=pltpu.PrefetchScalarGridSpec(
            num_scalar_prefetch=0,
            grid=grid,
            in_specs=in_specs,
            out_specs=pl.BlockSpec((R, C), lambda i: (i, 0)),
        ),
        compiler_params=pltpu.CompilerParams(
            dimension_semantics=("parallel",),
            vmem_limit_bytes=vmem_limit_bytes,
        ),
    )(*args)

    out = out.reshape(B_, Np, C)
    if pad:
        out = out[:, :N]
    return out


def wmsa_reference(x, params, *, num_heads, mask=None, pe=None, rpe=None,
                   qk_scale=None):
    """Pure-JAX f32 reference mirroring the PyTorch forward exactly."""
    B_, N, C = x.shape
    head_dim = C // num_heads
    scale = qk_scale if qk_scale is not None else head_dim ** (-0.5)
    if pe is not None:
        x = x + pe
    qkv = x @ params["wqkv"].T + params["bqkv"]                    # (B_, N, 3C)
    qkv = qkv.reshape(B_, N, 3, num_heads, head_dim).transpose(2, 0, 3, 1, 4)
    q, k, v = qkv[0], qkv[1], qkv[2]                               # (B_, H, N, hd)
    q = q * scale
    attn = jnp.einsum("bhnd,bhmd->bhnm", q, k)                     # (B_, H, N, N)
    if rpe is not None:
        attn = attn + rpe[None]
    if mask is not None:
        nW = mask.shape[0]
        attn = attn.reshape(B_ // nW, nW, num_heads, N, N) + mask[None, :, None]
        attn = attn.reshape(-1, num_heads, N, N)
    attn = jax.nn.softmax(attn, axis=-1)
    out = jnp.einsum("bhnm,bhmd->bhnd", attn, v)
    out = out.transpose(0, 2, 1, 3).reshape(B_, N, C)
    return out @ params["wproj"].T + params["bproj"]


if __name__ == "__main__":
    key = jax.random.PRNGKey(0)
    k_x, k_wq, k_bq, k_wp, k_bp, k_m, k_r, k_x2 = jax.random.split(key, 8)

    # Swin-like: 16 windows of 7x7 = 49 tokens, C=64, 4 heads, 4 distinct masks.
    B_, N, C, H, nW = 16, 49, 64, 4, 4
    x = jax.random.normal(k_x, (B_, N, C), dtype=jnp.float32)
    params = {
        "wqkv": jax.random.normal(k_wq, (3 * C, C), dtype=jnp.float32) * 0.05,
        "bqkv": jax.random.normal(k_bq, (3 * C,), dtype=jnp.float32) * 0.01,
        "wproj": jax.random.normal(k_wp, (C, C), dtype=jnp.float32) * 0.05,
        "bproj": jax.random.normal(k_bp, (C,), dtype=jnp.float32) * 0.01,
    }
    mask = jnp.where(jax.random.uniform(k_m, (nW, N, N)) > 0.8,
                     -100.0, 0.0).astype(jnp.float32)
    rpe = jax.random.normal(k_r, (H, N, N), dtype=jnp.float32) * 0.1

    # Masked + rpe path, exercises N=49 -> 56 padding.
    out = jax.block_until_ready(
        wmsa_forward(x, params, num_heads=H, mask=mask, rpe=rpe))
    ref = wmsa_reference(x, params, num_heads=H, mask=mask, rpe=rpe)
    assert out.shape == (B_, N, C)
    err = float(jnp.max(jnp.abs(out - ref)))
    # bf16 MXU inputs + bf16 EUP exp + approx reciprocal => ~2-3 digits.
    assert err < 2e-2, f"masked/rpe/padded path max abs err {err}"

    # Clean path: no mask, no rpe, token count already a multiple of 8.
    N2 = 64
    x2 = jax.random.normal(k_x2, (B_, N2, C), dtype=jnp.float32)
    out2 = jax.block_until_ready(wmsa_forward(x2, params, num_heads=H))
    ref2 = wmsa_reference(x2, params, num_heads=H)
    err2 = float(jnp.max(jnp.abs(out2 - ref2)))
    assert err2 < 2e-2, f"no-bias path max abs err {err2}"

    print("KERNEL_OK")
</pallas_src>

<mosaic_0001>
module attributes {stable_mosaic.version = 11 : i64} {
  func.func @_wmsa_kernel(%arg0: i32, %arg1: memref<448x64xf32, #tpu.memory_space<vmem>>, %arg2: memref<4x56x56xf32, #tpu.memory_space<vmem>>, %arg3: memref<4x56x56xf32, #tpu.memory_space<vmem>>, %arg4: memref<64x192xbf16, #tpu.memory_space<vmem>>, %arg5: memref<1x192xf32, #tpu.memory_space<vmem>>, %arg6: memref<64x64xbf16, #tpu.memory_space<vmem>>, %arg7: memref<1x64xf32, #tpu.memory_space<vmem>>, %arg8: memref<448x64xf32, #tpu.memory_space<vmem>>) attributes {dimension_semantics = [#tpu.dimension_semantics<parallel>], iteration_bounds = array<i64: 2>, scalar_prefetch = 0 : i64, scratch_operands = 0 : i64, tpu.core_type = #tpu.core_type<tc>, window_params = [{transform_indices = @transform_0, window_bounds = array<i64: 448, 64>}, {pipeline_mode = #tpu.pipeline_mode<synchronous>, transform_indices = @transform_1, window_bounds = array<i64: 4, 56, 56>}, {pipeline_mode = #tpu.pipeline_mode<synchronous>, transform_indices = @transform_2, window_bounds = array<i64: 4, 56, 56>}, {pipeline_mode = #tpu.pipeline_mode<synchronous>, transform_indices = @transform_3, window_bounds = array<i64: 64, 192>}, {pipeline_mode = #tpu.pipeline_mode<synchronous>, transform_indices = @transform_4, window_bounds = array<i64: 1, 192>}, {pipeline_mode = #tpu.pipeline_mode<synchronous>, transform_indices = @transform_5, window_bounds = array<i64: 64, 64>}, {pipeline_mode = #tpu.pipeline_mode<synchronous>, transform_indices = @transform_6, window_bounds = array<i64: 1, 64>}, {transform_indices = @transform_7, window_bounds = array<i64: 448, 64>}]} {
    %c0 = arith.constant 0 : index
    %c0_0 = arith.constant 0 : index
    %0 = vector.load %arg1[%c0, %c0_0] : memref<448x64xf32, #tpu.memory_space<vmem>>, vector<448x64xf32>
    %1 = arith.truncf %0 : vector<448x64xf32> to vector<448x64xbf16>
    %c0_1 = arith.constant 0 : index
    %c0_2 = arith.constant 0 : index
    %2 = vector.load %arg4[%c0_1, %c0_2] : memref<64x192xbf16, #tpu.memory_space<vmem>>, vector<64x192xbf16>
    %cst = arith.constant dense<0.000000e+00> : vector<448x192xf32>
    %3 = tpu.matmul %1, %2, %cst {dimension_numbers = #tpu.dot_dimension_numbers<[1], [0], [0], [1], [0, 0, 1, 1], [], []>} : vector<448x64xbf16>, vector<64x192xbf16>, vector<448x192xf32> -> vector<448x192xf32>
    %c0_3 = arith.constant 0 : index
    %c0_4 = arith.constant 0 : index
    %4 = vector.load %arg5[%c0_3, %c0_4] : memref<1x192xf32, #tpu.memory_space<vmem>>, vector<1x192xf32>
    %5 = vector.broadcast %4 : vector<1x192xf32> to vector<448x192xf32>
    %6 = arith.addf %3, %5 : vector<448x192xf32>
    %7 = arith.truncf %6 : vector<448x192xf32> to vector<448x192xbf16>
    %8 = vector.extract_strided_slice %7 {offsets = [0, 0], sizes = [448, 16], strides = [1, 1]} : vector<448x192xbf16> to vector<448x16xbf16>
    %9 = vector.extract_strided_slice %7 {offsets = [0, 16], sizes = [448, 16], strides = [1, 1]} : vector<448x192xbf16> to vector<448x16xbf16>
    %10 = vector.extract_strided_slice %7 {offsets = [0, 32], sizes = [448, 16], strides = [1, 1]} : vector<448x192xbf16> to vector<448x16xbf16>
    %11 = vector.extract_strided_slice %7 {offsets = [0, 48], sizes = [448, 16], strides = [1, 1]} : vector<448x192xbf16> to vector<448x16xbf16>
    %12 = vector.shape_cast %8 : vector<448x16xbf16> to vector<1x448x16xbf16>
    %13 = vector.shape_cast %9 : vector<448x16xbf16> to vector<1x448x16xbf16>
    %14 = vector.shape_cast %10 : vector<448x16xbf16> to vector<1x448x16xbf16>
    %15 = vector.shape_cast %11 : vector<448x16xbf16> to vector<1x448x16xbf16>
    %16 = tpu.concatenate %12, %13, %14, %15 in 0 : vector<1x448x16xbf16>, vector<1x448x16xbf16>, vector<1x448x16xbf16>, vector<1x448x16xbf16> -> vector<4x448x16xbf16>
    %17 = vector.shape_cast %16 : vector<4x448x16xbf16> to vector<32x56x16xbf16>
    %18 = vector.extract_strided_slice %7 {offsets = [0, 64], sizes = [448, 16], strides = [1, 1]} : vector<448x192xbf16> to vector<448x16xbf16>
    %19 = vector.extract_strided_slice %7 {offsets = [0, 80], sizes = [448, 16], strides = [1, 1]} : vector<448x192xbf16> to vector<448x16xbf16>
    %20 = vector.extract_strided_slice %7 {offsets = [0, 96], sizes = [448, 16], strides = [1, 1]} : vector<448x192xbf16> to vector<448x16xbf16>
    %21 = vector.extract_strided_slice %7 {offsets = [0, 112], sizes = [448, 16], strides = [1, 1]} : vector<448x192xbf16> to vector<448x16xbf16>
    %22 = vector.shape_cast %18 : vector<448x16xbf16> to vector<1x448x16xbf16>
    %23 = vector.shape_cast %19 : vector<448x16xbf16> to vector<1x448x16xbf16>
    %24 = vector.shape_cast %20 : vector<448x16xbf16> to vector<1x448x16xbf16>
    %25 = vector.shape_cast %21 : vector<448x16xbf16> to vector<1x448x16xbf16>
    %26 = tpu.concatenate %22, %23, %24, %25 in 0 : vector<1x448x16xbf16>, vector<1x448x16xbf16>, vector<1x448x16xbf16>, vector<1x448x16xbf16> -> vector<4x448x16xbf16>
    %27 = vector.shape_cast %26 : vector<4x448x16xbf16> to vector<32x56x16xbf16>
    %28 = vector.extract_strided_slice %7 {offsets = [0, 128], sizes = [448, 16], strides = [1, 1]} : vector<448x192xbf16> to vector<448x16xbf16>
    %29 = vector.extract_strided_slice %7 {offsets = [0, 144], sizes = [448, 16], strides = [1, 1]} : vector<448x192xbf16> to vector<448x16xbf16>
    %30 = vector.extract_strided_slice %7 {offsets = [0, 160], sizes = [448, 16], strides = [1, 1]} : vector<448x192xbf16> to vector<448x16xbf16>
    %31 = vector.extract_strided_slice %7 {offsets = [0, 176], sizes = [448, 16], strides = [1, 1]} : vector<448x192xbf16> to vector<448x16xbf16>
    %32 = vector.shape_cast %28 : vector<448x16xbf16> to vector<1x448x16xbf16>
    %33 = vector.shape_cast %29 : vector<448x16xbf16> to vector<1x448x16xbf16>
    %34 = vector.shape_cast %30 : vector<448x16xbf16> to vector<1x448x16xbf16>
    %35 = vector.shape_cast %31 : vector<448x16xbf16> to vector<1x448x16xbf16>
    %36 = tpu.concatenate %32, %33, %34, %35 in 0 : vector<1x448x16xbf16>, vector<1x448x16xbf16>, vector<1x448x16xbf16>, vector<1x448x16xbf16> -> vector<4x448x16xbf16>
    %37 = vector.shape_cast %36 : vector<4x448x16xbf16> to vector<32x56x16xbf16>
    "tpu.trace_start"() <{level = 10 : i32, message = "bnd,bmd->bnm"}> : () -> ()
    %cst_5 = arith.constant dense<0.000000e+00> : vector<32x56x56xf32>
    %38 = tpu.matmul %17, %27, %cst_5 {dimension_numbers = #tpu.dot_dimension_numbers<[2], [2], [1], [1], [0, 0, 0, 1, 1, 1], [0], [0]>} : vector<32x56x16xbf16>, vector<32x56x16xbf16>, vector<32x56x56xf32> -> vector<32x56x56xf32>
    "tpu.trace_stop"() : () -> ()
    %39 = vector.shape_cast %38 : vector<32x56x56xf32> to vector<4x8x56x56xf32>
    %c0_6 = arith.constant 0 : index
    %c0_7 = arith.constant 0 : index
    %c0_8 = arith.constant 0 : index
    %40 = vector.load %arg2[%c0_6, %c0_7, %c0_8] : memref<4x56x56xf32, #tpu.memory_space<vmem>>, vector<4x56x56xf32>
    %41 = vector.shape_cast %40 : vector<4x56x56xf32> to vector<4x1x56x56xf32>
    %42 = vector.broadcast %41 : vector<4x1x56x56xf32> to vector<4x8x56x56xf32>
    %43 = arith.addf %39, %42 : vector<4x8x56x56xf32>
    %44 = vector.shape_cast %43 : vector<4x8x56x56xf32> to vector<32x56x56xf32>
    %45 = vector.shape_cast %44 : vector<32x56x56xf32> to vector<8x4x56x56xf32>
    %c0_9 = arith.constant 0 : index
    %c0_10 = arith.constant 0 : index
    %c0_11 = arith.constant 0 : index
    %46 = vector.load %arg3[%c0_9, %c0_10, %c0_11] : memref<4x56x56xf32, #tpu.memory_space<vmem>>, vector<4x56x56xf32>
    %47 = vector.shape_cast %46 : vector<4x56x56xf32> to vector<1x4x56x56xf32>
    %48 = vector.broadcast %47 : vector<1x4x56x56xf32> to vector<8x4x56x56xf32>
    %49 = arith.addf %45, %48 : vector<8x4x56x56xf32>
    %50 = vector.shape_cast %49 : vector<8x4x56x56xf32> to vector<32x56x56xf32>
    %cst_12 = arith.constant dense<0xFF800000> : vector<32x56xf32>
    %51 = vector.multi_reduction <maximumf>, %50, %cst_12 [2] : vector<32x56x56xf32> to vector<32x56xf32>
    %52 = vector.shape_cast %51 : vector<32x56xf32> to vector<32x56x1xf32>
    %53 = vector.broadcast %52 : vector<32x56x1xf32> to vector<32x56x56xf32>
    %54 = arith.subf %50, %53 : vector<32x56x56xf32>
    %55 = arith.truncf %54 : vector<32x56x56xf32> to vector<32x56x56xbf16>
    %56 = math.exp %55 : vector<32x56x56xbf16>
    %57 = arith.extf %56 : vector<32x56x56xbf16> to vector<32x56x56xf32>
    %cst_13 = arith.constant dense<0.000000e+00> : vector<32x56xf32>
    %58 = vector.multi_reduction <add>, %57, %cst_13 [2] : vector<32x56x56xf32> to vector<32x56xf32>
    %59 = vector.shape_cast %58 : vector<32x56xf32> to vector<32x56x1xf32>
    "tpu.trace_start"() <{level = 10 : i32, message = "bnm,bmd->bnd"}> : () -> ()
    %cst_14 = arith.constant dense<0.000000e+00> : vector<32x56x16xf32>
    %60 = tpu.matmul %56, %37, %cst_14 {dimension_numbers = #tpu.dot_dimension_numbers<[2], [1], [1], [2], [0, 0, 0, 1, 1, 2], [0], [0]>} : vector<32x56x56xbf16>, vector<32x56x16xbf16>, vector<32x56x16xf32> -> vector<32x56x16xf32>
    "tpu.trace_stop"() : () -> ()
    %61 = tpu.reciprocal %59 {approx = true} : vector<32x56x1xf32> -> vector<32x56x1xf32>
    %62 = vector.broadcast %61 : vector<32x56x1xf32> to vector<32x56x16xf32>
    %63 = arith.mulf %60, %62 : vector<32x56x16xf32>
    %64 = arith.truncf %63 : vector<32x56x16xf32> to vector<32x56x16xbf16>
    %65 = vector.extract_strided_slice %64 {offsets = [0, 0, 0], sizes = [8, 56, 16], strides = [1, 1, 1]} : vector<32x56x16xbf16> to vector<8x56x16xbf16>
    %66 = vector.extract_strided_slice %64 {offsets = [8, 0, 0], sizes = [8, 56, 16], strides = [1, 1, 1]} : vector<32x56x16xbf16> to vector<8x56x16xbf16>
    %67 = vector.extract_strided_slice %64 {offsets = [16, 0, 0], sizes = [8, 56, 16], strides = [1, 1, 1]} : vector<32x56x16xbf16> to vector<8x56x16xbf16>
    %68 = vector.extract_strided_slice %64 {offsets = [24, 0, 0], sizes = [8, 56, 16], strides = [1, 1, 1]} : vector<32x56x16xbf16> to vector<8x56x16xbf16>
    %69 = tpu.concatenate %65, %66, %67, %68 in 2 : vector<8x56x16xbf16>, vector<8x56x16xbf16>, vector<8x56x16xbf16>, vector<8x56x16xbf16> -> vector<8x56x64xbf16>
    %70 = vector.shape_cast %69 : vector<8x56x64xbf16> to vector<448x64xbf16>
    %c0_15 = arith.constant 0 : index
    %c0_16 = arith.constant 0 : index
    %71 = vector.load %arg6[%c0_15, %c0_16] : memref<64x64xbf16, #tpu.memory_space<vmem>>, vector<64x64xbf16>
    %cst_17 = arith.constant dense<0.000000e+00> : vector<448x64xf32>
    %72 = tpu.matmul %70, %71, %cst_17 {dimension_numbers = #tpu.dot_dimension_numbers<[1], [0], [0], [1], [0, 0, 1, 1], [], []>} : vector<448x64xbf16>, vector<64x64xbf16>, vector<448x64xf32> -> vector<448x64xf32>
    %c0_18 = arith.constant 0 : index
    %c0_19 = arith.constant 0 : index
    %73 = vector.load %arg7[%c0_18, %c0_19] : memref<1x64xf32, #tpu.memory_space<vmem>>, vector<1x64xf32>
    %74 = vector.broadcast %73 : vector<1x64xf32> to vector<448x64xf32>
    %75 = arith.addf %72, %74 : vector<448x64xf32>
    %c0_20 = arith.constant 0 : index
    %c0_21 = arith.constant 0 : index
    %76 = vector.load %arg8[%c0_20, %c0_21] : memref<448x64xf32, #tpu.memory_space<vmem>>, vector<448x64xf32>
    tpu.vector_store %arg8[%c0_20, %c0_21], %75 {strides = array<i32>} : memref<448x64xf32, #tpu.memory_space<vmem>>, vector<448x64xf32>,
    return
  }
  func.func @transform_0(%arg0: i32) -> (i32, i32) {
    %c0_i32 = arith.constant 0 : i32
    %c0_i32_0 = arith.constant 0 : i32
    return %arg0, %c0_i32 : i32, i32
  }
  func.func @transform_1(%arg0: i32) -> (i32, i32, i32) {
    %c0_i32 = arith.constant 0 : i32
    %c0_i32_0 = arith.constant 0 : i32
    %c0_i32_1 = arith.constant 0 : i32
    %c0_i32_2 = arith.constant 0 : i32
    return %c0_i32, %c0_i32_0, %c0_i32_1 : i32, i32, i32
  }
  func.func @transform_2(%arg0: i32) -> (i32, i32, i32) {
    %c0_i32 = arith.constant 0 : i32
    %c0_i32_0 = arith.constant 0 : i32
    %c0_i32_1 = arith.constant 0 : i32
    %c0_i32_2 = arith.constant 0 : i32
    return %c0_i32, %c0_i32_0, %c0_i32_1 : i32, i32, i32
  }
  func.func @transform_3(%arg0: i32) -> (i32, i32) {
    %c0_i32 = arith.constant 0 : i32
    %c0_i32_0 = arith.constant 0 : i32
    %c0_i32_1 = arith.constant 0 : i32
    return %c0_i32, %c0_i32_0 : i32, i32
  }
  func.func @transform_4(%arg0: i32) -> (i32, i32) {
    %c0_i32 = arith.constant 0 : i32
    %c0_i32_0 = arith.constant 0 : i32
    %c0_i32_1 = arith.constant 0 : i32
    return %c0_i32, %c0_i32_0 : i32, i32
  }
  func.func @transform_5(%arg0: i32) -> (i32, i32) {
    %c0_i32 = arith.constant 0 : i32
    %c0_i32_0 = arith.constant 0 : i32
    %c0_i32_1 = arith.constant 0 : i32
    return %c0_i32, %c0_i32_0 : i32, i32
  }
  func.func @transform_6(%arg0: i32) -> (i32, i32) {
    %c0_i32 = arith.constant 0 : i32
    %c0_i32_0 = arith.constant 0 : i32
    %c0_i32_1 = arith.constant 0 : i32
    return %c0_i32, %c0_i32_0 : i32, i32
  }
  func.func @transform_7(%arg0: i32) -> (i32, i32) {
    %c0_i32 = arith.constant 0 : i32
    %c0_i32_0 = arith.constant 0 : i32
    return %arg0, %c0_i32 : i32, i32
  }
}

</mosaic_0001>

<llo_original>
// kernel: tpu_custom_call.1
$region0: #{tpu_custom_call.1}
  #allocation0 [shape = 'u32[]', space=smem, size = 0x4, offset = 0x4, fixed_abs, tag = 'smem constant byte address 0x4 - core index']
  #allocation1 [shape = 'u32[144,128]{1,0:T(1,128)}', space=vmem, size = 0x12000, scoped, tag = 'internal scratch']
  %s0 = inlined_call_operand.vmem [shape: f32[896,64], index: 0, kind: input, shape index: {}]
  %s1 = inlined_call_operand.vmem [shape: f32[4,56,56], index: 1, kind: input, shape index: {}]
  %s2 = inlined_call_operand.vmem [shape: f32[4,56,56], index: 2, kind: input, shape index: {}]
  %s3 = inlined_call_operand.vmem [shape: bf16[64,192], index: 3, kind: input, shape index: {}]
  %s4 = inlined_call_operand.vmem [shape: f32[1,192], index: 4, kind: input, shape index: {}]
  %s5 = inlined_call_operand.vmem [shape: bf16[64,64], index: 5, kind: input, shape index: {}]
  %s6 = inlined_call_operand.vmem [shape: f32[1,64], index: 6, kind: input, shape index: {}]
  %s7 = inlined_call_operand.vmem [shape: f32[896,64], index: 7, kind: output, shape index: {}]
  %s8 = sld [smem:[#allocation0]]
  $region61: #{tpu_custom_call.1} parent=0
    _
  %s10 = ssub.s32 1, %s8
  %s11 = scalar_select 0, %s10, %s8
  loop: start=0, step=1, limit=4
  $region2: #{tpu_custom_call.1} parent=0 // loop_pre_header
    _
  $region3: #{tpu_custom_call.1} parent=0 // loop_header
    %s13 = sphi 0, %s17
    %p14 = scmp.ge.s32.totalorder %s13, 4
    %s23 = sphi 0, %s25
    %s26 = sphi 0, %s23
    %s27 = sphi 0, %s26
    %s43 = sphi 0, %s27
    %s47 = sphi 0, %s47
    %s49 = sphi 0, %s47
    %s50 = sphi 0, %s49
    %s64 = sphi 0, %s50
    %s68 = sphi 0, %s68
    %s70 = sphi 0, %s68
    %s71 = sphi 0, %s70
    %s85 = sphi 0, %s71
    %s89 = sphi 0, %s89
    %s91 = sphi 0, %s89
    %s92 = sphi 0, %s91
    %s106 = sphi 0, %s92
    %s110 = sphi 0, %s110
    %s112 = sphi 0, %s110
    %s113 = sphi 0, %s112
    %s127 = sphi 0, %s113
    %s131 = sphi 0, %s131
    %s133 = sphi 0, %s131
    %s134 = sphi 0, %s133
    %s148 = sphi 0, %s134
    %s152 = sphi 0, %s152
    %s154 = sphi 0, %s152
    %s155 = sphi 0, %s154
    %s169 = sphi 0, %s155
    %s175 = sphi 0, %s177
    %s178 = sphi 0, %s175
    %s179 = sphi 0, %s178
    %s195 = sphi 0, %s179
  $region4: #{tpu_custom_call.1} parent=0 // loop_header_branch
    %16 = sbr.rel (%p14) target = $region8
  $region5: #{tpu_custom_call.1} parent=0 // loop_body
    %s18 = ssub.s32 %s13, 1
    %s19 = ssub.s32 %s13, 2
    %s20 = sadd.s32 %s13, 1
    %s21 = ssub.s32 %s13, %s20
    %p22 = scmp.eq.s32.totalorder %s21, 0
    %s24 = sadd.s32 %s23, 1
    %s25 = scalar_select %p22, %s23, %s24
    %p28 = pneg %p22
    %p29 = scmp.eq.s32.totalorder %s13, 1
    %p30 = por %p28, %p29
    %p31 = scmp.ne.s32.totalorder %s23, %s26
    %p32 = scmp.eq.s32.totalorder %s13, 0
    %p33 = por %p31, %p32
    %p34 = scmp.ne.s32.totalorder %s23, %s26
    %p35 = scmp.eq.s32.totalorder %s18, 1
    %p36 = por %p34, %p35
    %p37 = scmp.ne.s32.totalorder %s26, %s27
    %p38 = scmp.eq.s32.totalorder %s18, 0
    %p39 = por %p37, %p38
    %p40 = scmp.ne.s32.totalorder %s26, %s27
    %p41 = scmp.eq.s32.totalorder %s19, 1
    %p42 = por %p40, %p41
    %p44 = scmp.ne.s32.totalorder %s27, %s43
    %p45 = scmp.eq.s32.totalorder %s19, 0
    %p46 = por %p44, %p45
    %s48 = sadd.s32 %s47, 1
    %p51 = scmp.eq.s32.totalorder %s13, 1
    %p52 = scmp.ne.s32.totalorder %s47, %s49
    %p53 = scmp.eq.s32.totalorder %s13, 0
    %p54 = por %p52, %p53
    %p55 = scmp.ne.s32.totalorder %s47, %s49
    %p56 = scmp.eq.s32.totalorder %s18, 1
    %p57 = por %p55, %p56
    %p58 = scmp.ne.s32.totalorder %s49, %s50
    %p59 = scmp.eq.s32.totalorder %s18, 0
    %p60 = por %p58, %p59
    %p61 = scmp.ne.s32.totalorder %s49, %s50
    %p62 = scmp.eq.s32.totalorder %s19, 1
    %p63 = por %p61, %p62
    %p65 = scmp.ne.s32.totalorder %s50, %s64
    %p66 = scmp.eq.s32.totalorder %s19, 0
    %p67 = por %p65, %p66
    %s69 = sadd.s32 %s68, 1
    %p72 = scmp.eq.s32.totalorder %s13, 1
    %p73 = scmp.ne.s32.totalorder %s68, %s70
    %p74 = scmp.eq.s32.totalorder %s13, 0
    %p75 = por %p73, %p74
    %p76 = scmp.ne.s32.totalorder %s68, %s70
    %p77 = scmp.eq.s32.totalorder %s18, 1
    %p78 = por %p76, %p77
    %p79 = scmp.ne.s32.totalorder %s70, %s71
    %p80 = scmp.eq.s32.totalorder %s18, 0
    %p81 = por %p79, %p80
    %p82 = scmp.ne.s32.totalorder %s70, %s71
    %p83 = scmp.eq.s32.totalorder %s19, 1
    %p84 = por %p82, %p83
    %p86 = scmp.ne.s32.totalorder %s71, %s85
    %p87 = scmp.eq.s32.totalorder %s19, 0
    %p88 = por %p86, %p87
    %s90 = sadd.s32 %s89, 1
    %p93 = scmp.eq.s32.totalorder %s13, 1
    %p94 = scmp.ne.s32.totalorder %s89, %s91
    %p95 = scmp.eq.s32.totalorder %s13, 0
    %p96 = por %p94, %p95
    %p97 = scmp.ne.s32.totalorder %s89, %s91
    %p98 = scmp.eq.s32.totalorder %s18, 1
    %p99 = por %p97, %p98
    %p100 = scmp.ne.s32.totalorder %s91, %s92
    %p101 = scmp.eq.s32.totalorder %s18, 0
    %p102 = por %p100, %p101
    %p103 = scmp.ne.s32.totalorder %s91, %s92
    %p104 = scmp.eq.s32.totalorder %s19, 1
    %p105 = por %p103, %p104
    %p107 = scmp.ne.s32.totalorder %s92, %s106
    %p108 = scmp.eq.s32.totalorder %s19, 0
    %p109 = por %p107, %p108
    %s111 = sadd.s32 %s110, 1
    %p114 = scmp.eq.s32.totalorder %s13, 1
    %p115 = scmp.ne.s32.totalorder %s110, %s112
    %p116 = scmp.eq.s32.totalorder %s13, 0
    %p117 = por %p115, %p116
    %p118 = scmp.ne.s32.totalorder %s110, %s112
    %p119 = scmp.eq.s32.totalorder %s18, 1
    %p120 = por %p118, %p119
    %p121 = scmp.ne.s32.totalorder %s112, %s113
    %p122 = scmp.eq.s32.totalorder %s18, 0
    %p123 = por %p121, %p122
    %p124 = scmp.ne.s32.totalorder %s112, %s113
    %p125 = scmp.eq.s32.totalorder %s19, 1
    %p126 = por %p124, %p125
    %p128 = scmp.ne.s32.totalorder %s113, %s127
    %p129 = scmp.eq.s32.totalorder %s19, 0
    %p130 = por %p128, %p129
    %s132 = sadd.s32 %s131, 1
    %p135 = scmp.eq.s32.totalorder %s13, 1
    %p136 = scmp.ne.s32.totalorder %s131, %s133
    %p137 = scmp.eq.s32.totalorder %s13, 0
    %p138 = por %p136, %p137
    %p139 = scmp.ne.s32.totalorder %s131, %s133
    %p140 = scmp.eq.s32.totalorder %s18, 1
    %p141 = por %p139, %p140
    %p142 = scmp.ne.s32.totalorder %s133, %s134
    %p143 = scmp.eq.s32.totalorder %s18, 0
    %p144 = por %p142, %p143
    %p145 = scmp.ne.s32.totalorder %s133, %s134
    %p146 = scmp.eq.s32.totalorder %s19, 1
    %p147 = por %p145, %p146
    %p149 = scmp.ne.s32.totalorder %s134, %s148
    %p150 = scmp.eq.s32.totalorder %s19, 0
    %p151 = por %p149, %p150
    %s153 = sadd.s32 %s152, 1
    %p156 = scmp.eq.s32.totalorder %s13, 1
    %p157 = scmp.ne.s32.totalorder %s152, %s154
    %p158 = scmp.eq.s32.totalorder %s13, 0
    %p159 = por %p157, %p158
    %p160 = scmp.ne.s32.totalorder %s152, %s154
    %p161 = scmp.eq.s32.totalorder %s18, 1
    %p162 = por %p160, %p161
    %p163 = scmp.ne.s32.totalorder %s154, %s155
    %p164 = scmp.eq.s32.totalorder %s18, 0
    %p165 = por %p163, %p164
    %p166 = scmp.ne.s32.totalorder %s154, %s155
    %p167 = scmp.eq.s32.totalorder %s19, 1
    %p168 = por %p166, %p167
    %p170 = scmp.ne.s32.totalorder %s155, %s169
    %p171 = scmp.eq.s32.totalorder %s19, 0
    %p172 = por %p170, %p171
    %s173 = ssub.s32 %s13, %s20
    %p174 = scmp.eq.s32.totalorder %s173, 0
    %s176 = sadd.s32 %s175, 1
    %s177 = scalar_select %p174, %s175, %s176
    %p180 = pneg %p174
    %p181 = scmp.eq.s32.totalorder %s13, 1
    %p182 = por %p180, %p181
    %p183 = scmp.ne.s32.totalorder %s175, %s178
    %p184 = scmp.eq.s32.totalorder %s13, 0
    %p185 = por %p183, %p184
    %p186 = scmp.ne.s32.totalorder %s175, %s178
    %p187 = scmp.eq.s32.totalorder %s18, 1
    %p188 = por %p186, %p187
    %p189 = scmp.ne.s32.totalorder %s178, %s179
    %p190 = scmp.eq.s32.totalorder %s18, 0
    %p191 = por %p189, %p190
    %p192 = scmp.ne.s32.totalorder %s178, %s179
    %p193 = scmp.eq.s32.totalorder %s19, 1
    %p194 = por %p192, %p193
    %p196 = scmp.ne.s32.totalorder %s179, %s195
    %p197 = scmp.eq.s32.totalorder %s19, 0
    %p198 = por %p196, %p197
    %p199 = scmp.le.s32.totalorder 1, %s13
    %p200 = scmp.lt.s32.totalorder %s13, 3
    %p201 = pnand %p199, %p200
    %p202 = pneg %p201
    // Predicated region
    $region9: #{tpu_custom_call.1} parent=5 // pred_check
      _
    $region10: #{tpu_custom_call.1} parent=5 // pred_check_branch
      %204 = sbr.rel (%p201) target = $region12
    $region11: #{tpu_custom_call.1} parent=5 // pred_region
      %s205 = ssub.s32 %s13, 1
      // Predicated region
      $region13: #{tpu_custom_call.1} parent=11 // pred_check
        %p206 = pneg %p60
      $region14: #{tpu_custom_call.1} parent=11 // pred_check_branch
        %208 = sbr.rel (%p206) target = $region16
      $region15: #{tpu_custom_call.1} parent=11 // pred_region
        _
      $region16: #{tpu_custom_call.1} parent=11 // pred_fallthru
        _
      // Predicated region
      $region17: #{tpu_custom_call.1} parent=11 // pred_check
        %p209 = pneg %p81
      $region18: #{tpu_custom_call.1} parent=11 // pred_check_branch
        %211 = sbr.rel (%p209) target = $region20
      $region19: #{tpu_custom_call.1} parent=11 // pred_region
        _
      $region20: #{tpu_custom_call.1} parent=11 // pred_fallthru
        _
      // Predicated region
      $region21: #{tpu_custom_call.1} parent=11 // pred_check
        %p212 = pneg %p102
      $region22: #{tpu_custom_call.1} parent=11 // pred_check_branch
        %214 = sbr.rel (%p212) target = $region24
      $region23: #{tpu_custom_call.1} parent=11 // pred_region
        _
      $region24: #{tpu_custom_call.1} parent=11 // pred_fallthru
        _
      // Predicated region
      $region25: #{tpu_custom_call.1} parent=11 // pred_check
        %p215 = pneg %p123
      $region26: #{tpu_custom_call.1} parent=11 // pred_check_branch
        %217 = sbr.rel (%p215) target = $region28
      $region27: #{tpu_custom_call.1} parent=11 // pred_region
        _
      $region28: #{tpu_custom_call.1} parent=11 // pred_fallthru
        _
      // Predicated region
      $region29: #{tpu_custom_call.1} parent=11 // pred_check
        %p218 = pneg %p144
      $region30: #{tpu_custom_call.1} parent=11 // pred_check_branch
        %220 = sbr.rel (%p218) target = $region32
      $region31: #{tpu_custom_call.1} parent=11 // pred_region
        _
      $region32: #{tpu_custom_call.1} parent=11 // pred_fallthru
        _
      // Predicated region
      $region33: #{tpu_custom_call.1} parent=11 // pred_check
        %p221 = pneg %p165
      $region34: #{tpu_custom_call.1} parent=11 // pred_check_branch
        %223 = sbr.rel (%p221) target = $region36
      $region35: #{tpu_custom_call.1} parent=11 // pred_region
        _
      $region36: #{tpu_custom_call.1} parent=11 // pred_fallthru
        _
    $region12: #{tpu_custom_call.1} parent=5 // pred_fallthru
      _
    %p224 = scmp.lt.s32.totalorder %s13, 2
    // Predicated region
    $region37: #{tpu_custom_call.1} parent=5 // pred_check
      %p225 = pneg %p224
    $region38: #{tpu_custom_call.1} parent=5 // pred_check_branch
      %227 = sbr.rel (%p225) target = $region40
    $region39: #{tpu_custom_call.1} parent=5 // pred_region
      // Predicated region
      $region41: #{tpu_custom_call.1} parent=39 // pred_check
        %p228 = pneg %p33
      $region42: #{tpu_custom_call.1} parent=39 // pred_check_branch
        %230 = sbr.rel (%p228) target = $region44
      $region43: #{tpu_custom_call.1} parent=39 // pred_region
        %s231 = smul.u32 56, %s13
        %p232 = scmp.lt.s32.totalorder %s231, 111
        %s233 = scalar_select %p232, %s231, 111
        %s234 = smul.addr %s233, 8
        %s235 = scalar_lea.vmem %s0, %s234
        %s236 = smul.u32 56, %s13
      $region44: #{tpu_custom_call.1} parent=39 // pred_fallthru
        _
    $region40: #{tpu_custom_call.1} parent=5 // pred_fallthru
      _
    %p237 = scmp.le.s32.totalorder 1, %s13
    %p238 = scmp.lt.s32.totalorder %s13, 3
    %p239 = pnand %p237, %p238
    %p240 = pneg %p239
    // Predicated region
    $region45: #{tpu_custom_call.1} parent=5 // pred_check
      _
    $region46: #{tpu_custom_call.1} parent=5 // pred_check_branch
      %242 = sbr.rel (%p239) target = $region48
    $region47: #{tpu_custom_call.1} parent=5 // pred_region
      %s243 = ssub.s32 %s13, 1
      %s244 = smul.u32 56, %s18
      %p245 = scmp.lt.s32.totalorder %s244, 111
      %s246 = scalar_select %p245, %s244, 111
      %s247 = smul.addr %s246, 8
      %s248 = scalar_lea.vmem %s0, %s247
      %p249 = pneg %p39
      %p250 = pneg %p36
      %p251 = pneg %p60
      %p252 = pneg %p57
      %p253 = pneg %p81
      %p254 = pneg %p78
      %p255 = pneg %p102
      %p256 = pneg %p99
      %p257 = pneg %p123
      %p258 = pneg %p120
      %p259 = pneg %p144
      %p260 = pneg %p141
      %p261 = pneg %p165
      %p262 = pneg %p162
      %p263 = pneg %p191
      %p264 = pneg %p188
      %s265 = smul.u32 56, %s18
      %p266 = scmp.lt.s32.totalorder %s265, 111
      %s267 = scalar_select %p266, %s265, 111
      %s268 = smul.addr %s267, 8
      %s269 = scalar_lea.vmem %s7, %s268
      %s270 = smul.u32 56, %s18
      %p271 = scmp.lt.s32.totalorder %s270, 111
      %s272 = scalar_select %p271, %s270, 111
      %s273 = smul.addr %s272, 8
      %s274 = scalar_lea.vmem %s0, %s273
      %s275 = smul.u32 56, %s18
      %s276 = smul.u32 56, %s18
      %p277 = scmp.lt.s32.totalorder %s276, 111
      %s278 = scalar_select %p277, %s276, 111
      %s279 = smul.addr %s278, 8
      %s280 = scalar_lea.vmem %s7, %s279
      %s281 = smul.u32 56, %s18
      %v283 = vld [vmem:[%s274] sm:$0xff]
      %v284 = vld [vmem:[%s274 + $0x8] sm:$0xff]
      %v285 = vld [vmem:[%s274 + $0x10] sm:$0xff]
      %v286 = vld [vmem:[%s274 + $0x18] sm:$0xff]
      %v287 = vld [vmem:[%s274 + $0x20] sm:$0xff]
      %v288 = vld [vmem:[%s274 + $0x28] sm:$0xff]
      %v289 = vld [vmem:[%s274 + $0x30] sm:$0xff]
      %v290 = vld [vmem:[%s274 + $0x38] sm:$0xff]
      %v291 = vld [vmem:[%s274 + $0x40] sm:$0xff]
      %v292 = vld [vmem:[%s274 + $0x48] sm:$0xff]
      %v293 = vld [vmem:[%s274 + $0x50] sm:$0xff]
      %v294 = vld [vmem:[%s274 + $0x58] sm:$0xff]
      %v295 = vld [vmem:[%s274 + $0x60] sm:$0xff]
      %v296 = vld [vmem:[%s274 + $0x68] sm:$0xff]
      %v297 = vld [vmem:[%s274 + $0x70] sm:$0xff]
      %v298 = vld [vmem:[%s274 + $0x78] sm:$0xff]
      %v299 = vld [vmem:[%s274 + $0x80] sm:$0xff]
      %v300 = vld [vmem:[%s274 + $0x88] sm:$0xff]
      %v301 = vld [vmem:[%s274 + $0x90] sm:$0xff]
      %v302 = vld [vmem:[%s274 + $0x98] sm:$0xff]
      %v303 = vld [vmem:[%s274 + $0xa0] sm:$0xff]
      %v304 = vld [vmem:[%s274 + $0xa8] sm:$0xff]
      %v305 = vld [vmem:[%s274 + $0xb0] sm:$0xff]
      %v306 = vld [vmem:[%s274 + $0xb8] sm:$0xff]
      %v307 = vld [vmem:[%s274 + $0xc0] sm:$0xff]
      %v308 = vld [vmem:[%s274 + $0xc8] sm:$0xff]
      %v309 = vld [vmem:[%s274 + $0xd0] sm:$0xff]
      %v310 = vld [vmem:[%s274 + $0xd8] sm:$0xff]
      %v311 = vld [vmem:[%s274 + $0xe0] sm:$0xff]
      %v312 = vld [vmem:[%s274 + $0xe8] sm:$0xff]
      %v313 = vld [vmem:[%s274 + $0xf0] sm:$0xff]
      %v314 = vld [vmem:[%s274 + $0xf8] sm:$0xff]
      %v315 = vld [vmem:[%s274 + $0x100] sm:$0xff]
      %v316 = vld [vmem:[%s274 + $0x108] sm:$0xff]
      %v317 = vld [vmem:[%s274 + $0x110] sm:$0xff]
      %v318 = vld [vmem:[%s274 + $0x118] sm:$0xff]
      %v319 = vld [vmem:[%s274 + $0x120] sm:$0xff]
      %v320 = vld [vmem:[%s274 + $0x128] sm:$0xff]
      %v321 = vld [vmem:[%s274 + $0x130] sm:$0xff]
      %v322 = vld [vmem:[%s274 + $0x138] sm:$0xff]
      %v323 = vld [vmem:[%s274 + $0x140] sm:$0xff]
      %v324 = vld [vmem:[%s274 + $0x148] sm:$0xff]
      %v325 = vld [vmem:[%s274 + $0x150] sm:$0xff]
      %v326 = vld [vmem:[%s274 + $0x158] sm:$0xff]
      %v327 = vld [vmem:[%s274 + $0x160] sm:$0xff]
      %v328 = vld [vmem:[%s274 + $0x168] sm:$0xff]
      %v329 = vld [vmem:[%s274 + $0x170] sm:$0xff]
      %v330 = vld [vmem:[%s274 + $0x178] sm:$0xff]
      %v331 = vld [vmem:[%s274 + $0x180] sm:$0xff]
      %v332 = vld [vmem:[%s274 + $0x188] sm:$0xff]
      %v333 = vld [vmem:[%s274 + $0x190] sm:$0xff]
      %v334 = vld [vmem:[%s274 + $0x198] sm:$0xff]
      %v335 = vld [vmem:[%s274 + $0x1a0] sm:$0xff]
      %v336 = vld [vmem:[%s274 + $0x1a8] sm:$0xff]
      %v337 = vld [vmem:[%s274 + $0x1b0] sm:$0xff]
      %v338 = vld [vmem:[%s274 + $0x1b8] sm:$0xff]
      %v339 = vpack.c.bf16 %v284, %v283
      %v340 = vpack.c.bf16 %v286, %v285
      %v341 = vpack.c.bf16 %v288, %v287
      %v342 = vpack.c.bf16 %v290, %v289
      %v343 = vpack.c.bf16 %v292, %v291
      %v344 = vpack.c.bf16 %v294, %v293
      %v345 = vpack.c.bf16 %v296, %v295
      %v346 = vpack.c.bf16 %v298, %v297
      %v347 = vpack.c.bf16 %v300, %v299
      %v348 = vpack.c.bf16 %v302, %v301
      %v349 = vpack.c.bf16 %v304, %v303
      %v350 = vpack.c.bf16 %v306, %v305
      %v351 = vpack.c.bf16 %v308, %v307
      %v352 = vpack.c.bf16 %v310, %v309
      %v353 = vpack.c.bf16 %v312, %v311
      %v354 = vpack.c.bf16 %v314, %v313
      %v355 = vpack.c.bf16 %v316, %v315
      %v356 = vpack.c.bf16 %v318, %v317
      %v357 = vpack.c.bf16 %v320, %v319
      %v358 = vpack.c.bf16 %v322, %v321
      %v359 = vpack.c.bf16 %v324, %v323
      %v360 = vpack.c.bf16 %v326, %v325
      %v361 = vpack.c.bf16 %v328, %v327
      %v362 = vpack.c.bf16 %v330, %v329
      %v363 = vpack.c.bf16 %v332, %v331
      %v364 = vpack.c.bf16 %v334, %v333
      %v365 = vpack.c.bf16 %v336, %v335
      %v366 = vpack.c.bf16 %v338, %v337
      %v367 = vld [vmem:[%s3] sm:$0xff]
      %v368 = vld [vmem:[%s3 + $0x8] sm:$0xff]
      %v369 = vld [vmem:[%s3 + $0x10] sm:$0xff]
      %v370 = vld [vmem:[%s3 + $0x18] sm:$0xff]
      %v371 = vld [vmem:[%s3 + $0x20] sm:$0xff]
      %v372 = vld [vmem:[%s3 + $0x28] sm:$0xff]
      %v373 = vld [vmem:[%s3 + $0x30] sm:$0xff]
      %v374 = vld [vmem:[%s3 + $0x38] sm:$0xff]
      %v375 = vld [vmem:[%s4] sm:$0x3]
      %v377 = vlaneseq
      %v378 = vshrl.u32 %v377, 7
      %v379 = vsub.s32 0, %v378
      %v380 = vrot.slane %v375, %v379
      %v381 = vlaneseq
      %v382 = vshrl.u32 %v381, 7
      %v383 = vsub.s32 1, %v382
      %v384 = vrot.slane %v375, %v383
      %v395 = vunpack.c.l.b16 %v367
      %v396 = vunpack.c.h.b16 %v367
      %v397 = vunpack.c.l.b16 %v368
      %v398 = vunpack.c.h.b16 %v368
      %v399 = vunpack.c.l.b16 %v369
      %v400 = vunpack.c.h.b16 %v369
      %v401 = vunpack.c.l.b16 %v370
      %v402 = vunpack.c.h.b16 %v370
      %v403 = vunpack.c.l.b16 %v371
      %v404 = vunpack.c.h.b16 %v371
      %v405 = vunpack.c.l.b16 %v372
      %v406 = vunpack.c.h.b16 %v372
      %v407 = vunpack.c.l.b16 %v373
      %v408 = vunpack.c.h.b16 %v373
      %v409 = vunpack.c.l.b16 %v374
      %v410 = vunpack.c.h.b16 %v374
      %v411 = vpack.c.b16 %v397, %v395
      %v412 = vpack.c.b16 %v398, %v396
      %v413 = vpack.c.b16 %v401, %v399
      %v414 = vpack.c.b16 %v402, %v400
      %v415 = vpack.c.b16 %v405, %v403
      %v416 = vpack.c.b16 %v406, %v404
      %v417 = vpack.c.b16 %v409, %v407
      %v418 = vpack.c.b16 %v410, %v408
      %vm427 = vcmask 523264
      %v429 = vsel %vm427, %v339, 0
      %v432 = vsel %vm427, %v340, 0
      %v435 = vsel %vm427, %v341, 0
      %v438 = vsel %vm427, %v342, 0
      %v441 = vsel %vm427, %v343, 0
      %v444 = vsel %vm427, %v344, 0
      %v447 = vsel %vm427, %v345, 0
      %v450 = vsel %vm427, %v346, 0
      %v453 = vsel %vm427, %v347, 0
      %v456 = vsel %vm427, %v348, 0
      %v459 = vsel %vm427, %v349, 0
      %v462 = vsel %vm427, %v350, 0
      %v465 = vsel %vm427, %v351, 0
      %v468 = vsel %vm427, %v352, 0
      %v471 = vsel %vm427, %v353, 0
      %v474 = vsel %vm427, %v354, 0
      %v477 = vsel %vm427, %v355, 0
      %v480 = vsel %vm427, %v356, 0
      %v483 = vsel %vm427, %v357, 0
      %v486 = vsel %vm427, %v358, 0
      %v489 = vsel %vm427, %v359, 0
      %v492 = vsel %vm427, %v360, 0
      %v495 = vsel %vm427, %v361, 0
      %v498 = vsel %vm427, %v362, 0
      %v501 = vsel %vm427, %v363, 0
      %v504 = vsel %vm427, %v364, 0
      %v507 = vsel %vm427, %v365, 0
      %v510 = vsel %vm427, %v366, 0
      %512 = vmatprep.subr.bf16.mxu0 %v412
      %513 = vmatpush1.bf16.msra.mxu0 %v411
      %514 = vmatprep.subr.bf16.mxu0 %v414
      %515 = vmatpush1.bf16.msra.mxu0 %v413
      %516 = vmatprep.subr.bf16.mxu0 %v416
      %517 = vmatpush1.bf16.msra.mxu0 %v415
      %518 = vmatprep.subr.bf16.mxu0 %v418
      %519 = vmatpush1.bf16.msra.mxu0 %v417
      %520 = vmatprep.subr.bf16.mxu0 0
      %521 = vmatpush1.bf16.msra.mxu0 0
      %522 = vmatprep.subr.bf16.mxu0 0
      %523 = vmatpush1.bf16.msra.mxu0 0
      %524 = vmatprep.subr.bf16.mxu0 0
      %525 = vmatpush1.bf16.msra.mxu0 0
      %526 = vmatprep.subr.bf16.mxu0 0
      %527 = vmatpush1.bf16.msra.mxu0 0
      %528 = vmatprep.subr.bf16.mxu0 0
      %529 = vmatpush1.bf16.msra.mxu0 0
      %530 = vmatprep.subr.bf16.mxu0 0
      %531 = vmatpush1.bf16.msra.mxu0 0
      %532 = vmatprep.subr.bf16.mxu0 0
      %533 = vmatpush1.bf16.msra.mxu0 0
      %534 = vmatprep.subr.bf16.mxu0 0
      %535 = vmatpush1.bf16.msra.mxu0 0
      %536 = vmatprep.subr.bf16.mxu0 0
      %537 = vmatpush1.bf16.msra.mxu0 0
      %538 = vmatprep.subr.bf16.mxu0 0
      %539 = vmatpush1.bf16.msra.mxu0 0
      %540 = vmatprep.subr.bf16.mxu0 0
      %541 = vmatpush1.bf16.msra.mxu0 0
      %542 = vmatprep.subr.bf16.mxu0 0
      %543 = vmatpush1.bf16.msra.mxu0 0
      %544 = vmatprep.mubr.bf16.mxu0 0
      %545 = vmatmul.mubr.bf16.gmra.mrb[0].mxu0 %v429
      %v546 = vpop.f32.mrb[0].mxu0
      %v547 = vadd.f32 %v380, %v546
      %v548 = vpop.f32.mrb[0].mxu0
      %v549 = vadd.f32 %v384, %v548
      %v550 = vpop.f32.mrb[0].mxu0
      %v551 = vadd.f32 %v380, %v550
      %v552 = vpop.f32.mrb[0].mxu0
      %v553 = vadd.f32 %v384, %v552
      %554 = vmatprep.mubr.bf16.mxu0 0
      %555 = vmatmul.mubr.bf16.gmra.mrb[0].mxu0 %v432
      %v556 = vpop.f32.mrb[0].mxu0
      %v557 = vadd.f32 %v380, %v556
      %v558 = vpop.f32.mrb[0].mxu0
      %v559 = vadd.f32 %v384, %v558
      %v560 = vpop.f32.mrb[0].mxu0
      %v561 = vadd.f32 %v380, %v560
      %v562 = vpop.f32.mrb[0].mxu0
      %v563 = vadd.f32 %v384, %v562
      %564 = vmatprep.mubr.bf16.mxu0 0
      %565 = vmatmul.mubr.bf16.gmra.mrb[0].mxu0 %v435
      %v566 = vpop.f32.mrb[0].mxu0
      %v567 = vadd.f32 %v380, %v566
      %v568 = vpop.f32.mrb[0].mxu0
      %v569 = vadd.f32 %v384, %v568
      %v570 = vpop.f32.mrb[0].mxu0
      %v571 = vadd.f32 %v380, %v570
      %v572 = vpop.f32.mrb[0].mxu0
      %v573 = vadd.f32 %v384, %v572
      %574 = vmatprep.mubr.bf16.mxu0 0
      %575 = vmatmul.mubr.bf16.gmra.mrb[0].mxu0 %v438
      %v576 = vpop.f32.mrb[0].mxu0
      %v577 = vadd.f32 %v380, %v576
      %v578 = vpop.f32.mrb[0].mxu0
      %v579 = vadd.f32 %v384, %v578
      %v580 = vpop.f32.mrb[0].mxu0
      %v581 = vadd.f32 %v380, %v580
      %v582 = vpop.f32.mrb[0].mxu0
      %v583 = vadd.f32 %v384, %v582
      %584 = vmatprep.mubr.bf16.mxu0 0
      %585 = vmatmul.mubr.bf16.gmra.mrb[0].mxu0 %v441
      %v586 = vpop.f32.mrb[0].mxu0
      %v587 = vadd.f32 %v380, %v586
      %v588 = vpop.f32.mrb[0].mxu0
      %v589 = vadd.f32 %v384, %v588
      %v590 = vpop.f32.mrb[0].mxu0
      %v591 = vadd.f32 %v380, %v590
      %v592 = vpop.f32.mrb[0].mxu0
      %v593 = vadd.f32 %v384, %v592
      %594 = vmatprep.mubr.bf16.mxu0 0
      %595 = vmatmul.mubr.bf16.gmra.mrb[0].mxu0 %v444
      %v596 = vpop.f32.mrb[0].mxu0
      %v597 = vadd.f32 %v380, %v596
      %v598 = vpop.f32.mrb[0].mxu0
      %v599 = vadd.f32 %v384, %v598
      %v600 = vpop.f32.mrb[0].mxu0
      %v601 = vadd.f32 %v380, %v600
      %v602 = vpop.f32.mrb[0].mxu0
      %v603 = vadd.f32 %v384, %v602
      %604 = vmatprep.mubr.bf16.mxu0 0
      %605 = vmatmul.mubr.bf16.gmra.mrb[0].mxu0 %v447
      %v606 = vpop.f32.mrb[0].mxu0
      %v607 = vadd.f32 %v380, %v606
      %v608 = vpop.f32.mrb[0].mxu0
      %v609 = vadd.f32 %v384, %v608
      %v610 = vpop.f32.mrb[0].mxu0
      %v611 = vadd.f32 %v380, %v610
      %v612 = vpop.f32.mrb[0].mxu0
      %v613 = vadd.f32 %v384, %v612
      %614 = vmatprep.mubr.bf16.mxu0 0
      %615 = vmatmul.mubr.bf16.gmra.mrb[0].mxu0 %v450
      %v616 = vpop.f32.mrb[0].mxu0
      %v617 = vadd.f32 %v380, %v616
      %v618 = vpop.f32.mrb[0].mxu0
      %v619 = vadd.f32 %v384, %v618
      %v620 = vpop.f32.mrb[0].mxu0
      %v621 = vadd.f32 %v380, %v620
      %v622 = vpop.f32.mrb[0].mxu0
      %v623 = vadd.f32 %v384, %v622
      %624 = vmatprep.mubr.bf16.mxu0 0
      %625 = vmatmul.mubr.bf16.gmra.mrb[0].mxu0 %v453
      %v626 = vpop.f32.mrb[0].mxu0
      %v627 = vadd.f32 %v380, %v626
      %v628 = vpop.f32.mrb[0].mxu0
      %v629 = vadd.f32 %v384, %v628
      %v630 = vpop.f32.mrb[0].mxu0
      %v631 = vadd.f32 %v380, %v630
      %v632 = vpop.f32.mrb[0].mxu0
      %v633 = vadd.f32 %v384, %v632
      %634 = vmatprep.mubr.bf16.mxu0 0
      %635 = vmatmul.mubr.bf16.gmra.mrb[0].mxu0 %v456
      %v636 = vpop.f32.mrb[0].mxu0
      %v637 = vadd.f32 %v380, %v636
      %v638 = vpop.f32.mrb[0].mxu0
      %v639 = vadd.f32 %v384, %v638
      %v640 = vpop.f32.mrb[0].mxu0
      %v641 = vadd.f32 %v380, %v640
      %v642 = vpop.f32.mrb[0].mxu0
      %v643 = vadd.f32 %v384, %v642
      %644 = vmatprep.mubr.bf16.mxu0 0
      %645 = vmatmul.mubr.bf16.gmra.mrb[0].mxu0 %v459
      %v646 = vpop.f32.mrb[0].mxu0
      %v647 = vadd.f32 %v380, %v646
      %v648 = vpop.f32.mrb[0].mxu0
      %v649 = vadd.f32 %v384, %v648
      %v650 = vpop.f32.mrb[0].mxu0
      %v651 = vadd.f32 %v380, %v650
      %v652 = vpop.f32.mrb[0].mxu0
      %v653 = vadd.f32 %v384, %v652
      %654 = vmatprep.mubr.bf16.mxu0 0
      %655 = vmatmul.mubr.bf16.gmra.mrb[0].mxu0 %v462
      %v656 = vpop.f32.mrb[0].mxu0
      %v657 = vadd.f32 %v380, %v656
      %v658 = vpop.f32.mrb[0].mxu0
      %v659 = vadd.f32 %v384, %v658
      %v660 = vpop.f32.mrb[0].mxu0
      %v661 = vadd.f32 %v380, %v660
      %v662 = vpop.f32.mrb[0].mxu0
      %v663 = vadd.f32 %v384, %v662
      %664 = vmatprep.mubr.bf16.mxu0 0
      %665 = vmatmul.mubr.bf16.gmra.mrb[0].mxu0 %v465
      %v666 = vpop.f32.mrb[0].mxu0
      %v667 = vadd.f32 %v380, %v666
      %v668 = vpop.f32.mrb[0].mxu0
      %v669 = vadd.f32 %v384, %v668
      %v670 = vpop.f32.mrb[0].mxu0
      %v671 = vadd.f32 %v380, %v670
      %v672 = vpop.f32.mrb[0].mxu0
      %v673 = vadd.f32 %v384, %v672
      %674 = vmatprep.mubr.bf16.mxu0 0
      %675 = vmatmul.mubr.bf16.gmra.mrb[0].mxu0 %v468
      %v676 = vpop.f32.mrb[0].mxu0
      %v677 = vadd.f32 %v380, %v676
      %v678 = vpop.f32.mrb[0].mxu0
      %v679 = vadd.f32 %v384, %v678
      %v680 = vpop.f32.mrb[0].mxu0
      %v681 = vadd.f32 %v380, %v680
      %v682 = vpop.f32.mrb[0].mxu0
      %v683 = vadd.f32 %v384, %v682
      %684 = vmatprep.mubr.bf16.mxu0 0
      %685 = vmatmul.mubr.bf16.gmra.mrb[0].mxu0 %v471
      %v686 = vpop.f32.mrb[0].mxu0
      %v687 = vadd.f32 %v380, %v686
      %v688 = vpop.f32.mrb[0].mxu0
      %v689 = vadd.f32 %v384, %v688
      %v690 = vpop.f32.mrb[0].mxu0
      %v691 = vadd.f32 %v380, %v690
      %v692 = vpop.f32.mrb[0].mxu0
      %v693 = vadd.f32 %v384, %v692
      %694 = vmatprep.mubr.bf16.mxu0 0
      %695 = vmatmul.mubr.bf16.gmra.mrb[0].mxu0 %v474
      %v696 = vpop.f32.mrb[0].mxu0
      %v697 = vadd.f32 %v380, %v696
      %v698 = vpop.f32.mrb[0].mxu0
      %v699 = vadd.f32 %v384, %v698
      %v700 = vpop.f32.mrb[0].mxu0
      %v701 = vadd.f32 %v380, %v700
      %v702 = vpop.f32.mrb[0].mxu0
      %v703 = vadd.f32 %v384, %v702
      %704 = vmatprep.mubr.bf16.mxu0 0
      %705 = vmatmul.mubr.bf16.gmra.mrb[0].mxu0 %v477
      %v706 = vpop.f32.mrb[0].mxu0
      %v707 = vadd.f32 %v380, %v706
      %v708 = vpop.f32.mrb[0].mxu0
      %v709 = vadd.f32 %v384, %v708
      %v710 = vpop.f32.mrb[0].mxu0
      %v711 = vadd.f32 %v380, %v710
      %v712 = vpop.f32.mrb[0].mxu0
      %v713 = vadd.f32 %v384, %v712
      %714 = vmatprep.mubr.bf16.mxu0 0
      %715 = vmatmul.mubr.bf16.gmra.mrb[0].mxu0 %v480
      %v716 = vpop.f32.mrb[0].mxu0
      %v717 = vadd.f32 %v380, %v716
      %v718 = vpop.f32.mrb[0].mxu0
      %v719 = vadd.f32 %v384, %v718
      %v720 = vpop.f32.mrb[0].mxu0
      %v721 = vadd.f32 %v380, %v720
      %v722 = vpop.f32.mrb[0].mxu0
      %v723 = vadd.f32 %v384, %v722
      %724 = vmatprep.mubr.bf16.mxu0 0
      %725 = vmatmul.mubr.bf16.gmra.mrb[0].mxu0 %v483
      %v726 = vpop.f32.mrb[0].mxu0
      %v727 = vadd.f32 %v380, %v726
      %v728 = vpop.f32.mrb[0].mxu0
      %v729 = vadd.f32 %v384, %v728
      %v730 = vpop.f32.mrb[0].mxu0
      %v731 = vadd.f32 %v380, %v730
      %v732 = vpop.f32.mrb[0].mxu0
      %v733 = vadd.f32 %v384, %v732
      %734 = vmatprep.mubr.bf16.mxu0 0
      %735 = vmatmul.mubr.bf16.gmra.mrb[0].mxu0 %v486
      %v736 = vpop.f32.mrb[0].mxu0
      %v737 = vadd.f32 %v380, %v736
      %v738 = vpop.f32.mrb[0].mxu0
      %v739 = vadd.f32 %v384, %v738
      %v740 = vpop.f32.mrb[0].mxu0
      %v741 = vadd.f32 %v380, %v740
      %v742 = vpop.f32.mrb[0].mxu0
      %v743 = vadd.f32 %v384, %v742
      %744 = vmatprep.mubr.bf16.mxu0 0
      %745 = vmatmul.mubr.bf16.gmra.mrb[0].mxu0 %v489
      %v746 = vpop.f32.mrb[0].mxu0
      %v747 = vadd.f32 %v380, %v746
      %v748 = vpop.f32.mrb[0].mxu0
      %v749 = vadd.f32 %v384, %v748
      %v750 = vpop.f32.mrb[0].mxu0
      %v751 = vadd.f32 %v380, %v750
      %v752 = vpop.f32.mrb[0].mxu0
      %v753 = vadd.f32 %v384, %v752
      %754 = vmatprep.mubr.bf16.mxu0 0
      %755 = vmatmul.mubr.bf16.gmra.mrb[0].mxu0 %v492
      %v756 = vpop.f32.mrb[0].mxu0
      %v757 = vadd.f32 %v380, %v756
      %v758 = vpop.f32.mrb[0].mxu0
      %v759 = vadd.f32 %v384, %v758
      %v760 = vpop.f32.mrb[0].mxu0
      %v761 = vadd.f32 %v380, %v760
      %v762 = vpop.f32.mrb[0].mxu0
      %v763 = vadd.f32 %v384, %v762
      %764 = vmatprep.mubr.bf16.mxu0 0
      %765 = vmatmul.mubr.bf16.gmra.mrb[0].mxu0 %v495
      %v766 = vpop.f32.mrb[0].mxu0
      %v767 = vadd.f32 %v380, %v766
      %v768 = vpop.f32.mrb[0].mxu0
      %v769 = vadd.f32 %v384, %v768
      %v770 = vpop.f32.mrb[0].mxu0
      %v771 = vadd.f32 %v380, %v770
      %v772 = vpop.f32.mrb[0].mxu0
      %v773 = vadd.f32 %v384, %v772
      %774 = vmatprep.mubr.bf16.mxu0 0
      %775 = vmatmul.mubr.bf16.gmra.mrb[0].mxu0 %v498
      %v776 = vpop.f32.mrb[0].mxu0
      %v777 = vadd.f32 %v380, %v776
      %v778 = vpop.f32.mrb[0].mxu0
      %v779 = vadd.f32 %v384, %v778
      %v780 = vpop.f32.mrb[0].mxu0
      %v781 = vadd.f32 %v380, %v780
      %v782 = vpop.f32.mrb[0].mxu0
      %v783 = vadd.f32 %v384, %v782
      %784 = vmatprep.mubr.bf16.mxu0 0
      %785 = vmatmul.mubr.bf16.gmra.mrb[0].mxu0 %v501
      %v786 = vpop.f32.mrb[0].mxu0
      %v787 = vadd.f32 %v380, %v786
      %v788 = vpop.f32.mrb[0].mxu0
      %v789 = vadd.f32 %v384, %v788
      %v790 = vpop.f32.mrb[0].mxu0
      %v791 = vadd.f32 %v380, %v790
      %v792 = vpop.f32.mrb[0].mxu0
      %v793 = vadd.f32 %v384, %v792
      %794 = vmatprep.mubr.bf16.mxu0 0
      %795 = vmatmul.mubr.bf16.gmra.mrb[0].mxu0 %v504
      %v796 = vpop.f32.mrb[0].mxu0
      %v797 = vadd.f32 %v380, %v796
      %v798 = vpop.f32.mrb[0].mxu0
      %v799 = vadd.f32 %v384, %v798
      %v800 = vpop.f32.mrb[0].mxu0
      %v801 = vadd.f32 %v380, %v800
      %v802 = vpop.f32.mrb[0].mxu0
      %v803 = vadd.f32 %v384, %v802
      %804 = vmatprep.mubr.bf16.mxu0 0
      %805 = vmatmul.mubr.bf16.gmra.mrb[0].mxu0 %v507
      %v806 = vpop.f32.mrb[0].mxu0
      %v807 = vadd.f32 %v380, %v806
      %v808 = vpop.f32.mrb[0].mxu0
      %v809 = vadd.f32 %v384, %v808
      %v810 = vpop.f32.mrb[0].mxu0
      %v811 = vadd.f32 %v380, %v810
      %v812 = vpop.f32.mrb[0].mxu0
      %v813 = vadd.f32 %v384, %v812
      %814 = vmatprep.mubr.bf16.mxu0 0
      %815 = vmatmul.mubr.bf16.gmra.mrb[0].mxu0 %v510
      %v816 = vpop.f32.mrb[0].mxu0
      %v817 = vadd.f32 %v380, %v816
      %v818 = vpop.f32.mrb[0].mxu0
      %v819 = vadd.f32 %v384, %v818
      %v820 = vpop.f32.mrb[0].mxu0
      %v821 = vadd.f32 %v380, %v820
      %v822 = vpop.f32.mrb[0].mxu0
      %v823 = vadd.f32 %v384, %v822
      %824 = vdwg.mxu0
      %v825 = vpack.c.bf16 %v551, %v547
      %v826 = vpack.c.bf16 %v553, %v549
      %v827 = vpack.c.bf16 %v561, %v557
      %v828 = vpack.c.bf16 %v563, %v559
      %v829 = vpack.c.bf16 %v571, %v567
      %v830 = vpack.c.bf16 %v573, %v569
      %v831 = vpack.c.bf16 %v581, %v577
      %v832 = vpack.c.bf16 %v583, %v579
      %v833 = vpack.c.bf16 %v591, %v587
      %v834 = vpack.c.bf16 %v593, %v589
      %v835 = vpack.c.bf16 %v601, %v597
      %v836 = vpack.c.bf16 %v603, %v599
      %v837 = vpack.c.bf16 %v611, %v607
      %v838 = vpack.c.bf16 %v613, %v609
      %v839 = vpack.c.bf16 %v621, %v617
      %v840 = vpack.c.bf16 %v623, %v619
      %v841 = vpack.c.bf16 %v631, %v627
      %v842 = vpack.c.bf16 %v633, %v629
      %v843 = vpack.c.bf16 %v641, %v637
      %v844 = vpack.c.bf16 %v643, %v639
      %v845 = vpack.c.bf16 %v651, %v647
      %v846 = vpack.c.bf16 %v653, %v649
      %v847 = vpack.c.bf16 %v661, %v657
      %v848 = vpack.c.bf16 %v663, %v659
      %v849 = vpack.c.bf16 %v671, %v667
      %v850 = vpack.c.bf16 %v673, %v669
      %v851 = vpack.c.bf16 %v681, %v677
      %v852 = vpack.c.bf16 %v683, %v679
      %v853 = vpack.c.bf16 %v691, %v687
      %v854 = vpack.c.bf16 %v693, %v689
      %v855 = vpack.c.bf16 %v701, %v697
      %v856 = vpack.c.bf16 %v703, %v699
      %v857 = vpack.c.bf16 %v711, %v707
      %v858 = vpack.c.bf16 %v713, %v709
      %v859 = vpack.c.bf16 %v721, %v717
      %v860 = vpack.c.bf16 %v723, %v719
      %v861 = vpack.c.bf16 %v731, %v727
      %v862 = vpack.c.bf16 %v733, %v729
      %v863 = vpack.c.bf16 %v741, %v737
      %v864 = vpack.c.bf16 %v743, %v739
      %v865 = vpack.c.bf16 %v751, %v747
      %v866 = vpack.c.bf16 %v753, %v749
      %v867 = vpack.c.bf16 %v761, %v757
      %v868 = vpack.c.bf16 %v763, %v759
      %v869 = vpack.c.bf16 %v771, %v767
      %v870 = vpack.c.bf16 %v773, %v769
      %v871 = vpack.c.bf16 %v781, %v777
      %v872 = vpack.c.bf16 %v783, %v779
      %v873 = vpack.c.bf16 %v791, %v787
      %v874 = vpack.c.bf16 %v793, %v789
      %v875 = vpack.c.bf16 %v801, %v797
      %v876 = vpack.c.bf16 %v803, %v799
      %v877 = vpack.c.bf16 %v811, %v807
      %v878 = vpack.c.bf16 %v813, %v809
      %v879 = vpack.c.bf16 %v821, %v817
      %v880 = vpack.c.bf16 %v823, %v819
      %909 = vrot.lane.b32.xlu0 %v825, 112
      %v910 = vpop.permute.xlu0 %909
      %911 = vrot.lane.b32.xlu0 %v827, 112
      %v912 = vpop.permute.xlu0 %911
      %913 = vrot.lane.b32.xlu0 %v829, 112
      %v914 = vpop.permute.xlu0 %913
      %915 = vrot.lane.b32.xlu0 %v831, 112
      %v916 = vpop.permute.xlu0 %915
      %917 = vrot.lane.b32.xlu0 %v833, 112
      %v918 = vpop.permute.xlu0 %917
      %919 = vrot.lane.b32.xlu0 %v835, 112
      %v920 = vpop.permute.xlu0 %919
      %921 = vrot.lane.b32.xlu0 %v837, 112
      %v922 = vpop.permute.xlu0 %921
      %923 = vrot.lane.b32.xlu0 %v839, 112
      %v924 = vpop.permute.xlu0 %923
      %925 = vrot.lane.b32.xlu0 %v841, 112
      %v926 = vpop.permute.xlu0 %925
      %927 = vrot.lane.b32.xlu0 %v843, 112
      %v928 = vpop.permute.xlu0 %927
      %929 = vrot.lane.b32.xlu0 %v845, 112
      %v930 = vpop.permute.xlu0 %929
      %931 = vrot.lane.b32.xlu0 %v847, 112
      %v932 = vpop.permute.xlu0 %931
      %933 = vrot.lane.b32.xlu0 %v849, 112
      %v934 = vpop.permute.xlu0 %933
      %935 = vrot.lane.b32.xlu0 %v851, 112
      %v936 = vpop.permute.xlu0 %935
      %937 = vrot.lane.b32.xlu0 %v853, 112
      %v938 = vpop.permute.xlu0 %937
      %939 = vrot.lane.b32.xlu0 %v855, 112
      %v940 = vpop.permute.xlu0 %939
      %941 = vrot.lane.b32.xlu0 %v857, 112
      %v942 = vpop.permute.xlu0 %941
      %943 = vrot.lane.b32.xlu0 %v859, 112
      %v944 = vpop.permute.xlu0 %943
      %945 = vrot.lane.b32.xlu0 %v861, 112
      %v946 = vpop.permute.xlu0 %945
      %947 = vrot.lane.b32.xlu0 %v863, 112
      %v948 = vpop.permute.xlu0 %947
      %949 = vrot.lane.b32.xlu0 %v865, 112
      %v950 = vpop.permute.xlu0 %949
      %951 = vrot.lane.b32.xlu0 %v867, 112
      %v952 = vpop.permute.xlu0 %951
      %953 = vrot.lane.b32.xlu0 %v869, 112
      %v954 = vpop.permute.xlu0 %953
      %955 = vrot.lane.b32.xlu0 %v871, 112
      %v956 = vpop.permute.xlu0 %955
      %957 = vrot.lane.b32.xlu0 %v873, 112
      %v958 = vpop.permute.xlu0 %957
      %959 = vrot.lane.b32.xlu0 %v875, 112
      %v960 = vpop.permute.xlu0 %959
      %961 = vrot.lane.b32.xlu0 %v877, 112
      %v962 = vpop.permute.xlu0 %961
      %963 = vrot.lane.b32.xlu0 %v879, 112
      %v964 = vpop.permute.xlu0 %963
      %965 = vrot.lane.b32.xlu0 %v825, 96
      %v966 = vpop.permute.xlu0 %965
      %967 = vrot.lane.b32.xlu0 %v827, 96
      %v968 = vpop.permute.xlu0 %967
      %969 = vrot.lane.b32.xlu0 %v829, 96
      %v970 = vpop.permute.xlu0 %969
      %971 = vrot.lane.b32.xlu0 %v831, 96
      %v972 = vpop.permute.xlu0 %971
      %973 = vrot.lane.b32.xlu0 %v833, 96
      %v974 = vpop.permute.xlu0 %973
      %975 = vrot.lane.b32.xlu0 %v835, 96
      %v976 = vpop.permute.xlu0 %975
      %977 = vrot.lane.b32.xlu0 %v837, 96
      %v978 = vpop.permute.xlu0 %977
      %979 = vrot.lane.b32.xlu0 %v839, 96
      %v980 = vpop.permute.xlu0 %979
      %981 = vrot.lane.b32.xlu0 %v841, 96
      %v982 = vpop.permute.xlu0 %981
      %983 = vrot.lane.b32.xlu0 %v843, 96
      %v984 = vpop.permute.xlu0 %983
      %985 = vrot.lane.b32.xlu0 %v845, 96
      %v986 = vpop.permute.xlu0 %985
      %987 = vrot.lane.b32.xlu0 %v847, 96
      %v988 = vpop.permute.xlu0 %987
      %989 = vrot.lane.b32.xlu0 %v849, 96
      %v990 = vpop.permute.xlu0 %989
      %991 = vrot.lane.b32.xlu0 %v851, 96
      %v992 = vpop.permute.xlu0 %991
      %993 = vrot.lane.b32.xlu0 %v853, 96
      %v994 = vpop.permute.xlu0 %993
      %995 = vrot.lane.b32.xlu0 %v855, 96
      %v996 = vpop.permute.xlu0 %995
      %997 = vrot.lane.b32.xlu0 %v857, 96
      %v998 = vpop.permute.xlu0 %997
      %999 = vrot.lane.b32.xlu0 %v859, 96
      %v1000 = vpop.permute.xlu0 %999
      %1001 = vrot.lane.b32.xlu0 %v861, 96
      %v1002 = vpop.permute.xlu0 %1001
      %1003 = vrot.lane.b32.xlu0 %v863, 96
      %v1004 = vpop.permute.xlu0 %1003
      %1005 = vrot.lane.b32.xlu0 %v865, 96
      %v1006 = vpop.permute.xlu0 %1005
      %1007 = vrot.lane.b32.xlu0 %v867, 96
      %v1008 = vpop.permute.xlu0 %1007
      %1009 = vrot.lane.b32.xlu0 %v869, 96
      %v1010 = vpop.permute.xlu0 %1009
      %1011 = vrot.lane.b32.xlu0 %v871, 96
      %v1012 = vpop.permute.xlu0 %1011
      %1013 = vrot.lane.b32.xlu0 %v873, 96
      %v1014 = vpop.permute.xlu0 %1013
      %1015 = vrot.lane.b32.xlu0 %v875, 96
      %v1016 = vpop.permute.xlu0 %1015
      %1017 = vrot.lane.b32.xlu0 %v877, 96
      %v1018 = vpop.permute.xlu0 %1017
      %1019 = vrot.lane.b32.xlu0 %v879, 96
      %v1020 = vpop.permute.xlu0 %1019
      %1021 = vrot.lane.b32.xlu0 %v825, 80
      %v1022 = vpop.permute.xlu0 %1021
      %1023 = vrot.lane.b32.xlu0 %v827, 80
      %v1024 = vpop.permute.xlu0 %1023
      %1025 = vrot.lane.b32.xlu0 %v829, 80
      %v1026 = vpop.permute.xlu0 %1025
      %1027 = vrot.lane.b32.xlu0 %v831, 80
      %v1028 = vpop.permute.xlu0 %1027
      %1029 = vrot.lane.b32.xlu0 %v833, 80
      %v1030 = vpop.permute.xlu0 %1029
      %1031 = vrot.lane.b32.xlu0 %v835, 80
      %v1032 = vpop.permute.xlu0 %1031
      %1033 = vrot.lane.b32.xlu0 %v837, 80
      %v1034 = vpop.permute.xlu0 %1033
      %1035 = vrot.lane.b32.xlu0 %v839, 80
      %v1036 = vpop.permute.xlu0 %1035
      %1037 = vrot.lane.b32.xlu0 %v841, 80
      %v1038 = vpop.permute.xlu0 %1037
      %1039 = vrot.lane.b32.xlu0 %v843, 80
      %v1040 = vpop.permute.xlu0 %1039
      %1041 = vrot.lane.b32.xlu0 %v845, 80
      %v1042 = vpop.permute.xlu0 %1041
      %1043 = vrot.lane.b32.xlu0 %v847, 80
      %v1044 = vpop.permute.xlu0 %1043
      %1045 = vrot.lane.b32.xlu0 %v849, 80
      %v1046 = vpop.permute.xlu0 %1045
      %1047 = vrot.lane.b32.xlu0 %v851, 80
      %v1048 = vpop.permute.xlu0 %1047
      %1049 = vrot.lane.b32.xlu0 %v853, 80
      %v1050 = vpop.permute.xlu0 %1049
      %1051 = vrot.lane.b32.xlu0 %v855, 80
      %v1052 = vpop.permute.xlu0 %1051
      %1053 = vrot.lane.b32.xlu0 %v857, 80
      %v1054 = vpop.permute.xlu0 %1053
      %1055 = vrot.lane.b32.xlu0 %v859, 80
      %v1056 = vpop.permute.xlu0 %1055
      %1057 = vrot.lane.b32.xlu0 %v861, 80
      %v1058 = vpop.permute.xlu0 %1057
      %1059 = vrot.lane.b32.xlu0 %v863, 80
      %v1060 = vpop.permute.xlu0 %1059
      %1061 = vrot.lane.b32.xlu0 %v865, 80
      %v1062 = vpop.permute.xlu0 %1061
      %1063 = vrot.lane.b32.xlu0 %v867, 80
      %v1064 = vpop.permute.xlu0 %1063
      %1065 = vrot.lane.b32.xlu0 %v869, 80
      %v1066 = vpop.permute.xlu0 %1065
      %1067 = vrot.lane.b32.xlu0 %v871, 80
      %v1068 = vpop.permute.xlu0 %1067
      %1069 = vrot.lane.b32.xlu0 %v873, 80
      %v1070 = vpop.permute.xlu0 %1069
      %1071 = vrot.lane.b32.xlu0 %v875, 80
      %v1072 = vpop.permute.xlu0 %1071
      %1073 = vrot.lane.b32.xlu0 %v877, 80
      %v1074 = vpop.permute.xlu0 %1073
      %1075 = vrot.lane.b32.xlu0 %v879, 80
      %v1076 = vpop.permute.xlu0 %1075
      %v1077 = vunpack.c.l.b16 %v825
      %v1078 = vunpack.c.h.b16 %v825
      %v1079 = vunpack.c.l.b16 %v827
      %v1080 = vunpack.c.h.b16 %v827
      %v1081 = vunpack.c.l.b16 %v829
      %v1082 = vunpack.c.h.b16 %v829
      %v1083 = vunpack.c.l.b16 %v831
      %v1084 = vunpack.c.h.b16 %v831
      %v1085 = vunpack.c.l.b16 %v833
      %v1086 = vunpack.c.h.b16 %v833
      %v1087 = vunpack.c.l.b16 %v835
      %v1088 = vunpack.c.h.b16 %v835
      %v1089 = vunpack.c.l.b16 %v837
      %v1090 = vunpack.c.h.b16 %v837
      %v1091 = vunpack.c.l.b16 %v839
      %v1092 = vunpack.c.h.b16 %v839
      %v1093 = vunpack.c.l.b16 %v841
      %v1094 = vunpack.c.h.b16 %v841
      %v1095 = vunpack.c.l.b16 %v843
      %v1096 = vunpack.c.h.b16 %v843
      %v1097 = vunpack.c.l.b16 %v845
      %v1098 = vunpack.c.h.b16 %v845
      %v1099 = vunpack.c.l.b16 %v847
      %v1100 = vunpack.c.h.b16 %v847
      %v1101 = vunpack.c.l.b16 %v849
      %v1102 = vunpack.c.h.b16 %v849
      %v1103 = vunpack.c.l.b16 %v851
      %v1104 = vunpack.c.h.b16 %v851
      %v1105 = vunpack.c.l.b16 %v853
      %v1106 = vunpack.c.h.b16 %v853
      %v1107 = vunpack.c.l.b16 %v855
      %v1108 = vunpack.c.h.b16 %v855
      %v1109 = vunpack.c.l.b16 %v857
      %v1110 = vunpack.c.h.b16 %v857
      %v1111 = vunpack.c.l.b16 %v859
      %v1112 = vunpack.c.h.b16 %v859
      %v1113 = vunpack.c.l.b16 %v861
      %v1114 = vunpack.c.h.b16 %v861
      %v1115 = vunpack.c.l.b16 %v863
      %v1116 = vunpack.c.h.b16 %v863
      %v1117 = vunpack.c.l.b16 %v865
      %v1118 = vunpack.c.h.b16 %v865
      %v1119 = vunpack.c.l.b16 %v867
      %v1120 = vunpack.c.h.b16 %v867
      %v1121 = vunpack.c.l.b16 %v869
      %v1122 = vunpack.c.h.b16 %v869
      %v1123 = vunpack.c.l.b16 %v871
      %v1124 = vunpack.c.h.b16 %v871
      %v1125 = vunpack.c.l.b16 %v873
      %v1126 = vunpack.c.h.b16 %v873
      %v1127 = vunpack.c.l.b16 %v875
      %v1128 = vunpack.c.h.b16 %v875
      %v1129 = vunpack.c.l.b16 %v877
      %v1130 = vunpack.c.h.b16 %v877
      %v1131 = vunpack.c.l.b16 %v879
      %v1132 = vunpack.c.h.b16 %v879
      %v1133 = vunpack.c.l.b16 %v910
      %v1134 = vunpack.c.h.b16 %v910
      %v1135 = vunpack.c.l.b16 %v912
      %v1136 = vunpack.c.h.b16 %v912
      %v1137 = vunpack.c.l.b16 %v914
      %v1138 = vunpack.c.h.b16 %v914
      %v1139 = vunpack.c.l.b16 %v916
      %v1140 = vunpack.c.h.b16 %v916
      %v1141 = vunpack.c.l.b16 %v918
      %v1142 = vunpack.c.h.b16 %v918
      %v1143 = vunpack.c.l.b16 %v920
      %v1144 = vunpack.c.h.b16 %v920
      %v1145 = vunpack.c.l.b16 %v922
      %v1146 = vunpack.c.h.b16 %v922
      %v1147 = vunpack.c.l.b16 %v924
      %v1148 = vunpack.c.h.b16 %v924
      %v1149 = vunpack.c.l.b16 %v926
      %v1150 = vunpack.c.h.b16 %v926
      %v1151 = vunpack.c.l.b16 %v928
      %v1152 = vunpack.c.h.b16 %v928
      %v1153 = vunpack.c.l.b16 %v930
      %v1154 = vunpack.c.h.b16 %v930
      %v1155 = vunpack.c.l.b16 %v932
      %v1156 = vunpack.c.h.b16 %v932
      %v1157 = vunpack.c.l.b16 %v934
      %v1158 = vunpack.c.h.b16 %v934
      %v1159 = vunpack.c.l.b16 %v936
      %v1160 = vunpack.c.h.b16 %v936
      %v1161 = vunpack.c.l.b16 %v938
      %v1162 = vunpack.c.h.b16 %v938
      %v1163 = vunpack.c.l.b16 %v940
      %v1164 = vunpack.c.h.b16 %v940
      %v1165 = vunpack.c.l.b16 %v942
      %v1166 = vunpack.c.h.b16 %v942
      %v1167 = vunpack.c.l.b16 %v944
      %v1168 = vunpack.c.h.b16 %v944
      %v1169 = vunpack.c.l.b16 %v946
      %v1170 = vunpack.c.h.b16 %v946
      %v1171 = vunpack.c.l.b16 %v948
      %v1172 = vunpack.c.h.b16 %v948
      %v1173 = vunpack.c.l.b16 %v950
      %v1174 = vunpack.c.h.b16 %v950
      %v1175 = vunpack.c.l.b16 %v952
      %v1176 = vunpack.c.h.b16 %v952
      %v1177 = vunpack.c.l.b16 %v954
      %v1178 = vunpack.c.h.b16 %v954
      %v1179 = vunpack.c.l.b16 %v956
      %v1180 = vunpack.c.h.b16 %v956
      %v1181 = vunpack.c.l.b16 %v958
      %v1182 = vunpack.c.h.b16 %v958
      %v1183 = vunpack.c.l.b16 %v960
      %v1184 = vunpack.c.h.b16 %v960
      %v1185 = vunpack.c.l.b16 %v962
      %v1186 = vunpack.c.h.b16 %v962
      %v1187 = vunpack.c.l.b16 %v964
      %v1188 = vunpack.c.h.b16 %v964
      %v1189 = vunpack.c.l.b16 %v966
      %v1190 = vunpack.c.h.b16 %v966
      %v1191 = vunpack.c.l.b16 %v968
      %v1192 = vunpack.c.h.b16 %v968
      %v1193 = vunpack.c.l.b16 %v970
      %v1194 = vunpack.c.h.b16 %v970
      %v1195 = vunpack.c.l.b16 %v972
      %v1196 = vunpack.c.h.b16 %v972
      %v1197 = vunpack.c.l.b16 %v974
      %v1198 = vunpack.c.h.b16 %v974
      %v1199 = vunpack.c.l.b16 %v976
      %v1200 = vunpack.c.h.b16 %v976
      %v1201 = vunpack.c.l.b16 %v978
      %v1202 = vunpack.c.h.b16 %v978
      %v1203 = vunpack.c.l.b16 %v980
      %v1204 = vunpack.c.h.b16 %v980
      %v1205 = vunpack.c.l.b16 %v982
      %v1206 = vunpack.c.h.b16 %v982
      %v1207 = vunpack.c.l.b16 %v984
      %v1208 = vunpack.c.h.b16 %v984
      %v1209 = vunpack.c.l.b16 %v986
      %v1210 = vunpack.c.h.b16 %v986
      %v1211 = vunpack.c.l.b16 %v988
      %v1212 = vunpack.c.h.b16 %v988
      %v1213 = vunpack.c.l.b16 %v990
      %v1214 = vunpack.c.h.b16 %v990
      %v1215 = vunpack.c.l.b16 %v992
      %v1216 = vunpack.c.h.b16 %v992
      %v1217 = vunpack.c.l.b16 %v994
      %v1218 = vunpack.c.h.b16 %v994
      %v1219 = vunpack.c.l.b16 %v996
      %v1220 = vunpack.c.h.b16 %v996
      %v1221 = vunpack.c.l.b16 %v998
      %v1222 = vunpack.c.h.b16 %v998
      %v1223 = vunpack.c.l.b16 %v1000
      %v1224 = vunpack.c.h.b16 %v1000
      %v1225 = vunpack.c.l.b16 %v1002
      %v1226 = vunpack.c.h.b16 %v1002
      %v1227 = vunpack.c.l.b16 %v1004
      %v1228 = vunpack.c.h.b16 %v1004
      %v1229 = vunpack.c.l.b16 %v1006
      %v1230 = vunpack.c.h.b16 %v1006
      %v1231 = vunpack.c.l.b16 %v1008
      %v1232 = vunpack.c.h.b16 %v1008
      %v1233 = vunpack.c.l.b16 %v1010
      %v1234 = vunpack.c.h.b16 %v1010
      %v1235 = vunpack.c.l.b16 %v1012
      %v1236 = vunpack.c.h.b16 %v1012
      %v1237 = vunpack.c.l.b16 %v1014
      %v1238 = vunpack.c.h.b16 %v1014
      %v1239 = vunpack.c.l.b16 %v1016
      %v1240 = vunpack.c.h.b16 %v1016
      %v1241 = vunpack.c.l.b16 %v1018
      %v1242 = vunpack.c.h.b16 %v1018
      %v1243 = vunpack.c.l.b16 %v1020
      %v1244 = vunpack.c.h.b16 %v1020
      %v1245 = vunpack.c.l.b16 %v1022
      %v1246 = vunpack.c.h.b16 %v1022
      %v1247 = vunpack.c.l.b16 %v1024
      %v1248 = vunpack.c.h.b16 %v1024
      %v1249 = vunpack.c.l.b16 %v1026
      %v1250 = vunpack.c.h.b16 %v1026
      %v1251 = vunpack.c.l.b16 %v1028
      %v1252 = vunpack.c.h.b16 %v1028
      %v1253 = vunpack.c.l.b16 %v1030
      %v1254 = vunpack.c.h.b16 %v1030
      %v1255 = vunpack.c.l.b16 %v1032
      %v1256 = vunpack.c.h.b16 %v1032
      %v1257 = vunpack.c.l.b16 %v1034
      %v1258 = vunpack.c.h.b16 %v1034
      %v1259 = vunpack.c.l.b16 %v1036
      %v1260 = vunpack.c.h.b16 %v1036
      %v1261 = vunpack.c.l.b16 %v1038
      %v1262 = vunpack.c.h.b16 %v1038
      %v1263 = vunpack.c.l.b16 %v1040
      %v1264 = vunpack.c.h.b16 %v1040
      %v1265 = vunpack.c.l.b16 %v1042
      %v1266 = vunpack.c.h.b16 %v1042
      %v1267 = vunpack.c.l.b16 %v1044
      %v1268 = vunpack.c.h.b16 %v1044
      %v1269 = vunpack.c.l.b16 %v1046
      %v1270 = vunpack.c.h.b16 %v1046
      %v1271 = vunpack.c.l.b16 %v1048
      %v1272 = vunpack.c.h.b16 %v1048
      %v1273 = vunpack.c.l.b16 %v1050
      %v1274 = vunpack.c.h.b16 %v1050
      %v1275 = vunpack.c.l.b16 %v1052
      %v1276 = vunpack.c.h.b16 %v1052
      %v1277 = vunpack.c.l.b16 %v1054
      %v1278 = vunpack.c.h.b16 %v1054
      %v1279 = vunpack.c.l.b16 %v1056
      %v1280 = vunpack.c.h.b16 %v1056
      %v1281 = vunpack.c.l.b16 %v1058
      %v1282 = vunpack.c.h.b16 %v1058
      %v1283 = vunpack.c.l.b16 %v1060
      %v1284 = vunpack.c.h.b16 %v1060
      %v1285 = vunpack.c.l.b16 %v1062
      %v1286 = vunpack.c.h.b16 %v1062
      %v1287 = vunpack.c.l.b16 %v1064
      %v1288 = vunpack.c.h.b16 %v1064
      %v1289 = vunpack.c.l.b16 %v1066
      %v1290 = vunpack.c.h.b16 %v1066
      %v1291 = vunpack.c.l.b16 %v1068
      %v1292 = vunpack.c.h.b16 %v1068
      %v1293 = vunpack.c.l.b16 %v1070
      %v1294 = vunpack.c.h.b16 %v1070
      %v1295 = vunpack.c.l.b16 %v1072
      %v1296 = vunpack.c.h.b16 %v1072
      %v1297 = vunpack.c.l.b16 %v1074
      %v1298 = vunpack.c.h.b16 %v1074
      %v1299 = vunpack.c.l.b16 %v1076
      %v1300 = vunpack.c.h.b16 %v1076
      %1329 = vrot.lane.b32.xlu0 %v826, 112
      %v1330 = vpop.permute.xlu0 %1329
      %1331 = vrot.lane.b32.xlu0 %v828, 112
      %v1332 = vpop.permute.xlu0 %1331
      %1333 = vrot.lane.b32.xlu0 %v830, 112
      %v1334 = vpop.permute.xlu0 %1333
      %1335 = vrot.lane.b32.xlu0 %v832, 112
      %v1336 = vpop.permute.xlu0 %1335
      %1337 = vrot.lane.b32.xlu0 %v834, 112
      %v1338 = vpop.permute.xlu0 %1337
      %1339 = vrot.lane.b32.xlu0 %v836, 112
      %v1340 = vpop.permute.xlu0 %1339
      %1341 = vrot.lane.b32.xlu0 %v838, 112
      %v1342 = vpop.permute.xlu0 %1341
      %1343 = vrot.lane.b32.xlu0 %v840, 112
      %v1344 = vpop.permute.xlu0 %1343
      %1345 = vrot.lane.b32.xlu0 %v842, 112
      %v1346 = vpop.permute.xlu0 %1345
      %1347 = vrot.lane.b32.xlu0 %v844, 112
      %v1348 = vpop.permute.xlu0 %1347
      %1349 = vrot.lane.b32.xlu0 %v846, 112
      %v1350 = vpop.permute.xlu0 %1349
      %1351 = vrot.lane.b32.xlu0 %v848, 112
      %v1352 = vpop.permute.xlu0 %1351
      %1353 = vrot.lane.b32.xlu0 %v850, 112
      %v1354 = vpop.permute.xlu0 %1353
      %1355 = vrot.lane.b32.xlu0 %v852, 112
      %v1356 = vpop.permute.xlu0 %1355
      %1357 = vrot.lane.b32.xlu0 %v854, 112
      %v1358 = vpop.permute.xlu0 %1357
      %1359 = vrot.lane.b32.xlu0 %v856, 112
      %v1360 = vpop.permute.xlu0 %1359
      %1361 = vrot.lane.b32.xlu0 %v858, 112
      %v1362 = vpop.permute.xlu0 %1361
      %1363 = vrot.lane.b32.xlu0 %v860, 112
      %v1364 = vpop.permute.xlu0 %1363
      %1365 = vrot.lane.b32.xlu0 %v862, 112
      %v1366 = vpop.permute.xlu0 %1365
      %1367 = vrot.lane.b32.xlu0 %v864, 112
      %v1368 = vpop.permute.xlu0 %1367
      %1369 = vrot.lane.b32.xlu0 %v866, 112
      %v1370 = vpop.permute.xlu0 %1369
      %1371 = vrot.lane.b32.xlu0 %v868, 112
      %v1372 = vpop.permute.xlu0 %1371
      %1373 = vrot.lane.b32.xlu0 %v870, 112
      %v1374 = vpop.permute.xlu0 %1373
      %1375 = vrot.lane.b32.xlu0 %v872, 112
      %v1376 = vpop.permute.xlu0 %1375
      %1377 = vrot.lane.b32.xlu0 %v874, 112
      %v1378 = vpop.permute.xlu0 %1377
      %1379 = vrot.lane.b32.xlu0 %v876, 112
      %v1380 = vpop.permute.xlu0 %1379
      %1381 = vrot.lane.b32.xlu0 %v878, 112
      %v1382 = vpop.permute.xlu0 %1381
      %1383 = vrot.lane.b32.xlu0 %v880, 112
      %v1384 = vpop.permute.xlu0 %1383
      %1385 = vrot.lane.b32.xlu0 %v826, 96
      %v1386 = vpop.permute.xlu0 %1385
      %1387 = vrot.lane.b32.xlu0 %v828, 96
      %v1388 = vpop.permute.xlu0 %1387
      %1389 = vrot.lane.b32.xlu0 %v830, 96
      %v1390 = vpop.permute.xlu0 %1389
      %1391 = vrot.lane.b32.xlu0 %v832, 96
      %v1392 = vpop.permute.xlu0 %1391
      %1393 = vrot.lane.b32.xlu0 %v834, 96
      %v1394 = vpop.permute.xlu0 %1393
      %1395 = vrot.lane.b32.xlu0 %v836, 96
      %v1396 = vpop.permute.xlu0 %1395
      %1397 = vrot.lane.b32.xlu0 %v838, 96
      %v1398 = vpop.permute.xlu0 %1397
      %1399 = vrot.lane.b32.xlu0 %v840, 96
      %v1400 = vpop.permute.xlu0 %1399
      %1401 = vrot.lane.b32.xlu0 %v842, 96
      %v1402 = vpop.permute.xlu0 %1401
      %1403 = vrot.lane.b32.xlu0 %v844, 96
      %v1404 = vpop.permute.xlu0 %1403
      %1405 = vrot.lane.b32.xlu0 %v846, 96
      %v1406 = vpop.permute.xlu0 %1405
      %1407 = vrot.lane.b32.xlu0 %v848, 96
      %v1408 = vpop.permute.xlu0 %1407
      %1409 = vrot.lane.b32.xlu0 %v850, 96
      %v1410 = vpop.permute.xlu0 %1409
      %1411 = vrot.lane.b32.xlu0 %v852, 96
      %v1412 = vpop.permute.xlu0 %1411
      %1413 = vrot.lane.b32.xlu0 %v854, 96
      %v1414 = vpop.permute.xlu0 %1413
      %1415 = vrot.lane.b32.xlu0 %v856, 96
      %v1416 = vpop.permute.xlu0 %1415
      %1417 = vrot.lane.b32.xlu0 %v858, 96
      %v1418 = vpop.permute.xlu0 %1417
      %1419 = vrot.lane.b32.xlu0 %v860, 96
      %v1420 = vpop.permute.xlu0 %1419
      %1421 = vrot.lane.b32.xlu0 %v862, 96
      %v1422 = vpop.permute.xlu0 %1421
      %1423 = vrot.lane.b32.xlu0 %v864, 96
      %v1424 = vpop.permute.xlu0 %1423
      %1425 = vrot.lane.b32.xlu0 %v866, 96
      %v1426 = vpop.permute.xlu0 %1425
      %1427 = vrot.lane.b32.xlu0 %v868, 96
      %v1428 = vpop.permute.xlu0 %1427
      %1429 = vrot.lane.b32.xlu0 %v870, 96
      %v1430 = vpop.permute.xlu0 %1429
      %1431 = vrot.lane.b32.xlu0 %v872, 96
      %v1432 = vpop.permute.xlu0 %1431
      %1433 = vrot.lane.b32.xlu0 %v874, 96
      %v1434 = vpop.permute.xlu0 %1433
      %1435 = vrot.lane.b32.xlu0 %v876, 96
      %v1436 = vpop.permute.xlu0 %1435
      %1437 = vrot.lane.b32.xlu0 %v878, 96
      %v1438 = vpop.permute.xlu0 %1437
      %1439 = vrot.lane.b32.xlu0 %v880, 96
      %v1440 = vpop.permute.xlu0 %1439
      %1441 = vrot.lane.b32.xlu0 %v826, 80
      %v1442 = vpop.permute.xlu0 %1441
      %1443 = vrot.lane.b32.xlu0 %v828, 80
      %v1444 = vpop.permute.xlu0 %1443
      %1445 = vrot.lane.b32.xlu0 %v830, 80
      %v1446 = vpop.permute.xlu0 %1445
      %1447 = vrot.lane.b32.xlu0 %v832, 80
      %v1448 = vpop.permute.xlu0 %1447
      %1449 = vrot.lane.b32.xlu0 %v834, 80
      %v1450 = vpop.permute.xlu0 %1449
      %1451 = vrot.lane.b32.xlu0 %v836, 80
      %v1452 = vpop.permute.xlu0 %1451
      %1453 = vrot.lane.b32.xlu0 %v838, 80
      %v1454 = vpop.permute.xlu0 %1453
      %1455 = vrot.lane.b32.xlu0 %v840, 80
      %v1456 = vpop.permute.xlu0 %1455
      %1457 = vrot.lane.b32.xlu0 %v842, 80
      %v1458 = vpop.permute.xlu0 %1457
      %1459 = vrot.lane.b32.xlu0 %v844, 80
      %v1460 = vpop.permute.xlu0 %1459
      %1461 = vrot.lane.b32.xlu0 %v846, 80
      %v1462 = vpop.permute.xlu0 %1461
      %1463 = vrot.lane.b32.xlu0 %v848, 80
      %v1464 = vpop.permute.xlu0 %1463
      %1465 = vrot.lane.b32.xlu0 %v850, 80
      %v1466 = vpop.permute.xlu0 %1465
      %1467 = vrot.lane.b32.xlu0 %v852, 80
      %v1468 = vpop.permute.xlu0 %1467
      %1469 = vrot.lane.b32.xlu0 %v854, 80
      %v1470 = vpop.permute.xlu0 %1469
      %1471 = vrot.lane.b32.xlu0 %v856, 80
      %v1472 = vpop.permute.xlu0 %1471
      %1473 = vrot.lane.b32.xlu0 %v858, 80
      %v1474 = vpop.permute.xlu0 %1473
      %1475 = vrot.lane.b32.xlu0 %v860, 80
      %v1476 = vpop.permute.xlu0 %1475
      %1477 = vrot.lane.b32.xlu0 %v862, 80
      %v1478 = vpop.permute.xlu0 %1477
      %1479 = vrot.lane.b32.xlu0 %v864, 80
      %v1480 = vpop.permute.xlu0 %1479
      %1481 = vrot.lane.b32.xlu0 %v866, 80
      %v1482 = vpop.permute.xlu0 %1481
      %1483 = vrot.lane.b32.xlu0 %v868, 80
      %v1484 = vpop.permute.xlu0 %1483
      %1485 = vrot.lane.b32.xlu0 %v870, 80
      %v1486 = vpop.permute.xlu0 %1485
      %1487 = vrot.lane.b32.xlu0 %v872, 80
      %v1488 = vpop.permute.xlu0 %1487
      %1489 = vrot.lane.b32.xlu0 %v874, 80
      %v1490 = vpop.permute.xlu0 %1489
      %1491 = vrot.lane.b32.xlu0 %v876, 80
      %v1492 = vpop.permute.xlu0 %1491
      %1493 = vrot.lane.b32.xlu0 %v878, 80
      %v1494 = vpop.permute.xlu0 %1493
      %1495 = vrot.lane.b32.xlu0 %v880, 80
      %v1496 = vpop.permute.xlu0 %1495
      %v1497 = vunpack.c.l.b16 %v826
      %v1498 = vunpack.c.h.b16 %v826
      %v1499 = vunpack.c.l.b16 %v828
      %v1500 = vunpack.c.h.b16 %v828
      %v1501 = vunpack.c.l.b16 %v830
      %v1502 = vunpack.c.h.b16 %v830
      %v1503 = vunpack.c.l.b16 %v832
      %v1504 = vunpack.c.h.b16 %v832
      %v1505 = vunpack.c.l.b16 %v834
      %v1506 = vunpack.c.h.b16 %v834
      %v1507 = vunpack.c.l.b16 %v836
      %v1508 = vunpack.c.h.b16 %v836
      %v1509 = vunpack.c.l.b16 %v838
      %v1510 = vunpack.c.h.b16 %v838
      %v1511 = vunpack.c.l.b16 %v840
      %v1512 = vunpack.c.h.b16 %v840
      %v1513 = vunpack.c.l.b16 %v842
      %v1514 = vunpack.c.h.b16 %v842
      %v1515 = vunpack.c.l.b16 %v844
      %v1516 = vunpack.c.h.b16 %v844
      %v1517 = vunpack.c.l.b16 %v846
      %v1518 = vunpack.c.h.b16 %v846
      %v1519 = vunpack.c.l.b16 %v848
      %v1520 = vunpack.c.h.b16 %v848
      %v1521 = vunpack.c.l.b16 %v850
      %v1522 = vunpack.c.h.b16 %v850
      %v1523 = vunpack.c.l.b16 %v852
      %v1524 = vunpack.c.h.b16 %v852
      %v1525 = vunpack.c.l.b16 %v854
      %v1526 = vunpack.c.h.b16 %v854
      %v1527 = vunpack.c.l.b16 %v856
      %v1528 = vunpack.c.h.b16 %v856
      %v1529 = vunpack.c.l.b16 %v858
      %v1530 = vunpack.c.h.b16 %v858
      %v1531 = vunpack.c.l.b16 %v860
      %v1532 = vunpack.c.h.b16 %v860
      %v1533 = vunpack.c.l.b16 %v862
      %v1534 = vunpack.c.h.b16 %v862
      %v1535 = vunpack.c.l.b16 %v864
      %v1536 = vunpack.c.h.b16 %v864
      %v1537 = vunpack.c.l.b16 %v866
      %v1538 = vunpack.c.h.b16 %v866
      %v1539 = vunpack.c.l.b16 %v868
      %v1540 = vunpack.c.h.b16 %v868
      %v1541 = vunpack.c.l.b16 %v870
      %v1542 = vunpack.c.h.b16 %v870
      %v1543 = vunpack.c.l.b16 %v872
      %v1544 = vunpack.c.h.b16 %v872
      %v1545 = vunpack.c.l.b16 %v874
      %v1546 = vunpack.c.h.b16 %v874
      %v1547 = vunpack.c.l.b16 %v876
      %v1548 = vunpack.c.h.b16 %v876
      %v1549 = vunpack.c.l.b16 %v878
      %v1550 = vunpack.c.h.b16 %v878
      %v1551 = vunpack.c.l.b16 %v880
      %v1552 = vunpack.c.h.b16 %v880
      %v1553 = vunpack.c.l.b16 %v1330
      %v1554 = vunpack.c.h.b16 %v1330
      %v1555 = vunpack.c.l.b16 %v1332
      %v1556 = vunpack.c.h.b16 %v1332
      %v1557 = vunpack.c.l.b16 %v1334
      %v1558 = vunpack.c.h.b16 %v1334
      %v1559 = vunpack.c.l.b16 %v1336
      %v1560 = vunpack.c.h.b16 %v1336
      %v1561 = vunpack.c.l.b16 %v1338
      %v1562 = vunpack.c.h.b16 %v1338
      %v1563 = vunpack.c.l.b16 %v1340
      %v1564 = vunpack.c.h.b16 %v1340
      %v1565 = vunpack.c.l.b16 %v1342
      %v1566 = vunpack.c.h.b16 %v1342
      %v1567 = vunpack.c.l.b16 %v1344
      %v1568 = vunpack.c.h.b16 %v1344
      %v1569 = vunpack.c.l.b16 %v1346
      %v1570 = vunpack.c.h.b16 %v1346
      %v1571 = vunpack.c.l.b16 %v1348
      %v1572 = vunpack.c.h.b16 %v1348
      %v1573 = vunpack.c.l.b16 %v1350
      %v1574 = vunpack.c.h.b16 %v1350
      %v1575 = vunpack.c.l.b16 %v1352
      %v1576 = vunpack.c.h.b16 %v1352
      %v1577 = vunpack.c.l.b16 %v1354
      %v1578 = vunpack.c.h.b16 %v1354
      %v1579 = vunpack.c.l.b16 %v1356
      %v1580 = vunpack.c.h.b16 %v1356
      %v1581 = vunpack.c.l.b16 %v1358
      %v1582 = vunpack.c.h.b16 %v1358
      %v1583 = vunpack.c.l.b16 %v1360
      %v1584 = vunpack.c.h.b16 %v1360
      %v1585 = vunpack.c.l.b16 %v1362
      %v1586 = vunpack.c.h.b16 %v1362
      %v1587 = vunpack.c.l.b16 %v1364
      %v1588 = vunpack.c.h.b16 %v1364
      %v1589 = vunpack.c.l.b16 %v1366
      %v1590 = vunpack.c.h.b16 %v1366
      %v1591 = vunpack.c.l.b16 %v1368
      %v1592 = vunpack.c.h.b16 %v1368
      %v1593 = vunpack.c.l.b16 %v1370
      %v1594 = vunpack.c.h.b16 %v1370
      %v1595 = vunpack.c.l.b16 %v1372
      %v1596 = vunpack.c.h.b16 %v1372
      %v1597 = vunpack.c.l.b16 %v1374
      %v1598 = vunpack.c.h.b16 %v1374
      %v1599 = vunpack.c.l.b16 %v1376
      %v1600 = vunpack.c.h.b16 %v1376
      %v1601 = vunpack.c.l.b16 %v1378
      %v1602 = vunpack.c.h.b16 %v1378
      %v1603 = vunpack.c.l.b16 %v1380
      %v1604 = vunpack.c.h.b16 %v1380
      %v1605 = vunpack.c.l.b16 %v1382
      %v1606 = vunpack.c.h.b16 %v1382
      %v1607 = vunpack.c.l.b16 %v1384
      %v1608 = vunpack.c.h.b16 %v1384
      %v1609 = vunpack.c.l.b16 %v1386
      %v1610 = vunpack.c.h.b16 %v1386
      %v1611 = vunpack.c.l.b16 %v1388
      %v1612 = vunpack.c.h.b16 %v1388
      %v1613 = vunpack.c.l.b16 %v1390
      %v1614 = vunpack.c.h.b16 %v1390
      %v1615 = vunpack.c.l.b16 %v1392
      %v1616 = vunpack.c.h.b16 %v1392
      %v1617 = vunpack.c.l.b16 %v1394
      %v1618 = vunpack.c.h.b16 %v1394
      %v1619 = vunpack.c.l.b16 %v1396
      %v1620 = vunpack.c.h.b16 %v1396
      %v1621 = vunpack.c.l.b16 %v1398
      %v1622 = vunpack.c.h.b16 %v1398
      %v1623 = vunpack.c.l.b16 %v1400
      %v1624 = vunpack.c.h.b16 %v1400
      %v1625 = vunpack.c.l.b16 %v1402
      %v1626 = vunpack.c.h.b16 %v1402
      %v1627 = vunpack.c.l.b16 %v1404
      %v1628 = vunpack.c.h.b16 %v1404
      %v1629 = vunpack.c.l.b16 %v1406
      %v1630 = vunpack.c.h.b16 %v1406
      %v1631 = vunpack.c.l.b16 %v1408
      %v1632 = vunpack.c.h.b16 %v1408
      %v1633 = vunpack.c.l.b16 %v1410
      %v1634 = vunpack.c.h.b16 %v1410
      %v1635 = vunpack.c.l.b16 %v1412
      %v1636 = vunpack.c.h.b16 %v1412
      %v1637 = vunpack.c.l.b16 %v1414
      %v1638 = vunpack.c.h.b16 %v1414
      %v1639 = vunpack.c.l.b16 %v1416
      %v1640 = vunpack.c.h.b16 %v1416
      %v1641 = vunpack.c.l.b16 %v1418
      %v1642 = vunpack.c.h.b16 %v1418
      %v1643 = vunpack.c.l.b16 %v1420
      %v1644 = vunpack.c.h.b16 %v1420
      %v1645 = vunpack.c.l.b16 %v1422
      %v1646 = vunpack.c.h.b16 %v1422
      %v1647 = vunpack.c.l.b16 %v1424
      %v1648 = vunpack.c.h.b16 %v1424
      %v1649 = vunpack.c.l.b16 %v1426
      %v1650 = vunpack.c.h.b16 %v1426
      %v1651 = vunpack.c.l.b16 %v1428
      %v1652 = vunpack.c.h.b16 %v1428
      %v1653 = vunpack.c.l.b16 %v1430
      %v1654 = vunpack.c.h.b16 %v1430
      %v1655 = vunpack.c.l.b16 %v1432
      %v1656 = vunpack.c.h.b16 %v1432
      %v1657 = vunpack.c.l.b16 %v1434
      %v1658 = vunpack.c.h.b16 %v1434
      %v1659 = vunpack.c.l.b16 %v1436
      %v1660 = vunpack.c.h.b16 %v1436
      %v1661 = vunpack.c.l.b16 %v1438
      %v1662 = vunpack.c.h.b16 %v1438
      %v1663 = vunpack.c.l.b16 %v1440
      %v1664 = vunpack.c.h.b16 %v1440
      %v1665 = vunpack.c.l.b16 %v1442
      %v1666 = vunpack.c.h.b16 %v1442
      %v1667 = vunpack.c.l.b16 %v1444
      %v1668 = vunpack.c.h.b16 %v1444
      %v1669 = vunpack.c.l.b16 %v1446
      %v1670 = vunpack.c.h.b16 %v1446
      %v1671 = vunpack.c.l.b16 %v1448
      %v1672 = vunpack.c.h.b16 %v1448
      %v1673 = vunpack.c.l.b16 %v1450
      %v1674 = vunpack.c.h.b16 %v1450
      %v1675 = vunpack.c.l.b16 %v1452
      %v1676 = vunpack.c.h.b16 %v1452
      %v1677 = vunpack.c.l.b16 %v1454
      %v1678 = vunpack.c.h.b16 %v1454
      %v1679 = vunpack.c.l.b16 %v1456
      %v1680 = vunpack.c.h.b16 %v1456
      %v1681 = vunpack.c.l.b16 %v1458
      %v1682 = vunpack.c.h.b16 %v1458
      %v1683 = vunpack.c.l.b16 %v1460
      %v1684 = vunpack.c.h.b16 %v1460
      %v1685 = vunpack.c.l.b16 %v1462
      %v1686 = vunpack.c.h.b16 %v1462
      %v1687 = vunpack.c.l.b16 %v1464
      %v1688 = vunpack.c.h.b16 %v1464
      %v1689 = vunpack.c.l.b16 %v1466
      %v1690 = vunpack.c.h.b16 %v1466
      %v1691 = vunpack.c.l.b16 %v1468
      %v1692 = vunpack.c.h.b16 %v1468
      %v1693 = vunpack.c.l.b16 %v1470
      %v1694 = vunpack.c.h.b16 %v1470
      %v1695 = vunpack.c.l.b16 %v1472
      %v1696 = vunpack.c.h.b16 %v1472
      %v1697 = vunpack.c.l.b16 %v1474
      %v1698 = vunpack.c.h.b16 %v1474
      %v1699 = vunpack.c.l.b16 %v1476
      %v1700 = vunpack.c.h.b16 %v1476
      %v1701 = vunpack.c.l.b16 %v1478
      %v1702 = vunpack.c.h.b16 %v1478
      %v1703 = vunpack.c.l.b16 %v1480
      %v1704 = vunpack.c.h.b16 %v1480
      %v1705 = vunpack.c.l.b16 %v1482
      %v1706 = vunpack.c.h.b16 %v1482
      %v1707 = vunpack.c.l.b16 %v1484
      %v1708 = vunpack.c.h.b16 %v1484
      %v1709 = vunpack.c.l.b16 %v1486
      %v1710 = vunpack.c.h.b16 %v1486
      %v1711 = vunpack.c.l.b16 %v1488
      %v1712 = vunpack.c.h.b16 %v1488
      %v1713 = vunpack.c.l.b16 %v1490
      %v1714 = vunpack.c.h.b16 %v1490
      %v1715 = vunpack.c.l.b16 %v1492
      %v1716 = vunpack.c.h.b16 %v1492
      %v1717 = vunpack.c.l.b16 %v1494
      %v1718 = vunpack.c.h.b16 %v1494
      %v1719 = vunpack.c.l.b16 %v1496
      %v1720 = vunpack.c.h.b16 %v1496
      %v1721 = vpack.c.b16 %v1078, %v1077
      %v1722 = vpack.c.b16 %v1080, %v1079
      %v1723 = vpack.c.b16 %v1082, %v1081
      %v1724 = vpack.c.b16 %v1083, %v1083
      %1725 = vrot.lane.b32.xlu0 %v1721, 64
      %v1726 = vpop.permute.xlu0 %1725
      %1727 = vrot.lane.b32.xlu0 %v1722, 64
      %v1728 = vpop.permute.xlu0 %1727
      %1729 = vrot.lane.b32.xlu0 %v1723, 64
      %v1730 = vpop.permute.xlu0 %1729
      %1731 = vrot.lane.b32.xlu0 %v1724, 64
      %v1732 = vpop.permute.xlu0 %1731
      %vm1733 = vcmask 130048
      %v1735 = vsel %vm1733, %v1721, 0
      %v1738 = vsel %vm1733, %v1722, 0
      %v1741 = vsel %vm1733, %v1723, 0
      %v1744 = vsel %vm1733, %v1724, 0
      %v1747 = vsel %vm1733, %v1726, 0
      %v1750 = vsel %vm1733, %v1728, 0
      %v1753 = vsel %vm1733, %v1730, 0
      %v1756 = vsel %vm1733, %v1732, 0
      %1758 = vmatprep.subr.bf16.mxu0 0
      %1759 = vmatpush1.bf16.xpose.msra.mxu0 %v1747
      %1760 = vmatprep.subr.bf16.mxu0 0
      %1761 = vmatpush1.bf16.xpose.msra.mxu0 %v1750
      %1762 = vmatprep.subr.bf16.mxu0 0
      %1763 = vmatpush1.bf16.xpose.msra.mxu0 %v1753
      %1764 = vmatprep.subr.bf16.mxu0 0
      %1765 = vmatpush1.bf16.xpose.msra.mxu0 %v1756
      %1766 = vmatprep.subr.bf16.mxu0 0
      %1767 = vmatpush1.bf16.xpose.msra.mxu0 0
      %1768 = vmatprep.subr.bf16.mxu0 0
      %1769 = vmatpush1.bf16.xpose.msra.mxu0 0
      %1770 = vmatprep.subr.bf16.mxu0 0
      %1771 = vmatpush1.bf16.xpose.msra.mxu0 0
      %1772 = vmatprep.subr.bf16.mxu0 0
      %1773 = vmatpush1.bf16.xpose.msra.mxu0 0
      %1774 = vmatprep.subr.bf16.mxu0 0
      %1775 = vmatpush1.bf16.xpose.msra.mxu0 0
      %1776 = vmatprep.subr.bf16.mxu0 0
      %1777 = vmatpush1.bf16.xpose.msra.mxu0 0
      %1778 = vmatprep.subr.bf16.mxu0 0
      %1779 = vmatpush1.bf16.xpose.msra.mxu0 0
      %1780 = vmatprep.subr.bf16.mxu0 0
      %1781 = vmatpush1.bf16.xpose.msra.mxu0 0
      %1782 = vmatprep.subr.bf16.mxu0 0
      %1783 = vmatpush1.bf16.xpose.msra.mxu0 0
      %1784 = vmatprep.subr.bf16.mxu0 0
      %1785 = vmatpush1.bf16.xpose.msra.mxu0 0
      %1786 = vmatprep.subr.bf16.mxu0 0
      %1787 = vmatpush1.bf16.xpose.msra.mxu0 0
      %1788 = vmatprep.subr.bf16.mxu0 0
      %1789 = vmatpush1.bf16.xpose.msra.mxu0 0
      %1790 = vmatprep.mubr.bf16.mxu0 0
      %1791 = vmatmul.mubr.bf16.gmra.mrb[0].mxu0 %v1735
      %v1792 = vpop.f32.mrb[0].mxu0
      %v1793 = vadd.f32 0.0, %v1792
      %v1794 = vpop.f32.mrb[0].mxu0
      %v1795 = vpop.f32.mrb[0].mxu0
      %v1796 = vadd.f32 0.0, %v1795
      %v1797 = vpop.f32.mrb[0].mxu0
      %1798 = vmatprep.mubr.bf16.mxu0 0
      %1799 = vmatmul.mubr.bf16.gmra.mrb[0].mxu0 %v1738
      %v1800 = vpop.f32.mrb[0].mxu0
      %v1801 = vadd.f32 0.0, %v1800
      %v1802 = vpop.f32.mrb[0].mxu0
      %v1803 = vpop.f32.mrb[0].mxu0
      %v1804 = vadd.f32 0.0, %v1803
      %v1805 = vpop.f32.mrb[0].mxu0
      %1806 = vmatprep.mubr.bf16.mxu0 0
      %1807 = vmatmul.mubr.bf16.gmra.mrb[0].mxu0 %v1741
      %v1808 = vpop.f32.mrb[0].mxu0
      %v1809 = vadd.f32 0.0, %v1808
      %v1810 = vpop.f32.mrb[0].mxu0
      %v1811 = vpop.f32.mrb[0].mxu0
      %v1812 = vadd.f32 0.0, %v1811
      %v1813 = vpop.f32.mrb[0].mxu0
      %1814 = vmatprep.mubr.bf16.mxu0 0
      %1815 = vmatmul.mubr.bf16.gmra.mrb[0].mxu0 %v1744
      %v1816 = vpop.f32.mrb[0].mxu0
      %v1817 = vadd.f32 0.0, %v1816
      %v1818 = vpop.f32.mrb[0].mxu0
      %v1819 = vpop.f32.mrb[0].mxu0
      %v1820 = vpop.f32.mrb[0].mxu0
      %1821 = vdwg.mxu0
      %v1822 = vpack.c.b16 %v1085, %v1084
      %v1823 = vpack.c.b16 %v1087, %v1086
      %v1824 = vpack.c.b16 %v1089, %v1088
      %v1825 = vpack.c.b16 %v1090, %v1090
      %1826 = vrot.lane.b32.xlu0 %v1822, 64
      %v1827 = vpop.permute.xlu0 %1826
      %1828 = vrot.lane.b32.xlu0 %v1823, 64
      %v1829 = vpop.permute.xlu0 %1828
      %1830 = vrot.lane.b32.xlu0 %v1824, 64
      %v1831 = vpop.permute.xlu0 %1830
      %1832 = vrot.lane.b32.xlu0 %v1825, 64
      %v1833 = vpop.permute.xlu0 %1832
      %v1835 = vsel %vm1733, %v1822, 0
      %v1838 = vsel %vm1733, %v1823, 0
      %v1841 = vsel %vm1733, %v1824, 0
      %v1844 = vsel %vm1733, %v1825, 0
      %v1847 = vsel %vm1733, %v1827, 0
      %v1850 = vsel %vm1733, %v1829, 0
      %v1853 = vsel %vm1733, %v1831, 0
      %v1856 = vsel %vm1733, %v1833, 0
      %1858 = vmatprep.subr.bf16.mxu0 0
      %1859 = vmatpush1.bf16.xpose.msra.mxu0 %v1847
      %1860 = vmatprep.subr.bf16.mxu0 0
      %1861 = vmatpush1.bf16.xpose.msra.mxu0 %v1850
      %1862 = vmatprep.subr.bf16.mxu0 0
      %1863 = vmatpush1.bf16.xpose.msra.mxu0 %v1853
      %1864 = vmatprep.subr.bf16.mxu0 0
      %1865 = vmatpush1.bf16.xpose.msra.mxu0 %v1856
      %1866 = vmatprep.subr.bf16.mxu0 0
      %1867 = vmatpush1.bf16.xpose.msra.mxu0 0
      %1868 = vmatprep.subr.bf16.mxu0 0
      %1869 = vmatpush1.bf16.xpose.msra.mxu0 0
      %1870 = vmatprep.subr.bf16.mxu0 0
      %1871 = vmatpush1.bf16.xpose.msra.mxu0 0
      %1872 = vmatprep.subr.bf16.mxu0 0
      %1873 = vmatpush1.bf16.xpose.msra.mxu0 0
      %1874 = vmatprep.subr.bf16.mxu0 0
      %1875 = vmatpush1.bf16.xpose.msra.mxu0 0
      %1876 = vmatprep.subr.bf16.mxu0 0
      %1877 = vmatpush1.bf16.xpose.msra.mxu0 0
      %1878 = vmatprep.subr.bf16.mxu0 0
      %1879 = vmatpush1.bf16.xpose.msra.mxu0 0
      %1880 = vmatprep.subr.bf16.mxu0 0
      %1881 = vmatpush1.bf16.xpose.msra.mxu0 0
      %1882 = vmatprep.subr.bf16.mxu0 0
      %1883 = vmatpush1.bf16.xpose.msra.mxu0 0
      %1884 = vmatprep.subr.bf16.mxu0 0
      %1885 = vmatpush1.bf16.xpose.msra.mxu0 0
      %1886 = vmatprep.subr.bf16.mxu0 0
      %1887 = vmatpush1.bf16.xpose.msra.mxu0 0
      %1888 = vmatprep.subr.bf16.mxu0 0
      %1889 = vmatpush1.bf16.xpose.msra.mxu0 0
      %1890 = vmatprep.mubr.bf16.mxu0 0
      %1891 = vmatmul.mubr.bf16.gmra.mrb[0].mxu0 %v1835
      %v1892 = vpop.f32.mrb[0].mxu0
      %v1893 = vadd.f32 0.0, %v1892
      %v1894 = vpop.f32.mrb[0].mxu0
      %v1895 = vpop.f32.mrb[0].mxu0
      %v1896 = vadd.f32 0.0, %v1895
      %v1897 = vpop.f32.mrb[0].mxu0
      %1898 = vmatprep.mubr.bf16.mxu0 0
      %1899 = vmatmul.mubr.bf16.gmra.mrb[0].mxu0 %v1838
      %v1900 = vpop.f32.mrb[0].mxu0
      %v1901 = vadd.f32 0.0, %v1900
      %v1902 = vpop.f32.mrb[0].mxu0
      %v1903 = vpop.f32.mrb[0].mxu0
      %v1904 = vadd.f32 0.0, %v1903
      %v1905 = vpop.f32.mrb[0].mxu0
      %1906 = vmatprep.mubr.bf16.mxu0 0
      %1907 = vmatmul.mubr.bf16.gmra.mrb[0].mxu0 %v1841
      %v1908 = vpop.f32.mrb[0].mxu0
      %v1909 = vadd.f32 0.0, %v1908
      %v1910 = vpop.f32.mrb[0].mxu0
      %v1911 = vpop.f32.mrb[0].mxu0
      %v1912 = vadd.f32 0.0, %v1911
      %v1913 = vpop.f32.mrb[0].mxu0
      %1914 = vmatprep.mubr.bf16.mxu0 0
      %1915 = vmatmul.mubr.bf16.gmra.mrb[0].mxu0 %v1844
      %v1916 = vpop.f32.mrb[0].mxu0
      %v1917 = vadd.f32 0.0, %v1916
      %v1918 = vpop.f32.mrb[0].mxu0
      %v1919 = vpop.f32.mrb[0].mxu0
      %v1920 = vpop.f32.mrb[0].mxu0
      %1921 = vdwg.mxu0
      %v1922 = vpack.c.b16 %v1092, %v1091
      %v1923 = vpack.c.b16 %v1094, %v1093
      %v1924 = vpack.c.b16 %v1096, %v1095
      %v1925 = vpack.c.b16 %v1097, %v1097
      %1926 = vrot.lane.b32.xlu0 %v1922, 64
      %v1927 = vpop.permute.xlu0 %1926
      %1928 = vrot.lane.b32.xlu0 %v1923, 64
      %v1929 = vpop.permute.xlu0 %1928
      %1930 = vrot.lane.b32.xlu0 %v1924, 64
      %v1931 = vpop.permute.xlu0 %1930
      %1932 = vrot.lane.b32.xlu0 %v1925, 64
      %v1933 = vpop.permute.xlu0 %1932
      %v1935 = vsel %vm1733, %v1922, 0
      %v1938 = vsel %vm1733, %v1923, 0
      %v1941 = vsel %vm1733, %v1924, 0
      %v1944 = vsel %vm1733, %v1925, 0
      %v1947 = vsel %vm1733, %v1927, 0
      %v1950 = vsel %vm1733, %v1929, 0
      %v1953 = vsel %vm1733, %v1931, 0
      %v1956 = vsel %vm1733, %v1933, 0
      %1958 = vmatprep.subr.bf16.mxu0 0
      %1959 = vmatpush1.bf16.xpose.msra.mxu0 %v1947
      %1960 = vmatprep.subr.bf16.mxu0 0
      %1961 = vmatpush1.bf16.xpose.msra.mxu0 %v1950
      %1962 = vmatprep.subr.bf16.mxu0 0
      %1963 = vmatpush1.bf16.xpose.msra.mxu0 %v1953
      %1964 = vmatprep.subr.bf16.mxu0 0
      %1965 = vmatpush1.bf16.xpose.msra.mxu0 %v1956
      %1966 = vmatprep.subr.bf16.mxu0 0
      %1967 = vmatpush1.bf16.xpose.msra.mxu0 0
      %1968 = vmatprep.subr.bf16.mxu0 0
      %1969 = vmatpush1.bf16.xpose.msra.mxu0 0
      %1970 = vmatprep.subr.bf16.mxu0 0
      %1971 = vmatpush1.bf16.xpose.msra.mxu0 0
      %1972 = vmatprep.subr.bf16.mxu0 0
      %1973 = vmatpush1.bf16.xpose.msra.mxu0 0
      %1974 = vmatprep.subr.bf16.mxu0 0
      %1975 = vmatpush1.bf16.xpose.msra.mxu0 0
      %1976 = vmatprep.subr.bf16.mxu0 0
      %1977 = vmatpush1.bf16.xpose.msra.mxu0 0
      %1978 = vmatprep.subr.bf16.mxu0 0
      %1979 = vmatpush1.bf16.xpose.msra.mxu0 0
      %1980 = vmatprep.subr.bf16.mxu0 0
      %1981 = vmatpush1.bf16.xpose.msra.mxu0 0
      %1982 = vmatprep.subr.bf16.mxu0 0
      %1983 = vmatpush1.bf16.xpose.msra.mxu0 0
      %1984 = vmatprep.subr.bf16.mxu0 0
      %1985 = vmatpush1.bf16.xpose.msra.mxu0 0
      %1986 = vmatprep.subr.bf16.mxu0 0
      %1987 = vmatpush1.bf16.xpose.msra.mxu0 0
      %1988 = vmatprep.subr.bf16.mxu0 0
      %1989 = vmatpush1.bf16.xpose.msra.mxu0 0
      %1990 = vmatprep.mubr.bf16.mxu0 0
      %1991 = vmatmul.mubr.bf16.gmra.mrb[0].mxu0 %v1935
      %v1992 = vpop.f32.mrb[0].mxu0
      %v1993 = vadd.f32 0.0, %v1992
      %v1994 = vpop.f32.mrb[0].mxu0
      %v1995 = vpop.f32.mrb[0].mxu0
      %v1996 = vadd.f32 0.0, %v1995
      %v1997 = vpop.f32.mrb[0].mxu0
      %1998 = vmatprep.mubr.bf16.mxu0 0
      %1999 = vmatmul.mubr.bf16.gmra.mrb[0].mxu0 %v1938
      %v2000 = vpop.f32.mrb[0].mxu0
      %v2001 = vadd.f32 0.0, %v2000
      %v2002 = vpop.f32.mrb[0].mxu0
      %v2003 = vpop.f32.mrb[0].mxu0
      %v2004 = vadd.f32 0.0, %v2003
      %v2005 = vpop.f32.mrb[0].mxu0
      %2006 = vmatprep.mubr.bf16.mxu0 0
      %2007 = vmatmul.mubr.bf16.gmra.mrb[0].mxu0 %v1941
      %v2008 = vpop.f32.mrb[0].mxu0
      %v2009 = vadd.f32 0.0, %v2008
      %v2010 = vpop.f32.mrb[0].mxu0
      %v2011 = vpop.f32.mrb[0].mxu0
      %v2012 = vadd.f32 0.0, %v2011
      %v2013 = vpop.f32.mrb[0].mxu0
      %2014 = vmatprep.mubr.bf16.mxu0 0
      %2015 = vmatmul.mubr.bf16.gmra.mrb[0].mxu0 %v1944
      %v2016 = vpop.f32.mrb[0].mxu0
      %v2017 = vadd.f32 0.0, %v2016
      %v2018 = vpop.f32.mrb[0].mxu0
      %v2019 = vpop.f32.mrb[0].mxu0
      %v2020 = vpop.f32.mrb[0].mxu0
      %2021 = vdwg.mxu0
      %v2022 = vpack.c.b16 %v1099, %v1098
      %v2023 = vpack.c.b16 %v1101, %v1100
      %v2024 = vpack.c.b16 %v1103, %v1102
      %v2025 = vpack.c.b16 %v1104, %v1104
      %2026 = vrot.lane.b32.xlu0 %v2022, 64
      %v2027 = vpop.permute.xlu0 %2026
      %2028 = vrot.lane.b32.xlu0 %v2023, 64
      %v2029 = vpop.permute.xlu0 %2028
      %2030 = vrot.lane.b32.xlu0 %v2024, 64
      %v2031 = vpop.permute.xlu0 %2030
      %2032 = vrot.lane.b32.xlu0 %v2025, 64
      %v2033 = vpop.permute.xlu0 %2032
      %v2035 = vsel %vm1733, %v2022, 0
      %v2038 = vsel %vm1733, %v2023, 0
      %v2041 = vsel %vm1733, %v2024, 0
      %v2044 = vsel %vm1733, %v2025, 0
      %v2047 = vsel %vm1733, %v2027, 0
      %v2050 = vsel %vm1733, %v2029, 0
      %v2053 = vsel %vm1733, %v2031, 0
      %v2056 = vsel %vm1733, %v2033, 0
      %2058 = vmatprep.subr.bf16.mxu0 0
      %2059 = vmatpush1.bf16.xpose.msra.mxu0 %v2047
      %2060 = vmatprep.subr.bf16.mxu0 0
      %2061 = vmatpush1.bf16.xpose.msra.mxu0 %v2050
      %2062 = vmatprep.subr.bf16.mxu0 0
      %2063 = vmatpush1.bf16.xpose.msra.mxu0 %v2053
      %2064 = vmatprep.subr.bf16.mxu0 0
      %2065 = vmatpush1.bf16.xpose.msra.mxu0 %v2056
      %2066 = vmatprep.subr.bf16.mxu0 0
      %2067 = vmatpush1.bf16.xpose.msra.mxu0 0
      %2068 = vmatprep.subr.bf16.mxu0 0
      %2069 = vmatpush1.bf16.xpose.msra.mxu0 0
      %2070 = vmatprep.subr.bf16.mxu0 0
      %2071 = vmatpush1.bf16.xpose.msra.mxu0 0
      %2072 = vmatprep.subr.bf16.mxu0 0
      %2073 = vmatpush1.bf16.xpose.msra.mxu0 0
      %2074 = vmatprep.subr.bf16.mxu0 0
      %2075 = vmatpush1.bf16.xpose.msra.mxu0 0
      %2076 = vmatprep.subr.bf16.mxu0 0
      %2077 = vmatpush1.bf16.xpose.msra.mxu0 0
      %2078 = vmatprep.subr.bf16.mxu0 0
      %2079 = vmatpush1.bf16.xpose.msra.mxu0 0
      %2080 = vmatprep.subr.bf16.mxu0 0
      %2081 = vmatpush1.bf16.xpose.msra.mxu0 0
      %2082 = vmatprep.subr.bf16.mxu0 0
      %2083 = vmatpush1.bf16.xpose.msra.mxu0 0
      %2084 = vmatprep.subr.bf16.mxu0 0
      %2085 = vmatpush1.bf16.xpose.msra.mxu0 0
      %2086 = vmatprep.subr.bf16.mxu0 0
      %2087 = vmatpush1.bf16.xpose.msra.mxu0 0
      %2088 = vmatprep.subr.bf16.mxu0 0
      %2089 = vmatpush1.bf16.xpose.msra.mxu0 0
      %2090 = vmatprep.mubr.bf16.mxu0 0
      %2091 = vmatmul.mubr.bf16.gmra.mrb[0].mxu0 %v2035
      %v2092 = vpop.f32.mrb[0].mxu0
      %v2093 = vadd.f32 0.0, %v2092
      %v2094 = vpop.f32.mrb[0].mxu0
      %v2095 = vpop.f32.mrb[0].mxu0
      %v2096 = vadd.f32 0.0, %v2095
      %v2097 = vpop.f32.mrb[0].mxu0
      %2098 = vmatprep.mubr.bf16.mxu0 0
      %2099 = vmatmul.mubr.bf16.gmra.mrb[0].mxu0 %v2038
      %v2100 = vpop.f32.mrb[0].mxu0
      %v2101 = vadd.f32 0.0, %v2100
      %v2102 = vpop.f32.mrb[0].mxu0
      %v2103 = vpop.f32.mrb[0].mxu0
      %v2104 = vadd.f32 0.0, %v2103
      %v2105 = vpop.f32.mrb[0].mxu0
      %2106 = vmatprep.mubr.bf16.mxu0 0
      %2107 = vmatmul.mubr.bf16.gmra.mrb[0].mxu0 %v2041
      %v2108 = vpop.f32.mrb[0].mxu0
      %v2109 = vadd.f32 0.0, %v2108
      %v2110 = vpop.f32.mrb[0].mxu0
      %v2111 = vpop.f32.mrb[0].mxu0
      %v2112 = vadd.f32 0.0, %v2111
      %v2113 = vpop.f32.mrb[0].mxu0
      %2114 = vmatprep.mubr.bf16.mxu0 0
      %2115 = vmatmul.mubr.bf16.gmra.mrb[0].mxu0 %v2044
      %v2116 = vpop.f32.mrb[0].mxu0
      %v2117 = vadd.f32 0.0, %v2116
      %v2118 = vpop.f32.mrb[0].mxu0
      %v2119 = vpop.f32.mrb[0].mxu0
      %v2120 = vpop.f32.mrb[0].mxu0
      %2121 = vdwg.mxu0
      %v2122 = vpack.c.b16 %v1106, %v1105
      %v2123 = vpack.c.b16 %v1108, %v1107
      %v2124 = vpack.c.b16 %v1110, %v1109
      %v2125 = vpack.c.b16 %v1111, %v1111
      %2126 = vrot.lane.b32.xlu0 %v2122, 64
      %v2127 = vpop.permute.xlu0 %2126
      %2128 = vrot.lane.b32.xlu0 %v2123, 64
      %v2129 = vpop.permute.xlu0 %2128
      %2130 = vrot.lane.b32.xlu0 %v2124, 64
      %v2131 = vpop.permute.xlu0 %2130
      %2132 = vrot.lane.b32.xlu0 %v2125, 64
      %v2133 = vpop.permute.xlu0 %2132
      %v2135 = vsel %vm1733, %v2122, 0
      %v2138 = vsel %vm1733, %v2123, 0
      %v2141 = vsel %vm1733, %v2124, 0
      %v2144 = vsel %vm1733, %v2125, 0
      %v2147 = vsel %vm1733, %v2127, 0
      %v2150 = vsel %vm1733, %v2129, 0
      %v2153 = vsel %vm1733, %v2131, 0
      %v2156 = vsel %vm1733, %v2133, 0
      %2158 = vmatprep.subr.bf16.mxu0 0
      %2159 = vmatpush1.bf16.xpose.msra.mxu0 %v2147
      %2160 = vmatprep.subr.bf16.mxu0 0
      %2161 = vmatpush1.bf16.xpose.msra.mxu0 %v2150
      %2162 = vmatprep.subr.bf16.mxu0 0
      %2163 = vmatpush1.bf16.xpose.msra.mxu0 %v2153
      %2164 = vmatprep.subr.bf16.mxu0 0
      %2165 = vmatpush1.bf16.xpose.msra.mxu0 %v2156
      %2166 = vmatprep.subr.bf16.mxu0 0
      %2167 = vmatpush1.bf16.xpose.msra.mxu0 0
      %2168 = vmatprep.subr.bf16.mxu0 0
      %2169 = vmatpush1.bf16.xpose.msra.mxu0 0
      %2170 = vmatprep.subr.bf16.mxu0 0
      %2171 = vmatpush1.bf16.xpose.msra.mxu0 0
      %2172 = vmatprep.subr.bf16.mxu0 0
      %2173 = vmatpush1.bf16.xpose.msra.mxu0 0
      %2174 = vmatprep.subr.bf16.mxu0 0
      %2175 = vmatpush1.bf16.xpose.msra.mxu0 0
      %2176 = vmatprep.subr.bf16.mxu0 0
      %2177 = vmatpush1.bf16.xpose.msra.mxu0 0
      %2178 = vmatprep.subr.bf16.mxu0 0
      %2179 = vmatpush1.bf16.xpose.msra.mxu0 0
      %2180 = vmatprep.subr.bf16.mxu0 0
      %2181 = vmatpush1.bf16.xpose.msra.mxu0 0
      %2182 = vmatprep.subr.bf16.mxu0 0
      %2183 = vmatpush1.bf16.xpose.msra.mxu0 0
      %2184 = vmatprep.subr.bf16.mxu0 0
      %2185 = vmatpush1.bf16.xpose.msra.mxu0 0
      %2186 = vmatprep.subr.bf16.mxu0 0
      %2187 = vmatpush1.bf16.xpose.msra.mxu0 0
      %2188 = vmatprep.subr.bf16.mxu0 0
      %2189 = vmatpush1.bf16.xpose.msra.mxu0 0
      %2190 = vmatprep.mubr.bf16.mxu0 0
      %2191 = vmatmul.mubr.bf16.gmra.mrb[0].mxu0 %v2135
      %v2192 = vpop.f32.mrb[0].mxu0
      %v2193 = vadd.f32 0.0, %v2192
      %v2194 = vpop.f32.mrb[0].mxu0
      %v2195 = vpop.f32.mrb[0].mxu0
      %v2196 = vadd.f32 0.0, %v2195
      %v2197 = vpop.f32.mrb[0].mxu0
      %2198 = vmatprep.mubr.bf16.mxu0 0
      %2199 = vmatmul.mubr.bf16.gmra.mrb[0].mxu0 %v2138
      %v2200 = vpop.f32.mrb[0].mxu0
      %v2201 = vadd.f32 0.0, %v2200
      %v2202 = vpop.f32.mrb[0].mxu0
      %v2203 = vpop.f32.mrb[0].mxu0
      %v2204 = vadd.f32 0.0, %v2203
      %v2205 = vpop.f32.mrb[0].mxu0
      %2206 = vmatprep.mubr.bf16.mxu0 0
      %2207 = vmatmul.mubr.bf16.gmra.mrb[0].mxu0 %v2141
      %v2208 = vpop.f32.mrb[0].mxu0
      %v2209 = vadd.f32 0.0, %v2208
      %v2210 = vpop.f32.mrb[0].mxu0
      %v2211 = vpop.f32.mrb[0].mxu0
      %v2212 = vadd.f32 0.0, %v2211
      %v2213 = vpop.f32.mrb[0].mxu0
      %2214 = vmatprep.mubr.bf16.mxu0 0
      %2215 = vmatmul.mubr.bf16.gmra.mrb[0].mxu0 %v2144
      %v2216 = vpop.f32.mrb[0].mxu0
      %v2217 = vadd.f32 0.0, %v2216
      %v2218 = vpop.f32.mrb[0].mxu0
      %v2219 = vpop.f32.mrb[0].mxu0
      %v2220 = vpop.f32.mrb[0].mxu0
      %2221 = vdwg.mxu0
      %v2222 = vpack.c.b16 %v1113, %v1112
      %v2223 = vpack.c.b16 %v1115, %v1114
      %v2224 = vpack.c.b16 %v1117, %v1116
      %v2225 = vpack.c.b16 %v1118, %v1118
      %2226 = vrot.lane.b32.xlu0 %v2222, 64
      %v2227 = vpop.permute.xlu0 %2226
      %2228 = vrot.lane.b32.xlu0 %v2223, 64
      %v2229 = vpop.permute.xlu0 %2228
      %2230 = vrot.lane.b32.xlu0 %v2224, 64
      %v2231 = vpop.permute.xlu0 %2230
      %2232 = vrot.lane.b32.xlu0 %v2225, 64
      %v2233 = vpop.permute.xlu0 %2232
      %v2235 = vsel %vm1733, %v2222, 0
      %v2238 = vsel %vm1733, %v2223, 0
      %v2241 = vsel %vm1733, %v2224, 0
      %v2244 = vsel %vm1733, %v2225, 0
      %v2247 = vsel %vm1733, %v2227, 0
      %v2250 = vsel %vm1733, %v2229, 0
      %v2253 = vsel %vm1733, %v2231, 0
      %v2256 = vsel %vm1733, %v2233, 0
      %2258 = vmatprep.subr.bf16.mxu0 0
      %2259 = vmatpush1.bf16.xpose.msra.mxu0 %v2247
      %2260 = vmatprep.subr.bf16.mxu0 0
      %2261 = vmatpush1.bf16.xpose.msra.mxu0 %v2250
      %2262 = vmatprep.subr.bf16.mxu0 0
      %2263 = vmatpush1.bf16.xpose.msra.mxu0 %v2253
      %2264 = vmatprep.subr.bf16.mxu0 0
      %2265 = vmatpush1.bf16.xpose.msra.mxu0 %v2256
      %2266 = vmatprep.subr.bf16.mxu0 0
      %2267 = vmatpush1.bf16.xpose.msra.mxu0 0
      %2268 = vmatprep.subr.bf16.mxu0 0
      %2269 = vmatpush1.bf16.xpose.msra.mxu0 0
      %2270 = vmatprep.subr.bf16.mxu0 0
      %2271 = vmatpush1.bf16.xpose.msra.mxu0 0
      %2272 = vmatprep.subr.bf16.mxu0 0
      %2273 = vmatpush1.bf16.xpose.msra.mxu0 0
      %2274 = vmatprep.subr.bf16.mxu0 0
      %2275 = vmatpush1.bf16.xpose.msra.mxu0 0
      %2276 = vmatprep.subr.bf16.mxu0 0
      %2277 = vmatpush1.bf16.xpose.msra.mxu0 0
      %2278 = vmatprep.subr.bf16.mxu0 0
      %2279 = vmatpush1.bf16.xpose.msra.mxu0 0
      %2280 = vmatprep.subr.bf16.mxu0 0
      %2281 = vmatpush1.bf16.xpose.msra.mxu0 0
      %2282 = vmatprep.subr.bf16.mxu0 0
      %2283 = vmatpush1.bf16.xpose.msra.mxu0 0
      %2284 = vmatprep.subr.bf16.mxu0 0
      %2285 = vmatpush1.bf16.xpose.msra.mxu0 0
      %2286 = vmatprep.subr.bf16.mxu0 0
      %2287 = vmatpush1.bf16.xpose.msra.mxu0 0
      %2288 = vmatprep.subr.bf16.mxu0 0
      %2289 = vmatpush1.bf16.xpose.msra.mxu0 0
      %2290 = vmatprep.mubr.bf16.mxu0 0
      %2291 = vmatmul.mubr.bf16.gmra.mrb[0].mxu0 %v2235
      %v2292 = vpop.f32.mrb[0].mxu0
      %v2293 = vadd.f32 0.0, %v2292
      %v2294 = vpop.f32.mrb[0].mxu0
      %v2295 = vpop.f32.mrb[0].mxu0
      %v2296 = vadd.f32 0.0, %v2295
      %v2297 = vpop.f32.mrb[0].mxu0
      %2298 = vmatprep.mubr.bf16.mxu0 0
      %2299 = vmatmul.mubr.bf16.gmra.mrb[0].mxu0 %v2238
      %v2300 = vpop.f32.mrb[0].mxu0
      %v2301 = vadd.f32 0.0, %v2300
      %v2302 = vpop.f32.mrb[0].mxu0
      %v2303 = vpop.f32.mrb[0].mxu0
      %v2304 = vadd.f32 0.0, %v2303
      %v2305 = vpop.f32.mrb[0].mxu0
      %2306 = vmatprep.mubr.bf16.mxu0 0
      %2307 = vmatmul.mubr.bf16.gmra.mrb[0].mxu0 %v2241
      %v2308 = vpop.f32.mrb[0].mxu0
      %v2309 = vadd.f32 0.0, %v2308
      %v2310 = vpop.f32.mrb[0].mxu0
      %v2311 = vpop.f32.mrb[0].mxu0
      %v2312 = vadd.f32 0.0, %v2311
      %v2313 = vpop.f32.mrb[0].mxu0
      %2314 = vmatprep.mubr.bf16.mxu0 0
      %2315 = vmatmul.mubr.bf16.gmra.mrb[0].mxu0 %v2244
      %v2316 = vpop.f32.mrb[0].mxu0
      %v2317 = vadd.f32 0.0, %v2316
      %v2318 = vpop.f32.mrb[0].mxu0
      %v2319 = vpop.f32.mrb[0].mxu0
      %v2320 = vpop.f32.mrb[0].mxu0
      %2321 = vdwg.mxu0
      %v2322 = vpack.c.b16 %v1120, %v1119
      %v2323 = vpack.c.b16 %v1122, %v1121
      %v2324 = vpack.c.b16 %v1124, %v1123
      %v2325 = vpack.c.b16 %v1125, %v1125
      %2326 = vrot.lane.b32.xlu0 %v2322, 64
      %v2327 = vpop.permute.xlu0 %2326
      %2328 = vrot.lane.b32.xlu0 %v2323, 64
      %v2329 = vpop.permute.xlu0 %2328
      %2330 = vrot.lane.b32.xlu0 %v2324, 64
      %v2331 = vpop.permute.xlu0 %2330
      %2332 = vrot.lane.b32.xlu0 %v2325, 64
      %v2333 = vpop.permute.xlu0 %2332
      %v2335 = vsel %vm1733, %v2322, 0
      %v2338 = vsel %vm1733, %v2323, 0
      %v2341 = vsel %vm1733, %v2324, 0
      %v2344 = vsel %vm1733, %v2325, 0
      %v2347 = vsel %vm1733, %v2327, 0
      %v2350 = vsel %vm1733, %v2329, 0
      %v2353 = vsel %vm1733, %v2331, 0
      %v2356 = vsel %vm1733, %v2333, 0
      %2358 = vmatprep.subr.bf16.mxu0 0
      %2359 = vmatpush1.bf16.xpose.msra.mxu0 %v2347
      %2360 = vmatprep.subr.bf16.mxu0 0
      %2361 = vmatpush1.bf16.xpose.msra.mxu0 %v2350
      %2362 = vmatprep.subr.bf16.mxu0 0
      %2363 = vmatpush1.bf16.xpose.msra.mxu0 %v2353
      %2364 = vmatprep.subr.bf16.mxu0 0
      %2365 = vmatpush1.bf16.xpose.msra.mxu0 %v2356
      %2366 = vmatprep.subr.bf16.mxu0 0
      %2367 = vmatpush1.bf16.xpose.msra.mxu0 0
      %2368 = vmatprep.subr.bf16.mxu0 0
      %2369 = vmatpush1.bf16.xpose.msra.mxu0 0
      %2370 = vmatprep.subr.bf16.mxu0 0
      %2371 = vmatpush1.bf16.xpose.msra.mxu0 0
      %2372 = vmatprep.subr.bf16.mxu0 0
      %2373 = vmatpush1.bf16.xpose.msra.mxu0 0
      %2374 = vmatprep.subr.bf16.mxu0 0
      %2375 = vmatpush1.bf16.xpose.msra.mxu0 0
      %2376 = vmatprep.subr.bf16.mxu0 0
      %2377 = vmatpush1.bf16.xpose.msra.mxu0 0
      %2378 = vmatprep.subr.bf16.mxu0 0
      %2379 = vmatpush1.bf16.xpose.msra.mxu0 0
      %2380 = vmatprep.subr.bf16.mxu0 0
      %2381 = vmatpush1.bf16.xpose.msra.mxu0 0
      %2382 = vmatprep.subr.bf16.mxu0 0
      %2383 = vmatpush1.bf16.xpose.msra.mxu0 0
      %2384 = vmatprep.subr.bf16.mxu0 0
      %2385 = vmatpush1.bf16.xpose.msra.mxu0 0
      %2386 = vmatprep.subr.bf16.mxu0 0
      %2387 = vmatpush1.bf16.xpose.msra.mxu0 0
      %2388 = vmatprep.subr.bf16.mxu0 0
      %2389 = vmatpush1.bf16.xpose.msra.mxu0 0
      %2390 = vmatprep.mubr.bf16.mxu0 0
      %2391 = vmatmul.mubr.bf16.gmra.mrb[0].mxu0 %v2335
      %v2392 = vpop.f32.mrb[0].mxu0
      %v2393 = vadd.f32 0.0, %v2392
      %v2394 = vpop.f32.mrb[0].mxu0
      %v2395 = vpop.f32.mrb[0].mxu0
      %v2396 = vadd.f32 0.0, %v2395
      %v2397 = vpop.f32.mrb[0].mxu0
      %2398 = vmatprep.mubr.bf16.mxu0 0
      %2399 = vmatmul.mubr.bf16.gmra.mrb[0].mxu0 %v2338
      %v2400 = vpop.f32.mrb[0].mxu0
      %v2401 = vadd.f32 0.0, %v2400
      %v2402 = vpop.f32.mrb[0].mxu0
      %v2403 = vpop.f32.mrb[0].mxu0
      %v2404 = vadd.f32 0.0, %v2403
      %v2405 = vpop.f32.mrb[0].mxu0
      %2406 = vmatprep.mubr.bf16.mxu0 0
      %2407 = vmatmul.mubr.bf16.gmra.mrb[0].mxu0 %v2341
      %v2408 = vpop.f32.mrb[0].mxu0
      %v2409 = vadd.f32 0.0, %v2408
      %v2410 = vpop.f32.mrb[0].mxu0
      %v2411 = vpop.f32.mrb[0].mxu0
      %v2412 = vadd.f32 0.0, %v2411
      %v2413 = vpop.f32.mrb[0].mxu0
      %2414 = vmatprep.mubr.bf16.mxu0 0
      %2415 = vmatmul.mubr.bf16.gmra.mrb[0].mxu0 %v2344
      %v2416 = vpop.f32.mrb[0].mxu0
      %v2417 = vadd.f32 0.0, %v2416
      %v2418 = vpop.f32.mrb[0].mxu0
      %v2419 = vpop.f32.mrb[0].mxu0
      %v2420 = vpop.f32.mrb[0].mxu0
      %2421 = vdwg.mxu0
      %v2422 = vpack.c.b16 %v1127, %v1126
      %v2423 = vpack.c.b16 %v1129, %v1128
      %v2424 = vpack.c.b16 %v1131, %v1130
      %v2425 = vpack.c.b16 %v1132, %v1132
      %2426 = vrot.lane.b32.xlu0 %v2422, 64
      %v2427 = vpop.permute.xlu0 %2426
      %2428 = vrot.lane.b32.xlu0 %v2423, 64
      %v2429 = vpop.permute.xlu0 %2428
      %2430 = vrot.lane.b32.xlu0 %v2424, 64
      %v2431 = vpop.permute.xlu0 %2430
      %2432 = vrot.lane.b32.xlu0 %v2425, 64
      %v2433 = vpop.permute.xlu0 %2432
      %v2435 = vsel %vm1733, %v2422, 0
      %v2438 = vsel %vm1733, %v2423, 0
      %v2441 = vsel %vm1733, %v2424, 0
      %v2444 = vsel %vm1733, %v2425, 0
      %v2447 = vsel %vm1733, %v2427, 0
      %v2450 = vsel %vm1733, %v2429, 0
      %v2453 = vsel %vm1733, %v2431, 0
      %v2456 = vsel %vm1733, %v2433, 0
      %2458 = vmatprep.subr.bf16.mxu0 0
      %2459 = vmatpush1.bf16.xpose.msra.mxu0 %v2447
      %2460 = vmatprep.subr.bf16.mxu0 0
      %2461 = vmatpush1.bf16.xpose.msra.mxu0 %v2450
      %2462 = vmatprep.subr.bf16.mxu0 0
      %2463 = vmatpush1.bf16.xpose.msra.mxu0 %v2453
      %2464 = vmatprep.subr.bf16.mxu0 0
      %2465 = vmatpush1.bf16.xpose.msra.mxu0 %v2456
      %2466 = vmatprep.subr.bf16.mxu0 0
      %2467 = vmatpush1.bf16.xpose.msra.mxu0 0
      %2468 = vmatprep.subr.bf16.mxu0 0
      %2469 = vmatpush1.bf16.xpose.msra.mxu0 0
      %2470 = vmatprep.subr.bf16.mxu0 0
      %2471 = vmatpush1.bf16.xpose.msra.mxu0 0
      %2472 = vmatprep.subr.bf16.mxu0 0
      %2473 = vmatpush1.bf16.xpose.msra.mxu0 0
      %2474 = vmatprep.subr.bf16.mxu0 0
      %2475 = vmatpush1.bf16.xpose.msra.mxu0 0
      %2476 = vmatprep.subr.bf16.mxu0 0
      %2477 = vmatpush1.bf16.xpose.msra.mxu0 0
      %2478 = vmatprep.subr.bf16.mxu0 0
      %2479 = vmatpush1.bf16.xpose.msra.mxu0 0
      %2480 = vmatprep.subr.bf16.mxu0 0
      %2481 = vmatpush1.bf16.xpose.msra.mxu0 0
      %2482 = vmatprep.subr.bf16.mxu0 0
      %2483 = vmatpush1.bf16.xpose.msra.mxu0 0
      %2484 = vmatprep.subr.bf16.mxu0 0
      %2485 = vmatpush1.bf16.xpose.msra.mxu0 0
      %2486 = vmatprep.subr.bf16.mxu0 0
      %2487 = vmatpush1.bf16.xpose.msra.mxu0 0
      %2488 = vmatprep.subr.bf16.mxu0 0
      %2489 = vmatpush1.bf16.xpose.msra.mxu0 0
      %2490 = vmatprep.mubr.bf16.mxu0 0
      %2491 = vmatmul.mubr.bf16.gmra.mrb[0].mxu0 %v2435
      %v2492 = vpop.f32.mrb[0].mxu0
      %v2493 = vadd.f32 0.0, %v2492
      %v2494 = vpop.f32.mrb[0].mxu0
      %v2495 = vpop.f32.mrb[0].mxu0
      %v2496 = vadd.f32 0.0, %v2495
      %v2497 = vpop.f32.mrb[0].mxu0
      %2498 = vmatprep.mubr.bf16.mxu0 0
      %2499 = vmatmul.mubr.bf16.gmra.mrb[0].mxu0 %v2438
      %v2500 = vpop.f32.mrb[0].mxu0
      %v2501 = vadd.f32 0.0, %v2500
      %v2502 = vpop.f32.mrb[0].mxu0
      %v2503 = vpop.f32.mrb[0].mxu0
      %v2504 = vadd.f32 0.0, %v2503
      %v2505 = vpop.f32.mrb[0].mxu0
      %2506 = vmatprep.mubr.bf16.mxu0 0
      %2507 = vmatmul.mubr.bf16.gmra.mrb[0].mxu0 %v2441
      %v2508 = vpop.f32.mrb[0].mxu0
      %v2509 = vadd.f32 0.0, %v2508
      %v2510 = vpop.f32.mrb[0].mxu0
      %v2511 = vpop.f32.mrb[0].mxu0
      %v2512 = vadd.f32 0.0, %v2511
      %v2513 = vpop.f32.mrb[0].mxu0
      %2514 = vmatprep.mubr.bf16.mxu0 0
      %2515 = vmatmul.mubr.bf16.gmra.mrb[0].mxu0 %v2444
      %v2516 = vpop.f32.mrb[0].mxu0
      %v2517 = vadd.f32 0.0, %v2516
      %v2518 = vpop.f32.mrb[0].mxu0
      %v2519 = vpop.f32.mrb[0].mxu0
      %v2520 = vpop.f32.mrb[0].mxu0
      %2521 = vdwg.mxu0
      %v2522 = vpack.c.b16 %v1134, %v1133
      %v2523 = vpack.c.b16 %v1136, %v1135
      %v2524 = vpack.c.b16 %v1138, %v1137
      %v2525 = vpack.c.b16 %v1139, %v1139
      %2526 = vrot.lane.b32.xlu0 %v2522, 64
      %v2527 = vpop.permute.xlu0 %2526
      %2528 = vrot.lane.b32.xlu0 %v2523, 64
      %v2529 = vpop.permute.xlu0 %2528
      %2530 = vrot.lane.b32.xlu0 %v2524, 64
      %v2531 = vpop.permute.xlu0 %2530
      %2532 = vrot.lane.b32.xlu0 %v2525, 64
      %v2533 = vpop.permute.xlu0 %2532
      %v2535 = vsel %vm1733, %v2522, 0
      %v2538 = vsel %vm1733, %v2523, 0
      %v2541 = vsel %vm1733, %v2524, 0
      %v2544 = vsel %vm1733, %v2525, 0
      %v2547 = vsel %vm1733, %v2527, 0
      %v2550 = vsel %vm1733, %v2529, 0
      %v2553 = vsel %vm1733, %v2531, 0
      %v2556 = vsel %vm1733, %v2533, 0
      %2558 = vmatprep.subr.bf16.mxu0 0
      %2559 = vmatpush1.bf16.xpose.msra.mxu0 %v2547
      %2560 = vmatprep.subr.bf16.mxu0 0
      %2561 = vmatpush1.bf16.xpose.msra.mxu0 %v2550
      %2562 = vmatprep.subr.bf16.mxu0 0
      %2563 = vmatpush1.bf16.xpose.msra.mxu0 %v2553
      %2564 = vmatprep.subr.bf16.mxu0 0
      %2565 = vmatpush1.bf16.xpose.msra.mxu0 %v2556
      %2566 = vmatprep.subr.bf16.mxu0 0
      %2567 = vmatpush1.bf16.xpose.msra.mxu0 0
      %2568 = vmatprep.subr.bf16.mxu0 0
      %2569 = vmatpush1.bf16.xpose.msra.mxu0 0
      %2570 = vmatprep.subr.bf16.mxu0 0
      %2571 = vmatpush1.bf16.xpose.msra.mxu0 0
      %2572 = vmatprep.subr.bf16.mxu0 0
      %2573 = vmatpush1.bf16.xpose.msra.mxu0 0
      %2574 = vmatprep.subr.bf16.mxu0 0
      %2575 = vmatpush1.bf16.xpose.msra.mxu0 0
      %2576 = vmatprep.subr.bf16.mxu0 0
      %2577 = vmatpush1.bf16.xpose.msra.mxu0 0
      %2578 = vmatprep.subr.bf16.mxu0 0
      %2579 = vmatpush1.bf16.xpose.msra.mxu0 0
      %2580 = vmatprep.subr.bf16.mxu0 0
      %2581 = vmatpush1.bf16.xpose.msra.mxu0 0
      %2582 = vmatprep.subr.bf16.mxu0 0
      %2583 = vmatpush1.bf16.xpose.msra.mxu0 0
      %2584 = vmatprep.subr.bf16.mxu0 0
      %2585 = vmatpush1.bf16.xpose.msra.mxu0 0
      %2586 = vmatprep.subr.bf16.mxu0 0
      %2587 = vmatpush1.bf16.xpose.msra.mxu0 0
      %2588 = vmatprep.subr.bf16.mxu0 0
      %2589 = vmatpush1.bf16.xpose.msra.mxu0 0
      %2590 = vmatprep.mubr.bf16.mxu0 0
      %2591 = vmatmul.mubr.bf16.gmra.mrb[0].mxu0 %v2535
      %v2592 = vpop.f32.mrb[0].mxu0
      %v2593 = vadd.f32 0.0, %v2592
      %v2594 = vpop.f32.mrb[0].mxu0
      %v2595 = vpop.f32.mrb[0].mxu0
      %v2596 = vadd.f32 0.0, %v2595
      %v2597 = vpop.f32.mrb[0].mxu0
      %2598 = vmatprep.mubr.bf16.mxu0 0
      %2599 = vmatmul.mubr.bf16.gmra.mrb[0].mxu0 %v2538
      %v2600 = vpop.f32.mrb[0].mxu0
      %v2601 = vadd.f32 0.0, %v2600
      %v2602 = vpop.f32.mrb[0].mxu0
      %v2603 = vpop.f32.mrb[0].mxu0
      %v2604 = vadd.f32 0.0, %v2603
      %v2605 = vpop.f32.mrb[0].mxu0
      %2606 = vmatprep.mubr.bf16.mxu0 0
      %2607 = vmatmul.mubr.bf16.gmra.mrb[0].mxu0 %v2541
      %v2608 = vpop.f32.mrb[0].mxu0
      %v2609 = vadd.f32 0.0, %v2608
      %v2610 = vpop.f32.mrb[0].mxu0
      %v2611 = vpop.f32.mrb[0].mxu0
      %v2612 = vadd.f32 0.0, %v2611
      %v2613 = vpop.f32.mrb[0].mxu0
      %2614 = vmatprep.mubr.bf16.mxu0 0
      %2615 = vmatmul.mubr.bf16.gmra.mrb[0].mxu0 %v2544
      %v2616 = vpop.f32.mrb[0].mxu0
      %v2617 = vadd.f32 0.0, %v2616
      %v2618 = vpop.f32.mrb[0].mxu0
      %v2619 = vpop.f32.mrb[0].mxu0
      %v2620 = vpop.f32.mrb[0].mxu0
      %2621 = vdwg.mxu0
      %v2622 = vpack.c.b16 %v1141, %v1140
      %v2623 = vpack.c.b16 %v1143, %v1142
      %v2624 = vpack.c.b16 %v1145, %v1144
      %v2625 = vpack.c.b16 %v1146, %v1146
      %2626 = vrot.lane.b32.xlu0 %v2622, 64
      %v2627 = vpop.permute.xlu0 %2626
      %2628 = vrot.lane.b32.xlu0 %v2623, 64
      %v2629 = vpop.permute.xlu0 %2628
      %2630 = vrot.lane.b32.xlu0 %v2624, 64
      %v2631 = vpop.permute.xlu0 %2630
      %2632 = vrot.lane.b32.xlu0 %v2625, 64
      %v2633 = vpop.permute.xlu0 %2632
      %v2635 = vsel %vm1733, %v2622, 0
      %v2638 = vsel %vm1733, %v2623, 0
      %v2641 = vsel %vm1733, %v2624, 0
      %v2644 = vsel %vm1733, %v2625, 0
      %v2647 = vsel %vm1733, %v2627, 0
      %v2650 = vsel %vm1733, %v2629, 0
      %v2653 = vsel %vm1733, %v2631, 0
      %v2656 = vsel %vm1733, %v2633, 0
      %2658 = vmatprep.subr.bf16.mxu0 0
      %2659 = vmatpush1.bf16.xpose.msra.mxu0 %v2647
      %2660 = vmatprep.subr.bf16.mxu0 0
      %2661 = vmatpush1.bf16.xpose.msra.mxu0 %v2650
      %2662 = vmatprep.subr.bf16.mxu0 0
      %2663 = vmatpush1.bf16.xpose.msra.mxu0 %v2653
      %2664 = vmatprep.subr.bf16.mxu0 0
      %2665 = vmatpush1.bf16.xpose.msra.mxu0 %v2656
      %2666 = vmatprep.subr.bf16.mxu0 0
      %2667 = vmatpush1.bf16.xpose.msra.mxu0 0
      %2668 = vmatprep.subr.bf16.mxu0 0
      %2669 = vmatpush1.bf16.xpose.msra.mxu0 0
      %2670 = vmatprep.subr.bf16.mxu0 0
      %2671 = vmatpush1.bf16.xpose.msra.mxu0 0
      %2672 = vmatprep.subr.bf16.mxu0 0
      %2673 = vmatpush1.bf16.xpose.msra.mxu0 0
      %2674 = vmatprep.subr.bf16.mxu0 0
      %2675 = vmatpush1.bf16.xpose.msra.mxu0 0
      %2676 = vmatprep.subr.bf16.mxu0 0
      %2677 = vmatpush1.bf16.xpose.msra.mxu0 0
      %2678 = vmatprep.subr.bf16.mxu0 0
      %2679 = vmatpush1.bf16.xpose.msra.mxu0 0
      %2680 = vmatprep.subr.bf16.mxu0 0
      %2681 = vmatpush1.bf16.xpose.msra.mxu0 0
      %2682 = vmatprep.subr.bf16.mxu0 0
      %2683 = vmatpush1.bf16.xpose.msra.mxu0 0
      %2684 = vmatprep.subr.bf16.mxu0 0
      %2685 = vmatpush1.bf16.xpose.msra.mxu0 0
      %2686 = vmatprep.subr.bf16.mxu0 0
      %2687 = vmatpush1.bf16.xpose.msra.mxu0 0
      %2688 = vmatprep.subr.bf16.mxu0 0
      %2689 = vmatpush1.bf16.xpose.msra.mxu0 0
      %2690 = vmatprep.mubr.bf16.mxu0 0
      %2691 = vmatmul.mubr.bf16.gmra.mrb[0].mxu0 %v2635
      %v2692 = vpop.f32.mrb[0].mxu0
      %v2693 = vadd.f32 0.0, %v2692
      %v2694 = vpop.f32.mrb[0].mxu0
      %v2695 = vpop.f32.mrb[0].mxu0
      %v2696 = vadd.f32 0.0, %v2695
      %v2697 = vpop.f32.mrb[0].mxu0
      %2698 = vmatprep.mubr.bf16.mxu0 0
      %2699 = vmatmul.mubr.bf16.gmra.mrb[0].mxu0 %v2638
      %v2700 = vpop.f32.mrb[0].mxu0
      %v2701 = vadd.f32 0.0, %v2700
      %v2702 = vpop.f32.mrb[0].mxu0
      %v2703 = vpop.f32.mrb[0].mxu0
      %v2704 = vadd.f32 0.0, %v2703
      %v2705 = vpop.f32.mrb[0].mxu0
      %2706 = vmatprep.mubr.bf16.mxu0 0
      %2707 = vmatmul.mubr.bf16.gmra.mrb[0].mxu0 %v2641
      %v2708 = vpop.f32.mrb[0].mxu0
      %v2709 = vadd.f32 0.0, %v2708
      %v2710 = vpop.f32.mrb[0].mxu0
      %v2711 = vpop.f32.mrb[0].mxu0
      %v2712 = vadd.f32 0.0, %v2711
      %v2713 = vpop.f32.mrb[0].mxu0
      %2714 = vmatprep.mubr.bf16.mxu0 0
      %2715 = vmatmul.mubr.bf16.gmra.mrb[0].mxu0 %v2644
      %v2716 = vpop.f32.mrb[0].mxu0
      %v2717 = vadd.f32 0.0, %v2716
      %v2718 = vpop.f32.mrb[0].mxu0
      %v2719 = vpop.f32.mrb[0].mxu0
      %v2720 = vpop.f32.mrb[0].mxu0
      %2721 = vdwg.mxu0
      %v2722 = vpack.c.b16 %v1148, %v1147
      %v2723 = vpack.c.b16 %v1150, %v1149
      %v2724 = vpack.c.b16 %v1152, %v1151
      %v2725 = vpack.c.b16 %v1153, %v1153
      %2726 = vrot.lane.b32.xlu0 %v2722, 64
      %v2727 = vpop.permute.xlu0 %2726
      %2728 = vrot.lane.b32.xlu0 %v2723, 64
      %v2729 = vpop.permute.xlu0 %2728
      %2730 = vrot.lane.b32.xlu0 %v2724, 64
      %v2731 = vpop.permute.xlu0 %2730
      %2732 = vrot.lane.b32.xlu0 %v2725, 64
      %v2733 = vpop.permute.xlu0 %2732
      %v2735 = vsel %vm1733, %v2722, 0
      %v2738 = vsel %vm1733, %v2723, 0
      %v2741 = vsel %vm1733, %v2724, 0
      %v2744 = vsel %vm1733, %v2725, 0
      %v2747 = vsel %vm1733, %v2727, 0
      %v2750 = vsel %vm1733, %v2729, 0
      %v2753 = vsel %vm1733, %v2731, 0
      %v2756 = vsel %vm1733, %v2733, 0
      %2758 = vmatprep.subr.bf16.mxu0 0
      %2759 = vmatpush1.bf16.xpose.msra.mxu0 %v2747
      %2760 = vmatprep.subr.bf16.mxu0 0
      %2761 = vmatpush1.bf16.xpose.msra.mxu0 %v2750
      %2762 = vmatprep.subr.bf16.mxu0 0
      %2763 = vmatpush1.bf16.xpose.msra.mxu0 %v2753
      %2764 = vmatprep.subr.bf16.mxu0 0
      %2765 = vmatpush1.bf16.xpose.msra.mxu0 %v2756
      %2766 = vmatprep.subr.bf16.mxu0 0
      %2767 = vmatpush1.bf16.xpose.msra.mxu0 0
      %2768 = vmatprep.subr.bf16.mxu0 0
      %2769 = vmatpush1.bf16.xpose.msra.mxu0 0
      %2770 = vmatprep.subr.bf16.mxu0 0
      %2771 = vmatpush1.bf16.xpose.msra.mxu0 0
      %2772 = vmatprep.subr.bf16.mxu0 0
      %2773 = vmatpush1.bf16.xpose.msra.mxu0 0
      %2774 = vmatprep.subr.bf16.mxu0 0
      %2775 = vmatpush1.bf16.xpose.msra.mxu0 0
      %2776 = vmatprep.subr.bf16.mxu0 0
      %2777 = vmatpush1.bf16.xpose.msra.mxu0 0
      %2778 = vmatprep.subr.bf16.mxu0 0
      %2779 = vmatpush1.bf16.xpose.msra.mxu0 0
      %2780 = vmatprep.subr.bf16.mxu0 0
      %2781 = vmatpush1.bf16.xpose.msra.mxu0 0
      %2782 = vmatprep.subr.bf16.mxu0 0
      %2783 = vmatpush1.bf16.xpose.msra.mxu0 0
      %2784 = vmatprep.subr.bf16.mxu0 0
      %2785 = vmatpush1.bf16.xpose.msra.mxu0 0
      %2786 = vmatprep.subr.bf16.mxu0 0
      %2787 = vmatpush1.bf16.xpose.msra.mxu0 0
      %2788 = vmatprep.subr.bf16.mxu0 0
      %2789 = vmatpush1.bf16.xpose.msra.mxu0 0
      %2790 = vmatprep.mubr.bf16.mxu0 0
      %2791 = vmatmul.mubr.bf16.gmra.mrb[0].mxu0 %v2735
      %v2792 = vpop.f32.mrb[0].mxu0
      %v2793 = vadd.f32 0.0, %v2792
      %v2794 = vpop.f32.mrb[0].mxu0
      %v2795 = vpop.f32.mrb[0].mxu0
      %v2796 = vadd.f32 0.0, %v2795
      %v2797 = vpop.f32.mrb[0].mxu0
      %2798 = vmatprep.mubr.bf16.mxu0 0
      %2799 = vmatmul.mubr.bf16.gmra.mrb[0].mxu0 %v2738
      %v2800 = vpop.f32.mrb[0].mxu0
      %v2801 = vadd.f32 0.0, %v2800
      %v2802 = vpop.f32.mrb[0].mxu0
      %v2803 = vpop.f32.mrb[0].mxu0
      %v2804 = vadd.f32 0.0, %v2803
      %v2805 = vpop.f32.mrb[0].mxu0
      %2806 = vmatprep.mubr.bf16.mxu0 0
      %2807 = vmatmul.mubr.bf16.gmra.mrb[0].mxu0 %v2741
      %v2808 = vpop.f32.mrb[0].mxu0
      %v2809 = vadd.f32 0.0, %v2808
      %v2810 = vpop.f32.mrb[0].mxu0
      %v2811 = vpop.f32.mrb[0].mxu0
      %v2812 = vadd.f32 0.0, %v2811
      %v2813 = vpop.f32.mrb[0].mxu0
      %2814 = vmatprep.mubr.bf16.mxu0 0
      %2815 = vmatmul.mubr.bf16.gmra.mrb[0].mxu0 %v2744
      %v2816 = vpop.f32.mrb[0].mxu0
      %v2817 = vadd.f32 0.0, %v2816
      %v2818 = vpop.f32.mrb[0].mxu0
      %v2819 = vpop.f32.mrb[0].mxu0
      %v2820 = vpop.f32.mrb[0].mxu0
      %2821 = vdwg.mxu0
      %v2822 = vpack.c.b16 %v1155, %v1154
      %v2823 = vpack.c.b16 %v1157, %v1156
      %v2824 = vpack.c.b16 %v1159, %v1158
      %v2825 = vpack.c.b16 %v1160, %v1160
      %2826 = vrot.lane.b32.xlu0 %v2822, 64
      %v2827 = vpop.permute.xlu0 %2826
      %2828 = vrot.lane.b32.xlu0 %v2823, 64
      %v2829 = vpop.permute.xlu0 %2828
      %2830 = vrot.lane.b32.xlu0 %v2824, 64
      %v2831 = vpop.permute.xlu0 %2830
      %2832 = vrot.lane.b32.xlu0 %v2825, 64
      %v2833 = vpop.permute.xlu0 %2832
      %v2835 = vsel %vm1733, %v2822, 0
      %v2838 = vsel %vm1733, %v2823, 0
      %v2841 = vsel %vm1733, %v2824, 0
      %v2844 = vsel %vm1733, %v2825, 0
      %v2847 = vsel %vm1733, %v2827, 0
      %v2850 = vsel %vm1733, %v2829, 0
      %v2853 = vsel %vm1733, %v2831, 0
      %v2856 = vsel %vm1733, %v2833, 0
      %2858 = vmatprep.subr.bf16.mxu0 0
      %2859 = vmatpush1.bf16.xpose.msra.mxu0 %v2847
      %2860 = vmatprep.subr.bf16.mxu0 0
      %2861 = vmatpush1.bf16.xpose.msra.mxu0 %v2850
      %2862 = vmatprep.subr.bf16.mxu0 0
      %2863 = vmatpush1.bf16.xpose.msra.mxu0 %v2853
      %2864 = vmatprep.subr.bf16.mxu0 0
      %2865 = vmatpush1.bf16.xpose.msra.mxu0 %v2856
      %2866 = vmatprep.subr.bf16.mxu0 0
      %2867 = vmatpush1.bf16.xpose.msra.mxu0 0
      %2868 = vmatprep.subr.bf16.mxu0 0
      %2869 = vmatpush1.bf16.xpose.msra.mxu0 0
      %2870 = vmatprep.subr.bf16.mxu0 0
      %2871 = vmatpush1.bf16.xpose.msra.mxu0 0
      %2872 = vmatprep.subr.bf16.mxu0 0
      %2873 = vmatpush1.bf16.xpose.msra.mxu0 0
      %2874 = vmatprep.subr.bf16.mxu0 0
      %2875 = vmatpush1.bf16.xpose.msra.mxu0 0
      %2876 = vmatprep.subr.bf16.mxu0 0
      %2877 = vmatpush1.bf16.xpose.msra.mxu0 0
      %2878 = vmatprep.subr.bf16.mxu0 0
      %2879 = vmatpush1.bf16.xpose.msra.mxu0 0
      %2880 = vmatprep.subr.bf16.mxu0 0
      %2881 = vmatpush1.bf16.xpose.msra.mxu0 0
      %2882 = vmatprep.subr.bf16.mxu0 0
      %2883 = vmatpush1.bf16.xpose.msra.mxu0 0
      %2884 = vmatprep.subr.bf16.mxu0 0
      %2885 = vmatpush1.bf16.xpose.msra.mxu0 0
      %2886 = vmatprep.subr.bf16.mxu0 0
      %2887 = vmatpush1.bf16.xpose.msra.mxu0 0
      %2888 = vmatprep.subr.bf16.mxu0 0
      %2889 = vmatpush1.bf16.xpose.msra.mxu0 0
      %2890 = vmatprep.mubr.bf16.mxu0 0
      %2891 = vmatmul.mubr.bf16.gmra.mrb[0].mxu0 %v2835
      %v2892 = vpop.f32.mrb[0].mxu0
      %v2893 = vadd.f32 0.0, %v2892
      %v2894 = vpop.f32.mrb[0].mxu0
      %v2895 = vpop.f32.mrb[0].mxu0
      %v2896 = vadd.f32 0.0, %v2895
      %v2897 = vpop.f32.mrb[0].mxu0
      %2898 = vmatprep.mubr.bf16.mxu0 0
      %2899 = vmatmul.mubr.bf16.gmra.mrb[0].mxu0 %v2838
      %v2900 = vpop.f32.mrb[0].mxu0
      %v2901 = vadd.f32 0.0, %v2900
      %v2902 = vpop.f32.mrb[0].mxu0
      %v2903 = vpop.f32.mrb[0].mxu0
      %v2904 = vadd.f32 0.0, %v2903
      %v2905 = vpop.f32.mrb[0].mxu0
      %2906 = vmatprep.mubr.bf16.mxu0 0
      %2907 = vmatmul.mubr.bf16.gmra.mrb[0].mxu0 %v2841
      %v2908 = vpop.f32.mrb[0].mxu0
      %v2909 = vadd.f32 0.0, %v2908
      %v2910 = vpop.f32.mrb[0].mxu0
      %v2911 = vpop.f32.mrb[0].mxu0
      %v2912 = vadd.f32 0.0, %v2911
      %v2913 = vpop.f32.mrb[0].mxu0
      %2914 = vmatprep.mubr.bf16.mxu0 0
      %2915 = vmatmul.mubr.bf16.gmra.mrb[0].mxu0 %v2844
      %v2916 = vpop.f32.mrb[0].mxu0
      %v2917 = vadd.f32 0.0, %v2916
      %v2918 = vpop.f32.mrb[0].mxu0
      %v2919 = vpop.f32.mrb[0].mxu0
      %v2920 = vpop.f32.mrb[0].mxu0
      %2921 = vdwg.mxu0
      %v2922 = vpack.c.b16 %v1162, %v1161
      %v2923 = vpack.c.b16 %v1164, %v1163
      %v2924 = vpack.c.b16 %v1166, %v1165
      %v2925 = vpack.c.b16 %v1167, %v1167
      %2926 = vrot.lane.b32.xlu0 %v2922, 64
      %v2927 = vpop.permute.xlu0 %2926
      %2928 = vrot.lane.b32.xlu0 %v2923, 64
      %v2929 = vpop.permute.xlu0 %2928
      %2930 = vrot.lane.b32.xlu0 %v2924, 64
      %v2931 = vpop.permute.xlu0 %2930
      %2932 = vrot.lane.b32.xlu0 %v2925, 64
      %v2933 = vpop.permute.xlu0 %2932
      %v2935 = vsel %vm1733, %v2922, 0
      %v2938 = vsel %vm1733, %v2923, 0
      %v2941 = vsel %vm1733, %v2924, 0
      %v2944 = vsel %vm1733, %v2925, 0
      %v2947 = vsel %vm1733, %v2927, 0
      %v2950 = vsel %vm1733, %v2929, 0
      %v2953 = vsel %vm1733, %v2931, 0
      %v2956 = vsel %vm1733, %v2933, 0
      %2958 = vmatprep.subr.bf16.mxu0 0
      %2959 = vmatpush1.bf16.xpose.msra.mxu0 %v2947
      %2960 = vmatprep.subr.bf16.mxu0 0
      %2961 = vmatpush1.bf16.xpose.msra.mxu0 %v2950
      %2962 = vmatprep.subr.bf16.mxu0 0
      %2963 = vmatpush1.bf16.xpose.msra.mxu0 %v2953
      %2964 = vmatprep.subr.bf16.mxu0 0
      %2965 = vmatpush1.bf16.xpose.msra.mxu0 %v2956
      %2966 = vmatprep.subr.bf16.mxu0 0
      %2967 = vmatpush1.bf16.xpose.msra.mxu0 0
      %2968 = vmatprep.subr.bf16.mxu0 0
      %2969 = vmatpush1.bf16.xpose.msra.mxu0 0
      %2970 = vmatprep.subr.bf16.mxu0 0
      %2971 = vmatpush1.bf16.xpose.msra.mxu0 0
      %2972 = vmatprep.subr.bf16.mxu0 0
      %2973 = vmatpush1.bf16.xpose.msra.mxu0 0
      %2974 = vmatprep.subr.bf16.mxu0 0
      %2975 = vmatpush1.bf16.xpose.msra.mxu0 0
      %2976 = vmatprep.subr.bf16.mxu0 0
      %2977 = vmatpush1.bf16.xpose.msra.mxu0 0
      %2978 = vmatprep.subr.bf16.mxu0 0
      %2979 = vmatpush1.bf16.xpose.msra.mxu0 0
      %2980 = vmatprep.subr.bf16.mxu0 0
      %2981 = vmatpush1.bf16.xpose.msra.mxu0 0
      %2982 = vmatprep.subr.bf16.mxu0 0
      %2983 = vmatpush1.bf16.xpose.msra.mxu0 0
      %2984 = vmatprep.subr.bf16.mxu0 0
      %2985 = vmatpush1.bf16.xpose.msra.mxu0 0
      %2986 = vmatprep.subr.bf16.mxu0 0
      %2987 = vmatpush1.bf16.xpose.msra.mxu0 0
      %2988 = vmatprep.subr.bf16.mxu0 0
      %2989 = vmatpush1.bf16.xpose.msra.mxu0 0
      %2990 = vmatprep.mubr.bf16.mxu0 0
      %2991 = vmatmul.mubr.bf16.gmra.mrb[0].mxu0 %v2935
      %v2992 = vpop.f32.mrb[0].mxu0
      %v2993 = vadd.f32 0.0, %v2992
      %v2994 = vpop.f32.mrb[0].mxu0
      %v2995 = vpop.f32.mrb[0].mxu0
      %v2996 = vadd.f32 0.0, %v2995
      %v2997 = vpop.f32.mrb[0].mxu0
      %2998 = vmatprep.mubr.bf16.mxu0 0
      %2999 = vmatmul.mubr.bf16.gmra.mrb[0].mxu0 %v2938
      %v3000 = vpop.f32.mrb[0].mxu0
      %v3001 = vadd.f32 0.0, %v3000
      %v3002 = vpop.f32.mrb[0].mxu0
      %v3003 = vpop.f32.mrb[0].mxu0
      %v3004 = vadd.f32 0.0, %v3003
      %v3005 = vpop.f32.mrb[0].mxu0
      %3006 = vmatprep.mubr.bf16.mxu0 0
      %3007 = vmatmul.mubr.bf16.gmra.mrb[0].mxu0 %v2941
      %v3008 = vpop.f32.mrb[0].mxu0
      %v3009 = vadd.f32 0.0, %v3008
      %v3010 = vpop.f32.mrb[0].mxu0
      %v3011 = vpop.f32.mrb[0].mxu0
      %v3012 = vadd.f32 0.0, %v3011
      %v3013 = vpop.f32.mrb[0].mxu0
      %3014 = vmatprep.mubr.bf16.mxu0 0
      %3015 = vmatmul.mubr.bf16.gmra.mrb[0].mxu0 %v2944
      %v3016 = vpop.f32.mrb[0].mxu0
      %v3017 = vadd.f32 0.0, %v3016
      %v3018 = vpop.f32.mrb[0].mxu0
      %v3019 = vpop.f32.mrb[0].mxu0
      %v3020 = vpop.f32.mrb[0].mxu0
      %3021 = vdwg.mxu0
      %v3022 = vpack.c.b16 %v1169, %v1168
      %v3023 = vpack.c.b16 %v1171, %v1170
      %v3024 = vpack.c.b16 %v1173, %v1172
      %v3025 = vpack.c.b16 %v1174, %v1174
      %3026 = vrot.lane.b32.xlu0 %v3022, 64
      %v3027 = vpop.permute.xlu0 %3026
      %3028 = vrot.lane.b32.xlu0 %v3023, 64
      %v3029 = vpop.permute.xlu0 %3028
      %3030 = vrot.lane.b32.xlu0 %v3024, 64
      %v3031 = vpop.permute.xlu0 %3030
      %3032 = vrot.lane.b32.xlu0 %v3025, 64
      %v3033 = vpop.permute.xlu0 %3032
      %v3035 = vsel %vm1733, %v3022, 0
      %v3038 = vsel %vm1733, %v3023, 0
      %v3041 = vsel %vm1733, %v3024, 0
      %v3044 = vsel %vm1733, %v3025, 0
      %v3047 = vsel %vm1733, %v3027, 0
      %v3050 = vsel %vm1733, %v3029, 0
      %v3053 = vsel %vm1733, %v3031, 0
      %v3056 = vsel %vm1733, %v3033, 0
      %3058 = vmatprep.subr.bf16.mxu0 0
      %3059 = vmatpush1.bf16.xpose.msra.mxu0 %v3047
      %3060 = vmatprep.subr.bf16.mxu0 0
      %3061 = vmatpush1.bf16.xpose.msra.mxu0 %v3050
      %3062 = vmatprep.subr.bf16.mxu0 0
      %3063 = vmatpush1.bf16.xpose.msra.mxu0 %v3053
      %3064 = vmatprep.subr.bf16.mxu0 0
      %3065 = vmatpush1.bf16.xpose.msra.mxu0 %v3056
      %3066 = vmatprep.subr.bf16.mxu0 0
      %3067 = vmatpush1.bf16.xpose.msra.mxu0 0
      %3068 = vmatprep.subr.bf16.mxu0 0
      %3069 = vmatpush1.bf16.xpose.msra.mxu0 0
      %3070 = vmatprep.subr.bf16.mxu0 0
      %3071 = vmatpush1.bf16.xpose.msra.mxu0 0
      %3072 = vmatprep.subr.bf16.mxu0 0
      %3073 = vmatpush1.bf16.xpose.msra.mxu0 0
      %3074 = vmatprep.subr.bf16.mxu0 0
      %3075 = vmatpush1.bf16.xpose.msra.mxu0 0
      %3076 = vmatprep.subr.bf16.mxu0 0
      %3077 = vmatpush1.bf16.xpose.msra.mxu0 0
      %3078 = vmatprep.subr.bf16.mxu0 0
      %3079 = vmatpush1.bf16.xpose.msra.mxu0 0
      %3080 = vmatprep.subr.bf16.mxu0 0
      %3081 = vmatpush1.bf16.xpose.msra.mxu0 0
      %3082 = vmatprep.subr.bf16.mxu0 0
      %3083 = vmatpush1.bf16.xpose.msra.mxu0 0
      %3084 = vmatprep.subr.bf16.mxu0 0
      %3085 = vmatpush1.bf16.xpose.msra.mxu0 0
      %3086 = vmatprep.subr.bf16.mxu0 0
      %3087 = vmatpush1.bf16.xpose.msra.mxu0 0
      %3088 = vmatprep.subr.bf16.mxu0 0
      %3089 = vmatpush1.bf16.xpose.msra.mxu0 0
      %3090 = vmatprep.mubr.bf16.mxu0 0
      %3091 = vmatmul.mubr.bf16.gmra.mrb[0].mxu0 %v3035
      %v3092 = vpop.f32.mrb[0].mxu0
      %v3093 = vadd.f32 0.0, %v3092
      %v3094 = vpop.f32.mrb[0].mxu0
      %v3095 = vpop.f32.mrb[0].mxu0
      %v3096 = vadd.f32 0.0, %v3095
      %v3097 = vpop.f32.mrb[0].mxu0
      %3098 = vmatprep.mubr.bf16.mxu0 0
      %3099 = vmatmul.mubr.bf16.gmra.mrb[0].mxu0 %v3038
      %v3100 = vpop.f32.mrb[0].mxu0
      %v3101 = vadd.f32 0.0, %v3100
      %v3102 = vpop.f32.mrb[0].mxu0
      %v3103 = vpop.f32.mrb[0].mxu0
      %v3104 = vadd.f32 0.0, %v3103
      %v3105 = vpop.f32.mrb[0].mxu0
      %3106 = vmatprep.mubr.bf16.mxu0 0
      %3107 = vmatmul.mubr.bf16.gmra.mrb[0].mxu0 %v3041
      %v3108 = vpop.f32.mrb[0].mxu0
      %v3109 = vadd.f32 0.0, %v3108
      %v3110 = vpop.f32.mrb[0].mxu0
      %v3111 = vpop.f32.mrb[0].mxu0
      %v3112 = vadd.f32 0.0, %v3111
      %v3113 = vpop.f32.mrb[0].mxu0
      %3114 = vmatprep.mubr.bf16.mxu0 0
      %3115 = vmatmul.mubr.bf16.gmra.mrb[0].mxu0 %v3044
      %v3116 = vpop.f32.mrb[0].mxu0
      %v3117 = vadd.f32 0.0, %v3116
      %v3118 = vpop.f32.mrb[0].mxu0
      %v3119 = vpop.f32.mrb[0].mxu0
      %v3120 = vpop.f32.mrb[0].mxu0
      %3121 = vdwg.mxu0
      %v3122 = vpack.c.b16 %v1176, %v1175
      %v3123 = vpack.c.b16 %v1178, %v1177
      %v3124 = vpack.c.b16 %v1180, %v1179
      %v3125 = vpack.c.b16 %v1181, %v1181
      %3126 = vrot.lane.b32.xlu0 %v3122, 64
      %v3127 = vpop.permute.xlu0 %3126
      %3128 = vrot.lane.b32.xlu0 %v3123, 64
      %v3129 = vpop.permute.xlu0 %3128
      %3130 = vrot.lane.b32.xlu0 %v3124, 64
      %v3131 = vpop.permute.xlu0 %3130
      %3132 = vrot.lane.b32.xlu0 %v3125, 64
      %v3133 = vpop.permute.xlu0 %3132
      %v3135 = vsel %vm1733, %v3122, 0
      %v3138 = vsel %vm1733, %v3123, 0
      %v3141 = vsel %vm1733, %v3124, 0
      %v3144 = vsel %vm1733, %v3125, 0
      %v3147 = vsel %vm1733, %v3127, 0
      %v3150 = vsel %vm1733, %v3129, 0
      %v3153 = vsel %vm1733, %v3131, 0
      %v3156 = vsel %vm1733, %v3133, 0
      %3158 = vmatprep.subr.bf16.mxu0 0
      %3159 = vmatpush1.bf16.xpose.msra.mxu0 %v3147
      %3160 = vmatprep.subr.bf16.mxu0 0
      %3161 = vmatpush1.bf16.xpose.msra.mxu0 %v3150
      %3162 = vmatprep.subr.bf16.mxu0 0
      %3163 = vmatpush1.bf16.xpose.msra.mxu0 %v3153
      %3164 = vmatprep.subr.bf16.mxu0 0
      %3165 = vmatpush1.bf16.xpose.msra.mxu0 %v3156
      %3166 = vmatprep.subr.bf16.mxu0 0
      %3167 = vmatpush1.bf16.xpose.msra.mxu0 0
      %3168 = vmatprep.subr.bf16.mxu0 0
      %3169 = vmatpush1.bf16.xpose.msra.mxu0 0
      %3170 = vmatprep.subr.bf16.mxu0 0
      %3171 = vmatpush1.bf16.xpose.msra.mxu0 0
      %3172 = vmatprep.subr.bf16.mxu0 0
      %3173 = vmatpush1.bf16.xpose.msra.mxu0 0
      %3174 = vmatprep.subr.bf16.mxu0 0
      %3175 = vmatpush1.bf16.xpose.msra.mxu0 0
      %3176 = vmatprep.subr.bf16.mxu0 0
      %3177 = vmatpush1.bf16.xpose.msra.mxu0 0
      %3178 = vmatprep.subr.bf16.mxu0 0
      %3179 = vmatpush1.bf16.xpose.msra.mxu0 0
      %3180 = vmatprep.subr.bf16.mxu0 0
      %3181 = vmatpush1.bf16.xpose.msra.mxu0 0
      %3182 = vmatprep.subr.bf16.mxu0 0
      %3183 = vmatpush1.bf16.xpose.msra.mxu0 0
      %3184 = vmatprep.subr.bf16.mxu0 0
      %3185 = vmatpush1.bf16.xpose.msra.mxu0 0
      %3186 = vmatprep.subr.bf16.mxu0 0
      %3187 = vmatpush1.bf16.xpose.msra.mxu0 0
      %3188 = vmatprep.subr.bf16.mxu0 0
      %3189 = vmatpush1.bf16.xpose.msra.mxu0 0
      %3190 = vmatprep.mubr.bf16.mxu0 0
      %3191 = vmatmul.mubr.bf16.gmra.mrb[0].mxu0 %v3135
      %v3192 = vpop.f32.mrb[0].mxu0
      %v3193 = vadd.f32 0.0, %v3192
      %v3194 = vpop.f32.mrb[0].mxu0
      %v3195 = vpop.f32.mrb[0].mxu0
      %v3196 = vadd.f32 0.0, %v3195
      %v3197 = vpop.f32.mrb[0].mxu0
      %3198 = vmatprep.mubr.bf16.mxu0 0
      %3199 = vmatmul.mubr.bf16.gmra.mrb[0].mxu0 %v3138
      %v3200 = vpop.f32.mrb[0].mxu0
      %v3201 = vadd.f32 0.0, %v3200
      %v3202 = vpop.f32.mrb[0].mxu0
      %v3203 = vpop.f32.mrb[0].mxu0
      %v3204 = vadd.f32 0.0, %v3203
      %v3205 = vpop.f32.mrb[0].mxu0
      %3206 = vmatprep.mubr.bf16.mxu0 0
      %3207 = vmatmul.mubr.bf16.gmra.mrb[0].mxu0 %v3141
      %v3208 = vpop.f32.mrb[0].mxu0
      %v3209 = vadd.f32 0.0, %v3208
      %v3210 = vpop.f32.mrb[0].mxu0
      %v3211 = vpop.f32.mrb[0].mxu0
      %v3212 = vadd.f32 0.0, %v3211
      %v3213 = vpop.f32.mrb[0].mxu0
      %3214 = vmatprep.mubr.bf16.mxu0 0
      %3215 = vmatmul.mubr.bf16.gmra.mrb[0].mxu0 %v3144
      %v3216 = vpop.f32.mrb[0].mxu0
      %v3217 = vadd.f32 0.0, %v3216
      %v3218 = vpop.f32.mrb[0].mxu0
      %v3219 = vpop.f32.mrb[0].mxu0
      %v3220 = vpop.f32.mrb[0].mxu0
      %3221 = vdwg.mxu0
      %v3222 = vpack.c.b16 %v1183, %v1182
      %v3223 = vpack.c.b16 %v1185, %v1184
      %v3224 = vpack.c.b16 %v1187, %v1186
      %v3225 = vpack.c.b16 %v1188, %v1188
      %3226 = vrot.lane.b32.xlu0 %v3222, 64
      %v3227 = vpop.permute.xlu0 %3226
      %3228 = vrot.lane.b32.xlu0 %v3223, 64
      %v3229 = vpop.permute.xlu0 %3228
      %3230 = vrot.lane.b32.xlu0 %v3224, 64
      %v3231 = vpop.permute.xlu0 %3230
      %3232 = vrot.lane.b32.xlu0 %v3225, 64
      %v3233 = vpop.permute.xlu0 %3232
      %v3235 = vsel %vm1733, %v3222, 0
      %v3238 = vsel %vm1733, %v3223, 0
      %v3241 = vsel %vm1733, %v3224, 0
      %v3244 = vsel %vm1733, %v3225, 0
      %v3247 = vsel %vm1733, %v3227, 0
      %v3250 = vsel %vm1733, %v3229, 0
      %v3253 = vsel %vm1733, %v3231, 0
      %v3256 = vsel %vm1733, %v3233, 0
      %3258 = vmatprep.subr.bf16.mxu0 0
      %3259 = vmatpush1.bf16.xpose.msra.mxu0 %v3247
      %3260 = vmatprep.subr.bf16.mxu0 0
      %3261 = vmatpush1.bf16.xpose.msra.mxu0 %v3250
      %3262 = vmatprep.subr.bf16.mxu0 0
      %3263 = vmatpush1.bf16.xpose.msra.mxu0 %v3253
      %3264 = vmatprep.subr.bf16.mxu0 0
      %3265 = vmatpush1.bf16.xpose.msra.mxu0 %v3256
      %3266 = vmatprep.subr.bf16.mxu0 0
      %3267 = vmatpush1.bf16.xpose.msra.mxu0 0
      %3268 = vmatprep.subr.bf16.mxu0 0
      %3269 = vmatpush1.bf16.xpose.msra.mxu0 0
      %3270 = vmatprep.subr.bf16.mxu0 0
      %3271 = vmatpush1.bf16.xpose.msra.mxu0 0
      %3272 = vmatprep.subr.bf16.mxu0 0
      %3273 = vmatpush1.bf16.xpose.msra.mxu0 0
      %3274 = vmatprep.subr.bf16.mxu0 0
      %3275 = vmatpush1.bf16.xpose.msra.mxu0 0
      %3276 = vmatprep.subr.bf16.mxu0 0
      %3277 = vmatpush1.bf16.xpose.msra.mxu0 0
      %3278 = vmatprep.subr.bf16.mxu0 0
      %3279 = vmatpush1.bf16.xpose.msra.mxu0 0
      %3280 = vmatprep.subr.bf16.mxu0 0
      %3281 = vmatpush1.bf16.xpose.msra.mxu0 0
      %3282 = vmatprep.subr.bf16.mxu0 0
      %3283 = vmatpush1.bf16.xpose.msra.mxu0 0
      %3284 = vmatprep.subr.bf16.mxu0 0
      %3285 = vmatpush1.bf16.xpose.msra.mxu0 0
      %3286 = vmatprep.subr.bf16.mxu0 0
      %3287 = vmatpush1.bf16.xpose.msra.mxu0 0
      %3288 = vmatprep.subr.bf16.mxu0 0
      %3289 = vmatpush1.bf16.xpose.msra.mxu0 0
      %3290 = vmatprep.mubr.bf16.mxu0 0
      %3291 = vmatmul.mubr.bf16.gmra.mrb[0].mxu0 %v3235
      %v3292 = vpop.f32.mrb[0].mxu0
      %v3293 = vadd.f32 0.0, %v3292
      %v3294 = vpop.f32.mrb[0].mxu0
      %v3295 = vpop.f32.mrb[0].mxu0
      %v3296 = vadd.f32 0.0, %v3295
      %v3297 = vpop.f32.mrb[0].mxu0
      %3298 = vmatprep.mubr.bf16.mxu0 0
      %3299 = vmatmul.mubr.bf16.gmra.mrb[0].mxu0 %v3238
      %v3300 = vpop.f32.mrb[0].mxu0
      %v3301 = vadd.f32 0.0, %v3300
      %v3302 = vpop.f32.mrb[0].mxu0
      %v3303 = vpop.f32.mrb[0].mxu0
      %v3304 = vadd.f32 0.0, %v3303
      %v3305 = vpop.f32.mrb[0].mxu0
      %3306 = vmatprep.mubr.bf16.mxu0 0
      %3307 = vmatmul.mubr.bf16.gmra.mrb[0].mxu0 %v3241
      %v3308 = vpop.f32.mrb[0].mxu0
      %v3309 = vadd.f32 0.0, %v3308
      %v3310 = vpop.f32.mrb[0].mxu0
      %v3311 = vpop.f32.mrb[0].mxu0
      %v3312 = vadd.f32 0.0, %v3311
      %v3313 = vpop.f32.mrb[0].mxu0
      %3314 = vmatprep.mubr.bf16.mxu0 0
      %3315 = vmatmul.mubr.bf16.gmra.mrb[0].mxu0 %v3244
      %v3316 = vpop.f32.mrb[0].mxu0
      %v3317 = vadd.f32 0.0, %v3316
      %v3318 = vpop.f32.mrb[0].mxu0
      %v3319 = vpop.f32.mrb[0].mxu0
      %v3320 = vpop.f32.mrb[0].mxu0
      %3321 = vdwg.mxu0
      %v3322 = vpack.c.b16 %v1190, %v1189
      %v3323 = vpack.c.b16 %v1192, %v1191
      %v3324 = vpack.c.b16 %v1194, %v1193
      %v3325 = vpack.c.b16 %v1195, %v1195
      %3326 = vrot.lane.b32.xlu0 %v3322, 64
      %v3327 = vpop.permute.xlu0 %3326
      %3328 = vrot.lane.b32.xlu0 %v3323, 64
      %v3329 = vpop.permute.xlu0 %3328
      %3330 = vrot.lane.b32.xlu0 %v3324, 64
      %v3331 = vpop.permute.xlu0 %3330
      %3332 = vrot.lane.b32.xlu0 %v3325, 64
      %v3333 = vpop.permute.xlu0 %3332
      %v3335 = vsel %vm1733, %v3322, 0
      %v3338 = vsel %vm1733, %v3323, 0
      %v3341 = vsel %vm1733, %v3324, 0
      %v3344 = vsel %vm1733, %v3325, 0
      %v3347 = vsel %vm1733, %v3327, 0
      %v3350 = vsel %vm1733, %v3329, 0
      %v3353 = vsel %vm1733, %v3331, 0
      %v3356 = vsel %vm1733, %v3333, 0
      %3358 = vmatprep.subr.bf16.mxu0 0
      %3359 = vmatpush1.bf16.xpose.msra.mxu0 %v3347
      %3360 = vmatprep.subr.bf16.mxu0 0
      %3361 = vmatpush1.bf16.xpose.msra.mxu0 %v3350
      %3362 = vmatprep.subr.bf16.mxu0 0
      %3363 = vmatpush1.bf16.xpose.msra.mxu0 %v3353
      %3364 = vmatprep.subr.bf16.mxu0 0
      %3365 = vmatpush1.bf16.xpose.msra.mxu0 %v3356
      %3366 = vmatprep.subr.bf16.mxu0 0
      %3367 = vmatpush1.bf16.xpose.msra.mxu0 0
      %3368 = vmatprep.subr.bf16.mxu0 0
      %3369 = vmatpush1.bf16.xpose.msra.mxu0 0
      %3370 = vmatprep.subr.bf16.mxu0 0
      %3371 = vmatpush1.bf16.xpose.msra.mxu0 0
      %3372 = vmatprep.subr.bf16.mxu0 0
      %3373 = vmatpush1.bf16.xpose.msra.mxu0 0
      %3374 = vmatprep.subr.bf16.mxu0 0
      %3375 = vmatpush1.bf16.xpose.msra.mxu0 0
      %3376 = vmatprep.subr.bf16.mxu0 0
      %3377 = vmatpush1.bf16.xpose.msra.mxu0 0
      %3378 = vmatprep.subr.bf16.mxu0 0
      %3379 = vmatpush1.bf16.xpose.msra.mxu0 0
      %3380 = vmatprep.subr.bf16.mxu0 0
      %3381 = vmatpush1.bf16.xpose.msra.mxu0 0
      %3382 = vmatprep.subr.bf16.mxu0 0
      %3383 = vmatpush1.bf16.xpose.msra.mxu0 0
      %3384 = vmatprep.subr.bf16.mxu0 0
      %3385 = vmatpush1.bf16.xpose.msra.mxu0 0
      %3386 = vmatprep.subr.bf16.mxu0 0
      %3387 = vmatpush1.bf16.xpose.msra.mxu0 0
      %3388 = vmatprep.subr.bf16.mxu0 0
      %3389 = vmatpush1.bf16.xpose.msra.mxu0 0
      %3390 = vmatprep.mubr.bf16.mxu0 0
      %3391 = vmatmul.mubr.bf16.gmra.mrb[0].mxu0 %v3335
      %v3392 = vpop.f32.mrb[0].mxu0
      %v3393 = vadd.f32 0.0, %v3392
      %v3394 = vpop.f32.mrb[0].mxu0
      %v3395 = vpop.f32.mrb[0].mxu0
      %v3396 = vadd.f32 0.0, %v3395
      %v3397 = vpop.f32.mrb[0].mxu0
      %3398 = vmatprep.mubr.bf16.mxu0 0
      %3399 = vmatmul.mubr.bf16.gmra.mrb[0].mxu0 %v3338
      %v3400 = vpop.f32.mrb[0].mxu0
      %v3401 = vadd.f32 0.0, %v3400
      %v3402 = vpop.f32.mrb[0].mxu0
      %v3403 = vpop.f32.mrb[0].mxu0
      %v3404 = vadd.f32 0.0, %v3403
      %v3405 = vpop.f32.mrb[0].mxu0
      %3406 = vmatprep.mubr.bf16.mxu0 0
      %3407 = vmatmul.mubr.bf16.gmra.mrb[0].mxu0 %v3341
      %v3408 = vpop.f32.mrb[0].mxu0
      %v3409 = vadd.f32 0.0, %v3408
      %v3410 = vpop.f32.mrb[0].mxu0
      %v3411 = vpop.f32.mrb[0].mxu0
      %v3412 = vadd.f32 0.0, %v3411
      %v3413 = vpop.f32.mrb[0].mxu0
      %3414 = vmatprep.mubr.bf16.mxu0 0
      %3415 = vmatmul.mubr.bf16.gmra.mrb[0].mxu0 %v3344
      %v3416 = vpop.f32.mrb[0].mxu0
      %v3417 = vadd.f32 0.0, %v3416
      %v3418 = vpop.f32.mrb[0].mxu0
      %v3419 = vpop.f32.mrb[0].mxu0
      %v3420 = vpop.f32.mrb[0].mxu0
      %3421 = vdwg.mxu0
      %v3422 = vpack.c.b16 %v1197, %v1196
      %v3423 = vpack.c.b16 %v1199, %v1198
      %v3424 = vpack.c.b16 %v1201, %v1200
      %v3425 = vpack.c.b16 %v1202, %v1202
      %3426 = vrot.lane.b32.xlu0 %v3422, 64
      %v3427 = vpop.permute.xlu0 %3426
      %3428 = vrot.lane.b32.xlu0 %v3423, 64
      %v3429 = vpop.permute.xlu0 %3428
      %3430 = vrot.lane.b32.xlu0 %v3424, 64
      %v3431 = vpop.permute.xlu0 %3430
      %3432 = vrot.lane.b32.xlu0 %v3425, 64
      %v3433 = vpop.permute.xlu0 %3432
      %v3435 = vsel %vm1733, %v3422, 0
      %v3438 = vsel %vm1733, %v3423, 0
      %v3441 = vsel %vm1733, %v3424, 0
      %v3444 = vsel %vm1733, %v3425, 0
      %v3447 = vsel %vm1733, %v3427, 0
      %v3450 = vsel %vm1733, %v3429, 0
      %v3453 = vsel %vm1733, %v3431, 0
      %v3456 = vsel %vm1733, %v3433, 0
      %3458 = vmatprep.subr.bf16.mxu0 0
      %3459 = vmatpush1.bf16.xpose.msra.mxu0 %v3447
      %3460 = vmatprep.subr.bf16.mxu0 0
      %3461 = vmatpush1.bf16.xpose.msra.mxu0 %v3450
      %3462 = vmatprep.subr.bf16.mxu0 0
      %3463 = vmatpush1.bf16.xpose.msra.mxu0 %v3453
      %3464 = vmatprep.subr.bf16.mxu0 0
      %3465 = vmatpush1.bf16.xpose.msra.mxu0 %v3456
      %3466 = vmatprep.subr.bf16.mxu0 0
      %3467 = vmatpush1.bf16.xpose.msra.mxu0 0
      %3468 = vmatprep.subr.bf16.mxu0 0
      %3469 = vmatpush1.bf16.xpose.msra.mxu0 0
      %3470 = vmatprep.subr.bf16.mxu0 0
      %3471 = vmatpush1.bf16.xpose.msra.mxu0 0
      %3472 = vmatprep.subr.bf16.mxu0 0
      %3473 = vmatpush1.bf16.xpose.msra.mxu0 0
      %3474 = vmatprep.subr.bf16.mxu0 0
      %3475 = vmatpush1.bf16.xpose.msra.mxu0 0
      %3476 = vmatprep.subr.bf16.mxu0 0
      %3477 = vmatpush1.bf16.xpose.msra.mxu0 0
      %3478 = vmatprep.subr.bf16.mxu0 0
      %3479 = vmatpush1.bf16.xpose.msra.mxu0 0
      %3480 = vmatprep.subr.bf16.mxu0 0
      %3481 = vmatpush1.bf16.xpose.msra.mxu0 0
      %3482 = vmatprep.subr.bf16.mxu0 0
      %3483 = vmatpush1.bf16.xpose.msra.mxu0 0
      %3484 = vmatprep.subr.bf16.mxu0 0
      %3485 = vmatpush1.bf16.xpose.msra.mxu0 0
      %3486 = vmatprep.subr.bf16.mxu0 0
      %3487 = vmatpush1.bf16.xpose.msra.mxu0 0
      %3488 = vmatprep.subr.bf16.mxu0 0
      %3489 = vmatpush1.bf16.xpose.msra.mxu0 0
      %3490 = vmatprep.mubr.bf16.mxu0 0
      %3491 = vmatmul.mubr.bf16.gmra.mrb[0].mxu0 %v3435
      %v3492 = vpop.f32.mrb[0].mxu0
      %v3493 = vadd.f32 0.0, %v3492
      %v3494 = vpop.f32.mrb[0].mxu0
      %v3495 = vpop.f32.mrb[0].mxu0
      %v3496 = vadd.f32 0.0, %v3495
      %v3497 = vpop.f32.mrb[0].mxu0
      %3498 = vmatprep.mubr.bf16.mxu0 0
      %3499 = vmatmul.mubr.bf16.gmra.mrb[0].mxu0 %v3438
      %v3500 = vpop.f32.mrb[0].mxu0
      %v3501 = vadd.f32 0.0, %v3500
      %v3502 = vpop.f32.mrb[0].mxu0
      %v3503 = vpop.f32.mrb[0].mxu0
      %v3504 = vadd.f32 0.0, %v3503
      %v3505 = vpop.f32.mrb[0].mxu0
      %3506 = vmatprep.mubr.bf16.mxu0 0
      %3507 = vmatmul.mubr.bf16.gmra.mrb[0].mxu0 %v3441
      %v3508 = vpop.f32.mrb[0].mxu0
      %v3509 = vadd.f32 0.0, %v3508
      %v3510 = vpop.f32.mrb[0].mxu0
      %v3511 = vpop.f32.mrb[0].mxu0
      %v3512 = vadd.f32 0.0, %v3511
      %v3513 = vpop.f32.mrb[0].mxu0
      %3514 = vmatprep.mubr.bf16.mxu0 0
      %3515 = vmatmul.mubr.bf16.gmra.mrb[0].mxu0 %v3444
      %v3516 = vpop.f32.mrb[0].mxu0
      %v3517 = vadd.f32 0.0, %v3516
      %v3518 = vpop.f32.mrb[0].mxu0
      %v3519 = vpop.f32.mrb[0].mxu0
      %v3520 = vpop.f32.mrb[0].mxu0
      %3521 = vdwg.mxu0
      %v3522 = vpack.c.b16 %v1204, %v1203
      %v3523 = vpack.c.b16 %v1206, %v1205
      %v3524 = vpack.c.b16 %v1208, %v1207
      %v3525 = vpack.c.b16 %v1209, %v1209
      %3526 = vrot.lane.b32.xlu0 %v3522, 64
      %v3527 = vpop.permute.xlu0 %3526
      %3528 = vrot.lane.b32.xlu0 %v3523, 64
      %v3529 = vpop.permute.xlu0 %3528
      %3530 = vrot.lane.b32.xlu0 %v3524, 64
      %v3531 = vpop.permute.xlu0 %3530
      %3532 = vrot.lane.b32.xlu0 %v3525, 64
      %v3533 = vpop.permute.xlu0 %3532
      %v3535 = vsel %vm1733, %v3522, 0
      %v3538 = vsel %vm1733, %v3523, 0
      %v3541 = vsel %vm1733, %v3524, 0
      %v3544 = vsel %vm1733, %v3525, 0
      %v3547 = vsel %vm1733, %v3527, 0
      %v3550 = vsel %vm1733, %v3529, 0
      %v3553 = vsel %vm1733, %v3531, 0
      %v3556 = vsel %vm1733, %v3533, 0
      %3558 = vmatprep.subr.bf16.mxu0 0
      %3559 = vmatpush1.bf16.xpose.msra.mxu0 %v3547
      %3560 = vmatprep.subr.bf16.mxu0 0
      %3561 = vmatpush1.bf16.xpose.msra.mxu0 %v3550
      %3562 = vmatprep.subr.bf16.mxu0 0
      %3563 = vmatpush1.bf16.xpose.msra.mxu0 %v3553
      %3564 = vmatprep.subr.bf16.mxu0 0
      %3565 = vmatpush1.bf16.xpose.msra.mxu0 %v3556
      %3566 = vmatprep.subr.bf16.mxu0 0
      %3567 = vmatpush1.bf16.xpose.msra.mxu0 0
      %3568 = vmatprep.subr.bf16.mxu0 0
      %3569 = vmatpush1.bf16.xpose.msra.mxu0 0
      %3570 = vmatprep.subr.bf16.mxu0 0
      %3571 = vmatpush1.bf16.xpose.msra.mxu0 0
      %3572 = vmatprep.subr.bf16.mxu0 0
      %3573 = vmatpush1.bf16.xpose.msra.mxu0 0
      %3574 = vmatprep.subr.bf16.mxu0 0
      %3575 = vmatpush1.bf16.xpose.msra.mxu0 0
      %3576 = vmatprep.subr.bf16.mxu0 0
      %3577 = vmatpush1.bf16.xpose.msra.mxu0 0
      %3578 = vmatprep.subr.bf16.mxu0 0
      %3579 = vmatpush1.bf16.xpose.msra.mxu0 0
      %3580 = vmatprep.subr.bf16.mxu0 0
      %3581 = vmatpush1.bf16.xpose.msra.mxu0 0
      %3582 = vmatprep.subr.bf16.mxu0 0
      %3583 = vmatpush1.bf16.xpose.msra.mxu0 0
      %3584 = vmatprep.subr.bf16.mxu0 0
      %3585 = vmatpush1.bf16.xpose.msra.mxu0 0
      %3586 = vmatprep.subr.bf16.mxu0 0
      %3587 = vmatpush1.bf16.xpose.msra.mxu0 0
      %3588 = vmatprep.subr.bf16.mxu0 0
      %3589 = vmatpush1.bf16.xpose.msra.mxu0 0
      %3590 = vmatprep.mubr.bf16.mxu0 0
      %3591 = vmatmul.mubr.bf16.gmra.mrb[0].mxu0 %v3535
      %v3592 = vpop.f32.mrb[0].mxu0
      %v3593 = vadd.f32 0.0, %v3592
      %v3594 = vpop.f32.mrb[0].mxu0
      %v3595 = vpop.f32.mrb[0].mxu0
      %v3596 = vadd.f32 0.0, %v3595
      %v3597 = vpop.f32.mrb[0].mxu0
      %3598 = vmatprep.mubr.bf16.mxu0 0
      %3599 = vmatmul.mubr.bf16.gmra.mrb[0].mxu0 %v3538
      %v3600 = vpop.f32.mrb[0].mxu0
      %v3601 = vadd.f32 0.0, %v3600
      %v3602 = vpop.f32.mrb[0].mxu0
      %v3603 = vpop.f32.mrb[0].mxu0
      %v3604 = vadd.f32 0.0, %v3603
      %v3605 = vpop.f32.mrb[0].mxu0
      %3606 = vmatprep.mubr.bf16.mxu0 0
      %3607 = vmatmul.mubr.bf16.gmra.mrb[0].mxu0 %v3541
      %v3608 = vpop.f32.mrb[0].mxu0
      %v3609 = vadd.f32 0.0, %v3608
      %v3610 = vpop.f32.mrb[0].mxu0
      %v3611 = vpop.f32.mrb[0].mxu0
      %v3612 = vadd.f32 0.0, %v3611
      %v3613 = vpop.f32.mrb[0].mxu0
      %3614 = vmatprep.mubr.bf16.mxu0 0
      %3615 = vmatmul.mubr.bf16.gmra.mrb[0].mxu0 %v3544
      %v3616 = vpop.f32.mrb[0].mxu0
      %v3617 = vadd.f32 0.0, %v3616
      %v3618 = vpop.f32.mrb[0].mxu0
      %v3619 = vpop.f32.mrb[0].mxu0
      %v3620 = vpop.f32.mrb[0].mxu0
      %3621 = vdwg.mxu0
      %v3622 = vpack.c.b16 %v1211, %v1210
      %v3623 = vpack.c.b16 %v1213, %v1212
      %v3624 = vpack.c.b16 %v1215, %v1214
      %v3625 = vpack.c.b16 %v1216, %v1216
      %3626 = vrot.lane.b32.xlu0 %v3622, 64
      %v3627 = vpop.permute.xlu0 %3626
      %3628 = vrot.lane.b32.xlu0 %v3623, 64
      %v3629 = vpop.permute.xlu0 %3628
      %3630 = vrot.lane.b32.xlu0 %v3624, 64
      %v3631 = vpop.permute.xlu0 %3630
      %3632 = vrot.lane.b32.xlu0 %v3625, 64
      %v3633 = vpop.permute.xlu0 %3632
      %v3635 = vsel %vm1733, %v3622, 0
      %v3638 = vsel %vm1733, %v3623, 0
      %v3641 = vsel %vm1733, %v3624, 0
      %v3644 = vsel %vm1733, %v3625, 0
      %v3647 = vsel %vm1733, %v3627, 0
      %v3650 = vsel %vm1733, %v3629, 0
      %v3653 = vsel %vm1733, %v3631, 0
      %v3656 = vsel %vm1733, %v3633, 0
      %3658 = vmatprep.subr.bf16.mxu0 0
      %3659 = vmatpush1.bf16.xpose.msra.mxu0 %v3647
      %3660 = vmatprep.subr.bf16.mxu0 0
      %3661 = vmatpush1.bf16.xpose.msra.mxu0 %v3650
      %3662 = vmatprep.subr.bf16.mxu0 0
      %3663 = vmatpush1.bf16.xpose.msra.mxu0 %v3653
      %3664 = vmatprep.subr.bf16.mxu0 0
      %3665 = vmatpush1.bf16.xpose.msra.mxu0 %v3656
      %3666 = vmatprep.subr.bf16.mxu0 0
      %3667 = vmatpush1.bf16.xpose.msra.mxu0 0
      %3668 = vmatprep.subr.bf16.mxu0 0
      %3669 = vmatpush1.bf16.xpose.msra.mxu0 0
      %3670 = vmatprep.subr.bf16.mxu0 0
      %3671 = vmatpush1.bf16.xpose.msra.mxu0 0
      %3672 = vmatprep.subr.bf16.mxu0 0
      %3673 = vmatpush1.bf16.xpose.msra.mxu0 0
      %3674 = vmatprep.subr.bf16.mxu0 0
      %3675 = vmatpush1.bf16.xpose.msra.mxu0 0
      %3676 = vmatprep.subr.bf16.mxu0 0
      %3677 = vmatpush1.bf16.xpose.msra.mxu0 0
      %3678 = vmatprep.subr.bf16.mxu0 0
      %3679 = vmatpush1.bf16.xpose.msra.mxu0 0
      %3680 = vmatprep.subr.bf16.mxu0 0
      %3681 = vmatpush1.bf16.xpose.msra.mxu0 0
      %3682 = vmatprep.subr.bf16.mxu0 0
      %3683 = vmatpush1.bf16.xpose.msra.mxu0 0
      %3684 = vmatprep.subr.bf16.mxu0 0
      %3685 = vmatpush1.bf16.xpose.msra.mxu0 0
      %3686 = vmatprep.subr.bf16.mxu0 0
      %3687 = vmatpush1.bf16.xpose.msra.mxu0 0
      %3688 = vmatprep.subr.bf16.mxu0 0
      %3689 = vmatpush1.bf16.xpose.msra.mxu0 0
      %3690 = vmatprep.mubr.bf16.mxu0 0
      %3691 = vmatmul.mubr.bf16.gmra.mrb[0].mxu0 %v3635
      %v3692 = vpop.f32.mrb[0].mxu0
      %v3693 = vadd.f32 0.0, %v3692
      %v3694 = vpop.f32.mrb[0].mxu0
      %v3695 = vpop.f32.mrb[0].mxu0
      %v3696 = vadd.f32 0.0, %v3695
      %v3697 = vpop.f32.mrb[0].mxu0
      %3698 = vmatprep.mubr.bf16.mxu0 0
      %3699 = vmatmul.mubr.bf16.gmra.mrb[0].mxu0 %v3638
      %v3700 = vpop.f32.mrb[0].mxu0
      %v3701 = vadd.f32 0.0, %v3700
      %v3702 = vpop.f32.mrb[0].mxu0
      %v3703 = vpop.f32.mrb[0].mxu0
      %v3704 = vadd.f32 0.0, %v3703
      %v3705 = vpop.f32.mrb[0].mxu0
      %3706 = vmatprep.mubr.bf16.mxu0 0
      %3707 = vmatmul.mubr.bf16.gmra.mrb[0].mxu0 %v3641
      %v3708 = vpop.f32.mrb[0].mxu0
      %v3709 = vadd.f32 0.0, %v3708
      %v3710 = vpop.f32.mrb[0].mxu0
      %v3711 = vpop.f32.mrb[0].mxu0
      %v3712 = vadd.f32 0.0, %v3711
      %v3713 = vpop.f32.mrb[0].mxu0
      %3714 = vmatprep.mubr.bf16.mxu0 0
      %3715 = vmatmul.mubr.bf16.gmra.mrb[0].mxu0 %v3644
      %v3716 = vpop.f32.mrb[0].mxu0
      %v3717 = vadd.f32 0.0, %v3716
      %v3718 = vpop.f32.mrb[0].mxu0
      %v3719 = vpop.f32.mrb[0].mxu0
      %v3720 = vpop.f32.mrb[0].mxu0
      %3721 = vdwg.mxu0
      %v3722 = vpack.c.b16 %v1218, %v1217
      %v3723 = vpack.c.b16 %v1220, %v1219
      %v3724 = vpack.c.b16 %v1222, %v1221
      %v3725 = vpack.c.b16 %v1223, %v1223
      %3726 = vrot.lane.b32.xlu0 %v3722, 64
      %v3727 = vpop.permute.xlu0 %3726
      %3728 = vrot.lane.b32.xlu0 %v3723, 64
      %v3729 = vpop.permute.xlu0 %3728
      %3730 = vrot.lane.b32.xlu0 %v3724, 64
      %v3731 = vpop.permute.xlu0 %3730
      %3732 = vrot.lane.b32.xlu0 %v3725, 64
      %v3733 = vpop.permute.xlu0 %3732
      %v3735 = vsel %vm1733, %v3722, 0
      %v3738 = vsel %vm1733, %v3723, 0
      %v3741 = vsel %vm1733, %v3724, 0
      %v3744 = vsel %vm1733, %v3725, 0
      %v3747 = vsel %vm1733, %v3727, 0
      %v3750 = vsel %vm1733, %v3729, 0
      %v3753 = vsel %vm1733, %v3731, 0
      %v3756 = vsel %vm1733, %v3733, 0
      %3758 = vmatprep.subr.bf16.mxu0 0
      %3759 = vmatpush1.bf16.xpose.msra.mxu0 %v3747
      %3760 = vmatprep.subr.bf16.mxu0 0
      %3761 = vmatpush1.bf16.xpose.msra.mxu0 %v3750
      %3762 = vmatprep.subr.bf16.mxu0 0
      %3763 = vmatpush1.bf16.xpose.msra.mxu0 %v3753
      %3764 = vmatprep.subr.bf16.mxu0 0
      %3765 = vmatpush1.bf16.xpose.msra.mxu0 %v3756
      %3766 = vmatprep.subr.bf16.mxu0 0
      %3767 = vmatpush1.bf16.xpose.msra.mxu0 0
      %3768 = vmatprep.subr.bf16.mxu0 0
      %3769 = vmatpush1.bf16.xpose.msra.mxu0 0
      %3770 = vmatprep.subr.bf16.mxu0 0
      %3771 = vmatpush1.bf16.xpose.msra.mxu0 0
      %3772 = vmatprep.subr.bf16.mxu0 0
      %3773 = vmatpush1.bf16.xpose.msra.mxu0 0
      %3774 = vmatprep.subr.bf16.mxu0 0
      %3775 = vmatpush1.bf16.xpose.msra.mxu0 0
      %3776 = vmatprep.subr.bf16.mxu0 0
      %3777 = vmatpush1.bf16.xpose.msra.mxu0 0
      %3778 = vmatprep.subr.bf16.mxu0 0
      %3779 = vmatpush1.bf16.xpose.msra.mxu0 0
      %3780 = vmatprep.subr.bf16.mxu0 0
      %3781 = vmatpush1.bf16.xpose.msra.mxu0 0
      %3782 = vmatprep.subr.bf16.mxu0 0
      %3783 = vmatpush1.bf16.xpose.msra.mxu0 0
      %3784 = vmatprep.subr.bf16.mxu0 0
      %3785 = vmatpush1.bf16.xpose.msra.mxu0 0
      %3786 = vmatprep.subr.bf16.mxu0 0
      %3787 = vmatpush1.bf16.xpose.msra.mxu0 0
      %3788 = vmatprep.subr.bf16.mxu0 0
      %3789 = vmatpush1.bf16.xpose.msra.mxu0 0
      %3790 = vmatprep.mubr.bf16.mxu0 0
      %3791 = vmatmul.mubr.bf16.gmra.mrb[0].mxu0 %v3735
      %v3792 = vpop.f32.mrb[0].mxu0
      %v3793 = vadd.f32 0.0, %v3792
      %v3794 = vpop.f32.mrb[0].mxu0
      %v3795 = vpop.f32.mrb[0].mxu0
      %v3796 = vadd.f32 0.0, %v3795
      %v3797 = vpop.f32.mrb[0].mxu0
      %3798 = vmatprep.mubr.bf16.mxu0 0
      %3799 = vmatmul.mubr.bf16.gmra.mrb[0].mxu0 %v3738
      %v3800 = vpop.f32.mrb[0].mxu0
      %v3801 = vadd.f32 0.0, %v3800
      %v3802 = vpop.f32.mrb[0].mxu0
      %v3803 = vpop.f32.mrb[0].mxu0
      %v3804 = vadd.f32 0.0, %v3803
      %v3805 = vpop.f32.mrb[0].mxu0
      %3806 = vmatprep.mubr.bf16.mxu0 0
      %3807 = vmatmul.mubr.bf16.gmra.mrb[0].mxu0 %v3741
      %v3808 = vpop.f32.mrb[0].mxu0
      %v3809 = vadd.f32 0.0, %v3808
      %v3810 = vpop.f32.mrb[0].mxu0
      %v3811 = vpop.f32.mrb[0].mxu0
      %v3812 = vadd.f32 0.0, %v3811
      %v3813 = vpop.f32.mrb[0].mxu0
      %3814 = vmatprep.mubr.bf16.mxu0 0
      %3815 = vmatmul.mubr.bf16.gmra.mrb[0].mxu0 %v3744
      %v3816 = vpop.f32.mrb[0].mxu0
      %v3817 = vadd.f32 0.0, %v3816
      %v3818 = vpop.f32.mrb[0].mxu0
      %v3819 = vpop.f32.mrb[0].mxu0
      %v3820 = vpop.f32.mrb[0].mxu0
      %3821 = vdwg.mxu0
      %v3822 = vpack.c.b16 %v1225, %v1224
      %v3823 = vpack.c.b16 %v1227, %v1226
      %v3824 = vpack.c.b16 %v1229, %v1228
      %v3825 = vpack.c.b16 %v1230, %v1230
      %3826 = vrot.lane.b32.xlu0 %v3822, 64
      %v3827 = vpop.permute.xlu0 %3826
      %3828 = vrot.lane.b32.xlu0 %v3823, 64
      %v3829 = vpop.permute.xlu0 %3828
      %3830 = vrot.lane.b32.xlu0 %v3824, 64
      %v3831 = vpop.permute.xlu0 %3830
      %3832 = vrot.lane.b32.xlu0 %v3825, 64
      %v3833 = vpop.permute.xlu0 %3832
      %v3835 = vsel %vm1733, %v3822, 0
      %v3838 = vsel %vm1733, %v3823, 0
      %v3841 = vsel %vm1733, %v3824, 0
      %v3844 = vsel %vm1733, %v3825, 0
      %v3847 = vsel %vm1733, %v3827, 0
      %v3850 = vsel %vm1733, %v3829, 0
      %v3853 = vsel %vm1733, %v3831, 0
      %v3856 = vsel %vm1733, %v3833, 0
      %3858 = vmatprep.subr.bf16.mxu0 0
      %3859 = vmatpush1.bf16.xpose.msra.mxu0 %v3847
      %3860 = vmatprep.subr.bf16.mxu0 0
      %3861 = vmatpush1.bf16.xpose.msra.mxu0 %v3850
      %3862 = vmatprep.subr.bf16.mxu0 0
      %3863 = vmatpush1.bf16.xpose.msra.mxu0 %v3853
      %3864 = vmatprep.subr.bf16.mxu0 0
      %3865 = vmatpush1.bf16.xpose.msra.mxu0 %v3856
      %3866 = vmatprep.subr.bf16.mxu0 0
      %3867 = vmatpush1.bf16.xpose.msra.mxu0 0
      %3868 = vmatprep.subr.bf16.mxu0 0
      %3869 = vmatpush1.bf16.xpose.msra.mxu0 0
      %3870 = vmatprep.subr.bf16.mxu0 0
      %3871 = vmatpush1.bf16.xpose.msra.mxu0 0
      %3872 = vmatprep.subr.bf16.mxu0 0
      %3873 = vmatpush1.bf16.xpose.msra.mxu0 0
      %3874 = vmatprep.subr.bf16.mxu0 0
      %3875 = vmatpush1.bf16.xpose.msra.mxu0 0
      %3876 = vmatprep.subr.bf16.mxu0 0
      %3877 = vmatpush1.bf16.xpose.msra.mxu0 0
      %3878 = vmatprep.subr.bf16.mxu0 0
      %3879 = vmatpush1.bf16.xpose.msra.mxu0 0
      %3880 = vmatprep.subr.bf16.mxu0 0
      %3881 = vmatpush1.bf16.xpose.msra.mxu0 0
      %3882 = vmatprep.subr.bf16.mxu0 0
      %3883 = vmatpush1.bf16.xpose.msra.mxu0 0
      %3884 = vmatprep.subr.bf16.mxu0 0
      %3885 = vmatpush1.bf16.xpose.msra.mxu0 0
      %3886 = vmatprep.subr.bf16.mxu0 0
      %3887 = vmatpush1.bf16.xpose.msra.mxu0 0
      %3888 = vmatprep.subr.bf16.mxu0 0
      %3889 = vmatpush1.bf16.xpose.msra.mxu0 0
      %3890 = vmatprep.mubr.bf16.mxu0 0
      %3891 = vmatmul.mubr.bf16.gmra.mrb[0].mxu0 %v3835
      %v3892 = vpop.f32.mrb[0].mxu0
      %v3893 = vadd.f32 0.0, %v3892
      %v3894 = vpop.f32.mrb[0].mxu0
      %v3895 = vpop.f32.mrb[0].mxu0
      %v3896 = vadd.f32 0.0, %v3895
      %v3897 = vpop.f32.mrb[0].mxu0
      %3898 = vmatprep.mubr.bf16.mxu0 0
      %3899 = vmatmul.mubr.bf16.gmra.mrb[0].mxu0 %v3838
      %v3900 = vpop.f32.mrb[0].mxu0
      %v3901 = vadd.f32 0.0, %v3900
      %v3902 = vpop.f32.mrb[0].mxu0
      %v3903 = vpop.f32.mrb[0].mxu0
      %v3904 = vadd.f32 0.0, %v3903
      %v3905 = vpop.f32.mrb[0].mxu0
      %3906 = vmatprep.mubr.bf16.mxu0 0
      %3907 = vmatmul.mubr.bf16.gmra.mrb[0].mxu0 %v3841
      %v3908 = vpop.f32.mrb[0].mxu0
      %v3909 = vadd.f32 0.0, %v3908
      %v3910 = vpop.f32.mrb[0].mxu0
      %v3911 = vpop.f32.mrb[0].mxu0
      %v3912 = vadd.f32 0.0, %v3911
      %v3913 = vpop.f32.mrb[0].mxu0
      %3914 = vmatprep.mubr.bf16.mxu0 0
      %3915 = vmatmul.mubr.bf16.gmra.mrb[0].mxu0 %v3844
      %v3916 = vpop.f32.mrb[0].mxu0
      %v3917 = vadd.f32 0.0, %v3916
      %v3918 = vpop.f32.mrb[0].mxu0
      %v3919 = vpop.f32.mrb[0].mxu0
      %v3920 = vpop.f32.mrb[0].mxu0
      %3921 = vdwg.mxu0
      %v3922 = vpack.c.b16 %v1232, %v1231
      %v3923 = vpack.c.b16 %v1234, %v1233
      %v3924 = vpack.c.b16 %v1236, %v1235
      %v3925 = vpack.c.b16 %v1237, %v1237
      %3926 = vrot.lane.b32.xlu0 %v3922, 64
      %v3927 = vpop.permute.xlu0 %3926
      %3928 = vrot.lane.b32.xlu0 %v3923, 64
      %v3929 = vpop.permute.xlu0 %3928
      %3930 = vrot.lane.b32.xlu0 %v3924, 64
      %v3931 = vpop.permute.xlu0 %3930
      %3932 = vrot.lane.b32.xlu0 %v3925, 64
      %v3933 = vpop.permute.xlu0 %3932
      %v3935 = vsel %vm1733, %v3922, 0
      %v3938 = vsel %vm1733, %v3923, 0
      %v3941 = vsel %vm1733, %v3924, 0
      %v3944 = vsel %vm1733, %v3925, 0
      %v3947 = vsel %vm1733, %v3927, 0
      %v3950 = vsel %vm1733, %v3929, 0
      %v3953 = vsel %vm1733, %v3931, 0
      %v3956 = vsel %vm1733, %v3933, 0
      %3958 = vmatprep.subr.bf16.mxu0 0
      %3959 = vmatpush1.bf16.xpose.msra.mxu0 %v3947
      %3960 = vmatprep.subr.bf16.mxu0 0
      %3961 = vmatpush1.bf16.xpose.msra.mxu0 %v3950
      %3962 = vmatprep.subr.bf16.mxu0 0
      %3963 = vmatpush1.bf16.xpose.msra.mxu0 %v3953
      %3964 = vmatprep.subr.bf16.mxu0 0
      %3965 = vmatpush1.bf16.xpose.msra.mxu0 %v3956
      %3966 = vmatprep.subr.bf16.mxu0 0
      %3967 = vmatpush1.bf16.xpose.msra.mxu0 0
      %3968 = vmatprep.subr.bf16.mxu0 0
      %3969 = vmatpush1.bf16.xpose.msra.mxu0 0
      %3970 = vmatprep.subr.bf16.mxu0 0
      %3971 = vmatpush1.bf16.xpose.msra.mxu0 0
      %3972 = vmatprep.subr.bf16.mxu0 0
      %3973 = vmatpush1.bf16.xpose.msra.mxu0 0
      %3974 = vmatprep.subr.bf16.mxu0 0
      %3975 = vmatpush1.bf16.xpose.msra.mxu0 0
      %3976 = vmatprep.subr.bf16.mxu0 0
      %3977 = vmatpush1.bf16.xpose.msra.mxu0 0
      %3978 = vmatprep.subr.bf16.mxu0 0
      %3979 = vmatpush1.bf16.xpose.msra.mxu0 0
      %3980 = vmatprep.subr.bf16.mxu0 0
      %3981 = vmatpush1.bf16.xpose.msra.mxu0 0
      %3982 = vmatprep.subr.bf16.mxu0 0
      %3983 = vmatpush1.bf16.xpose.msra.mxu0 0
      %3984 = vmatprep.subr.bf16.mxu0 0
      %3985 = vmatpush1.bf16.xpose.msra.mxu0 0
      %3986 = vmatprep.subr.bf16.mxu0 0
      %3987 = vmatpush1.bf16.xpose.msra.mxu0 0
      %3988 = vmatprep.subr.bf16.mxu0 0
      %3989 = vmatpush1.bf16.xpose.msra.mxu0 0
      %3990 = vmatprep.mubr.bf16.mxu0 0
      %3991 = vmatmul.mubr.bf16.gmra.mrb[0].mxu0 %v3935
      %v3992 = vpop.f32.mrb[0].mxu0
      %v3993 = vadd.f32 0.0, %v3992
      %v3994 = vpop.f32.mrb[0].mxu0
      %v3995 = vpop.f32.mrb[0].mxu0
      %v3996 = vadd.f32 0.0, %v3995
      %v3997 = vpop.f32.mrb[0].mxu0
      %3998 = vmatprep.mubr.bf16.mxu0 0
      %3999 = vmatmul.mubr.bf16.gmra.mrb[0].mxu0 %v3938
      %v4000 = vpop.f32.mrb[0].mxu0
      %v4001 = vadd.f32 0.0, %v4000
      %v4002 = vpop.f32.mrb[0].mxu0
      %v4003 = vpop.f32.mrb[0].mxu0
      %v4004 = vadd.f32 0.0, %v4003
      %v4005 = vpop.f32.mrb[0].mxu0
      %4006 = vmatprep.mubr.bf16.mxu0 0
      %4007 = vmatmul.mubr.bf16.gmra.mrb[0].mxu0 %v3941
      %v4008 = vpop.f32.mrb[0].mxu0
      %v4009 = vadd.f32 0.0, %v4008
      %v4010 = vpop.f32.mrb[0].mxu0
      %v4011 = vpop.f32.mrb[0].mxu0
      %v4012 = vadd.f32 0.0, %v4011
      %v4013 = vpop.f32.mrb[0].mxu0
      %4014 = vmatprep.mubr.bf16.mxu0 0
      %4015 = vmatmul.mubr.bf16.gmra.mrb[0].mxu0 %v3944
      %v4016 = vpop.f32.mrb[0].mxu0
      %v4017 = vadd.f32 0.0, %v4016
      %v4018 = vpop.f32.mrb[0].mxu0
      %v4019 = vpop.f32.mrb[0].mxu0
      %v4020 = vpop.f32.mrb[0].mxu0
      %4021 = vdwg.mxu0
      %v4022 = vpack.c.b16 %v1239, %v1238
      %v4023 = vpack.c.b16 %v1241, %v1240
      %v4024 = vpack.c.b16 %v1243, %v1242
      %v4025 = vpack.c.b16 %v1244, %v1244
      %4026 = vrot.lane.b32.xlu0 %v4022, 64
      %v4027 = vpop.permute.xlu0 %4026
      %4028 = vrot.lane.b32.xlu0 %v4023, 64
      %v4029 = vpop.permute.xlu0 %4028
      %4030 = vrot.lane.b32.xlu0 %v4024, 64
      %v4031 = vpop.permute.xlu0 %4030
      %4032 = vrot.lane.b32.xlu0 %v4025, 64
      %v4033 = vpop.permute.xlu0 %4032
      %v4035 = vsel %vm1733, %v4022, 0
      %v4038 = vsel %vm1733, %v4023, 0
      %v4041 = vsel %vm1733, %v4024, 0
      %v4044 = vsel %vm1733, %v4025, 0
      %v4047 = vsel %vm1733, %v4027, 0
      %v4050 = vsel %vm1733, %v4029, 0
      %v4053 = vsel %vm1733, %v4031, 0
      %v4056 = vsel %vm1733, %v4033, 0
      %4058 = vmatprep.subr.bf16.mxu0 0
      %4059 = vmatpush1.bf16.xpose.msra.mxu0 %v4047
      %4060 = vmatprep.subr.bf16.mxu0 0
      %4061 = vmatpush1.bf16.xpose.msra.mxu0 %v4050
      %4062 = vmatprep.subr.bf16.mxu0 0
      %4063 = vmatpush1.bf16.xpose.msra.mxu0 %v4053
      %4064 = vmatprep.subr.bf16.mxu0 0
      %4065 = vmatpush1.bf16.xpose.msra.mxu0 %v4056
      %4066 = vmatprep.subr.bf16.mxu0 0
      %4067 = vmatpush1.bf16.xpose.msra.mxu0 0
      %4068 = vmatprep.subr.bf16.mxu0 0
      %4069 = vmatpush1.bf16.xpose.msra.mxu0 0
      %4070 = vmatprep.subr.bf16.mxu0 0
      %4071 = vmatpush1.bf16.xpose.msra.mxu0 0
      %4072 = vmatprep.subr.bf16.mxu0 0
      %4073 = vmatpush1.bf16.xpose.msra.mxu0 0
      %4074 = vmatprep.subr.bf16.mxu0 0
      %4075 = vmatpush1.bf16.xpose.msra.mxu0 0
      %4076 = vmatprep.subr.bf16.mxu0 0
      %4077 = vmatpush1.bf16.xpose.msra.mxu0 0
      %4078 = vmatprep.subr.bf16.mxu0 0
      %4079 = vmatpush1.bf16.xpose.msra.mxu0 0
      %4080 = vmatprep.subr.bf16.mxu0 0
      %4081 = vmatpush1.bf16.xpose.msra.mxu0 0
      %4082 = vmatprep.subr.bf16.mxu0 0
      %4083 = vmatpush1.bf16.xpose.msra.mxu0 0
      %4084 = vmatprep.subr.bf16.mxu0 0
      %4085 = vmatpush1.bf16.xpose.msra.mxu0 0
      %4086 = vmatprep.subr.bf16.mxu0 0
      %4087 = vmatpush1.bf16.xpose.msra.mxu0 0
      %4088 = vmatprep.subr.bf16.mxu0 0
      %4089 = vmatpush1.bf16.xpose.msra.mxu0 0
      %4090 = vmatprep.mubr.bf16.mxu0 0
      %4091 = vmatmul.mubr.bf16.gmra.mrb[0].mxu0 %v4035
      %v4092 = vpop.f32.mrb[0].mxu0
      %v4093 = vadd.f32 0.0, %v4092
      %v4094 = vpop.f32.mrb[0].mxu0
      %v4095 = vpop.f32.mrb[0].mxu0
      %v4096 = vadd.f32 0.0, %v4095
      %v4097 = vpop.f32.mrb[0].mxu0
      %4098 = vmatprep.mubr.bf16.mxu0 0
      %4099 = vmatmul.mubr.bf16.gmra.mrb[0].mxu0 %v4038
      %v4100 = vpop.f32.mrb[0].mxu0
      %v4101 = vadd.f32 0.0, %v4100
      %v4102 = vpop.f32.mrb[0].mxu0
      %v4103 = vpop.f32.mrb[0].mxu0
      %v4104 = vadd.f32 0.0, %v4103
      %v4105 = vpop.f32.mrb[0].mxu0
      %4106 = vmatprep.mubr.bf16.mxu0 0
      %4107 = vmatmul.mubr.bf16.gmra.mrb[0].mxu0 %v4041
      %v4108 = vpop.f32.mrb[0].mxu0
      %v4109 = vadd.f32 0.0, %v4108
      %v4110 = vpop.f32.mrb[0].mxu0
      %v4111 = vpop.f32.mrb[0].mxu0
      %v4112 = vadd.f32 0.0, %v4111
      %v4113 = vpop.f32.mrb[0].mxu0
      %4114 = vmatprep.mubr.bf16.mxu0 0
      %4115 = vmatmul.mubr.bf16.gmra.mrb[0].mxu0 %v4044
      %v4116 = vpop.f32.mrb[0].mxu0
      %v4117 = vadd.f32 0.0, %v4116
      %v4118 = vpop.f32.mrb[0].mxu0
      %v4119 = vpop.f32.mrb[0].mxu0
      %v4120 = vpop.f32.mrb[0].mxu0
      %4121 = vdwg.mxu0
      %v4122 = vpack.c.b16 %v1246, %v1245
      %v4123 = vpack.c.b16 %v1248, %v1247
      %v4124 = vpack.c.b16 %v1250, %v1249
      %v4125 = vpack.c.b16 %v1251, %v1251
      %4126 = vrot.lane.b32.xlu0 %v4122, 64
      %v4127 = vpop.permute.xlu0 %4126
      %4128 = vrot.lane.b32.xlu0 %v4123, 64
      %v4129 = vpop.permute.xlu0 %4128
      %4130 = vrot.lane.b32.xlu0 %v4124, 64
      %v4131 = vpop.permute.xlu0 %4130
      %4132 = vrot.lane.b32.xlu0 %v4125, 64
      %v4133 = vpop.permute.xlu0 %4132
      %v4135 = vsel %vm1733, %v4122, 0
      %v4138 = vsel %vm1733, %v4123, 0
      %v4141 = vsel %vm1733, %v4124, 0
      %v4144 = vsel %vm1733, %v4125, 0
      %v4147 = vsel %vm1733, %v4127, 0
      %v4150 = vsel %vm1733, %v4129, 0
      %v4153 = vsel %vm1733, %v4131, 0
      %v4156 = vsel %vm1733, %v4133, 0
      %4158 = vmatprep.subr.bf16.mxu0 0
      %4159 = vmatpush1.bf16.xpose.msra.mxu0 %v4147
      %4160 = vmatprep.subr.bf16.mxu0 0
      %4161 = vmatpush1.bf16.xpose.msra.mxu0 %v4150
      %4162 = vmatprep.subr.bf16.mxu0 0
      %4163 = vmatpush1.bf16.xpose.msra.mxu0 %v4153
      %4164 = vmatprep.subr.bf16.mxu0 0
      %4165 = vmatpush1.bf16.xpose.msra.mxu0 %v4156
      %4166 = vmatprep.subr.bf16.mxu0 0
      %4167 = vmatpush1.bf16.xpose.msra.mxu0 0
      %4168 = vmatprep.subr.bf16.mxu0 0
      %4169 = vmatpush1.bf16.xpose.msra.mxu0 0
      %4170 = vmatprep.subr.bf16.mxu0 0
      %4171 = vmatpush1.bf16.xpose.msra.mxu0 0
      %4172 = vmatprep.subr.bf16.mxu0 0
      %4173 = vmatpush1.bf16.xpose.msra.mxu0 0
      %4174 = vmatprep.subr.bf16.mxu0 0
      %4175 = vmatpush1.bf16.xpose.msra.mxu0 0
      %4176 = vmatprep.subr.bf16.mxu0 0
      %4177 = vmatpush1.bf16.xpose.msra.mxu0 0
      %4178 = vmatprep.subr.bf16.mxu0 0
      %4179 = vmatpush1.bf16.xpose.msra.mxu0 0
      %4180 = vmatprep.subr.bf16.mxu0 0
      %4181 = vmatpush1.bf16.xpose.msra.mxu0 0
      %4182 = vmatprep.subr.bf16.mxu0 0
      %4183 = vmatpush1.bf16.xpose.msra.mxu0 0
      %4184 = vmatprep.subr.bf16.mxu0 0
      %4185 = vmatpush1.bf16.xpose.msra.mxu0 0
      %4186 = vmatprep.subr.bf16.mxu0 0
      %4187 = vmatpush1.bf16.xpose.msra.mxu0 0
      %4188 = vmatprep.subr.bf16.mxu0 0
      %4189 = vmatpush1.bf16.xpose.msra.mxu0 0
      %4190 = vmatprep.mubr.bf16.mxu0 0
      %4191 = vmatmul.mubr.bf16.gmra.mrb[0].mxu0 %v4135
      %v4192 = vpop.f32.mrb[0].mxu0
      %v4193 = vadd.f32 0.0, %v4192
      %v4194 = vpop.f32.mrb[0].mxu0
      %v4195 = vpop.f32.mrb[0].mxu0
      %v4196 = vadd.f32 0.0, %v4195
      %v4197 = vpop.f32.mrb[0].mxu0
      %4198 = vmatprep.mubr.bf16.mxu0 0
      %4199 = vmatmul.mubr.bf16.gmra.mrb[0].mxu0 %v4138
      %v4200 = vpop.f32.mrb[0].mxu0
      %v4201 = vadd.f32 0.0, %v4200
      %v4202 = vpop.f32.mrb[0].mxu0
      %v4203 = vpop.f32.mrb[0].mxu0
      %v4204 = vadd.f32 0.0, %v4203
      %v4205 = vpop.f32.mrb[0].mxu0
      %4206 = vmatprep.mubr.bf16.mxu0 0
      %4207 = vmatmul.mubr.bf16.gmra.mrb[0].mxu0 %v4141
      %v4208 = vpop.f32.mrb[0].mxu0
      %v4209 = vadd.f32 0.0, %v4208
      %v4210 = vpop.f32.mrb[0].mxu0
      %v4211 = vpop.f32.mrb[0].mxu0
      %v4212 = vadd.f32 0.0, %v4211
      %v4213 = vpop.f32.mrb[0].mxu0
      %4214 = vmatprep.mubr.bf16.mxu0 0
      %4215 = vmatmul.mubr.bf16.gmra.mrb[0].mxu0 %v4144
      %v4216 = vpop.f32.mrb[0].mxu0
      %v4217 = vadd.f32 0.0, %v4216
      %v4218 = vpop.f32.mrb[0].mxu0
      %v4219 = vpop.f32.mrb[0].mxu0
      %v4220 = vpop.f32.mrb[0].mxu0
      %4221 = vdwg.mxu0
      %v4222 = vpack.c.b16 %v1253, %v1252
      %v4223 = vpack.c.b16 %v1255, %v1254
      %v4224 = vpack.c.b16 %v1257, %v1256
      %v4225 = vpack.c.b16 %v1258, %v1258
      %4226 = vrot.lane.b32.xlu0 %v4222, 64
      %v4227 = vpop.permute.xlu0 %4226
      %4228 = vrot.lane.b32.xlu0 %v4223, 64
      %v4229 = vpop.permute.xlu0 %4228
      %4230 = vrot.lane.b32.xlu0 %v4224, 64
      %v4231 = vpop.permute.xlu0 %4230
      %4232 = vrot.lane.b32.xlu0 %v4225, 64
      %v4233 = vpop.permute.xlu0 %4232
      %v4235 = vsel %vm1733, %v4222, 0
      %v4238 = vsel %vm1733, %v4223, 0
      %v4241 = vsel %vm1733, %v4224, 0
      %v4244 = vsel %vm1733, %v4225, 0
      %v4247 = vsel %vm1733, %v4227, 0
      %v4250 = vsel %vm1733, %v4229, 0
      %v4253 = vsel %vm1733, %v4231, 0
      %v4256 = vsel %vm1733, %v4233, 0
      %4258 = vmatprep.subr.bf16.mxu0 0
      %4259 = vmatpush1.bf16.xpose.msra.mxu0 %v4247
      %4260 = vmatprep.subr.bf16.mxu0 0
      %4261 = vmatpush1.bf16.xpose.msra.mxu0 %v4250
      %4262 = vmatprep.subr.bf16.mxu0 0
      %4263 = vmatpush1.bf16.xpose.msra.mxu0 %v4253
      %4264 = vmatprep.subr.bf16.mxu0 0
      %4265 = vmatpush1.bf16.xpose.msra.mxu0 %v4256
      %4266 = vmatprep.subr.bf16.mxu0 0
      %4267 = vmatpush1.bf16.xpose.msra.mxu0 0
      %4268 = vmatprep.subr.bf16.mxu0 0
      %4269 = vmatpush1.bf16.xpose.msra.mxu0 0
      %4270 = vmatprep.subr.bf16.mxu0 0
      %4271 = vmatpush1.bf16.xpose.msra.mxu0 0
      %4272 = vmatprep.subr.bf16.mxu0 0
      %4273 = vmatpush1.bf16.xpose.msra.mxu0 0
      %4274 = vmatprep.subr.bf16.mxu0 0
      %4275 = vmatpush1.bf16.xpose.msra.mxu0 0
      %4276 = vmatprep.subr.bf16.mxu0 0
      %4277 = vmatpush1.bf16.xpose.msra.mxu0 0
      %4278 = vmatprep.subr.bf16.mxu0 0
      %4279 = vmatpush1.bf16.xpose.msra.mxu0 0
      %4280 = vmatprep.subr.bf16.mxu0 0
      %4281 = vmatpush1.bf16.xpose.msra.mxu0 0
      %4282 = vmatprep.subr.bf16.mxu0 0
      %4283 = vmatpush1.bf16.xpose.msra.mxu0 0
      %4284 = vmatprep.subr.bf16.mxu0 0
      %4285 = vmatpush1.bf16.xpose.msra.mxu0 0
      %4286 = vmatprep.subr.bf16.mxu0 0
      %4287 = vmatpush1.bf16.xpose.msra.mxu0 0
      %4288 = vmatprep.subr.bf16.mxu0 0
      %4289 = vmatpush1.bf16.xpose.msra.mxu0 0
      %4290 = vmatprep.mubr.bf16.mxu0 0
      %4291 = vmatmul.mubr.bf16.gmra.mrb[0].mxu0 %v4235
      %v4292 = vpop.f32.mrb[0].mxu0
      %v4293 = vadd.f32 0.0, %v4292
      %v4294 = vpop.f32.mrb[0].mxu0
      %v4295 = vpop.f32.mrb[0].mxu0
      %v4296 = vadd.f32 0.0, %v4295
      %v4297 = vpop.f32.mrb[0].mxu0
      %4298 = vmatprep.mubr.bf16.mxu0 0
      %4299 = vmatmul.mubr.bf16.gmra.mrb[0].mxu0 %v4238
      %v4300 = vpop.f32.mrb[0].mxu0
      %v4301 = vadd.f32 0.0, %v4300
      %v4302 = vpop.f32.mrb[0].mxu0
      %v4303 = vpop.f32.mrb[0].mxu0
      %v4304 = vadd.f32 0.0, %v4303
      %v4305 = vpop.f32.mrb[0].mxu0
      %4306 = vmatprep.mubr.bf16.mxu0 0
      %4307 = vmatmul.mubr.bf16.gmra.mrb[0].mxu0 %v4241
      %v4308 = vpop.f32.mrb[0].mxu0
      %v4309 = vadd.f32 0.0, %v4308
      %v4310 = vpop.f32.mrb[0].mxu0
      %v4311 = vpop.f32.mrb[0].mxu0
      %v4312 = vadd.f32 0.0, %v4311
      %v4313 = vpop.f32.mrb[0].mxu0
      %4314 = vmatprep.mubr.bf16.mxu0 0
      %4315 = vmatmul.mubr.bf16.gmra.mrb[0].mxu0 %v4244
      %v4316 = vpop.f32.mrb[0].mxu0
      %v4317 = vadd.f32 0.0, %v4316
      %v4318 = vpop.f32.mrb[0].mxu0
      %v4319 = vpop.f32.mrb[0].mxu0
      %v4320 = vpop.f32.mrb[0].mxu0
      %4321 = vdwg.mxu0
      %v4322 = vpack.c.b16 %v1260, %v1259
      %v4323 = vpack.c.b16 %v1262, %v1261
      %v4324 = vpack.c.b16 %v1264, %v1263
      %v4325 = vpack.c.b16 %v1265, %v1265
      %4326 = vrot.lane.b32.xlu0 %v4322, 64
      %v4327 = vpop.permute.xlu0 %4326
      %4328 = vrot.lane.b32.xlu0 %v4323, 64
      %v4329 = vpop.permute.xlu0 %4328
      %4330 = vrot.lane.b32.xlu0 %v4324, 64
      %v4331 = vpop.permute.xlu0 %4330
      %4332 = vrot.lane.b32.xlu0 %v4325, 64
      %v4333 = vpop.permute.xlu0 %4332
      %v4335 = vsel %vm1733, %v4322, 0
      %v4338 = vsel %vm1733, %v4323, 0
      %v4341 = vsel %vm1733, %v4324, 0
      %v4344 = vsel %vm1733, %v4325, 0
      %v4347 = vsel %vm1733, %v4327, 0
      %v4350 = vsel %vm1733, %v4329, 0
      %v4353 = vsel %vm1733, %v4331, 0
      %v4356 = vsel %vm1733, %v4333, 0
      %4358 = vmatprep.subr.bf16.mxu0 0
      %4359 = vmatpush1.bf16.xpose.msra.mxu0 %v4347
      %4360 = vmatprep.subr.bf16.mxu0 0
      %4361 = vmatpush1.bf16.xpose.msra.mxu0 %v4350
      %4362 = vmatprep.subr.bf16.mxu0 0
      %4363 = vmatpush1.bf16.xpose.msra.mxu0 %v4353
      %4364 = vmatprep.subr.bf16.mxu0 0
      %4365 = vmatpush1.bf16.xpose.msra.mxu0 %v4356
      %4366 = vmatprep.subr.bf16.mxu0 0
      %4367 = vmatpush1.bf16.xpose.msra.mxu0 0
      %4368 = vmatprep.subr.bf16.mxu0 0
      %4369 = vmatpush1.bf16.xpose.msra.mxu0 0
      %4370 = vmatprep.subr.bf16.mxu0 0
      %4371 = vmatpush1.bf16.xpose.msra.mxu0 0
      %4372 = vmatprep.subr.bf16.mxu0 0
      %4373 = vmatpush1.bf16.xpose.msra.mxu0 0
      %4374 = vmatprep.subr.bf16.mxu0 0
      %4375 = vmatpush1.bf16.xpose.msra.mxu0 0
      %4376 = vmatprep.subr.bf16.mxu0 0
      %4377 = vmatpush1.bf16.xpose.msra.mxu0 0
      %4378 = vmatprep.subr.bf16.mxu0 0
      %4379 = vmatpush1.bf16.xpose.msra.mxu0 0
      %4380 = vmatprep.subr.bf16.mxu0 0
      %4381 = vmatpush1.bf16.xpose.msra.mxu0 0
      %4382 = vmatprep.subr.bf16.mxu0 0
      %4383 = vmatpush1.bf16.xpose.msra.mxu0 0
      %4384 = vmatprep.subr.bf16.mxu0 0
      %4385 = vmatpush1.bf16.xpose.msra.mxu0 0
      %4386 = vmatprep.subr.bf16.mxu0 0
      %4387 = vmatpush1.bf16.xpose.msra.mxu0 0
      %4388 = vmatprep.subr.bf16.mxu0 0
      %4389 = vmatpush1.bf16.xpose.msra.mxu0 0
      %4390 = vmatprep.mubr.bf16.mxu0 0
      %4391 = vmatmul.mubr.bf16.gmra.mrb[0].mxu0 %v4335
      %v4392 = vpop.f32.mrb[0].mxu0
      %v4393 = vadd.f32 0.0, %v4392
      %v4394 = vpop.f32.mrb[0].mxu0
      %v4395 = vpop.f32.mrb[0].mxu0
      %v4396 = vadd.f32 0.0, %v4395
      %v4397 = vpop.f32.mrb[0].mxu0
      %4398 = vmatprep.mubr.bf16.mxu0 0
      %4399 = vmatmul.mubr.bf16.gmra.mrb[0].mxu0 %v4338
      %v4400 = vpop.f32.mrb[0].mxu0
      %v4401 = vadd.f32 0.0, %v4400
      %v4402 = vpop.f32.mrb[0].mxu0
      %v4403 = vpop.f32.mrb[0].mxu0
      %v4404 = vadd.f32 0.0, %v4403
      %v4405 = vpop.f32.mrb[0].mxu0
      %4406 = vmatprep.mubr.bf16.mxu0 0
      %4407 = vmatmul.mubr.bf16.gmra.mrb[0].mxu0 %v4341
      %v4408 = vpop.f32.mrb[0].mxu0
      %v4409 = vadd.f32 0.0, %v4408
      %v4410 = vpop.f32.mrb[0].mxu0
      %v4411 = vpop.f32.mrb[0].mxu0
      %v4412 = vadd.f32 0.0, %v4411
      %v4413 = vpop.f32.mrb[0].mxu0
      %4414 = vmatprep.mubr.bf16.mxu0 0
      %4415 = vmatmul.mubr.bf16.gmra.mrb[0].mxu0 %v4344
      %v4416 = vpop.f32.mrb[0].mxu0
      %v4417 = vadd.f32 0.0, %v4416
      %v4418 = vpop.f32.mrb[0].mxu0
      %v4419 = vpop.f32.mrb[0].mxu0
      %v4420 = vpop.f32.mrb[0].mxu0
      %4421 = vdwg.mxu0
      %v4422 = vpack.c.b16 %v1267, %v1266
      %v4423 = vpack.c.b16 %v1269, %v1268
      %v4424 = vpack.c.b16 %v1271, %v1270
      %v4425 = vpack.c.b16 %v1272, %v1272
      %4426 = vrot.lane.b32.xlu0 %v4422, 64
      %v4427 = vpop.permute.xlu0 %4426
      %4428 = vrot.lane.b32.xlu0 %v4423, 64
      %v4429 = vpop.permute.xlu0 %4428
      %4430 = vrot.lane.b32.xlu0 %v4424, 64
      %v4431 = vpop.permute.xlu0 %4430
      %4432 = vrot.lane.b32.xlu0 %v4425, 64
      %v4433 = vpop.permute.xlu0 %4432
      %v4435 = vsel %vm1733, %v4422, 0
      %v4438 = vsel %vm1733, %v4423, 0
      %v4441 = vsel %vm1733, %v4424, 0
      %v4444 = vsel %vm1733, %v4425, 0
      %v4447 = vsel %vm1733, %v4427, 0
      %v4450 = vsel %vm1733, %v4429, 0
      %v4453 = vsel %vm1733, %v4431, 0
      %v4456 = vsel %vm1733, %v4433, 0
      %4458 = vmatprep.subr.bf16.mxu0 0
      %4459 = vmatpush1.bf16.xpose.msra.mxu0 %v4447
      %4460 = vmatprep.subr.bf16.mxu0 0
      %4461 = vmatpush1.bf16.xpose.msra.mxu0 %v4450
      %4462 = vmatprep.subr.bf16.mxu0 0
      %4463 = vmatpush1.bf16.xpose.msra.mxu0 %v4453
      %4464 = vmatprep.subr.bf16.mxu0 0
      %4465 = vmatpush1.bf16.xpose.msra.mxu0 %v4456
      %4466 = vmatprep.subr.bf16.mxu0 0
      %4467 = vmatpush1.bf16.xpose.msra.mxu0 0
      %4468 = vmatprep.subr.bf16.mxu0 0
      %4469 = vmatpush1.bf16.xpose.msra.mxu0 0
      %4470 = vmatprep.subr.bf16.mxu0 0
      %4471 = vmatpush1.bf16.xpose.msra.mxu0 0
      %4472 = vmatprep.subr.bf16.mxu0 0
      %4473 = vmatpush1.bf16.xpose.msra.mxu0 0
      %4474 = vmatprep.subr.bf16.mxu0 0
      %4475 = vmatpush1.bf16.xpose.msra.mxu0 0
      %4476 = vmatprep.subr.bf16.mxu0 0
      %4477 = vmatpush1.bf16.xpose.msra.mxu0 0
      %4478 = vmatprep.subr.bf16.mxu0 0
      %4479 = vmatpush1.bf16.xpose.msra.mxu0 0
      %4480 = vmatprep.subr.bf16.mxu0 0
      %4481 = vmatpush1.bf16.xpose.msra.mxu0 0
      %4482 = vmatprep.subr.bf16.mxu0 0
      %4483 = vmatpush1.bf16.xpose.msra.mxu0 0
      %4484 = vmatprep.subr.bf16.mxu0 0
      %4485 = vmatpush1.bf16.xpose.msra.mxu0 0
      %4486 = vmatprep.subr.bf16.mxu0 0
      %4487 = vmatpush1.bf16.xpose.msra.mxu0 0
      %4488 = vmatprep.subr.bf16.mxu0 0
      %4489 = vmatpush1.bf16.xpose.msra.mxu0 0
      %4490 = vmatprep.mubr.bf16.mxu0 0
      %4491 = vmatmul.mubr.bf16.gmra.mrb[0].mxu0 %v4435
      %v4492 = vpop.f32.mrb[0].mxu0
      %v4493 = vadd.f32 0.0, %v4492
      %v4494 = vpop.f32.mrb[0].mxu0
      %v4495 = vpop.f32.mrb[0].mxu0
      %v4496 = vadd.f32 0.0, %v4495
      %v4497 = vpop.f32.mrb[0].mxu0
      %4498 = vmatprep.mubr.bf16.mxu0 0
      %4499 = vmatmul.mubr.bf16.gmra.mrb[0].mxu0 %v4438
      %v4500 = vpop.f32.mrb[0].mxu0
      %v4501 = vadd.f32 0.0, %v4500
      %v4502 = vpop.f32.mrb[0].mxu0
      %v4503 = vpop.f32.mrb[0].mxu0
      %v4504 = vadd.f32 0.0, %v4503
      %v4505 = vpop.f32.mrb[0].mxu0
      %4506 = vmatprep.mubr.bf16.mxu0 0
      %4507 = vmatmul.mubr.bf16.gmra.mrb[0].mxu0 %v4441
      %v4508 = vpop.f32.mrb[0].mxu0
      %v4509 = vadd.f32 0.0, %v4508
      %v4510 = vpop.f32.mrb[0].mxu0
      %v4511 = vpop.f32.mrb[0].mxu0
      %v4512 = vadd.f32 0.0, %v4511
      %v4513 = vpop.f32.mrb[0].mxu0
      %4514 = vmatprep.mubr.bf16.mxu0 0
      %4515 = vmatmul.mubr.bf16.gmra.mrb[0].mxu0 %v4444
      %v4516 = vpop.f32.mrb[0].mxu0
      %v4517 = vadd.f32 0.0, %v4516
      %v4518 = vpop.f32.mrb[0].mxu0
      %v4519 = vpop.f32.mrb[0].mxu0
      %v4520 = vpop.f32.mrb[0].mxu0
      %4521 = vdwg.mxu0
      %v4522 = vpack.c.b16 %v1274, %v1273
      %v4523 = vpack.c.b16 %v1276, %v1275
      %v4524 = vpack.c.b16 %v1278, %v1277
      %v4525 = vpack.c.b16 %v1279, %v1279
      %4526 = vrot.lane.b32.xlu0 %v4522, 64
      %v4527 = vpop.permute.xlu0 %4526
      %4528 = vrot.lane.b32.xlu0 %v4523, 64
      %v4529 = vpop.permute.xlu0 %4528
      %4530 = vrot.lane.b32.xlu0 %v4524, 64
      %v4531 = vpop.permute.xlu0 %4530
      %4532 = vrot.lane.b32.xlu0 %v4525, 64
      %v4533 = vpop.permute.xlu0 %4532
      %v4535 = vsel %vm1733, %v4522, 0
      %v4538 = vsel %vm1733, %v4523, 0
      %v4541 = vsel %vm1733, %v4524, 0
      %v4544 = vsel %vm1733, %v4525, 0
      %v4547 = vsel %vm1733, %v4527, 0
      %v4550 = vsel %vm1733, %v4529, 0
      %v4553 = vsel %vm1733, %v4531, 0
      %v4556 = vsel %vm1733, %v4533, 0
      %4558 = vmatprep.subr.bf16.mxu0 0
      %4559 = vmatpush1.bf16.xpose.msra.mxu0 %v4547
      %4560 = vmatprep.subr.bf16.mxu0 0
      %4561 = vmatpush1.bf16.xpose.msra.mxu0 %v4550
      %4562 = vmatprep.subr.bf16.mxu0 0
      %4563 = vmatpush1.bf16.xpose.msra.mxu0 %v4553
      %4564 = vmatprep.subr.bf16.mxu0 0
      %4565 = vmatpush1.bf16.xpose.msra.mxu0 %v4556
      %4566 = vmatprep.subr.bf16.mxu0 0
      %4567 = vmatpush1.bf16.xpose.msra.mxu0 0
      %4568 = vmatprep.subr.bf16.mxu0 0
      %4569 = vmatpush1.bf16.xpose.msra.mxu0 0
      %4570 = vmatprep.subr.bf16.mxu0 0
      %4571 = vmatpush1.bf16.xpose.msra.mxu0 0
      %4572 = vmatprep.subr.bf16.mxu0 0
      %4573 = vmatpush1.bf16.xpose.msra.mxu0 0
      %4574 = vmatprep.subr.bf16.mxu0 0
      %4575 = vmatpush1.bf16.xpose.msra.mxu0 0
      %4576 = vmatprep.subr.bf16.mxu0 0
      %4577 = vmatpush1.bf16.xpose.msra.mxu0 0
      %4578 = vmatprep.subr.bf16.mxu0 0
      %4579 = vmatpush1.bf16.xpose.msra.mxu0 0
      %4580 = vmatprep.subr.bf16.mxu0 0
      %4581 = vmatpush1.bf16.xpose.msra.mxu0 0
      %4582 = vmatprep.subr.bf16.mxu0 0
      %4583 = vmatpush1.bf16.xpose.msra.mxu0 0
      %4584 = vmatprep.subr.bf16.mxu0 0
      %4585 = vmatpush1.bf16.xpose.msra.mxu0 0
      %4586 = vmatprep.subr.bf16.mxu0 0
      %4587 = vmatpush1.bf16.xpose.msra.mxu0 0
      %4588 = vmatprep.subr.bf16.mxu0 0
      %4589 = vmatpush1.bf16.xpose.msra.mxu0 0
      %4590 = vmatprep.mubr.bf16.mxu0 0
      %4591 = vmatmul.mubr.bf16.gmra.mrb[0].mxu0 %v4535
      %v4592 = vpop.f32.mrb[0].mxu0
      %v4593 = vadd.f32 0.0, %v4592
      %v4594 = vpop.f32.mrb[0].mxu0
      %v4595 = vpop.f32.mrb[0].mxu0
      %v4596 = vadd.f32 0.0, %v4595
      %v4597 = vpop.f32.mrb[0].mxu0
      %4598 = vmatprep.mubr.bf16.mxu0 0
      %4599 = vmatmul.mubr.bf16.gmra.mrb[0].mxu0 %v4538
      %v4600 = vpop.f32.mrb[0].mxu0
      %v4601 = vadd.f32 0.0, %v4600
      %v4602 = vpop.f32.mrb[0].mxu0
      %v4603 = vpop.f32.mrb[0].mxu0
      %v4604 = vadd.f32 0.0, %v4603
      %v4605 = vpop.f32.mrb[0].mxu0
      %4606 = vmatprep.mubr.bf16.mxu0 0
      %4607 = vmatmul.mubr.bf16.gmra.mrb[0].mxu0 %v4541
      %v4608 = vpop.f32.mrb[0].mxu0
      %v4609 = vadd.f32 0.0, %v4608
      %v4610 = vpop.f32.mrb[0].mxu0
      %v4611 = vpop.f32.mrb[0].mxu0
      %v4612 = vadd.f32 0.0, %v4611
      %v4613 = vpop.f32.mrb[0].mxu0
      %4614 = vmatprep.mubr.bf16.mxu0 0
      %4615 = vmatmul.mubr.bf16.gmra.mrb[0].mxu0 %v4544
      %v4616 = vpop.f32.mrb[0].mxu0
      %v4617 = vadd.f32 0.0, %v4616
      %v4618 = vpop.f32.mrb[0].mxu0
      %v4619 = vpop.f32.mrb[0].mxu0
      %v4620 = vpop.f32.mrb[0].mxu0
      %4621 = vdwg.mxu0
      %v4622 = vpack.c.b16 %v1281, %v1280
      %v4623 = vpack.c.b16 %v1283, %v1282
      %v4624 = vpack.c.b16 %v1285, %v1284
      %v4625 = vpack.c.b16 %v1286, %v1286
      %4626 = vrot.lane.b32.xlu0 %v4622, 64
      %v4627 = vpop.permute.xlu0 %4626
      %4628 = vrot.lane.b32.xlu0 %v4623, 64
      %v4629 = vpop.permute.xlu0 %4628
      %4630 = vrot.lane.b32.xlu0 %v4624, 64
      %v4631 = vpop.permute.xlu0 %4630
      %4632 = vrot.lane.b32.xlu0 %v4625, 64
      %v4633 = vpop.permute.xlu0 %4632
      %v4635 = vsel %vm1733, %v4622, 0
      %v4638 = vsel %vm1733, %v4623, 0
      %v4641 = vsel %vm1733, %v4624, 0
      %v4644 = vsel %vm1733, %v4625, 0
      %v4647 = vsel %vm1733, %v4627, 0
      %v4650 = vsel %vm1733, %v4629, 0
      %v4653 = vsel %vm1733, %v4631, 0
      %v4656 = vsel %vm1733, %v4633, 0
      %4658 = vmatprep.subr.bf16.mxu0 0
      %4659 = vmatpush1.bf16.xpose.msra.mxu0 %v4647
      %4660 = vmatprep.subr.bf16.mxu0 0
      %4661 = vmatpush1.bf16.xpose.msra.mxu0 %v4650
      %4662 = vmatprep.subr.bf16.mxu0 0
      %4663 = vmatpush1.bf16.xpose.msra.mxu0 %v4653
      %4664 = vmatprep.subr.bf16.mxu0 0
      %4665 = vmatpush1.bf16.xpose.msra.mxu0 %v4656
      %4666 = vmatprep.subr.bf16.mxu0 0
      %4667 = vmatpush1.bf16.xpose.msra.mxu0 0
      %4668 = vmatprep.subr.bf16.mxu0 0
      %4669 = vmatpush1.bf16.xpose.msra.mxu0 0
      %4670 = vmatprep.subr.bf16.mxu0 0
      %4671 = vmatpush1.bf16.xpose.msra.mxu0 0
      %4672 = vmatprep.subr.bf16.mxu0 0
      %4673 = vmatpush1.bf16.xpose.msra.mxu0 0
      %4674 = vmatprep.subr.bf16.mxu0 0
      %4675 = vmatpush1.bf16.xpose.msra.mxu0 0
      %4676 = vmatprep.subr.bf16.mxu0 0
      %4677 = vmatpush1.bf16.xpose.msra.mxu0 0
      %4678 = vmatprep.subr.bf16.mxu0 0
      %4679 = vmatpush1.bf16.xpose.msra.mxu0 0
      %4680 = vmatprep.subr.bf16.mxu0 0
      %4681 = vmatpush1.bf16.xpose.msra.mxu0 0
      %4682 = vmatprep.subr.bf16.mxu0 0
      %4683 = vmatpush1.bf16.xpose.msra.mxu0 0
      %4684 = vmatprep.subr.bf16.mxu0 0
      %4685 = vmatpush1.bf16.xpose.msra.mxu0 0
      %4686 = vmatprep.subr.bf16.mxu0 0
      %4687 = vmatpush1.bf16.xpose.msra.mxu0 0
      %4688 = vmatprep.subr.bf16.mxu0 0
      %4689 = vmatpush1.bf16.xpose.msra.mxu0 0
      %4690 = vmatprep.mubr.bf16.mxu0 0
      %4691 = vmatmul.mubr.bf16.gmra.mrb[0].mxu0 %v4635
      %v4692 = vpop.f32.mrb[0].mxu0
      %v4693 = vadd.f32 0.0, %v4692
      %v4694 = vpop.f32.mrb[0].mxu0
      %v4695 = vpop.f32.mrb[0].mxu0
      %v4696 = vadd.f32 0.0, %v4695
      %v4697 = vpop.f32.mrb[0].mxu0
      %4698 = vmatprep.mubr.bf16.mxu0 0
      %4699 = vmatmul.mubr.bf16.gmra.mrb[0].mxu0 %v4638
      %v4700 = vpop.f32.mrb[0].mxu0
      %v4701 = vadd.f32 0.0, %v4700
      %v4702 = vpop.f32.mrb[0].mxu0
      %v4703 = vpop.f32.mrb[0].mxu0
      %v4704 = vadd.f32 0.0, %v4703
      %v4705 = vpop.f32.mrb[0].mxu0
      %4706 = vmatprep.mubr.bf16.mxu0 0
      %4707 = vmatmul.mubr.bf16.gmra.mrb[0].mxu0 %v4641
      %v4708 = vpop.f32.mrb[0].mxu0
      %v4709 = vadd.f32 0.0, %v4708
      %v4710 = vpop.f32.mrb[0].mxu0
      %v4711 = vpop.f32.mrb[0].mxu0
      %v4712 = vadd.f32 0.0, %v4711
      %v4713 = vpop.f32.mrb[0].mxu0
      %4714 = vmatprep.mubr.bf16.mxu0 0
      %4715 = vmatmul.mubr.bf16.gmra.mrb[0].mxu0 %v4644
      %v4716 = vpop.f32.mrb[0].mxu0
      %v4717 = vadd.f32 0.0, %v4716
      %v4718 = vpop.f32.mrb[0].mxu0
      %v4719 = vpop.f32.mrb[0].mxu0
      %v4720 = vpop.f32.mrb[0].mxu0
      %4721 = vdwg.mxu0
      %v4722 = vpack.c.b16 %v1288, %v1287
      %v4723 = vpack.c.b16 %v1290, %v1289
      %v4724 = vpack.c.b16 %v1292, %v1291
      %v4725 = vpack.c.b16 %v1293, %v1293
      %4726 = vrot.lane.b32.xlu0 %v4722, 64
      %v4727 = vpop.permute.xlu0 %4726
      %4728 = vrot.lane.b32.xlu0 %v4723, 64
      %v4729 = vpop.permute.xlu0 %4728
      %4730 = vrot.lane.b32.xlu0 %v4724, 64
      %v4731 = vpop.permute.xlu0 %4730
      %4732 = vrot.lane.b32.xlu0 %v4725, 64
      %v4733 = vpop.permute.xlu0 %4732
      %v4735 = vsel %vm1733, %v4722, 0
      %v4738 = vsel %vm1733, %v4723, 0
      %v4741 = vsel %vm1733, %v4724, 0
      %v4744 = vsel %vm1733, %v4725, 0
      %v4747 = vsel %vm1733, %v4727, 0
      %v4750 = vsel %vm1733, %v4729, 0
      %v4753 = vsel %vm1733, %v4731, 0
      %v4756 = vsel %vm1733, %v4733, 0
      %4758 = vmatprep.subr.bf16.mxu0 0
      %4759 = vmatpush1.bf16.xpose.msra.mxu0 %v4747
      %4760 = vmatprep.subr.bf16.mxu0 0
      %4761 = vmatpush1.bf16.xpose.msra.mxu0 %v4750
      %4762 = vmatprep.subr.bf16.mxu0 0
      %4763 = vmatpush1.bf16.xpose.msra.mxu0 %v4753
      %4764 = vmatprep.subr.bf16.mxu0 0
      %4765 = vmatpush1.bf16.xpose.msra.mxu0 %v4756
      %4766 = vmatprep.subr.bf16.mxu0 0
      %4767 = vmatpush1.bf16.xpose.msra.mxu0 0
      %4768 = vmatprep.subr.bf16.mxu0 0
      %4769 = vmatpush1.bf16.xpose.msra.mxu0 0
      %4770 = vmatprep.subr.bf16.mxu0 0
      %4771 = vmatpush1.bf16.xpose.msra.mxu0 0
      %4772 = vmatprep.subr.bf16.mxu0 0
      %4773 = vmatpush1.bf16.xpose.msra.mxu0 0
      %4774 = vmatprep.subr.bf16.mxu0 0
      %4775 = vmatpush1.bf16.xpose.msra.mxu0 0
      %4776 = vmatprep.subr.bf16.mxu0 0
      %4777 = vmatpush1.bf16.xpose.msra.mxu0 0
      %4778 = vmatprep.subr.bf16.mxu0 0
      %4779 = vmatpush1.bf16.xpose.msra.mxu0 0
      %4780 = vmatprep.subr.bf16.mxu0 0
      %4781 = vmatpush1.bf16.xpose.msra.mxu0 0
      %4782 = vmatprep.subr.bf16.mxu0 0
      %4783 = vmatpush1.bf16.xpose.msra.mxu0 0
      %4784 = vmatprep.subr.bf16.mxu0 0
      %4785 = vmatpush1.bf16.xpose.msra.mxu0 0
      %4786 = vmatprep.subr.bf16.mxu0 0
      %4787 = vmatpush1.bf16.xpose.msra.mxu0 0
      %4788 = vmatprep.subr.bf16.mxu0 0
      %4789 = vmatpush1.bf16.xpose.msra.mxu0 0
      %4790 = vmatprep.mubr.bf16.mxu0 0
      %4791 = vmatmul.mubr.bf16.gmra.mrb[0].mxu0 %v4735
      %v4792 = vpop.f32.mrb[0].mxu0
      %v4793 = vadd.f32 0.0, %v4792
      %v4794 = vpop.f32.mrb[0].mxu0
      %v4795 = vpop.f32.mrb[0].mxu0
      %v4796 = vadd.f32 0.0, %v4795
      %v4797 = vpop.f32.mrb[0].mxu0
      %4798 = vmatprep.mubr.bf16.mxu0 0
      %4799 = vmatmul.mubr.bf16.gmra.mrb[0].mxu0 %v4738
      %v4800 = vpop.f32.mrb[0].mxu0
      %v4801 = vadd.f32 0.0, %v4800
      %v4802 = vpop.f32.mrb[0].mxu0
      %v4803 = vpop.f32.mrb[0].mxu0
      %v4804 = vadd.f32 0.0, %v4803
      %v4805 = vpop.f32.mrb[0].mxu0
      %4806 = vmatprep.mubr.bf16.mxu0 0
      %4807 = vmatmul.mubr.bf16.gmra.mrb[0].mxu0 %v4741
      %v4808 = vpop.f32.mrb[0].mxu0
      %v4809 = vadd.f32 0.0, %v4808
      %v4810 = vpop.f32.mrb[0].mxu0
      %v4811 = vpop.f32.mrb[0].mxu0
      %v4812 = vadd.f32 0.0, %v4811
      %v4813 = vpop.f32.mrb[0].mxu0
      %4814 = vmatprep.mubr.bf16.mxu0 0
      %4815 = vmatmul.mubr.bf16.gmra.mrb[0].mxu0 %v4744
      %v4816 = vpop.f32.mrb[0].mxu0
      %v4817 = vadd.f32 0.0, %v4816
      %v4818 = vpop.f32.mrb[0].mxu0
      %v4819 = vpop.f32.mrb[0].mxu0
      %v4820 = vpop.f32.mrb[0].mxu0
      %4821 = vdwg.mxu0
      %v4822 = vpack.c.b16 %v1295, %v1294
      %v4823 = vpack.c.b16 %v1297, %v1296
      %v4824 = vpack.c.b16 %v1299, %v1298
      %v4825 = vpack.c.b16 %v1300, %v1300
      %4826 = vrot.lane.b32.xlu0 %v4822, 64
      %v4827 = vpop.permute.xlu0 %4826
      %4828 = vrot.lane.b32.xlu0 %v4823, 64
      %v4829 = vpop.permute.xlu0 %4828
      %4830 = vrot.lane.b32.xlu0 %v4824, 64
      %v4831 = vpop.permute.xlu0 %4830
      %4832 = vrot.lane.b32.xlu0 %v4825, 64
      %v4833 = vpop.permute.xlu0 %4832
      %v4835 = vsel %vm1733, %v4822, 0
      %v4838 = vsel %vm1733, %v4823, 0
      %v4841 = vsel %vm1733, %v4824, 0
      %v4844 = vsel %vm1733, %v4825, 0
      %v4847 = vsel %vm1733, %v4827, 0
      %v4850 = vsel %vm1733, %v4829, 0
      %v4853 = vsel %vm1733, %v4831, 0
      %v4856 = vsel %vm1733, %v4833, 0
      %4858 = vmatprep.subr.bf16.mxu0 0
      %4859 = vmatpush1.bf16.xpose.msra.mxu0 %v4847
      %4860 = vmatprep.subr.bf16.mxu0 0
      %4861 = vmatpush1.bf16.xpose.msra.mxu0 %v4850
      %4862 = vmatprep.subr.bf16.mxu0 0
      %4863 = vmatpush1.bf16.xpose.msra.mxu0 %v4853
      %4864 = vmatprep.subr.bf16.mxu0 0
      %4865 = vmatpush1.bf16.xpose.msra.mxu0 %v4856
      %4866 = vmatprep.subr.bf16.mxu0 0
      %4867 = vmatpush1.bf16.xpose.msra.mxu0 0
      %4868 = vmatprep.subr.bf16.mxu0 0
      %4869 = vmatpush1.bf16.xpose.msra.mxu0 0
      %4870 = vmatprep.subr.bf16.mxu0 0
      %4871 = vmatpush1.bf16.xpose.msra.mxu0 0
      %4872 = vmatprep.subr.bf16.mxu0 0
      %4873 = vmatpush1.bf16.xpose.msra.mxu0 0
      %4874 = vmatprep.subr.bf16.mxu0 0
      %4875 = vmatpush1.bf16.xpose.msra.mxu0 0
      %4876 = vmatprep.subr.bf16.mxu0 0
      %4877 = vmatpush1.bf16.xpose.msra.mxu0 0
      %4878 = vmatprep.subr.bf16.mxu0 0
      %4879 = vmatpush1.bf16.xpose.msra.mxu0 0
      %4880 = vmatprep.subr.bf16.mxu0 0
      %4881 = vmatpush1.bf16.xpose.msra.mxu0 0
      %4882 = vmatprep.subr.bf16.mxu0 0
      %4883 = vmatpush1.bf16.xpose.msra.mxu0 0
      %4884 = vmatprep.subr.bf16.mxu0 0
      %4885 = vmatpush1.bf16.xpose.msra.mxu0 0
      %4886 = vmatprep.subr.bf16.mxu0 0
      %4887 = vmatpush1.bf16.xpose.msra.mxu0 0
      %4888 = vmatprep.subr.bf16.mxu0 0
      %4889 = vmatpush1.bf16.xpose.msra.mxu0 0
      %4890 = vmatprep.mubr.bf16.mxu0 0
      %4891 = vmatmul.mubr.bf16.gmra.mrb[0].mxu0 %v4835
      %v4892 = vpop.f32.mrb[0].mxu0
      %v4893 = vadd.f32 0.0, %v4892
      %v4894 = vpop.f32.mrb[0].mxu0
      %v4895 = vpop.f32.mrb[0].mxu0
      %v4896 = vadd.f32 0.0, %v4895
      %v4897 = vpop.f32.mrb[0].mxu0
      %4898 = vmatprep.mubr.bf16.mxu0 0
      %4899 = vmatmul.mubr.bf16.gmra.mrb[0].mxu0 %v4838
      %v4900 = vpop.f32.mrb[0].mxu0
      %v4901 = vadd.f32 0.0, %v4900
      %v4902 = vpop.f32.mrb[0].mxu0
      %v4903 = vpop.f32.mrb[0].mxu0
      %v4904 = vadd.f32 0.0, %v4903
      %v4905 = vpop.f32.mrb[0].mxu0
      %4906 = vmatprep.mubr.bf16.mxu0 0
      %4907 = vmatmul.mubr.bf16.gmra.mrb[0].mxu0 %v4841
      %v4908 = vpop.f32.mrb[0].mxu0
      %v4909 = vadd.f32 0.0, %v4908
      %v4910 = vpop.f32.mrb[0].mxu0
      %v4911 = vpop.f32.mrb[0].mxu0
      %v4912 = vadd.f32 0.0, %v4911
      %v4913 = vpop.f32.mrb[0].mxu0
      %4914 = vmatprep.mubr.bf16.mxu0 0
      %4915 = vmatmul.mubr.bf16.gmra.mrb[0].mxu0 %v4844
      %v4916 = vpop.f32.mrb[0].mxu0
      %v4917 = vadd.f32 0.0, %v4916
      %v4918 = vpop.f32.mrb[0].mxu0
      %v4919 = vpop.f32.mrb[0].mxu0
      %v4920 = vpop.f32.mrb[0].mxu0
      %4921 = vdwg.mxu0
      %v4922 = vld [vmem:[%s1] sm:$0xff]
      %v4923 = vld [vmem:[%s1 + $0x8] sm:$0xff]
      %v4924 = vld [vmem:[%s1 + $0x10] sm:$0xff]
      %v4925 = vld [vmem:[%s1 + $0x18] sm:$0xff]
      %v4926 = vld [vmem:[%s1 + $0x20] sm:$0xff]
      %v4927 = vld [vmem:[%s1 + $0x28] sm:$0xff]
      %v4928 = vld [vmem:[%s1 + $0x30] sm:$0xff]
      %v4929 = vld [vmem:[%s1 + $0x38] sm:$0xff]
      %v4930 = vld [vmem:[%s1 + $0x40] sm:$0xff]
      %v4931 = vld [vmem:[%s1 + $0x48] sm:$0xff]
      %v4932 = vld [vmem:[%s1 + $0x50] sm:$0xff]
      %v4933 = vld [vmem:[%s1 + $0x58] sm:$0xff]
      %v4934 = vld [vmem:[%s1 + $0x60] sm:$0xff]
      %v4935 = vld [vmem:[%s1 + $0x68] sm:$0xff]
      %v4936 = vld [vmem:[%s1 + $0x70] sm:$0xff]
      %v4937 = vld [vmem:[%s1 + $0x78] sm:$0xff]
      %v4938 = vld [vmem:[%s1 + $0x80] sm:$0xff]
      %v4939 = vld [vmem:[%s1 + $0x88] sm:$0xff]
      %v4940 = vld [vmem:[%s1 + $0x90] sm:$0xff]
      %v4941 = vld [vmem:[%s1 + $0x98] sm:$0xff]
      %v4942 = vld [vmem:[%s1 + $0xa0] sm:$0xff]
      %v4943 = vld [vmem:[%s1 + $0xa8] sm:$0xff]
      %v4944 = vld [vmem:[%s1 + $0xb0] sm:$0xff]
      %v4945 = vld [vmem:[%s1 + $0xb8] sm:$0xff]
      %v4946 = vld [vmem:[%s1 + $0xc0] sm:$0xff]
      %v4947 = vld [vmem:[%s1 + $0xc8] sm:$0xff]
      %v4948 = vld [vmem:[%s1 + $0xd0] sm:$0xff]
      %v4949 = vld [vmem:[%s1 + $0xd8] sm:$0xff]
      %v4950 = vadd.f32 %v1793, %v4922
      %v4951 = vadd.f32 %v1796, %v4923
      %v4952 = vadd.f32 %v1801, %v4924
      %v4953 = vadd.f32 %v1804, %v4925
      %v4954 = vadd.f32 %v1809, %v4926
      %v4955 = vadd.f32 %v1812, %v4927
      %v4956 = vadd.f32 %v1817, %v4928
      %v4957 = vadd.f32 %v1893, %v4922
      %v4958 = vadd.f32 %v1896, %v4923
      %v4959 = vadd.f32 %v1901, %v4924
      %v4960 = vadd.f32 %v1904, %v4925
      %v4961 = vadd.f32 %v1909, %v4926
      %v4962 = vadd.f32 %v1912, %v4927
      %v4963 = vadd.f32 %v1917, %v4928
      %v4964 = vadd.f32 %v1993, %v4922
      %v4965 = vadd.f32 %v1996, %v4923
      %v4966 = vadd.f32 %v2001, %v4924
      %v4967 = vadd.f32 %v2004, %v4925
      %v4968 = vadd.f32 %v2009, %v4926
      %v4969 = vadd.f32 %v2012, %v4927
      %v4970 = vadd.f32 %v2017, %v4928
      %v4971 = vadd.f32 %v2093, %v4922
      %v4972 = vadd.f32 %v2096, %v4923
      %v4973 = vadd.f32 %v2101, %v4924
      %v4974 = vadd.f32 %v2104, %v4925
      %v4975 = vadd.f32 %v2109, %v4926
      %v4976 = vadd.f32 %v2112, %v4927
      %v4977 = vadd.f32 %v2117, %v4928
      %v4978 = vadd.f32 %v2193, %v4922
      %v4979 = vadd.f32 %v2196, %v4923
      %v4980 = vadd.f32 %v2201, %v4924
      %v4981 = vadd.f32 %v2204, %v4925
      %v4982 = vadd.f32 %v2209, %v4926
      %v4983 = vadd.f32 %v2212, %v4927
      %v4984 = vadd.f32 %v2217, %v4928
      %v4985 = vadd.f32 %v2293, %v4922
      %v4986 = vadd.f32 %v2296, %v4923
      %v4987 = vadd.f32 %v2301, %v4924
      %v4988 = vadd.f32 %v2304, %v4925
      %v4989 = vadd.f32 %v2309, %v4926
      %v4990 = vadd.f32 %v2312, %v4927
      %v4991 = vadd.f32 %v2317, %v4928
      %v4992 = vadd.f32 %v2393, %v4922
      %v4993 = vadd.f32 %v2396, %v4923
      %v4994 = vadd.f32 %v2401, %v4924
      %v4995 = vadd.f32 %v2404, %v4925
      %v4996 = vadd.f32 %v2409, %v4926
      %v4997 = vadd.f32 %v2412, %v4927
      %v4998 = vadd.f32 %v2417, %v4928
      %v4999 = vadd.f32 %v2493, %v4922
      %v5000 = vadd.f32 %v2496, %v4923
      %v5001 = vadd.f32 %v2501, %v4924
      %v5002 = vadd.f32 %v2504, %v4925
      %v5003 = vadd.f32 %v2509, %v4926
      %v5004 = vadd.f32 %v2512, %v4927
      %v5005 = vadd.f32 %v2517, %v4928
      %v5006 = vadd.f32 %v2593, %v4929
      %v5007 = vadd.f32 %v2596, %v4930
      %v5008 = vadd.f32 %v2601, %v4931
      %v5009 = vadd.f32 %v2604, %v4932
      %v5010 = vadd.f32 %v2609, %v4933
      %v5011 = vadd.f32 %v2612, %v4934
      %v5012 = vadd.f32 %v2617, %v4935
      %v5013 = vadd.f32 %v2693, %v4929
      %v5014 = vadd.f32 %v2696, %v4930
      %v5015 = vadd.f32 %v2701, %v4931
      %v5016 = vadd.f32 %v2704, %v4932
      %v5017 = vadd.f32 %v2709, %v4933
      %v5018 = vadd.f32 %v2712, %v4934
      %v5019 = vadd.f32 %v2717, %v4935
      %v5020 = vadd.f32 %v2793, %v4929
      %v5021 = vadd.f32 %v2796, %v4930
      %v5022 = vadd.f32 %v2801, %v4931
      %v5023 = vadd.f32 %v2804, %v4932
      %v5024 = vadd.f32 %v2809, %v4933
      %v5025 = vadd.f32 %v2812, %v4934
      %v5026 = vadd.f32 %v2817, %v4935
      %v5027 = vadd.f32 %v2893, %v4929
      %v5028 = vadd.f32 %v2896, %v4930
      %v5029 = vadd.f32 %v2901, %v4931
      %v5030 = vadd.f32 %v2904, %v4932
      %v5031 = vadd.f32 %v2909, %v4933
      %v5032 = vadd.f32 %v2912, %v4934
      %v5033 = vadd.f32 %v2917, %v4935
      %v5034 = vadd.f32 %v2993, %v4929
      %v5035 = vadd.f32 %v2996, %v4930
      %v5036 = vadd.f32 %v3001, %v4931
      %v5037 = vadd.f32 %v3004, %v4932
      %v5038 = vadd.f32 %v3009, %v4933
      %v5039 = vadd.f32 %v3012, %v4934
      %v5040 = vadd.f32 %v3017, %v4935
      %v5041 = vadd.f32 %v3093, %v4929
      %v5042 = vadd.f32 %v3096, %v4930
      %v5043 = vadd.f32 %v3101, %v4931
      %v5044 = vadd.f32 %v3104, %v4932
      %v5045 = vadd.f32 %v3109, %v4933
      %v5046 = vadd.f32 %v3112, %v4934
      %v5047 = vadd.f32 %v3117, %v4935
      %v5048 = vadd.f32 %v3193, %v4929
      %v5049 = vadd.f32 %v3196, %v4930
      %v5050 = vadd.f32 %v3201, %v4931
      %v5051 = vadd.f32 %v3204, %v4932
      %v5052 = vadd.f32 %v3209, %v4933
      %v5053 = vadd.f32 %v3212, %v4934
      %v5054 = vadd.f32 %v3217, %v4935
      %v5055 = vadd.f32 %v3293, %v4929
      %v5056 = vadd.f32 %v3296, %v4930
      %v5057 = vadd.f32 %v3301, %v4931
      %v5058 = vadd.f32 %v3304, %v4932
      %v5059 = vadd.f32 %v3309, %v4933
      %v5060 = vadd.f32 %v3312, %v4934
      %v5061 = vadd.f32 %v3317, %v4935
      %v5062 = vadd.f32 %v3393, %v4936
      %v5063 = vadd.f32 %v3396, %v4937
      %v5064 = vadd.f32 %v3401, %v4938
      %v5065 = vadd.f32 %v3404, %v4939
      %v5066 = vadd.f32 %v3409, %v4940
      %v5067 = vadd.f32 %v3412, %v4941
      %v5068 = vadd.f32 %v3417, %v4942
      %v5069 = vadd.f32 %v3493, %v4936
      %v5070 = vadd.f32 %v3496, %v4937
      %v5071 = vadd.f32 %v3501, %v4938
      %v5072 = vadd.f32 %v3504, %v4939
      %v5073 = vadd.f32 %v3509, %v4940
      %v5074 = vadd.f32 %v3512, %v4941
      %v5075 = vadd.f32 %v3517, %v4942
      %v5076 = vadd.f32 %v3593, %v4936
      %v5077 = vadd.f32 %v3596, %v4937
      %v5078 = vadd.f32 %v3601, %v4938
      %v5079 = vadd.f32 %v3604, %v4939
      %v5080 = vadd.f32 %v3609, %v4940
      %v5081 = vadd.f32 %v3612, %v4941
      %v5082 = vadd.f32 %v3617, %v4942
      %v5083 = vadd.f32 %v3693, %v4936
      %v5084 = vadd.f32 %v3696, %v4937
      %v5085 = vadd.f32 %v3701, %v4938
      %v5086 = vadd.f32 %v3704, %v4939
      %v5087 = vadd.f32 %v3709, %v4940
      %v5088 = vadd.f32 %v3712, %v4941
      %v5089 = vadd.f32 %v3717, %v4942
      %v5090 = vadd.f32 %v3793, %v4936
      %v5091 = vadd.f32 %v3796, %v4937
      %v5092 = vadd.f32 %v3801, %v4938
      %v5093 = vadd.f32 %v3804, %v4939
      %v5094 = vadd.f32 %v3809, %v4940
      %v5095 = vadd.f32 %v3812, %v4941
      %v5096 = vadd.f32 %v3817, %v4942
      %v5097 = vadd.f32 %v3893, %v4936
      %v5098 = vadd.f32 %v3896, %v4937
      %v5099 = vadd.f32 %v3901, %v4938
      %v5100 = vadd.f32 %v3904, %v4939
      %v5101 = vadd.f32 %v3909, %v4940
      %v5102 = vadd.f32 %v3912, %v4941
      %v5103 = vadd.f32 %v3917, %v4942
      %v5104 = vadd.f32 %v3993, %v4936
      %v5105 = vadd.f32 %v3996, %v4937
      %v5106 = vadd.f32 %v4001, %v4938
      %v5107 = vadd.f32 %v4004, %v4939
      %v5108 = vadd.f32 %v4009, %v4940
      %v5109 = vadd.f32 %v4012, %v4941
      %v5110 = vadd.f32 %v4017, %v4942
      %v5111 = vadd.f32 %v4093, %v4936
      %v5112 = vadd.f32 %v4096, %v4937
      %v5113 = vadd.f32 %v4101, %v4938
      %v5114 = vadd.f32 %v4104, %v4939
      %v5115 = vadd.f32 %v4109, %v4940
      %v5116 = vadd.f32 %v4112, %v4941
      %v5117 = vadd.f32 %v4117, %v4942
      %v5118 = vadd.f32 %v4193, %v4943
      %v5119 = vadd.f32 %v4196, %v4944
      %v5120 = vadd.f32 %v4201, %v4945
      %v5121 = vadd.f32 %v4204, %v4946
      %v5122 = vadd.f32 %v4209, %v4947
      %v5123 = vadd.f32 %v4212, %v4948
      %v5124 = vadd.f32 %v4217, %v4949
      %v5125 = vadd.f32 %v4293, %v4943
      %v5126 = vadd.f32 %v4296, %v4944
      %v5127 = vadd.f32 %v4301, %v4945
      %v5128 = vadd.f32 %v4304, %v4946
      %v5129 = vadd.f32 %v4309, %v4947
      %v5130 = vadd.f32 %v4312, %v4948
      %v5131 = vadd.f32 %v4317, %v4949
      %v5132 = vadd.f32 %v4393, %v4943
      %v5133 = vadd.f32 %v4396, %v4944
      %v5134 = vadd.f32 %v4401, %v4945
      %v5135 = vadd.f32 %v4404, %v4946
      %v5136 = vadd.f32 %v4409, %v4947
      %v5137 = vadd.f32 %v4412, %v4948
      %v5138 = vadd.f32 %v4417, %v4949
      %v5139 = vadd.f32 %v4493, %v4943
      %v5140 = vadd.f32 %v4496, %v4944
      %v5141 = vadd.f32 %v4501, %v4945
      %v5142 = vadd.f32 %v4504, %v4946
      %v5143 = vadd.f32 %v4509, %v4947
      %v5144 = vadd.f32 %v4512, %v4948
      %v5145 = vadd.f32 %v4517, %v4949
      %v5146 = vadd.f32 %v4593, %v4943
      %v5147 = vadd.f32 %v4596, %v4944
      %v5148 = vadd.f32 %v4601, %v4945
      %v5149 = vadd.f32 %v4604, %v4946
      %v5150 = vadd.f32 %v4609, %v4947
      %v5151 = vadd.f32 %v4612, %v4948
      %v5152 = vadd.f32 %v4617, %v4949
      %v5153 = vadd.f32 %v4693, %v4943
      %v5154 = vadd.f32 %v4696, %v4944
      %v5155 = vadd.f32 %v4701, %v4945
      %v5156 = vadd.f32 %v4704, %v4946
      %v5157 = vadd.f32 %v4709, %v4947
      %v5158 = vadd.f32 %v4712, %v4948
      %v5159 = vadd.f32 %v4717, %v4949
      %v5160 = vadd.f32 %v4793, %v4943
      %v5161 = vadd.f32 %v4796, %v4944
      %v5162 = vadd.f32 %v4801, %v4945
      %v5163 = vadd.f32 %v4804, %v4946
      %v5164 = vadd.f32 %v4809, %v4947
      %v5165 = vadd.f32 %v4812, %v4948
      %v5166 = vadd.f32 %v4817, %v4949
      %v5167 = vadd.f32 %v4893, %v4943
      %v5168 = vadd.f32 %v4896, %v4944
      %v5169 = vadd.f32 %v4901, %v4945
      %v5170 = vadd.f32 %v4904, %v4946
      %v5171 = vadd.f32 %v4909, %v4947
      %v5172 = vadd.f32 %v4912, %v4948
      %v5173 = vadd.f32 %v4917, %v4949
      %v5174 = vld [vmem:[%s2] sm:$0xff]
      %v5175 = vld [vmem:[%s2 + $0x8] sm:$0xff]
      %v5176 = vld [vmem:[%s2 + $0x10] sm:$0xff]
      %v5177 = vld [vmem:[%s2 + $0x18] sm:$0xff]
      %v5178 = vld [vmem:[%s2 + $0x20] sm:$0xff]
      %v5179 = vld [vmem:[%s2 + $0x28] sm:$0xff]
      %v5180 = vld [vmem:[%s2 + $0x30] sm:$0xff]
      %v5181 = vld [vmem:[%s2 + $0x38] sm:$0xff]
      %v5182 = vld [vmem:[%s2 + $0x40] sm:$0xff]
      %v5183 = vld [vmem:[%s2 + $0x48] sm:$0xff]
      %v5184 = vld [vmem:[%s2 + $0x50] sm:$0xff]
      %v5185 = vld [vmem:[%s2 + $0x58] sm:$0xff]
      %v5186 = vld [vmem:[%s2 + $0x60] sm:$0xff]
      %v5187 = vld [vmem:[%s2 + $0x68] sm:$0xff]
      %v5188 = vld [vmem:[%s2 + $0x70] sm:$0xff]
      %v5189 = vld [vmem:[%s2 + $0x78] sm:$0xff]
      %v5190 = vld [vmem:[%s2 + $0x80] sm:$0xff]
      %v5191 = vld [vmem:[%s2 + $0x88] sm:$0xff]
      %v5192 = vld [vmem:[%s2 + $0x90] sm:$0xff]
      %v5193 = vld [vmem:[%s2 + $0x98] sm:$0xff]
      %v5194 = vld [vmem:[%s2 + $0xa0] sm:$0xff]
      %v5195 = vld [vmem:[%s2 + $0xa8] sm:$0xff]
      %v5196 = vld [vmem:[%s2 + $0xb0] sm:$0xff]
      %v5197 = vld [vmem:[%s2 + $0xb8] sm:$0xff]
      %v5198 = vld [vmem:[%s2 + $0xc0] sm:$0xff]
      %v5199 = vld [vmem:[%s2 + $0xc8] sm:$0xff]
      %v5200 = vld [vmem:[%s2 + $0xd0] sm:$0xff]
      %v5201 = vld [vmem:[%s2 + $0xd8] sm:$0xff]
      %v5202 = vadd.f32 %v4950, %v5174
      %v5203 = vadd.f32 %v4951, %v5175
      %v5204 = vadd.f32 %v4952, %v5176
      %v5205 = vadd.f32 %v4953, %v5177
      %v5206 = vadd.f32 %v4954, %v5178
      %v5207 = vadd.f32 %v4955, %v5179
      %v5208 = vadd.f32 %v4956, %v5180
      %v5209 = vadd.f32 %v4957, %v5181
      %v5210 = vadd.f32 %v4958, %v5182
      %v5211 = vadd.f32 %v4959, %v5183
      %v5212 = vadd.f32 %v4960, %v5184
      %v5213 = vadd.f32 %v4961, %v5185
      %v5214 = vadd.f32 %v4962, %v5186
      %v5215 = vadd.f32 %v4963, %v5187
      %v5216 = vadd.f32 %v4964, %v5188
      %v5217 = vadd.f32 %v4965, %v5189
      %v5218 = vadd.f32 %v4966, %v5190
      %v5219 = vadd.f32 %v4967, %v5191
      %v5220 = vadd.f32 %v4968, %v5192
      %v5221 = vadd.f32 %v4969, %v5193
      %v5222 = vadd.f32 %v4970, %v5194
      %v5223 = vadd.f32 %v4971, %v5195
      %v5224 = vadd.f32 %v4972, %v5196
      %v5225 = vadd.f32 %v4973, %v5197
      %v5226 = vadd.f32 %v4974, %v5198
      %v5227 = vadd.f32 %v4975, %v5199
      %v5228 = vadd.f32 %v4976, %v5200
      %v5229 = vadd.f32 %v4977, %v5201
      %v5230 = vadd.f32 %v4978, %v5174
      %v5231 = vadd.f32 %v4979, %v5175
      %v5232 = vadd.f32 %v4980, %v5176
      %v5233 = vadd.f32 %v4981, %v5177
      %v5234 = vadd.f32 %v4982, %v5178
      %v5235 = vadd.f32 %v4983, %v5179
      %v5236 = vadd.f32 %v4984, %v5180
      %v5237 = vadd.f32 %v4985, %v5181
      %v5238 = vadd.f32 %v4986, %v5182
      %v5239 = vadd.f32 %v4987, %v5183
      %v5240 = vadd.f32 %v4988, %v5184
      %v5241 = vadd.f32 %v4989, %v5185
      %v5242 = vadd.f32 %v4990, %v5186
      %v5243 = vadd.f32 %v4991, %v5187
      %v5244 = vadd.f32 %v4992, %v5188
      %v5245 = vadd.f32 %v4993, %v5189
      %v5246 = vadd.f32 %v4994, %v5190
      %v5247 = vadd.f32 %v4995, %v5191
      %v5248 = vadd.f32 %v4996, %v5192
      %v5249 = vadd.f32 %v4997, %v5193
      %v5250 = vadd.f32 %v4998, %v5194
      %v5251 = vadd.f32 %v4999, %v5195
      %v5252 = vadd.f32 %v5000, %v5196
      %v5253 = vadd.f32 %v5001, %v5197
      %v5254 = vadd.f32 %v5002, %v5198
      %v5255 = vadd.f32 %v5003, %v5199
      %v5256 = vadd.f32 %v5004, %v5200
      %v5257 = vadd.f32 %v5005, %v5201
      %v5258 = vadd.f32 %v5006, %v5174
      %v5259 = vadd.f32 %v5007, %v5175
      %v5260 = vadd.f32 %v5008, %v5176
      %v5261 = vadd.f32 %v5009, %v5177
      %v5262 = vadd.f32 %v5010, %v5178
      %v5263 = vadd.f32 %v5011, %v5179
      %v5264 = vadd.f32 %v5012, %v5180
      %v5265 = vadd.f32 %v5013, %v5181
      %v5266 = vadd.f32 %v5014, %v5182
      %v5267 = vadd.f32 %v5015, %v5183
      %v5268 = vadd.f32 %v5016, %v5184
      %v5269 = vadd.f32 %v5017, %v5185
      %v5270 = vadd.f32 %v5018, %v5186
      %v5271 = vadd.f32 %v5019, %v5187
      %v5272 = vadd.f32 %v5020, %v5188
      %v5273 = vadd.f32 %v5021, %v5189
      %v5274 = vadd.f32 %v5022, %v5190
      %v5275 = vadd.f32 %v5023, %v5191
      %v5276 = vadd.f32 %v5024, %v5192
      %v5277 = vadd.f32 %v5025, %v5193
      %v5278 = vadd.f32 %v5026, %v5194
      %v5279 = vadd.f32 %v5027, %v5195
      %v5280 = vadd.f32 %v5028, %v5196
      %v5281 = vadd.f32 %v5029, %v5197
      %v5282 = vadd.f32 %v5030, %v5198
      %v5283 = vadd.f32 %v5031, %v5199
      %v5284 = vadd.f32 %v5032, %v5200
      %v5285 = vadd.f32 %v5033, %v5201
      %v5286 = vadd.f32 %v5034, %v5174
      %v5287 = vadd.f32 %v5035, %v5175
      %v5288 = vadd.f32 %v5036, %v5176
      %v5289 = vadd.f32 %v5037, %v5177
      %v5290 = vadd.f32 %v5038, %v5178
      %v5291 = vadd.f32 %v5039, %v5179
      %v5292 = vadd.f32 %v5040, %v5180
      %v5293 = vadd.f32 %v5041, %v5181
      %v5294 = vadd.f32 %v5042, %v5182
      %v5295 = vadd.f32 %v5043, %v5183
      %v5296 = vadd.f32 %v5044, %v5184
      %v5297 = vadd.f32 %v5045, %v5185
      %v5298 = vadd.f32 %v5046, %v5186
      %v5299 = vadd.f32 %v5047, %v5187
      %v5300 = vadd.f32 %v5048, %v5188
      %v5301 = vadd.f32 %v5049, %v5189
      %v5302 = vadd.f32 %v5050, %v5190
      %v5303 = vadd.f32 %v5051, %v5191
      %v5304 = vadd.f32 %v5052, %v5192
      %v5305 = vadd.f32 %v5053, %v5193
      %v5306 = vadd.f32 %v5054, %v5194
      %v5307 = vadd.f32 %v5055, %v5195
      %v5308 = vadd.f32 %v5056, %v5196
      %v5309 = vadd.f32 %v5057, %v5197
      %v5310 = vadd.f32 %v5058, %v5198
      %v5311 = vadd.f32 %v5059, %v5199
      %v5312 = vadd.f32 %v5060, %v5200
      %v5313 = vadd.f32 %v5061, %v5201
      %v5314 = vadd.f32 %v5062, %v5174
      %v5315 = vadd.f32 %v5063, %v5175
      %v5316 = vadd.f32 %v5064, %v5176
      %v5317 = vadd.f32 %v5065, %v5177
      %v5318 = vadd.f32 %v5066, %v5178
      %v5319 = vadd.f32 %v5067, %v5179
      %v5320 = vadd.f32 %v5068, %v5180
      %v5321 = vadd.f32 %v5069, %v5181
      %v5322 = vadd.f32 %v5070, %v5182
      %v5323 = vadd.f32 %v5071, %v5183
      %v5324 = vadd.f32 %v5072, %v5184
      %v5325 = vadd.f32 %v5073, %v5185
      %v5326 = vadd.f32 %v5074, %v5186
      %v5327 = vadd.f32 %v5075, %v5187
      %v5328 = vadd.f32 %v5076, %v5188
      %v5329 = vadd.f32 %v5077, %v5189
      %v5330 = vadd.f32 %v5078, %v5190
      %v5331 = vadd.f32 %v5079, %v5191
      %v5332 = vadd.f32 %v5080, %v5192
      %v5333 = vadd.f32 %v5081, %v5193
      %v5334 = vadd.f32 %v5082, %v5194
      %v5335 = vadd.f32 %v5083, %v5195
      %v5336 = vadd.f32 %v5084, %v5196
      %v5337 = vadd.f32 %v5085, %v5197
      %v5338 = vadd.f32 %v5086, %v5198
      %v5339 = vadd.f32 %v5087, %v5199
      %v5340 = vadd.f32 %v5088, %v5200
      %v5341 = vadd.f32 %v5089, %v5201
      %v5342 = vadd.f32 %v5090, %v5174
      %v5343 = vadd.f32 %v5091, %v5175
      %v5344 = vadd.f32 %v5092, %v5176
      %v5345 = vadd.f32 %v5093, %v5177
      %v5346 = vadd.f32 %v5094, %v5178
      %v5347 = vadd.f32 %v5095, %v5179
      %v5348 = vadd.f32 %v5096, %v5180
      %v5349 = vadd.f32 %v5097, %v5181
      %v5350 = vadd.f32 %v5098, %v5182
      %v5351 = vadd.f32 %v5099, %v5183
      %v5352 = vadd.f32 %v5100, %v5184
      %v5353 = vadd.f32 %v5101, %v5185
      %v5354 = vadd.f32 %v5102, %v5186
      %v5355 = vadd.f32 %v5103, %v5187
      %v5356 = vadd.f32 %v5104, %v5188
      %v5357 = vadd.f32 %v5105, %v5189
      %v5358 = vadd.f32 %v5106, %v5190
      %v5359 = vadd.f32 %v5107, %v5191
      %v5360 = vadd.f32 %v5108, %v5192
      %v5361 = vadd.f32 %v5109, %v5193
      %v5362 = vadd.f32 %v5110, %v5194
      %v5363 = vadd.f32 %v5111, %v5195
      %v5364 = vadd.f32 %v5112, %v5196
      %v5365 = vadd.f32 %v5113, %v5197
      %v5366 = vadd.f32 %v5114, %v5198
      %v5367 = vadd.f32 %v5115, %v5199
      %v5368 = vadd.f32 %v5116, %v5200
      %v5369 = vadd.f32 %v5117, %v5201
      %v5370 = vadd.f32 %v5118, %v5174
      %v5371 = vadd.f32 %v5119, %v5175
      %v5372 = vadd.f32 %v5120, %v5176
      %v5373 = vadd.f32 %v5121, %v5177
      %v5374 = vadd.f32 %v5122, %v5178
      %v5375 = vadd.f32 %v5123, %v5179
      %v5376 = vadd.f32 %v5124, %v5180
      %v5377 = vadd.f32 %v5125, %v5181
      %v5378 = vadd.f32 %v5126, %v5182
      %v5379 = vadd.f32 %v5127, %v5183
      %v5380 = vadd.f32 %v5128, %v5184
      %v5381 = vadd.f32 %v5129, %v5185
      %v5382 = vadd.f32 %v5130, %v5186
      %v5383 = vadd.f32 %v5131, %v5187
      %v5384 = vadd.f32 %v5132, %v5188
      %v5385 = vadd.f32 %v5133, %v5189
      %v5386 = vadd.f32 %v5134, %v5190
      %v5387 = vadd.f32 %v5135, %v5191
      %v5388 = vadd.f32 %v5136, %v5192
      %v5389 = vadd.f32 %v5137, %v5193
      %v5390 = vadd.f32 %v5138, %v5194
      %v5391 = vadd.f32 %v5139, %v5195
      %v5392 = vadd.f32 %v5140, %v5196
      %v5393 = vadd.f32 %v5141, %v5197
      %v5394 = vadd.f32 %v5142, %v5198
      %v5395 = vadd.f32 %v5143, %v5199
      %v5396 = vadd.f32 %v5144, %v5200
      %v5397 = vadd.f32 %v5145, %v5201
      %v5398 = vadd.f32 %v5146, %v5174
      %v5399 = vadd.f32 %v5147, %v5175
      %v5400 = vadd.f32 %v5148, %v5176
      %v5401 = vadd.f32 %v5149, %v5177
      %v5402 = vadd.f32 %v5150, %v5178
      %v5403 = vadd.f32 %v5151, %v5179
      %v5404 = vadd.f32 %v5152, %v5180
      %v5405 = vadd.f32 %v5153, %v5181
      %v5406 = vadd.f32 %v5154, %v5182
      %v5407 = vadd.f32 %v5155, %v5183
      %v5408 = vadd.f32 %v5156, %v5184
      %v5409 = vadd.f32 %v5157, %v5185
      %v5410 = vadd.f32 %v5158, %v5186
      %v5411 = vadd.f32 %v5159, %v5187
      %v5412 = vadd.f32 %v5160, %v5188
      %v5413 = vadd.f32 %v5161, %v5189
      %v5414 = vadd.f32 %v5162, %v5190
      %v5415 = vadd.f32 %v5163, %v5191
      %v5416 = vadd.f32 %v5164, %v5192
      %v5417 = vadd.f32 %v5165, %v5193
      %v5418 = vadd.f32 %v5166, %v5194
      %v5419 = vadd.f32 %v5167, %v5195
      %v5420 = vadd.f32 %v5168, %v5196
      %v5421 = vadd.f32 %v5169, %v5197
      %v5422 = vadd.f32 %v5170, %v5198
      %v5423 = vadd.f32 %v5171, %v5199
      %v5424 = vadd.f32 %v5172, %v5200
      %v5425 = vadd.f32 %v5173, %v5201
      %vm5426 = vcmask 457728
      %v5427 = vsel %vm5426, %v5202, -inf
      %5428 = vmax.xlane.f32.xlu0 %v5427
      %v5429 = vpop.xlane.xlu0 %5428
      %v5430 = vsel %vm5426, %v5203, -inf
      %5431 = vmax.xlane.f32.xlu0 %v5430
      %v5432 = vpop.xlane.xlu0 %5431
      %v5433 = vsel %vm5426, %v5204, -inf
      %5434 = vmax.xlane.f32.xlu0 %v5433
      %v5435 = vpop.xlane.xlu0 %5434
      %v5436 = vsel %vm5426, %v5205, -inf
      %5437 = vmax.xlane.f32.xlu0 %v5436
      %v5438 = vpop.xlane.xlu0 %5437
      %v5439 = vsel %vm5426, %v5206, -inf
      %5440 = vmax.xlane.f32.xlu0 %v5439
      %v5441 = vpop.xlane.xlu0 %5440
      %v5442 = vsel %vm5426, %v5207, -inf
      %5443 = vmax.xlane.f32.xlu0 %v5442
      %v5444 = vpop.xlane.xlu0 %5443
      %v5445 = vsel %vm5426, %v5208, -inf
      %5446 = vmax.xlane.f32.xlu0 %v5445
      %v5447 = vpop.xlane.xlu0 %5446
      %v5448 = vsel %vm5426, %v5209, -inf
      %5449 = vmax.xlane.f32.xlu0 %v5448
      %v5450 = vpop.xlane.xlu0 %5449
      %v5451 = vsel %vm5426, %v5210, -inf
      %5452 = vmax.xlane.f32.xlu0 %v5451
      %v5453 = vpop.xlane.xlu0 %5452
      %v5454 = vsel %vm5426, %v5211, -inf
      %5455 = vmax.xlane.f32.xlu0 %v5454
      %v5456 = vpop.xlane.xlu0 %5455
      %v5457 = vsel %vm5426, %v5212, -inf
      %5458 = vmax.xlane.f32.xlu0 %v5457
      %v5459 = vpop.xlane.xlu0 %5458
      %v5460 = vsel %vm5426, %v5213, -inf
      %5461 = vmax.xlane.f32.xlu0 %v5460
      %v5462 = vpop.xlane.xlu0 %5461
      %v5463 = vsel %vm5426, %v5214, -inf
      %5464 = vmax.xlane.f32.xlu0 %v5463
      %v5465 = vpop.xlane.xlu0 %5464
      %v5466 = vsel %vm5426, %v5215, -inf
      %5467 = vmax.xlane.f32.xlu0 %v5466
      %v5468 = vpop.xlane.xlu0 %5467
      %v5469 = vsel %vm5426, %v5216, -inf
      %5470 = vmax.xlane.f32.xlu0 %v5469
      %v5471 = vpop.xlane.xlu0 %5470
      %v5472 = vsel %vm5426, %v5217, -inf
      %5473 = vmax.xlane.f32.xlu0 %v5472
      %v5474 = vpop.xlane.xlu0 %5473
      %v5475 = vsel %vm5426, %v5218, -inf
      %5476 = vmax.xlane.f32.xlu0 %v5475
      %v5477 = vpop.xlane.xlu0 %5476
      %v5478 = vsel %vm5426, %v5219, -inf
      %5479 = vmax.xlane.f32.xlu0 %v5478
      %v5480 = vpop.xlane.xlu0 %5479
      %v5481 = vsel %vm5426, %v5220, -inf
      %5482 = vmax.xlane.f32.xlu0 %v5481
      %v5483 = vpop.xlane.xlu0 %5482
      %v5484 = vsel %vm5426, %v5221, -inf
      %5485 = vmax.xlane.f32.xlu0 %v5484
      %v5486 = vpop.xlane.xlu0 %5485
      %v5487 = vsel %vm5426, %v5222, -inf
      %5488 = vmax.xlane.f32.xlu0 %v5487
      %v5489 = vpop.xlane.xlu0 %5488
      %v5490 = vsel %vm5426, %v5223, -inf
      %5491 = vmax.xlane.f32.xlu0 %v5490
      %v5492 = vpop.xlane.xlu0 %5491
      %v5493 = vsel %vm5426, %v5224, -inf
      %5494 = vmax.xlane.f32.xlu0 %v5493
      %v5495 = vpop.xlane.xlu0 %5494
      %v5496 = vsel %vm5426, %v5225, -inf
      %5497 = vmax.xlane.f32.xlu0 %v5496
      %v5498 = vpop.xlane.xlu0 %5497
      %v5499 = vsel %vm5426, %v5226, -inf
      %5500 = vmax.xlane.f32.xlu0 %v5499
      %v5501 = vpop.xlane.xlu0 %5500
      %v5502 = vsel %vm5426, %v5227, -inf
      %5503 = vmax.xlane.f32.xlu0 %v5502
      %v5504 = vpop.xlane.xlu0 %5503
      %v5505 = vsel %vm5426, %v5228, -inf
      %5506 = vmax.xlane.f32.xlu0 %v5505
      %v5507 = vpop.xlane.xlu0 %5506
      %v5508 = vsel %vm5426, %v5229, -inf
      %5509 = vmax.xlane.f32.xlu0 %v5508
      %v5510 = vpop.xlane.xlu0 %5509
      %v5511 = vsel %vm5426, %v5230, -inf
      %5512 = vmax.xlane.f32.xlu0 %v5511
      %v5513 = vpop.xlane.xlu0 %5512
      %v5514 = vsel %vm5426, %v5231, -inf
      %5515 = vmax.xlane.f32.xlu0 %v5514
      %v5516 = vpop.xlane.xlu0 %5515
      %v5517 = vsel %vm5426, %v5232, -inf
      %5518 = vmax.xlane.f32.xlu0 %v5517
      %v5519 = vpop.xlane.xlu0 %5518
      %v5520 = vsel %vm5426, %v5233, -inf
      %5521 = vmax.xlane.f32.xlu0 %v5520
      %v5522 = vpop.xlane.xlu0 %5521
      %v5523 = vsel %vm5426, %v5234, -inf
      %5524 = vmax.xlane.f32.xlu0 %v5523
      %v5525 = vpop.xlane.xlu0 %5524
      %v5526 = vsel %vm5426, %v5235, -inf
      %5527 = vmax.xlane.f32.xlu0 %v5526
      %v5528 = vpop.xlane.xlu0 %5527
      %v5529 = vsel %vm5426, %v5236, -inf
      %5530 = vmax.xlane.f32.xlu0 %v5529
      %v5531 = vpop.xlane.xlu0 %5530
      %v5532 = vsel %vm5426, %v5237, -inf
      %5533 = vmax.xlane.f32.xlu0 %v5532
      %v5534 = vpop.xlane.xlu0 %5533
      %v5535 = vsel %vm5426, %v5238, -inf
      %5536 = vmax.xlane.f32.xlu0 %v5535
      %v5537 = vpop.xlane.xlu0 %5536
      %v5538 = vsel %vm5426, %v5239, -inf
      %5539 = vmax.xlane.f32.xlu0 %v5538
      %v5540 = vpop.xlane.xlu0 %5539
      %v5541 = vsel %vm5426, %v5240, -inf
      %5542 = vmax.xlane.f32.xlu0 %v5541
      %v5543 = vpop.xlane.xlu0 %5542
      %v5544 = vsel %vm5426, %v5241, -inf
      %5545 = vmax.xlane.f32.xlu0 %v5544
      %v5546 = vpop.xlane.xlu0 %5545
      %v5547 = vsel %vm5426, %v5242, -inf
      %5548 = vmax.xlane.f32.xlu0 %v5547
      %v5549 = vpop.xlane.xlu0 %5548
      %v5550 = vsel %vm5426, %v5243, -inf
      %5551 = vmax.xlane.f32.xlu0 %v5550
      %v5552 = vpop.xlane.xlu0 %5551
      %v5553 = vsel %vm5426, %v5244, -inf
      %5554 = vmax.xlane.f32.xlu0 %v5553
      %v5555 = vpop.xlane.xlu0 %5554
      %v5556 = vsel %vm5426, %v5245, -inf
      %5557 = vmax.xlane.f32.xlu0 %v5556
      %v5558 = vpop.xlane.xlu0 %5557
      %v5559 = vsel %vm5426, %v5246, -inf
      %5560 = vmax.xlane.f32.xlu0 %v5559
      %v5561 = vpop.xlane.xlu0 %5560
      %v5562 = vsel %vm5426, %v5247, -inf
      %5563 = vmax.xlane.f32.xlu0 %v5562
      %v5564 = vpop.xlane.xlu0 %5563
      %v5565 = vsel %vm5426, %v5248, -inf
      %5566 = vmax.xlane.f32.xlu0 %v5565
      %v5567 = vpop.xlane.xlu0 %5566
      %v5568 = vsel %vm5426, %v5249, -inf
      %5569 = vmax.xlane.f32.xlu0 %v5568
      %v5570 = vpop.xlane.xlu0 %5569
      %v5571 = vsel %vm5426, %v5250, -inf
      %5572 = vmax.xlane.f32.xlu0 %v5571
      %v5573 = vpop.xlane.xlu0 %5572
      %v5574 = vsel %vm5426, %v5251, -inf
      %5575 = vmax.xlane.f32.xlu0 %v5574
      %v5576 = vpop.xlane.xlu0 %5575
      %v5577 = vsel %vm5426, %v5252, -inf
      %5578 = vmax.xlane.f32.xlu0 %v5577
      %v5579 = vpop.xlane.xlu0 %5578
      %v5580 = vsel %vm5426, %v5253, -inf
      %5581 = vmax.xlane.f32.xlu0 %v5580
      %v5582 = vpop.xlane.xlu0 %5581
      %v5583 = vsel %vm5426, %v5254, -inf
      %5584 = vmax.xlane.f32.xlu0 %v5583
      %v5585 = vpop.xlane.xlu0 %5584
      %v5586 = vsel %vm5426, %v5255, -inf
      %5587 = vmax.xlane.f32.xlu0 %v5586
      %v5588 = vpop.xlane.xlu0 %5587
      %v5589 = vsel %vm5426, %v5256, -inf
      %5590 = vmax.xlane.f32.xlu0 %v5589
      %v5591 = vpop.xlane.xlu0 %5590
      %v5592 = vsel %vm5426, %v5257, -inf
      %5593 = vmax.xlane.f32.xlu0 %v5592
      %v5594 = vpop.xlane.xlu0 %5593
      %v5595 = vsel %vm5426, %v5258, -inf
      %5596 = vmax.xlane.f32.xlu0 %v5595
      %v5597 = vpop.xlane.xlu0 %5596
      %v5598 = vsel %vm5426, %v5259, -inf
      %5599 = vmax.xlane.f32.xlu0 %v5598
      %v5600 = vpop.xlane.xlu0 %5599
      %v5601 = vsel %vm5426, %v5260, -inf
      %5602 = vmax.xlane.f32.xlu0 %v5601
      %v5603 = vpop.xlane.xlu0 %5602
      %v5604 = vsel %vm5426, %v5261, -inf
      %5605 = vmax.xlane.f32.xlu0 %v5604
      %v5606 = vpop.xlane.xlu0 %5605
      %v5607 = vsel %vm5426, %v5262, -inf
      %5608 = vmax.xlane.f32.xlu0 %v5607
      %v5609 = vpop.xlane.xlu0 %5608
      %v5610 = vsel %vm5426, %v5263, -inf
      %5611 = vmax.xlane.f32.xlu0 %v5610
      %v5612 = vpop.xlane.xlu0 %5611
      %v5613 = vsel %vm5426, %v5264, -inf
      %5614 = vmax.xlane.f32.xlu0 %v5613
      %v5615 = vpop.xlane.xlu0 %5614
      %v5616 = vsel %vm5426, %v5265, -inf
      %5617 = vmax.xlane.f32.xlu0 %v5616
      %v5618 = vpop.xlane.xlu0 %5617
      %v5619 = vsel %vm5426, %v5266, -inf
      %5620 = vmax.xlane.f32.xlu0 %v5619
      %v5621 = vpop.xlane.xlu0 %5620
      %v5622 = vsel %vm5426, %v5267, -inf
      %5623 = vmax.xlane.f32.xlu0 %v5622
      %v5624 = vpop.xlane.xlu0 %5623
      %v5625 = vsel %vm5426, %v5268, -inf
      %5626 = vmax.xlane.f32.xlu0 %v5625
      %v5627 = vpop.xlane.xlu0 %5626
      %v5628 = vsel %vm5426, %v5269, -inf
      %5629 = vmax.xlane.f32.xlu0 %v5628
      %v5630 = vpop.xlane.xlu0 %5629
      %v5631 = vsel %vm5426, %v5270, -inf
      %5632 = vmax.xlane.f32.xlu0 %v5631
      %v5633 = vpop.xlane.xlu0 %5632
      %v5634 = vsel %vm5426, %v5271, -inf
      %5635 = vmax.xlane.f32.xlu0 %v5634
      %v5636 = vpop.xlane.xlu0 %5635
      %v5637 = vsel %vm5426, %v5272, -inf
      %5638 = vmax.xlane.f32.xlu0 %v5637
      %v5639 = vpop.xlane.xlu0 %5638
      %v5640 = vsel %vm5426, %v5273, -inf
      %5641 = vmax.xlane.f32.xlu0 %v5640
      %v5642 = vpop.xlane.xlu0 %5641
      %v5643 = vsel %vm5426, %v5274, -inf
      %5644 = vmax.xlane.f32.xlu0 %v5643
      %v5645 = vpop.xlane.xlu0 %5644
      %v5646 = vsel %vm5426, %v5275, -inf
      %5647 = vmax.xlane.f32.xlu0 %v5646
      %v5648 = vpop.xlane.xlu0 %5647
      %v5649 = vsel %vm5426, %v5276, -inf
      %5650 = vmax.xlane.f32.xlu0 %v5649
      %v5651 = vpop.xlane.xlu0 %5650
      %v5652 = vsel %vm5426, %v5277, -inf
      %5653 = vmax.xlane.f32.xlu0 %v5652
      %v5654 = vpop.xlane.xlu0 %5653
      %v5655 = vsel %vm5426, %v5278, -inf
      %5656 = vmax.xlane.f32.xlu0 %v5655
      %v5657 = vpop.xlane.xlu0 %5656
      %v5658 = vsel %vm5426, %v5279, -inf
      %5659 = vmax.xlane.f32.xlu0 %v5658
      %v5660 = vpop.xlane.xlu0 %5659
      %v5661 = vsel %vm5426, %v5280, -inf
      %5662 = vmax.xlane.f32.xlu0 %v5661
      %v5663 = vpop.xlane.xlu0 %5662
      %v5664 = vsel %vm5426, %v5281, -inf
      %5665 = vmax.xlane.f32.xlu0 %v5664
      %v5666 = vpop.xlane.xlu0 %5665
      %v5667 = vsel %vm5426, %v5282, -inf
      %5668 = vmax.xlane.f32.xlu0 %v5667
      %v5669 = vpop.xlane.xlu0 %5668
      %v5670 = vsel %vm5426, %v5283, -inf
      %5671 = vmax.xlane.f32.xlu0 %v5670
      %v5672 = vpop.xlane.xlu0 %5671
      %v5673 = vsel %vm5426, %v5284, -inf
      %5674 = vmax.xlane.f32.xlu0 %v5673
      %v5675 = vpop.xlane.xlu0 %5674
      %v5676 = vsel %vm5426, %v5285, -inf
      %5677 = vmax.xlane.f32.xlu0 %v5676
      %v5678 = vpop.xlane.xlu0 %5677
      %v5679 = vsel %vm5426, %v5286, -inf
      %5680 = vmax.xlane.f32.xlu0 %v5679
      %v5681 = vpop.xlane.xlu0 %5680
      %v5682 = vsel %vm5426, %v5287, -inf
      %5683 = vmax.xlane.f32.xlu0 %v5682
      %v5684 = vpop.xlane.xlu0 %5683
      %v5685 = vsel %vm5426, %v5288, -inf
      %5686 = vmax.xlane.f32.xlu0 %v5685
      %v5687 = vpop.xlane.xlu0 %5686
      %v5688 = vsel %vm5426, %v5289, -inf
      %5689 = vmax.xlane.f32.xlu0 %v5688
      %v5690 = vpop.xlane.xlu0 %5689
      %v5691 = vsel %vm5426, %v5290, -inf
      %5692 = vmax.xlane.f32.xlu0 %v5691
      %v5693 = vpop.xlane.xlu0 %5692
      %v5694 = vsel %vm5426, %v5291, -inf
      %5695 = vmax.xlane.f32.xlu0 %v5694
      %v5696 = vpop.xlane.xlu0 %5695
      %v5697 = vsel %vm5426, %v5292, -inf
      %5698 = vmax.xlane.f32.xlu0 %v5697
      %v5699 = vpop.xlane.xlu0 %5698
      %v5700 = vsel %vm5426, %v5293, -inf
      %5701 = vmax.xlane.f32.xlu0 %v5700
      %v5702 = vpop.xlane.xlu0 %5701
      %v5703 = vsel %vm5426, %v5294, -inf
      %5704 = vmax.xlane.f32.xlu0 %v5703
      %v5705 = vpop.xlane.xlu0 %5704
      %v5706 = vsel %vm5426, %v5295, -inf
      %5707 = vmax.xlane.f32.xlu0 %v5706
      %v5708 = vpop.xlane.xlu0 %5707
      %v5709 = vsel %vm5426, %v5296, -inf
      %5710 = vmax.xlane.f32.xlu0 %v5709
      %v5711 = vpop.xlane.xlu0 %5710
      %v5712 = vsel %vm5426, %v5297, -inf
      %5713 = vmax.xlane.f32.xlu0 %v5712
      %v5714 = vpop.xlane.xlu0 %5713
      %v5715 = vsel %vm5426, %v5298, -inf
      %5716 = vmax.xlane.f32.xlu0 %v5715
      %v5717 = vpop.xlane.xlu0 %5716
      %v5718 = vsel %vm5426, %v5299, -inf
      %5719 = vmax.xlane.f32.xlu0 %v5718
      %v5720 = vpop.xlane.xlu0 %5719
      %v5721 = vsel %vm5426, %v5300, -inf
      %5722 = vmax.xlane.f32.xlu0 %v5721
      %v5723 = vpop.xlane.xlu0 %5722
      %v5724 = vsel %vm5426, %v5301, -inf
      %5725 = vmax.xlane.f32.xlu0 %v5724
      %v5726 = vpop.xlane.xlu0 %5725
      %v5727 = vsel %vm5426, %v5302, -inf
      %5728 = vmax.xlane.f32.xlu0 %v5727
      %v5729 = vpop.xlane.xlu0 %5728
      %v5730 = vsel %vm5426, %v5303, -inf
      %5731 = vmax.xlane.f32.xlu0 %v5730
      %v5732 = vpop.xlane.xlu0 %5731
      %v5733 = vsel %vm5426, %v5304, -inf
      %5734 = vmax.xlane.f32.xlu0 %v5733
      %v5735 = vpop.xlane.xlu0 %5734
      %v5736 = vsel %vm5426, %v5305, -inf
      %5737 = vmax.xlane.f32.xlu0 %v5736
      %v5738 = vpop.xlane.xlu0 %5737
      %v5739 = vsel %vm5426, %v5306, -inf
      %5740 = vmax.xlane.f32.xlu0 %v5739
      %v5741 = vpop.xlane.xlu0 %5740
      %v5742 = vsel %vm5426, %v5307, -inf
      %5743 = vmax.xlane.f32.xlu0 %v5742
      %v5744 = vpop.xlane.xlu0 %5743
      %v5745 = vsel %vm5426, %v5308, -inf
      %5746 = vmax.xlane.f32.xlu0 %v5745
      %v5747 = vpop.xlane.xlu0 %5746
      %v5748 = vsel %vm5426, %v5309, -inf
      %5749 = vmax.xlane.f32.xlu0 %v5748
      %v5750 = vpop.xlane.xlu0 %5749
      %v5751 = vsel %vm5426, %v5310, -inf
      %5752 = vmax.xlane.f32.xlu0 %v5751
      %v5753 = vpop.xlane.xlu0 %5752
      %v5754 = vsel %vm5426, %v5311, -inf
      %5755 = vmax.xlane.f32.xlu0 %v5754
      %v5756 = vpop.xlane.xlu0 %5755
      %v5757 = vsel %vm5426, %v5312, -inf
      %5758 = vmax.xlane.f32.xlu0 %v5757
      %v5759 = vpop.xlane.xlu0 %5758
      %v5760 = vsel %vm5426, %v5313, -inf
      %5761 = vmax.xlane.f32.xlu0 %v5760
      %v5762 = vpop.xlane.xlu0 %5761
      %v5763 = vsel %vm5426, %v5314, -inf
      %5764 = vmax.xlane.f32.xlu0 %v5763
      %v5765 = vpop.xlane.xlu0 %5764
      %v5766 = vsel %vm5426, %v5315, -inf
      %5767 = vmax.xlane.f32.xlu0 %v5766
      %v5768 = vpop.xlane.xlu0 %5767
      %v5769 = vsel %vm5426, %v5316, -inf
      %5770 = vmax.xlane.f32.xlu0 %v5769
      %v5771 = vpop.xlane.xlu0 %5770
      %v5772 = vsel %vm5426, %v5317, -inf
      %5773 = vmax.xlane.f32.xlu0 %v5772
      %v5774 = vpop.xlane.xlu0 %5773
      %v5775 = vsel %vm5426, %v5318, -inf
      %5776 = vmax.xlane.f32.xlu0 %v5775
      %v5777 = vpop.xlane.xlu0 %5776
      %v5778 = vsel %vm5426, %v5319, -inf
      %5779 = vmax.xlane.f32.xlu0 %v5778
      %v5780 = vpop.xlane.xlu0 %5779
      %v5781 = vsel %vm5426, %v5320, -inf
      %5782 = vmax.xlane.f32.xlu0 %v5781
      %v5783 = vpop.xlane.xlu0 %5782
      %v5784 = vsel %vm5426, %v5321, -inf
      %5785 = vmax.xlane.f32.xlu0 %v5784
      %v5786 = vpop.xlane.xlu0 %5785
      %v5787 = vsel %vm5426, %v5322, -inf
      %5788 = vmax.xlane.f32.xlu0 %v5787
      %v5789 = vpop.xlane.xlu0 %5788
      %v5790 = vsel %vm5426, %v5323, -inf
      %5791 = vmax.xlane.f32.xlu0 %v5790
      %v5792 = vpop.xlane.xlu0 %5791
      %v5793 = vsel %vm5426, %v5324, -inf
      %5794 = vmax.xlane.f32.xlu0 %v5793
      %v5795 = vpop.xlane.xlu0 %5794
      %v5796 = vsel %vm5426, %v5325, -inf
      %5797 = vmax.xlane.f32.xlu0 %v5796
      %v5798 = vpop.xlane.xlu0 %5797
      %v5799 = vsel %vm5426, %v5326, -inf
      %5800 = vmax.xlane.f32.xlu0 %v5799
      %v5801 = vpop.xlane.xlu0 %5800
      %v5802 = vsel %vm5426, %v5327, -inf
      %5803 = vmax.xlane.f32.xlu0 %v5802
      %v5804 = vpop.xlane.xlu0 %5803
      %v5805 = vsel %vm5426, %v5328, -inf
      %5806 = vmax.xlane.f32.xlu0 %v5805
      %v5807 = vpop.xlane.xlu0 %5806
      %v5808 = vsel %vm5426, %v5329, -inf
      %5809 = vmax.xlane.f32.xlu0 %v5808
      %v5810 = vpop.xlane.xlu0 %5809
      %v5811 = vsel %vm5426, %v5330, -inf
      %5812 = vmax.xlane.f32.xlu0 %v5811
      %v5813 = vpop.xlane.xlu0 %5812
      %v5814 = vsel %vm5426, %v5331, -inf
      %5815 = vmax.xlane.f32.xlu0 %v5814
      %v5816 = vpop.xlane.xlu0 %5815
      %v5817 = vsel %vm5426, %v5332, -inf
      %5818 = vmax.xlane.f32.xlu0 %v5817
      %v5819 = vpop.xlane.xlu0 %5818
      %v5820 = vsel %vm5426, %v5333, -inf
      %5821 = vmax.xlane.f32.xlu0 %v5820
      %v5822 = vpop.xlane.xlu0 %5821
      %v5823 = vsel %vm5426, %v5334, -inf
      %5824 = vmax.xlane.f32.xlu0 %v5823
      %v5825 = vpop.xlane.xlu0 %5824
      %v5826 = vsel %vm5426, %v5335, -inf
      %5827 = vmax.xlane.f32.xlu0 %v5826
      %v5828 = vpop.xlane.xlu0 %5827
      %v5829 = vsel %vm5426, %v5336, -inf
      %5830 = vmax.xlane.f32.xlu0 %v5829
      %v5831 = vpop.xlane.xlu0 %5830
      %v5832 = vsel %vm5426, %v5337, -inf
      %5833 = vmax.xlane.f32.xlu0 %v5832
      %v5834 = vpop.xlane.xlu0 %5833
      %v5835 = vsel %vm5426, %v5338, -inf
      %5836 = vmax.xlane.f32.xlu0 %v5835
      %v5837 = vpop.xlane.xlu0 %5836
      %v5838 = vsel %vm5426, %v5339, -inf
      %5839 = vmax.xlane.f32.xlu0 %v5838
      %v5840 = vpop.xlane.xlu0 %5839
      %v5841 = vsel %vm5426, %v5340, -inf
      %5842 = vmax.xlane.f32.xlu0 %v5841
      %v5843 = vpop.xlane.xlu0 %5842
      %v5844 = vsel %vm5426, %v5341, -inf
      %5845 = vmax.xlane.f32.xlu0 %v5844
      %v5846 = vpop.xlane.xlu0 %5845
      %v5847 = vsel %vm5426, %v5342, -inf
      %5848 = vmax.xlane.f32.xlu0 %v5847
      %v5849 = vpop.xlane.xlu0 %5848
      %v5850 = vsel %vm5426, %v5343, -inf
      %5851 = vmax.xlane.f32.xlu0 %v5850
      %v5852 = vpop.xlane.xlu0 %5851
      %v5853 = vsel %vm5426, %v5344, -inf
      %5854 = vmax.xlane.f32.xlu0 %v5853
      %v5855 = vpop.xlane.xlu0 %5854
      %v5856 = vsel %vm5426, %v5345, -inf
      %5857 = vmax.xlane.f32.xlu0 %v5856
      %v5858 = vpop.xlane.xlu0 %5857
      %v5859 = vsel %vm5426, %v5346, -inf
      %5860 = vmax.xlane.f32.xlu0 %v5859
      %v5861 = vpop.xlane.xlu0 %5860
      %v5862 = vsel %vm5426, %v5347, -inf
      %5863 = vmax.xlane.f32.xlu0 %v5862
      %v5864 = vpop.xlane.xlu0 %5863
      %v5865 = vsel %vm5426, %v5348, -inf
      %5866 = vmax.xlane.f32.xlu0 %v5865
      %v5867 = vpop.xlane.xlu0 %5866
      %v5868 = vsel %vm5426, %v5349, -inf
      %5869 = vmax.xlane.f32.xlu0 %v5868
      %v5870 = vpop.xlane.xlu0 %5869
      %v5871 = vsel %vm5426, %v5350, -inf
      %5872 = vmax.xlane.f32.xlu0 %v5871
      %v5873 = vpop.xlane.xlu0 %5872
      %v5874 = vsel %vm5426, %v5351, -inf
      %5875 = vmax.xlane.f32.xlu0 %v5874
      %v5876 = vpop.xlane.xlu0 %5875
      %v5877 = vsel %vm5426, %v5352, -inf
      %5878 = vmax.xlane.f32.xlu0 %v5877
      %v5879 = vpop.xlane.xlu0 %5878
      %v5880 = vsel %vm5426, %v5353, -inf
      %5881 = vmax.xlane.f32.xlu0 %v5880
      %v5882 = vpop.xlane.xlu0 %5881
      %v5883 = vsel %vm5426, %v5354, -inf
      %5884 = vmax.xlane.f32.xlu0 %v5883
      %v5885 = vpop.xlane.xlu0 %5884
      %v5886 = vsel %vm5426, %v5355, -inf
      %5887 = vmax.xlane.f32.xlu0 %v5886
      %v5888 = vpop.xlane.xlu0 %5887
      %v5889 = vsel %vm5426, %v5356, -inf
      %5890 = vmax.xlane.f32.xlu0 %v5889
      %v5891 = vpop.xlane.xlu0 %5890
      %v5892 = vsel %vm5426, %v5357, -inf
      %5893 = vmax.xlane.f32.xlu0 %v5892
      %v5894 = vpop.xlane.xlu0 %5893
      %v5895 = vsel %vm5426, %v5358, -inf
      %5896 = vmax.xlane.f32.xlu0 %v5895
      %v5897 = vpop.xlane.xlu0 %5896
      %v5898 = vsel %vm5426, %v5359, -inf
      %5899 = vmax.xlane.f32.xlu0 %v5898
      %v5900 = vpop.xlane.xlu0 %5899
      %v5901 = vsel %vm5426, %v5360, -inf
      %5902 = vmax.xlane.f32.xlu0 %v5901
      %v5903 = vpop.xlane.xlu0 %5902
      %v5904 = vsel %vm5426, %v5361, -inf
      %5905 = vmax.xlane.f32.xlu0 %v5904
      %v5906 = vpop.xlane.xlu0 %5905
      %v5907 = vsel %vm5426, %v5362, -inf
      %5908 = vmax.xlane.f32.xlu0 %v5907
      %v5909 = vpop.xlane.xlu0 %5908
      %v5910 = vsel %vm5426, %v5363, -inf
      %5911 = vmax.xlane.f32.xlu0 %v5910
      %v5912 = vpop.xlane.xlu0 %5911
      %v5913 = vsel %vm5426, %v5364, -inf
      %5914 = vmax.xlane.f32.xlu0 %v5913
      %v5915 = vpop.xlane.xlu0 %5914
      %v5916 = vsel %vm5426, %v5365, -inf
      %5917 = vmax.xlane.f32.xlu0 %v5916
      %v5918 = vpop.xlane.xlu0 %5917
      %v5919 = vsel %vm5426, %v5366, -inf
      %5920 = vmax.xlane.f32.xlu0 %v5919
      %v5921 = vpop.xlane.xlu0 %5920
      %v5922 = vsel %vm5426, %v5367, -inf
      %5923 = vmax.xlane.f32.xlu0 %v5922
      %v5924 = vpop.xlane.xlu0 %5923
      %v5925 = vsel %vm5426, %v5368, -inf
      %5926 = vmax.xlane.f32.xlu0 %v5925
      %v5927 = vpop.xlane.xlu0 %5926
      %v5928 = vsel %vm5426, %v5369, -inf
      %5929 = vmax.xlane.f32.xlu0 %v5928
      %v5930 = vpop.xlane.xlu0 %5929
      %v5931 = vsel %vm5426, %v5370, -inf
      %5932 = vmax.xlane.f32.xlu0 %v5931
      %v5933 = vpop.xlane.xlu0 %5932
      %v5934 = vsel %vm5426, %v5371, -inf
      %5935 = vmax.xlane.f32.xlu0 %v5934
      %v5936 = vpop.xlane.xlu0 %5935
      %v5937 = vsel %vm5426, %v5372, -inf
      %5938 = vmax.xlane.f32.xlu0 %v5937
      %v5939 = vpop.xlane.xlu0 %5938
      %v5940 = vsel %vm5426, %v5373, -inf
      %5941 = vmax.xlane.f32.xlu0 %v5940
      %v5942 = vpop.xlane.xlu0 %5941
      %v5943 = vsel %vm5426, %v5374, -inf
      %5944 = vmax.xlane.f32.xlu0 %v5943
      %v5945 = vpop.xlane.xlu0 %5944
      %v5946 = vsel %vm5426, %v5375, -inf
      %5947 = vmax.xlane.f32.xlu0 %v5946
      %v5948 = vpop.xlane.xlu0 %5947
      %v5949 = vsel %vm5426, %v5376, -inf
      %5950 = vmax.xlane.f32.xlu0 %v5949
      %v5951 = vpop.xlane.xlu0 %5950
      %v5952 = vsel %vm5426, %v5377, -inf
      %5953 = vmax.xlane.f32.xlu0 %v5952
      %v5954 = vpop.xlane.xlu0 %5953
      %v5955 = vsel %vm5426, %v5378, -inf
      %5956 = vmax.xlane.f32.xlu0 %v5955
      %v5957 = vpop.xlane.xlu0 %5956
      %v5958 = vsel %vm5426, %v5379, -inf
      %5959 = vmax.xlane.f32.xlu0 %v5958
      %v5960 = vpop.xlane.xlu0 %5959
      %v5961 = vsel %vm5426, %v5380, -inf
      %5962 = vmax.xlane.f32.xlu0 %v5961
      %v5963 = vpop.xlane.xlu0 %5962
      %v5964 = vsel %vm5426, %v5381, -inf
      %5965 = vmax.xlane.f32.xlu0 %v5964
      %v5966 = vpop.xlane.xlu0 %5965
      %v5967 = vsel %vm5426, %v5382, -inf
      %5968 = vmax.xlane.f32.xlu0 %v5967
      %v5969 = vpop.xlane.xlu0 %5968
      %v5970 = vsel %vm5426, %v5383, -inf
      %5971 = vmax.xlane.f32.xlu0 %v5970
      %v5972 = vpop.xlane.xlu0 %5971
      %v5973 = vsel %vm5426, %v5384, -inf
      %5974 = vmax.xlane.f32.xlu0 %v5973
      %v5975 = vpop.xlane.xlu0 %5974
      %v5976 = vsel %vm5426, %v5385, -inf
      %5977 = vmax.xlane.f32.xlu0 %v5976
      %v5978 = vpop.xlane.xlu0 %5977
      %v5979 = vsel %vm5426, %v5386, -inf
      %5980 = vmax.xlane.f32.xlu0 %v5979
      %v5981 = vpop.xlane.xlu0 %5980
      %v5982 = vsel %vm5426, %v5387, -inf
      %5983 = vmax.xlane.f32.xlu0 %v5982
      %v5984 = vpop.xlane.xlu0 %5983
      %v5985 = vsel %vm5426, %v5388, -inf
      %5986 = vmax.xlane.f32.xlu0 %v5985
      %v5987 = vpop.xlane.xlu0 %5986
      %v5988 = vsel %vm5426, %v5389, -inf
      %5989 = vmax.xlane.f32.xlu0 %v5988
      %v5990 = vpop.xlane.xlu0 %5989
      %v5991 = vsel %vm5426, %v5390, -inf
      %5992 = vmax.xlane.f32.xlu0 %v5991
      %v5993 = vpop.xlane.xlu0 %5992
      %v5994 = vsel %vm5426, %v5391, -inf
      %5995 = vmax.xlane.f32.xlu0 %v5994
      %v5996 = vpop.xlane.xlu0 %5995
      %v5997 = vsel %vm5426, %v5392, -inf
      %5998 = vmax.xlane.f32.xlu0 %v5997
      %v5999 = vpop.xlane.xlu0 %5998
      %v6000 = vsel %vm5426, %v5393, -inf
      %6001 = vmax.xlane.f32.xlu0 %v6000
      %v6002 = vpop.xlane.xlu0 %6001
      %v6003 = vsel %vm5426, %v5394, -inf
      %6004 = vmax.xlane.f32.xlu0 %v6003
      %v6005 = vpop.xlane.xlu0 %6004
      %v6006 = vsel %vm5426, %v5395, -inf
      %6007 = vmax.xlane.f32.xlu0 %v6006
      %v6008 = vpop.xlane.xlu0 %6007
      %v6009 = vsel %vm5426, %v5396, -inf
      %6010 = vmax.xlane.f32.xlu0 %v6009
      %v6011 = vpop.xlane.xlu0 %6010
      %v6012 = vsel %vm5426, %v5397, -inf
      %6013 = vmax.xlane.f32.xlu0 %v6012
      %v6014 = vpop.xlane.xlu0 %6013
      %v6015 = vsel %vm5426, %v5398, -inf
      %6016 = vmax.xlane.f32.xlu0 %v6015
      %v6017 = vpop.xlane.xlu0 %6016
      %v6018 = vsel %vm5426, %v5399, -inf
      %6019 = vmax.xlane.f32.xlu0 %v6018
      %v6020 = vpop.xlane.xlu0 %6019
      %v6021 = vsel %vm5426, %v5400, -inf
      %6022 = vmax.xlane.f32.xlu0 %v6021
      %v6023 = vpop.xlane.xlu0 %6022
      %v6024 = vsel %vm5426, %v5401, -inf
      %6025 = vmax.xlane.f32.xlu0 %v6024
      %v6026 = vpop.xlane.xlu0 %6025
      %v6027 = vsel %vm5426, %v5402, -inf
      %6028 = vmax.xlane.f32.xlu0 %v6027
      %v6029 = vpop.xlane.xlu0 %6028
      %v6030 = vsel %vm5426, %v5403, -inf
      %6031 = vmax.xlane.f32.xlu0 %v6030
      %v6032 = vpop.xlane.xlu0 %6031
      %v6033 = vsel %vm5426, %v5404, -inf
      %6034 = vmax.xlane.f32.xlu0 %v6033
      %v6035 = vpop.xlane.xlu0 %6034
      %v6036 = vsel %vm5426, %v5405, -inf
      %6037 = vmax.xlane.f32.xlu0 %v6036
      %v6038 = vpop.xlane.xlu0 %6037
      %v6039 = vsel %vm5426, %v5406, -inf
      %6040 = vmax.xlane.f32.xlu0 %v6039
      %v6041 = vpop.xlane.xlu0 %6040
      %v6042 = vsel %vm5426, %v5407, -inf
      %6043 = vmax.xlane.f32.xlu0 %v6042
      %v6044 = vpop.xlane.xlu0 %6043
      %v6045 = vsel %vm5426, %v5408, -inf
      %6046 = vmax.xlane.f32.xlu0 %v6045
      %v6047 = vpop.xlane.xlu0 %6046
      %v6048 = vsel %vm5426, %v5409, -inf
      %6049 = vmax.xlane.f32.xlu0 %v6048
      %v6050 = vpop.xlane.xlu0 %6049
      %v6051 = vsel %vm5426, %v5410, -inf
      %6052 = vmax.xlane.f32.xlu0 %v6051
      %v6053 = vpop.xlane.xlu0 %6052
      %v6054 = vsel %vm5426, %v5411, -inf
      %6055 = vmax.xlane.f32.xlu0 %v6054
      %v6056 = vpop.xlane.xlu0 %6055
      %v6057 = vsel %vm5426, %v5412, -inf
      %6058 = vmax.xlane.f32.xlu0 %v6057
      %v6059 = vpop.xlane.xlu0 %6058
      %v6060 = vsel %vm5426, %v5413, -inf
      %6061 = vmax.xlane.f32.xlu0 %v6060
      %v6062 = vpop.xlane.xlu0 %6061
      %v6063 = vsel %vm5426, %v5414, -inf
      %6064 = vmax.xlane.f32.xlu0 %v6063
      %v6065 = vpop.xlane.xlu0 %6064
      %v6066 = vsel %vm5426, %v5415, -inf
      %6067 = vmax.xlane.f32.xlu0 %v6066
      %v6068 = vpop.xlane.xlu0 %6067
      %v6069 = vsel %vm5426, %v5416, -inf
      %6070 = vmax.xlane.f32.xlu0 %v6069
      %v6071 = vpop.xlane.xlu0 %6070
      %v6072 = vsel %vm5426, %v5417, -inf
      %6073 = vmax.xlane.f32.xlu0 %v6072
      %v6074 = vpop.xlane.xlu0 %6073
      %v6075 = vsel %vm5426, %v5418, -inf
      %6076 = vmax.xlane.f32.xlu0 %v6075
      %v6077 = vpop.xlane.xlu0 %6076
      %v6078 = vsel %vm5426, %v5419, -inf
      %6079 = vmax.xlane.f32.xlu0 %v6078
      %v6080 = vpop.xlane.xlu0 %6079
      %v6081 = vsel %vm5426, %v5420, -inf
      %6082 = vmax.xlane.f32.xlu0 %v6081
      %v6083 = vpop.xlane.xlu0 %6082
      %v6084 = vsel %vm5426, %v5421, -inf
      %6085 = vmax.xlane.f32.xlu0 %v6084
      %v6086 = vpop.xlane.xlu0 %6085
      %v6087 = vsel %vm5426, %v5422, -inf
      %6088 = vmax.xlane.f32.xlu0 %v6087
      %v6089 = vpop.xlane.xlu0 %6088
      %v6090 = vsel %vm5426, %v5423, -inf
      %6091 = vmax.xlane.f32.xlu0 %v6090
      %v6092 = vpop.xlane.xlu0 %6091
      %v6093 = vsel %vm5426, %v5424, -inf
      %6094 = vmax.xlane.f32.xlu0 %v6093
      %v6095 = vpop.xlane.xlu0 %6094
      %v6096 = vsel %vm5426, %v5425, -inf
      %6097 = vmax.xlane.f32.xlu0 %v6096
      %v6098 = vpop.xlane.xlu0 %6097
      %v6099 = vsub.f32 %v5202, %v5429
      %v6100 = vsub.f32 %v5203, %v5432
      %v6101 = vsub.f32 %v5204, %v5435
      %v6102 = vsub.f32 %v5205, %v5438
      %v6103 = vsub.f32 %v5206, %v5441
      %v6104 = vsub.f32 %v5207, %v5444
      %v6105 = vsub.f32 %v5208, %v5447
      %v6106 = vsub.f32 %v5209, %v5450
      %v6107 = vsub.f32 %v5210, %v5453
      %v6108 = vsub.f32 %v5211, %v5456
      %v6109 = vsub.f32 %v5212, %v5459
      %v6110 = vsub.f32 %v5213, %v5462
      %v6111 = vsub.f32 %v5214, %v5465
      %v6112 = vsub.f32 %v5215, %v5468
      %v6113 = vsub.f32 %v5216, %v5471
      %v6114 = vsub.f32 %v5217, %v5474
      %v6115 = vsub.f32 %v5218, %v5477
      %v6116 = vsub.f32 %v5219, %v5480
      %v6117 = vsub.f32 %v5220, %v5483
      %v6118 = vsub.f32 %v5221, %v5486
      %v6119 = vsub.f32 %v5222, %v5489
      %v6120 = vsub.f32 %v5223, %v5492
      %v6121 = vsub.f32 %v5224, %v5495
      %v6122 = vsub.f32 %v5225, %v5498
      %v6123 = vsub.f32 %v5226, %v5501
      %v6124 = vsub.f32 %v5227, %v5504
      %v6125 = vsub.f32 %v5228, %v5507
      %v6126 = vsub.f32 %v5229, %v5510
      %v6127 = vsub.f32 %v5230, %v5513
      %v6128 = vsub.f32 %v5231, %v5516
      %v6129 = vsub.f32 %v5232, %v5519
      %v6130 = vsub.f32 %v5233, %v5522
      %v6131 = vsub.f32 %v5234, %v5525
      %v6132 = vsub.f32 %v5235, %v5528
      %v6133 = vsub.f32 %v5236, %v5531
      %v6134 = vsub.f32 %v5237, %v5534
      %v6135 = vsub.f32 %v5238, %v5537
      %v6136 = vsub.f32 %v5239, %v5540
      %v6137 = vsub.f32 %v5240, %v5543
      %v6138 = vsub.f32 %v5241, %v5546
      %v6139 = vsub.f32 %v5242, %v5549
      %v6140 = vsub.f32 %v5243, %v5552
      %v6141 = vsub.f32 %v5244, %v5555
      %v6142 = vsub.f32 %v5245, %v5558
      %v6143 = vsub.f32 %v5246, %v5561
      %v6144 = vsub.f32 %v5247, %v5564
      %v6145 = vsub.f32 %v5248, %v5567
      %v6146 = vsub.f32 %v5249, %v5570
      %v6147 = vsub.f32 %v5250, %v5573
      %v6148 = vsub.f32 %v5251, %v5576
      %v6149 = vsub.f32 %v5252, %v5579
      %v6150 = vsub.f32 %v5253, %v5582
      %v6151 = vsub.f32 %v5254, %v5585
      %v6152 = vsub.f32 %v5255, %v5588
      %v6153 = vsub.f32 %v5256, %v5591
      %v6154 = vsub.f32 %v5257, %v5594
      %v6155 = vsub.f32 %v5258, %v5597
      %v6156 = vsub.f32 %v5259, %v5600
      %v6157 = vsub.f32 %v5260, %v5603
      %v6158 = vsub.f32 %v5261, %v5606
      %v6159 = vsub.f32 %v5262, %v5609
      %v6160 = vsub.f32 %v5263, %v5612
      %v6161 = vsub.f32 %v5264, %v5615
      %v6162 = vsub.f32 %v5265, %v5618
      %v6163 = vsub.f32 %v5266, %v5621
      %v6164 = vsub.f32 %v5267, %v5624
      %v6165 = vsub.f32 %v5268, %v5627
      %v6166 = vsub.f32 %v5269, %v5630
      %v6167 = vsub.f32 %v5270, %v5633
      %v6168 = vsub.f32 %v5271, %v5636
      %v6169 = vsub.f32 %v5272, %v5639
      %v6170 = vsub.f32 %v5273, %v5642
      %v6171 = vsub.f32 %v5274, %v5645
      %v6172 = vsub.f32 %v5275, %v5648
      %v6173 = vsub.f32 %v5276, %v5651
      %v6174 = vsub.f32 %v5277, %v5654
      %v6175 = vsub.f32 %v5278, %v5657
      %v6176 = vsub.f32 %v5279, %v5660
      %v6177 = vsub.f32 %v5280, %v5663
      %v6178 = vsub.f32 %v5281, %v5666
      %v6179 = vsub.f32 %v5282, %v5669
      %v6180 = vsub.f32 %v5283, %v5672
      %v6181 = vsub.f32 %v5284, %v5675
      %v6182 = vsub.f32 %v5285, %v5678
      %v6183 = vsub.f32 %v5286, %v5681
      %v6184 = vsub.f32 %v5287, %v5684
      %v6185 = vsub.f32 %v5288, %v5687
      %v6186 = vsub.f32 %v5289, %v5690
      %v6187 = vsub.f32 %v5290, %v5693
      %v6188 = vsub.f32 %v5291, %v5696
      %v6189 = vsub.f32 %v5292, %v5699
      %v6190 = vsub.f32 %v5293, %v5702
      %v6191 = vsub.f32 %v5294, %v5705
      %v6192 = vsub.f32 %v5295, %v5708
      %v6193 = vsub.f32 %v5296, %v5711
      %v6194 = vsub.f32 %v5297, %v5714
      %v6195 = vsub.f32 %v5298, %v5717
      %v6196 = vsub.f32 %v5299, %v5720
      %v6197 = vsub.f32 %v5300, %v5723
      %v6198 = vsub.f32 %v5301, %v5726
      %v6199 = vsub.f32 %v5302, %v5729
      %v6200 = vsub.f32 %v5303, %v5732
      %v6201 = vsub.f32 %v5304, %v5735
      %v6202 = vsub.f32 %v5305, %v5738
      %v6203 = vsub.f32 %v5306, %v5741
      %v6204 = vsub.f32 %v5307, %v5744
      %v6205 = vsub.f32 %v5308, %v5747
      %v6206 = vsub.f32 %v5309, %v5750
      %v6207 = vsub.f32 %v5310, %v5753
      %v6208 = vsub.f32 %v5311, %v5756
      %v6209 = vsub.f32 %v5312, %v5759
      %v6210 = vsub.f32 %v5313, %v5762
      %v6211 = vsub.f32 %v5314, %v5765
      %v6212 = vsub.f32 %v5315, %v5768
      %v6213 = vsub.f32 %v5316, %v5771
      %v6214 = vsub.f32 %v5317, %v5774
      %v6215 = vsub.f32 %v5318, %v5777
      %v6216 = vsub.f32 %v5319, %v5780
      %v6217 = vsub.f32 %v5320, %v5783
      %v6218 = vsub.f32 %v5321, %v5786
      %v6219 = vsub.f32 %v5322, %v5789
      %v6220 = vsub.f32 %v5323, %v5792
      %v6221 = vsub.f32 %v5324, %v5795
      %v6222 = vsub.f32 %v5325, %v5798
      %v6223 = vsub.f32 %v5326, %v5801
      %v6224 = vsub.f32 %v5327, %v5804
      %v6225 = vsub.f32 %v5328, %v5807
      %v6226 = vsub.f32 %v5329, %v5810
      %v6227 = vsub.f32 %v5330, %v5813
      %v6228 = vsub.f32 %v5331, %v5816
      %v6229 = vsub.f32 %v5332, %v5819
      %v6230 = vsub.f32 %v5333, %v5822
      %v6231 = vsub.f32 %v5334, %v5825
      %v6232 = vsub.f32 %v5335, %v5828
      %v6233 = vsub.f32 %v5336, %v5831
      %v6234 = vsub.f32 %v5337, %v5834
      %v6235 = vsub.f32 %v5338, %v5837
      %v6236 = vsub.f32 %v5339, %v5840
      %v6237 = vsub.f32 %v5340, %v5843
      %v6238 = vsub.f32 %v5341, %v5846
      %v6239 = vsub.f32 %v5342, %v5849
      %v6240 = vsub.f32 %v5343, %v5852
      %v6241 = vsub.f32 %v5344, %v5855
      %v6242 = vsub.f32 %v5345, %v5858
      %v6243 = vsub.f32 %v5346, %v5861
      %v6244 = vsub.f32 %v5347, %v5864
      %v6245 = vsub.f32 %v5348, %v5867
      %v6246 = vsub.f32 %v5349, %v5870
      %v6247 = vsub.f32 %v5350, %v5873
      %v6248 = vsub.f32 %v5351, %v5876
      %v6249 = vsub.f32 %v5352, %v5879
      %v6250 = vsub.f32 %v5353, %v5882
      %v6251 = vsub.f32 %v5354, %v5885
      %v6252 = vsub.f32 %v5355, %v5888
      %v6253 = vsub.f32 %v5356, %v5891
      %v6254 = vsub.f32 %v5357, %v5894
      %v6255 = vsub.f32 %v5358, %v5897
      %v6256 = vsub.f32 %v5359, %v5900
      %v6257 = vsub.f32 %v5360, %v5903
      %v6258 = vsub.f32 %v5361, %v5906
      %v6259 = vsub.f32 %v5362, %v5909
      %v6260 = vsub.f32 %v5363, %v5912
      %v6261 = vsub.f32 %v5364, %v5915
      %v6262 = vsub.f32 %v5365, %v5918
      %v6263 = vsub.f32 %v5366, %v5921
      %v6264 = vsub.f32 %v5367, %v5924
      %v6265 = vsub.f32 %v5368, %v5927
      %v6266 = vsub.f32 %v5369, %v5930
      %v6267 = vsub.f32 %v5370, %v5933
      %v6268 = vsub.f32 %v5371, %v5936
      %v6269 = vsub.f32 %v5372, %v5939
      %v6270 = vsub.f32 %v5373, %v5942
      %v6271 = vsub.f32 %v5374, %v5945
      %v6272 = vsub.f32 %v5375, %v5948
      %v6273 = vsub.f32 %v5376, %v5951
      %v6274 = vsub.f32 %v5377, %v5954
      %v6275 = vsub.f32 %v5378, %v5957
      %v6276 = vsub.f32 %v5379, %v5960
      %v6277 = vsub.f32 %v5380, %v5963
      %v6278 = vsub.f32 %v5381, %v5966
      %v6279 = vsub.f32 %v5382, %v5969
      %v6280 = vsub.f32 %v5383, %v5972
      %v6281 = vsub.f32 %v5384, %v5975
      %v6282 = vsub.f32 %v5385, %v5978
      %v6283 = vsub.f32 %v5386, %v5981
      %v6284 = vsub.f32 %v5387, %v5984
      %v6285 = vsub.f32 %v5388, %v5987
      %v6286 = vsub.f32 %v5389, %v5990
      %v6287 = vsub.f32 %v5390, %v5993
      %v6288 = vsub.f32 %v5391, %v5996
      %v6289 = vsub.f32 %v5392, %v5999
      %v6290 = vsub.f32 %v5393, %v6002
      %v6291 = vsub.f32 %v5394, %v6005
      %v6292 = vsub.f32 %v5395, %v6008
      %v6293 = vsub.f32 %v5396, %v6011
      %v6294 = vsub.f32 %v5397, %v6014
      %v6295 = vsub.f32 %v5398, %v6017
      %v6296 = vsub.f32 %v5399, %v6020
      %v6297 = vsub.f32 %v5400, %v6023
      %v6298 = vsub.f32 %v5401, %v6026
      %v6299 = vsub.f32 %v5402, %v6029
      %v6300 = vsub.f32 %v5403, %v6032
      %v6301 = vsub.f32 %v5404, %v6035
      %v6302 = vsub.f32 %v5405, %v6038
      %v6303 = vsub.f32 %v5406, %v6041
      %v6304 = vsub.f32 %v5407, %v6044
      %v6305 = vsub.f32 %v5408, %v6047
      %v6306 = vsub.f32 %v5409, %v6050
      %v6307 = vsub.f32 %v5410, %v6053
      %v6308 = vsub.f32 %v5411, %v6056
      %v6309 = vsub.f32 %v5412, %v6059
      %v6310 = vsub.f32 %v5413, %v6062
      %v6311 = vsub.f32 %v5414, %v6065
      %v6312 = vsub.f32 %v5415, %v6068
      %v6313 = vsub.f32 %v5416, %v6071
      %v6314 = vsub.f32 %v5417, %v6074
      %v6315 = vsub.f32 %v5418, %v6077
      %v6316 = vsub.f32 %v5419, %v6080
      %v6317 = vsub.f32 %v5420, %v6083
      %v6318 = vsub.f32 %v5421, %v6086
      %v6319 = vsub.f32 %v5422, %v6089
      %v6320 = vsub.f32 %v5423, %v6092
      %v6321 = vsub.f32 %v5424, %v6095
      %v6322 = vsub.f32 %v5425, %v6098
      %v6323 = vpack.c.bf16 %v6100, %v6099
      %v6324 = vpack.c.bf16 %v6102, %v6101
      %v6325 = vpack.c.bf16 %v6104, %v6103
      %v6326 = vpack.c.bf16 %v6105, %v6105
      %v6327 = vpack.c.bf16 %v6107, %v6106
      %v6328 = vpack.c.bf16 %v6109, %v6108
      %v6329 = vpack.c.bf16 %v6111, %v6110
      %v6330 = vpack.c.bf16 %v6112, %v6112
      %v6331 = vpack.c.bf16 %v6114, %v6113
      %v6332 = vpack.c.bf16 %v6116, %v6115
      %v6333 = vpack.c.bf16 %v6118, %v6117
      %v6334 = vpack.c.bf16 %v6119, %v6119
      %v6335 = vpack.c.bf16 %v6121, %v6120
      %v6336 = vpack.c.bf16 %v6123, %v6122
      %v6337 = vpack.c.bf16 %v6125, %v6124
      %v6338 = vpack.c.bf16 %v6126, %v6126
      %v6339 = vpack.c.bf16 %v6128, %v6127
      %v6340 = vpack.c.bf16 %v6130, %v6129
      %v6341 = vpack.c.bf16 %v6132, %v6131
      %v6342 = vpack.c.bf16 %v6133, %v6133
      %v6343 = vpack.c.bf16 %v6135, %v6134
      %v6344 = vpack.c.bf16 %v6137, %v6136
      %v6345 = vpack.c.bf16 %v6139, %v6138
      %v6346 = vpack.c.bf16 %v6140, %v6140
      %v6347 = vpack.c.bf16 %v6142, %v6141
      %v6348 = vpack.c.bf16 %v6144, %v6143
      %v6349 = vpack.c.bf16 %v6146, %v6145
      %v6350 = vpack.c.bf16 %v6147, %v6147
      %v6351 = vpack.c.bf16 %v6149, %v6148
      %v6352 = vpack.c.bf16 %v6151, %v6150
      %v6353 = vpack.c.bf16 %v6153, %v6152
      %v6354 = vpack.c.bf16 %v6154, %v6154
      %v6355 = vpack.c.bf16 %v6156, %v6155
      %v6356 = vpack.c.bf16 %v6158, %v6157
      %v6357 = vpack.c.bf16 %v6160, %v6159
      %v6358 = vpack.c.bf16 %v6161, %v6161
      %v6359 = vpack.c.bf16 %v6163, %v6162
      %v6360 = vpack.c.bf16 %v6165, %v6164
      %v6361 = vpack.c.bf16 %v6167, %v6166
      %v6362 = vpack.c.bf16 %v6168, %v6168
      %v6363 = vpack.c.bf16 %v6170, %v6169
      %v6364 = vpack.c.bf16 %v6172, %v6171
      %v6365 = vpack.c.bf16 %v6174, %v6173
      %v6366 = vpack.c.bf16 %v6175, %v6175
      %v6367 = vpack.c.bf16 %v6177, %v6176
      %v6368 = vpack.c.bf16 %v6179, %v6178
      %v6369 = vpack.c.bf16 %v6181, %v6180
      %v6370 = vpack.c.bf16 %v6182, %v6182
      %v6371 = vpack.c.bf16 %v6184, %v6183
      %v6372 = vpack.c.bf16 %v6186, %v6185
      %v6373 = vpack.c.bf16 %v6188, %v6187
      %v6374 = vpack.c.bf16 %v6189, %v6189
      %v6375 = vpack.c.bf16 %v6191, %v6190
      %v6376 = vpack.c.bf16 %v6193, %v6192
      %v6377 = vpack.c.bf16 %v6195, %v6194
      %v6378 = vpack.c.bf16 %v6196, %v6196
      %v6379 = vpack.c.bf16 %v6198, %v6197
      %v6380 = vpack.c.bf16 %v6200, %v6199
      %v6381 = vpack.c.bf16 %v6202, %v6201
      %v6382 = vpack.c.bf16 %v6203, %v6203
      %v6383 = vpack.c.bf16 %v6205, %v6204
      %v6384 = vpack.c.bf16 %v6207, %v6206
      %v6385 = vpack.c.bf16 %v6209, %v6208
      %v6386 = vpack.c.bf16 %v6210, %v6210
      %v6387 = vpack.c.bf16 %v6212, %v6211
      %v6388 = vpack.c.bf16 %v6214, %v6213
      %v6389 = vpack.c.bf16 %v6216, %v6215
      %v6390 = vpack.c.bf16 %v6217, %v6217
      %v6391 = vpack.c.bf16 %v6219, %v6218
      %v6392 = vpack.c.bf16 %v6221, %v6220
      %v6393 = vpack.c.bf16 %v6223, %v6222
      %v6394 = vpack.c.bf16 %v6224, %v6224
      %v6395 = vpack.c.bf16 %v6226, %v6225
      %v6396 = vpack.c.bf16 %v6228, %v6227
      %v6397 = vpack.c.bf16 %v6230, %v6229
      %v6398 = vpack.c.bf16 %v6231, %v6231
      %v6399 = vpack.c.bf16 %v6233, %v6232
      %v6400 = vpack.c.bf16 %v6235, %v6234
      %v6401 = vpack.c.bf16 %v6237, %v6236
      %v6402 = vpack.c.bf16 %v6238, %v6238
      %v6403 = vpack.c.bf16 %v6240, %v6239
      %v6404 = vpack.c.bf16 %v6242, %v6241
      %v6405 = vpack.c.bf16 %v6244, %v6243
      %v6406 = vpack.c.bf16 %v6245, %v6245
      %v6407 = vpack.c.bf16 %v6247, %v6246
      %v6408 = vpack.c.bf16 %v6249, %v6248
      %v6409 = vpack.c.bf16 %v6251, %v6250
      %v6410 = vpack.c.bf16 %v6252, %v6252
      %v6411 = vpack.c.bf16 %v6254, %v6253
      %v6412 = vpack.c.bf16 %v6256, %v6255
      %v6413 = vpack.c.bf16 %v6258, %v6257
      %v6414 = vpack.c.bf16 %v6259, %v6259
      %v6415 = vpack.c.bf16 %v6261, %v6260
      %v6416 = vpack.c.bf16 %v6263, %v6262
      %v6417 = vpack.c.bf16 %v6265, %v6264
      %v6418 = vpack.c.bf16 %v6266, %v6266
      %v6419 = vpack.c.bf16 %v6268, %v6267
      %v6420 = vpack.c.bf16 %v6270, %v6269
      %v6421 = vpack.c.bf16 %v6272, %v6271
      %v6422 = vpack.c.bf16 %v6273, %v6273
      %v6423 = vpack.c.bf16 %v6275, %v6274
      %v6424 = vpack.c.bf16 %v6277, %v6276
      %v6425 = vpack.c.bf16 %v6279, %v6278
      %v6426 = vpack.c.bf16 %v6280, %v6280
      %v6427 = vpack.c.bf16 %v6282, %v6281
      %v6428 = vpack.c.bf16 %v6284, %v6283
      %v6429 = vpack.c.bf16 %v6286, %v6285
      %v6430 = vpack.c.bf16 %v6287, %v6287
      %v6431 = vpack.c.bf16 %v6289, %v6288
      %v6432 = vpack.c.bf16 %v6291, %v6290
      %v6433 = vpack.c.bf16 %v6293, %v6292
      %v6434 = vpack.c.bf16 %v6294, %v6294
      %v6435 = vpack.c.bf16 %v6296, %v6295
      %v6436 = vpack.c.bf16 %v6298, %v6297
      %v6437 = vpack.c.bf16 %v6300, %v6299
      %v6438 = vpack.c.bf16 %v6301, %v6301
      %v6439 = vpack.c.bf16 %v6303, %v6302
      %v6440 = vpack.c.bf16 %v6305, %v6304
      %v6441 = vpack.c.bf16 %v6307, %v6306
      %v6442 = vpack.c.bf16 %v6308, %v6308
      %v6443 = vpack.c.bf16 %v6310, %v6309
      %v6444 = vpack.c.bf16 %v6312, %v6311
      %v6445 = vpack.c.bf16 %v6314, %v6313
      %v6446 = vpack.c.bf16 %v6315, %v6315
      %v6447 = vpack.c.bf16 %v6317, %v6316
      %v6448 = vpack.c.bf16 %v6319, %v6318
      %v6449 = vpack.c.bf16 %v6321, %v6320
      %v6450 = vpack.c.bf16 %v6322, %v6322
      %v6452 = vmul.bf16 %v6323, 1069105081
      %v6453 = vpow.bf16.pop %v6452
      %v6455 = vmul.bf16 %v6324, 1069105081
      %v6456 = vpow.bf16.pop %v6455
      %v6458 = vmul.bf16 %v6325, 1069105081
      %v6459 = vpow.bf16.pop %v6458
      %v6461 = vmul.bf16 %v6326, 1069105081
      %v6462 = vpow.bf16.pop %v6461
      %v6464 = vmul.bf16 %v6327, 1069105081
      %v6465 = vpow.bf16.pop %v6464
      %v6467 = vmul.bf16 %v6328, 1069105081
      %v6468 = vpow.bf16.pop %v6467
      %v6470 = vmul.bf16 %v6329, 1069105081
      %v6471 = vpow.bf16.pop %v6470
      %v6473 = vmul.bf16 %v6330, 1069105081
      %v6474 = vpow.bf16.pop %v6473
      %v6476 = vmul.bf16 %v6331, 1069105081
      %v6477 = vpow.bf16.pop %v6476
      %v6479 = vmul.bf16 %v6332, 1069105081
      %v6480 = vpow.bf16.pop %v6479
      %v6482 = vmul.bf16 %v6333, 1069105081
      %v6483 = vpow.bf16.pop %v6482
      %v6485 = vmul.bf16 %v6334, 1069105081
      %v6486 = vpow.bf16.pop %v6485
      %v6488 = vmul.bf16 %v6335, 1069105081
      %v6489 = vpow.bf16.pop %v6488
      %v6491 = vmul.bf16 %v6336, 1069105081
      %v6492 = vpow.bf16.pop %v6491
      %v6494 = vmul.bf16 %v6337, 1069105081
      %v6495 = vpow.bf16.pop %v6494
      %v6497 = vmul.bf16 %v6338, 1069105081
      %v6498 = vpow.bf16.pop %v6497
      %v6500 = vmul.bf16 %v6339, 1069105081
      %v6501 = vpow.bf16.pop %v6500
      %v6503 = vmul.bf16 %v6340, 1069105081
      %v6504 = vpow.bf16.pop %v6503
      %v6506 = vmul.bf16 %v6341, 1069105081
      %v6507 = vpow.bf16.pop %v6506
      %v6509 = vmul.bf16 %v6342, 1069105081
      %v6510 = vpow.bf16.pop %v6509
      %v6512 = vmul.bf16 %v6343, 1069105081
      %v6513 = vpow.bf16.pop %v6512
      %v6515 = vmul.bf16 %v6344, 1069105081
      %v6516 = vpow.bf16.pop %v6515
      %v6518 = vmul.bf16 %v6345, 1069105081
      %v6519 = vpow.bf16.pop %v6518
      %v6521 = vmul.bf16 %v6346, 1069105081
      %v6522 = vpow.bf16.pop %v6521
      %v6524 = vmul.bf16 %v6347, 1069105081
      %v6525 = vpow.bf16.pop %v6524
      %v6527 = vmul.bf16 %v6348, 1069105081
      %v6528 = vpow.bf16.pop %v6527
      %v6530 = vmul.bf16 %v6349, 1069105081
      %v6531 = vpow.bf16.pop %v6530
      %v6533 = vmul.bf16 %v6350, 1069105081
      %v6534 = vpow.bf16.pop %v6533
      %v6536 = vmul.bf16 %v6351, 1069105081
      %v6537 = vpow.bf16.pop %v6536
      %v6539 = vmul.bf16 %v6352, 1069105081
      %v6540 = vpow.bf16.pop %v6539
      %v6542 = vmul.bf16 %v6353, 1069105081
      %v6543 = vpow.bf16.pop %v6542
      %v6545 = vmul.bf16 %v6354, 1069105081
      %v6546 = vpow.bf16.pop %v6545
      %v6548 = vmul.bf16 %v6355, 1069105081
      %v6549 = vpow.bf16.pop %v6548
      %v6551 = vmul.bf16 %v6356, 1069105081
      %v6552 = vpow.bf16.pop %v6551
      %v6554 = vmul.bf16 %v6357, 1069105081
      %v6555 = vpow.bf16.pop %v6554
      %v6557 = vmul.bf16 %v6358, 1069105081
      %v6558 = vpow.bf16.pop %v6557
      %v6560 = vmul.bf16 %v6359, 1069105081
      %v6561 = vpow.bf16.pop %v6560
      %v6563 = vmul.bf16 %v6360, 1069105081
      %v6564 = vpow.bf16.pop %v6563
      %v6566 = vmul.bf16 %v6361, 1069105081
      %v6567 = vpow.bf16.pop %v6566
      %v6569 = vmul.bf16 %v6362, 1069105081
      %v6570 = vpow.bf16.pop %v6569
      %v6572 = vmul.bf16 %v6363, 1069105081
      %v6573 = vpow.bf16.pop %v6572
      %v6575 = vmul.bf16 %v6364, 1069105081
      %v6576 = vpow.bf16.pop %v6575
      %v6578 = vmul.bf16 %v6365, 1069105081
      %v6579 = vpow.bf16.pop %v6578
      %v6581 = vmul.bf16 %v6366, 1069105081
      %v6582 = vpow.bf16.pop %v6581
      %v6584 = vmul.bf16 %v6367, 1069105081
      %v6585 = vpow.bf16.pop %v6584
      %v6587 = vmul.bf16 %v6368, 1069105081
      %v6588 = vpow.bf16.pop %v6587
      %v6590 = vmul.bf16 %v6369, 1069105081
      %v6591 = vpow.bf16.pop %v6590
      %v6593 = vmul.bf16 %v6370, 1069105081
      %v6594 = vpow.bf16.pop %v6593
      %v6596 = vmul.bf16 %v6371, 1069105081
      %v6597 = vpow.bf16.pop %v6596
      %v6599 = vmul.bf16 %v6372, 1069105081
      %v6600 = vpow.bf16.pop %v6599
      %v6602 = vmul.bf16 %v6373, 1069105081
      %v6603 = vpow.bf16.pop %v6602
      %v6605 = vmul.bf16 %v6374, 1069105081
      %v6606 = vpow.bf16.pop %v6605
      %v6608 = vmul.bf16 %v6375, 1069105081
      %v6609 = vpow.bf16.pop %v6608
      %v6611 = vmul.bf16 %v6376, 1069105081
      %v6612 = vpow.bf16.pop %v6611
      %v6614 = vmul.bf16 %v6377, 1069105081
      %v6615 = vpow.bf16.pop %v6614
      %v6617 = vmul.bf16 %v6378, 1069105081
      %v6618 = vpow.bf16.pop %v6617
      %v6620 = vmul.bf16 %v6379, 1069105081
      %v6621 = vpow.bf16.pop %v6620
      %v6623 = vmul.bf16 %v6380, 1069105081
      %v6624 = vpow.bf16.pop %v6623
      %v6626 = vmul.bf16 %v6381, 1069105081
      %v6627 = vpow.bf16.pop %v6626
      %v6629 = vmul.bf16 %v6382, 1069105081
      %v6630 = vpow.bf16.pop %v6629
      %v6632 = vmul.bf16 %v6383, 1069105081
      %v6633 = vpow.bf16.pop %v6632
      %v6635 = vmul.bf16 %v6384, 1069105081
      %v6636 = vpow.bf16.pop %v6635
      %v6638 = vmul.bf16 %v6385, 1069105081
      %v6639 = vpow.bf16.pop %v6638
      %v6641 = vmul.bf16 %v6386, 1069105081
      %v6642 = vpow.bf16.pop %v6641
      %v6644 = vmul.bf16 %v6387, 1069105081
      %v6645 = vpow.bf16.pop %v6644
      %v6647 = vmul.bf16 %v6388, 1069105081
      %v6648 = vpow.bf16.pop %v6647
      %v6650 = vmul.bf16 %v6389, 1069105081
      %v6651 = vpow.bf16.pop %v6650
      %v6653 = vmul.bf16 %v6390, 1069105081
      %v6654 = vpow.bf16.pop %v6653
      %v6656 = vmul.bf16 %v6391, 1069105081
      %v6657 = vpow.bf16.pop %v6656
      %v6659 = vmul.bf16 %v6392, 1069105081
      %v6660 = vpow.bf16.pop %v6659
      %v6662 = vmul.bf16 %v6393, 1069105081
      %v6663 = vpow.bf16.pop %v6662
      %v6665 = vmul.bf16 %v6394, 1069105081
      %v6666 = vpow.bf16.pop %v6665
      %v6668 = vmul.bf16 %v6395, 1069105081
      %v6669 = vpow.bf16.pop %v6668
      %v6671 = vmul.bf16 %v6396, 1069105081
      %v6672 = vpow.bf16.pop %v6671
      %v6674 = vmul.bf16 %v6397, 1069105081
      %v6675 = vpow.bf16.pop %v6674
      %v6677 = vmul.bf16 %v6398, 1069105081
      %v6678 = vpow.bf16.pop %v6677
      %v6680 = vmul.bf16 %v6399, 1069105081
      %v6681 = vpow.bf16.pop %v6680
      %v6683 = vmul.bf16 %v6400, 1069105081
      %v6684 = vpow.bf16.pop %v6683
      %v6686 = vmul.bf16 %v6401, 1069105081
      %v6687 = vpow.bf16.pop %v6686
      %v6689 = vmul.bf16 %v6402, 1069105081
      %v6690 = vpow.bf16.pop %v6689
      %v6692 = vmul.bf16 %v6403, 1069105081
      %v6693 = vpow.bf16.pop %v6692
      %v6695 = vmul.bf16 %v6404, 1069105081
      %v6696 = vpow.bf16.pop %v6695
      %v6698 = vmul.bf16 %v6405, 1069105081
      %v6699 = vpow.bf16.pop %v6698
      %v6701 = vmul.bf16 %v6406, 1069105081
      %v6702 = vpow.bf16.pop %v6701
      %v6704 = vmul.bf16 %v6407, 1069105081
      %v6705 = vpow.bf16.pop %v6704
      %v6707 = vmul.bf16 %v6408, 1069105081
      %v6708 = vpow.bf16.pop %v6707
      %v6710 = vmul.bf16 %v6409, 1069105081
      %v6711 = vpow.bf16.pop %v6710
      %v6713 = vmul.bf16 %v6410, 1069105081
      %v6714 = vpow.bf16.pop %v6713
      %v6716 = vmul.bf16 %v6411, 1069105081
      %v6717 = vpow.bf16.pop %v6716
      %v6719 = vmul.bf16 %v6412, 1069105081
      %v6720 = vpow.bf16.pop %v6719
      %v6722 = vmul.bf16 %v6413, 1069105081
      %v6723 = vpow.bf16.pop %v6722
      %v6725 = vmul.bf16 %v6414, 1069105081
      %v6726 = vpow.bf16.pop %v6725
      %v6728 = vmul.bf16 %v6415, 1069105081
      %v6729 = vpow.bf16.pop %v6728
      %v6731 = vmul.bf16 %v6416, 1069105081
      %v6732 = vpow.bf16.pop %v6731
      %v6734 = vmul.bf16 %v6417, 1069105081
      %v6735 = vpow.bf16.pop %v6734
      %v6737 = vmul.bf16 %v6418, 1069105081
      %v6738 = vpow.bf16.pop %v6737
      %v6740 = vmul.bf16 %v6419, 1069105081
      %v6741 = vpow.bf16.pop %v6740
      %v6743 = vmul.bf16 %v6420, 1069105081
      %v6744 = vpow.bf16.pop %v6743
      %v6746 = vmul.bf16 %v6421, 1069105081
      %v6747 = vpow.bf16.pop %v6746
      %v6749 = vmul.bf16 %v6422, 1069105081
      %v6750 = vpow.bf16.pop %v6749
      %v6752 = vmul.bf16 %v6423, 1069105081
      %v6753 = vpow.bf16.pop %v6752
      %v6755 = vmul.bf16 %v6424, 1069105081
      %v6756 = vpow.bf16.pop %v6755
      %v6758 = vmul.bf16 %v6425, 1069105081
      %v6759 = vpow.bf16.pop %v6758
      %v6761 = vmul.bf16 %v6426, 1069105081
      %v6762 = vpow.bf16.pop %v6761
      %v6764 = vmul.bf16 %v6427, 1069105081
      %v6765 = vpow.bf16.pop %v6764
      %v6767 = vmul.bf16 %v6428, 1069105081
      %v6768 = vpow.bf16.pop %v6767
      %v6770 = vmul.bf16 %v6429, 1069105081
      %v6771 = vpow.bf16.pop %v6770
      %v6773 = vmul.bf16 %v6430, 1069105081
      %v6774 = vpow.bf16.pop %v6773
      %v6776 = vmul.bf16 %v6431, 1069105081
      %v6777 = vpow.bf16.pop %v6776
      %v6779 = vmul.bf16 %v6432, 1069105081
      %v6780 = vpow.bf16.pop %v6779
      %v6782 = vmul.bf16 %v6433, 1069105081
      %v6783 = vpow.bf16.pop %v6782
      %v6785 = vmul.bf16 %v6434, 1069105081
      %v6786 = vpow.bf16.pop %v6785
      %v6788 = vmul.bf16 %v6435, 1069105081
      %v6789 = vpow.bf16.pop %v6788
      %v6791 = vmul.bf16 %v6436, 1069105081
      %v6792 = vpow.bf16.pop %v6791
      %v6794 = vmul.bf16 %v6437, 1069105081
      %v6795 = vpow.bf16.pop %v6794
      %v6797 = vmul.bf16 %v6438, 1069105081
      %v6798 = vpow.bf16.pop %v6797
      %v6800 = vmul.bf16 %v6439, 1069105081
      %v6801 = vpow.bf16.pop %v6800
      %v6803 = vmul.bf16 %v6440, 1069105081
      %v6804 = vpow.bf16.pop %v6803
      %v6806 = vmul.bf16 %v6441, 1069105081
      %v6807 = vpow.bf16.pop %v6806
      %v6809 = vmul.bf16 %v6442, 1069105081
      %v6810 = vpow.bf16.pop %v6809
      %v6812 = vmul.bf16 %v6443, 1069105081
      %v6813 = vpow.bf16.pop %v6812
      %v6815 = vmul.bf16 %v6444, 1069105081
      %v6816 = vpow.bf16.pop %v6815
      %v6818 = vmul.bf16 %v6445, 1069105081
      %v6819 = vpow.bf16.pop %v6818
      %v6821 = vmul.bf16 %v6446, 1069105081
      %v6822 = vpow.bf16.pop %v6821
      %v6824 = vmul.bf16 %v6447, 1069105081
      %v6825 = vpow.bf16.pop %v6824
      %v6827 = vmul.bf16 %v6448, 1069105081
      %v6828 = vpow.bf16.pop %v6827
      %v6830 = vmul.bf16 %v6449, 1069105081
      %v6831 = vpow.bf16.pop %v6830
      %v6833 = vmul.bf16 %v6450, 1069105081
      %v6834 = vpow.bf16.pop %v6833
      %v6835 = vunpack.c.l.bf16 %v6453
      %v6836 = vunpack.c.h.bf16 %v6453
      %v6837 = vunpack.c.l.bf16 %v6456
      %v6838 = vunpack.c.h.bf16 %v6456
      %v6839 = vunpack.c.l.bf16 %v6459
      %v6840 = vunpack.c.h.bf16 %v6459
      %v6841 = vunpack.c.l.bf16 %v6462
      %v6842 = vunpack.c.l.bf16 %v6465
      %v6843 = vunpack.c.h.bf16 %v6465
      %v6844 = vunpack.c.l.bf16 %v6468
      %v6845 = vunpack.c.h.bf16 %v6468
      %v6846 = vunpack.c.l.bf16 %v6471
      %v6847 = vunpack.c.h.bf16 %v6471
      %v6848 = vunpack.c.l.bf16 %v6474
      %v6849 = vunpack.c.l.bf16 %v6477
      %v6850 = vunpack.c.h.bf16 %v6477
      %v6851 = vunpack.c.l.bf16 %v6480
      %v6852 = vunpack.c.h.bf16 %v6480
      %v6853 = vunpack.c.l.bf16 %v6483
      %v6854 = vunpack.c.h.bf16 %v6483
      %v6855 = vunpack.c.l.bf16 %v6486
      %v6856 = vunpack.c.l.bf16 %v6489
      %v6857 = vunpack.c.h.bf16 %v6489
      %v6858 = vunpack.c.l.bf16 %v6492
      %v6859 = vunpack.c.h.bf16 %v6492
      %v6860 = vunpack.c.l.bf16 %v6495
      %v6861 = vunpack.c.h.bf16 %v6495
      %v6862 = vunpack.c.l.bf16 %v6498
      %v6863 = vunpack.c.l.bf16 %v6501
      %v6864 = vunpack.c.h.bf16 %v6501
      %v6865 = vunpack.c.l.bf16 %v6504
      %v6866 = vunpack.c.h.bf16 %v6504
      %v6867 = vunpack.c.l.bf16 %v6507
      %v6868 = vunpack.c.h.bf16 %v6507
      %v6869 = vunpack.c.l.bf16 %v6510
      %v6870 = vunpack.c.l.bf16 %v6513
      %v6871 = vunpack.c.h.bf16 %v6513
      %v6872 = vunpack.c.l.bf16 %v6516
      %v6873 = vunpack.c.h.bf16 %v6516
      %v6874 = vunpack.c.l.bf16 %v6519
      %v6875 = vunpack.c.h.bf16 %v6519
      %v6876 = vunpack.c.l.bf16 %v6522
      %v6877 = vunpack.c.l.bf16 %v6525
      %v6878 = vunpack.c.h.bf16 %v6525
      %v6879 = vunpack.c.l.bf16 %v6528
      %v6880 = vunpack.c.h.bf16 %v6528
      %v6881 = vunpack.c.l.bf16 %v6531
      %v6882 = vunpack.c.h.bf16 %v6531
      %v6883 = vunpack.c.l.bf16 %v6534
      %v6884 = vunpack.c.l.bf16 %v6537
      %v6885 = vunpack.c.h.bf16 %v6537
      %v6886 = vunpack.c.l.bf16 %v6540
      %v6887 = vunpack.c.h.bf16 %v6540
      %v6888 = vunpack.c.l.bf16 %v6543
      %v6889 = vunpack.c.h.bf16 %v6543
      %v6890 = vunpack.c.l.bf16 %v6546
      %v6891 = vunpack.c.l.bf16 %v6549
      %v6892 = vunpack.c.h.bf16 %v6549
      %v6893 = vunpack.c.l.bf16 %v6552
      %v6894 = vunpack.c.h.bf16 %v6552
      %v6895 = vunpack.c.l.bf16 %v6555
      %v6896 = vunpack.c.h.bf16 %v6555
      %v6897 = vunpack.c.l.bf16 %v6558
      %v6898 = vunpack.c.l.bf16 %v6561
      %v6899 = vunpack.c.h.bf16 %v6561
      %v6900 = vunpack.c.l.bf16 %v6564
      %v6901 = vunpack.c.h.bf16 %v6564
      %v6902 = vunpack.c.l.bf16 %v6567
      %v6903 = vunpack.c.h.bf16 %v6567
      %v6904 = vunpack.c.l.bf16 %v6570
      %v6905 = vunpack.c.l.bf16 %v6573
      %v6906 = vunpack.c.h.bf16 %v6573
      %v6907 = vunpack.c.l.bf16 %v6576
      %v6908 = vunpack.c.h.bf16 %v6576
      %v6909 = vunpack.c.l.bf16 %v6579
      %v6910 = vunpack.c.h.bf16 %v6579
      %v6911 = vunpack.c.l.bf16 %v6582
      %v6912 = vunpack.c.l.bf16 %v6585
      %v6913 = vunpack.c.h.bf16 %v6585
      %v6914 = vunpack.c.l.bf16 %v6588
      %v6915 = vunpack.c.h.bf16 %v6588
      %v6916 = vunpack.c.l.bf16 %v6591
      %v6917 = vunpack.c.h.bf16 %v6591
      %v6918 = vunpack.c.l.bf16 %v6594
      %v6919 = vunpack.c.l.bf16 %v6597
      %v6920 = vunpack.c.h.bf16 %v6597
      %v6921 = vunpack.c.l.bf16 %v6600
      %v6922 = vunpack.c.h.bf16 %v6600
      %v6923 = vunpack.c.l.bf16 %v6603
      %v6924 = vunpack.c.h.bf16 %v6603
      %v6925 = vunpack.c.l.bf16 %v6606
      %v6926 = vunpack.c.l.bf16 %v6609
      %v6927 = vunpack.c.h.bf16 %v6609
      %v6928 = vunpack.c.l.bf16 %v6612
      %v6929 = vunpack.c.h.bf16 %v6612
      %v6930 = vunpack.c.l.bf16 %v6615
      %v6931 = vunpack.c.h.bf16 %v6615
      %v6932 = vunpack.c.l.bf16 %v6618
      %v6933 = vunpack.c.l.bf16 %v6621
      %v6934 = vunpack.c.h.bf16 %v6621
      %v6935 = vunpack.c.l.bf16 %v6624
      %v6936 = vunpack.c.h.bf16 %v6624
      %v6937 = vunpack.c.l.bf16 %v6627
      %v6938 = vunpack.c.h.bf16 %v6627
      %v6939 = vunpack.c.l.bf16 %v6630
      %v6940 = vunpack.c.l.bf16 %v6633
      %v6941 = vunpack.c.h.bf16 %v6633
      %v6942 = vunpack.c.l.bf16 %v6636
      %v6943 = vunpack.c.h.bf16 %v6636
      %v6944 = vunpack.c.l.bf16 %v6639
      %v6945 = vunpack.c.h.bf16 %v6639
      %v6946 = vunpack.c.l.bf16 %v6642
      %v6947 = vunpack.c.l.bf16 %v6645
      %v6948 = vunpack.c.h.bf16 %v6645
      %v6949 = vunpack.c.l.bf16 %v6648
      %v6950 = vunpack.c.h.bf16 %v6648
      %v6951 = vunpack.c.l.bf16 %v6651
      %v6952 = vunpack.c.h.bf16 %v6651
      %v6953 = vunpack.c.l.bf16 %v6654
      %v6954 = vunpack.c.l.bf16 %v6657
      %v6955 = vunpack.c.h.bf16 %v6657
      %v6956 = vunpack.c.l.bf16 %v6660
      %v6957 = vunpack.c.h.bf16 %v6660
      %v6958 = vunpack.c.l.bf16 %v6663
      %v6959 = vunpack.c.h.bf16 %v6663
      %v6960 = vunpack.c.l.bf16 %v6666
      %v6961 = vunpack.c.l.bf16 %v6669
      %v6962 = vunpack.c.h.bf16 %v6669
      %v6963 = vunpack.c.l.bf16 %v6672
      %v6964 = vunpack.c.h.bf16 %v6672
      %v6965 = vunpack.c.l.bf16 %v6675
      %v6966 = vunpack.c.h.bf16 %v6675
      %v6967 = vunpack.c.l.bf16 %v6678
      %v6968 = vunpack.c.l.bf16 %v6681
      %v6969 = vunpack.c.h.bf16 %v6681
      %v6970 = vunpack.c.l.bf16 %v6684
      %v6971 = vunpack.c.h.bf16 %v6684
      %v6972 = vunpack.c.l.bf16 %v6687
      %v6973 = vunpack.c.h.bf16 %v6687
      %v6974 = vunpack.c.l.bf16 %v6690
      %v6975 = vunpack.c.l.bf16 %v6693
      %v6976 = vunpack.c.h.bf16 %v6693
      %v6977 = vunpack.c.l.bf16 %v6696
      %v6978 = vunpack.c.h.bf16 %v6696
      %v6979 = vunpack.c.l.bf16 %v6699
      %v6980 = vunpack.c.h.bf16 %v6699
      %v6981 = vunpack.c.l.bf16 %v6702
      %v6982 = vunpack.c.l.bf16 %v6705
      %v6983 = vunpack.c.h.bf16 %v6705
      %v6984 = vunpack.c.l.bf16 %v6708
      %v6985 = vunpack.c.h.bf16 %v6708
      %v6986 = vunpack.c.l.bf16 %v6711
      %v6987 = vunpack.c.h.bf16 %v6711
      %v6988 = vunpack.c.l.bf16 %v6714
      %v6989 = vunpack.c.l.bf16 %v6717
      %v6990 = vunpack.c.h.bf16 %v6717
      %v6991 = vunpack.c.l.bf16 %v6720
      %v6992 = vunpack.c.h.bf16 %v6720
      %v6993 = vunpack.c.l.bf16 %v6723
      %v6994 = vunpack.c.h.bf16 %v6723
      %v6995 = vunpack.c.l.bf16 %v6726
      %v6996 = vunpack.c.l.bf16 %v6729
      %v6997 = vunpack.c.h.bf16 %v6729
      %v6998 = vunpack.c.l.bf16 %v6732
      %v6999 = vunpack.c.h.bf16 %v6732
      %v7000 = vunpack.c.l.bf16 %v6735
      %v7001 = vunpack.c.h.bf16 %v6735
      %v7002 = vunpack.c.l.bf16 %v6738
      %v7003 = vunpack.c.l.bf16 %v6741
      %v7004 = vunpack.c.h.bf16 %v6741
      %v7005 = vunpack.c.l.bf16 %v6744
      %v7006 = vunpack.c.h.bf16 %v6744
      %v7007 = vunpack.c.l.bf16 %v6747
      %v7008 = vunpack.c.h.bf16 %v6747
      %v7009 = vunpack.c.l.bf16 %v6750
      %v7010 = vunpack.c.l.bf16 %v6753
      %v7011 = vunpack.c.h.bf16 %v6753
      %v7012 = vunpack.c.l.bf16 %v6756
      %v7013 = vunpack.c.h.bf16 %v6756
      %v7014 = vunpack.c.l.bf16 %v6759
      %v7015 = vunpack.c.h.bf16 %v6759
      %v7016 = vunpack.c.l.bf16 %v6762
      %v7017 = vunpack.c.l.bf16 %v6765
      %v7018 = vunpack.c.h.bf16 %v6765
      %v7019 = vunpack.c.l.bf16 %v6768
      %v7020 = vunpack.c.h.bf16 %v6768
      %v7021 = vunpack.c.l.bf16 %v6771
      %v7022 = vunpack.c.h.bf16 %v6771
      %v7023 = vunpack.c.l.bf16 %v6774
      %v7024 = vunpack.c.l.bf16 %v6777
      %v7025 = vunpack.c.h.bf16 %v6777
      %v7026 = vunpack.c.l.bf16 %v6780
      %v7027 = vunpack.c.h.bf16 %v6780
      %v7028 = vunpack.c.l.bf16 %v6783
      %v7029 = vunpack.c.h.bf16 %v6783
      %v7030 = vunpack.c.l.bf16 %v6786
      %v7031 = vunpack.c.l.bf16 %v6789
      %v7032 = vunpack.c.h.bf16 %v6789
      %v7033 = vunpack.c.l.bf16 %v6792
      %v7034 = vunpack.c.h.bf16 %v6792
      %v7035 = vunpack.c.l.bf16 %v6795
      %v7036 = vunpack.c.h.bf16 %v6795
      %v7037 = vunpack.c.l.bf16 %v6798
      %v7038 = vunpack.c.l.bf16 %v6801
      %v7039 = vunpack.c.h.bf16 %v6801
      %v7040 = vunpack.c.l.bf16 %v6804
      %v7041 = vunpack.c.h.bf16 %v6804
      %v7042 = vunpack.c.l.bf16 %v6807
      %v7043 = vunpack.c.h.bf16 %v6807
      %v7044 = vunpack.c.l.bf16 %v6810
      %v7045 = vunpack.c.l.bf16 %v6813
      %v7046 = vunpack.c.h.bf16 %v6813
      %v7047 = vunpack.c.l.bf16 %v6816
      %v7048 = vunpack.c.h.bf16 %v6816
      %v7049 = vunpack.c.l.bf16 %v6819
      %v7050 = vunpack.c.h.bf16 %v6819
      %v7051 = vunpack.c.l.bf16 %v6822
      %v7052 = vunpack.c.l.bf16 %v6825
      %v7053 = vunpack.c.h.bf16 %v6825
      %v7054 = vunpack.c.l.bf16 %v6828
      %v7055 = vunpack.c.h.bf16 %v6828
      %v7056 = vunpack.c.l.bf16 %v6831
      %v7057 = vunpack.c.h.bf16 %v6831
      %v7058 = vunpack.c.l.bf16 %v6834
      %v7059 = vsel %vm5426, %v6835, 0.0
      %7060 = vadd.xlane.f32.xlu0 %v7059
      %v7061 = vpop.xlane.xlu0 %7060
      %v7062 = vsel %vm5426, %v6836, 0.0
      %7063 = vadd.xlane.f32.xlu0 %v7062
      %v7064 = vpop.xlane.xlu0 %7063
      %v7065 = vsel %vm5426, %v6837, 0.0
      %7066 = vadd.xlane.f32.xlu0 %v7065
      %v7067 = vpop.xlane.xlu0 %7066
      %v7068 = vsel %vm5426, %v6838, 0.0
      %7069 = vadd.xlane.f32.xlu0 %v7068
      %v7070 = vpop.xlane.xlu0 %7069
      %v7071 = vsel %vm5426, %v6839, 0.0
      %7072 = vadd.xlane.f32.xlu0 %v7071
      %v7073 = vpop.xlane.xlu0 %7072
      %v7074 = vsel %vm5426, %v6840, 0.0
      %7075 = vadd.xlane.f32.xlu0 %v7074
      %v7076 = vpop.xlane.xlu0 %7075
      %v7077 = vsel %vm5426, %v6841, 0.0
      %7078 = vadd.xlane.f32.xlu0 %v7077
      %v7079 = vpop.xlane.xlu0 %7078
      %v7080 = vsel %vm5426, %v6842, 0.0
      %7081 = vadd.xlane.f32.xlu0 %v7080
      %v7082 = vpop.xlane.xlu0 %7081
      %v7083 = vsel %vm5426, %v6843, 0.0
      %7084 = vadd.xlane.f32.xlu0 %v7083
      %v7085 = vpop.xlane.xlu0 %7084
      %v7086 = vsel %vm5426, %v6844, 0.0
      %7087 = vadd.xlane.f32.xlu0 %v7086
      %v7088 = vpop.xlane.xlu0 %7087
      %v7089 = vsel %vm5426, %v6845, 0.0
      %7090 = vadd.xlane.f32.xlu0 %v7089
      %v7091 = vpop.xlane.xlu0 %7090
      %v7092 = vsel %vm5426, %v6846, 0.0
      %7093 = vadd.xlane.f32.xlu0 %v7092
      %v7094 = vpop.xlane.xlu0 %7093
      %v7095 = vsel %vm5426, %v6847, 0.0
      %7096 = vadd.xlane.f32.xlu0 %v7095
      %v7097 = vpop.xlane.xlu0 %7096
      %v7098 = vsel %vm5426, %v6848, 0.0
      %7099 = vadd.xlane.f32.xlu0 %v7098
      %v7100 = vpop.xlane.xlu0 %7099
      %v7101 = vsel %vm5426, %v6849, 0.0
      %7102 = vadd.xlane.f32.xlu0 %v7101
      %v7103 = vpop.xlane.xlu0 %7102
      %v7104 = vsel %vm5426, %v6850, 0.0
      %7105 = vadd.xlane.f32.xlu0 %v7104
      %v7106 = vpop.xlane.xlu0 %7105
      %v7107 = vsel %vm5426, %v6851, 0.0
      %7108 = vadd.xlane.f32.xlu0 %v7107
      %v7109 = vpop.xlane.xlu0 %7108
      %v7110 = vsel %vm5426, %v6852, 0.0
      %7111 = vadd.xlane.f32.xlu0 %v7110
      %v7112 = vpop.xlane.xlu0 %7111
      %v7113 = vsel %vm5426, %v6853, 0.0
      %7114 = vadd.xlane.f32.xlu0 %v7113
      %v7115 = vpop.xlane.xlu0 %7114
      %v7116 = vsel %vm5426, %v6854, 0.0
      %7117 = vadd.xlane.f32.xlu0 %v7116
      %v7118 = vpop.xlane.xlu0 %7117
      %v7119 = vsel %vm5426, %v6855, 0.0
      %7120 = vadd.xlane.f32.xlu0 %v7119
      %v7121 = vpop.xlane.xlu0 %7120
      %v7122 = vsel %vm5426, %v6856, 0.0
      %7123 = vadd.xlane.f32.xlu0 %v7122
      %v7124 = vpop.xlane.xlu0 %7123
      %v7125 = vsel %vm5426, %v6857, 0.0
      %7126 = vadd.xlane.f32.xlu0 %v7125
      %v7127 = vpop.xlane.xlu0 %7126
      %v7128 = vsel %vm5426, %v6858, 0.0
      %7129 = vadd.xlane.f32.xlu0 %v7128
      %v7130 = vpop.xlane.xlu0 %7129
      %v7131 = vsel %vm5426, %v6859, 0.0
      %7132 = vadd.xlane.f32.xlu0 %v7131
      %v7133 = vpop.xlane.xlu0 %7132
      %v7134 = vsel %vm5426, %v6860, 0.0
      %7135 = vadd.xlane.f32.xlu0 %v7134
      %v7136 = vpop.xlane.xlu0 %7135
      %v7137 = vsel %vm5426, %v6861, 0.0
      %7138 = vadd.xlane.f32.xlu0 %v7137
      %v7139 = vpop.xlane.xlu0 %7138
      %v7140 = vsel %vm5426, %v6862, 0.0
      %7141 = vadd.xlane.f32.xlu0 %v7140
      %v7142 = vpop.xlane.xlu0 %7141
      %v7143 = vsel %vm5426, %v6863, 0.0
      %7144 = vadd.xlane.f32.xlu0 %v7143
      %v7145 = vpop.xlane.xlu0 %7144
      %v7146 = vsel %vm5426, %v6864, 0.0
      %7147 = vadd.xlane.f32.xlu0 %v7146
      %v7148 = vpop.xlane.xlu0 %7147
      %v7149 = vsel %vm5426, %v6865, 0.0
      %7150 = vadd.xlane.f32.xlu0 %v7149
      %v7151 = vpop.xlane.xlu0 %7150
      %v7152 = vsel %vm5426, %v6866, 0.0
      %7153 = vadd.xlane.f32.xlu0 %v7152
      %v7154 = vpop.xlane.xlu0 %7153
      %v7155 = vsel %vm5426, %v6867, 0.0
      %7156 = vadd.xlane.f32.xlu0 %v7155
      %v7157 = vpop.xlane.xlu0 %7156
      %v7158 = vsel %vm5426, %v6868, 0.0
      %7159 = vadd.xlane.f32.xlu0 %v7158
      %v7160 = vpop.xlane.xlu0 %7159
      %v7161 = vsel %vm5426, %v6869, 0.0
      %7162 = vadd.xlane.f32.xlu0 %v7161
      %v7163 = vpop.xlane.xlu0 %7162
      %v7164 = vsel %vm5426, %v6870, 0.0
      %7165 = vadd.xlane.f32.xlu0 %v7164
      %v7166 = vpop.xlane.xlu0 %7165
      %v7167 = vsel %vm5426, %v6871, 0.0
      %7168 = vadd.xlane.f32.xlu0 %v7167
      %v7169 = vpop.xlane.xlu0 %7168
      %v7170 = vsel %vm5426, %v6872, 0.0
      %7171 = vadd.xlane.f32.xlu0 %v7170
      %v7172 = vpop.xlane.xlu0 %7171
      %v7173 = vsel %vm5426, %v6873, 0.0
      %7174 = vadd.xlane.f32.xlu0 %v7173
      %v7175 = vpop.xlane.xlu0 %7174
      %v7176 = vsel %vm5426, %v6874, 0.0
      %7177 = vadd.xlane.f32.xlu0 %v7176
      %v7178 = vpop.xlane.xlu0 %7177
      %v7179 = vsel %vm5426, %v6875, 0.0
      %7180 = vadd.xlane.f32.xlu0 %v7179
      %v7181 = vpop.xlane.xlu0 %7180
      %v7182 = vsel %vm5426, %v6876, 0.0
      %7183 = vadd.xlane.f32.xlu0 %v7182
      %v7184 = vpop.xlane.xlu0 %7183
      %v7185 = vsel %vm5426, %v6877, 0.0
      %7186 = vadd.xlane.f32.xlu0 %v7185
      %v7187 = vpop.xlane.xlu0 %7186
      %v7188 = vsel %vm5426, %v6878, 0.0
      %7189 = vadd.xlane.f32.xlu0 %v7188
      %v7190 = vpop.xlane.xlu0 %7189
      %v7191 = vsel %vm5426, %v6879, 0.0
      %7192 = vadd.xlane.f32.xlu0 %v7191
      %v7193 = vpop.xlane.xlu0 %7192
      %v7194 = vsel %vm5426, %v6880, 0.0
      %7195 = vadd.xlane.f32.xlu0 %v7194
      %v7196 = vpop.xlane.xlu0 %7195
      %v7197 = vsel %vm5426, %v6881, 0.0
      %7198 = vadd.xlane.f32.xlu0 %v7197
      %v7199 = vpop.xlane.xlu0 %7198
      %v7200 = vsel %vm5426, %v6882, 0.0
      %7201 = vadd.xlane.f32.xlu0 %v7200
      %v7202 = vpop.xlane.xlu0 %7201
      %v7203 = vsel %vm5426, %v6883, 0.0
      %7204 = vadd.xlane.f32.xlu0 %v7203
      %v7205 = vpop.xlane.xlu0 %7204
      %v7206 = vsel %vm5426, %v6884, 0.0
      %7207 = vadd.xlane.f32.xlu0 %v7206
      %v7208 = vpop.xlane.xlu0 %7207
      %v7209 = vsel %vm5426, %v6885, 0.0
      %7210 = vadd.xlane.f32.xlu0 %v7209
      %v7211 = vpop.xlane.xlu0 %7210
      %v7212 = vsel %vm5426, %v6886, 0.0
      %7213 = vadd.xlane.f32.xlu0 %v7212
      %v7214 = vpop.xlane.xlu0 %7213
      %v7215 = vsel %vm5426, %v6887, 0.0
      %7216 = vadd.xlane.f32.xlu0 %v7215
      %v7217 = vpop.xlane.xlu0 %7216
      %v7218 = vsel %vm5426, %v6888, 0.0
      %7219 = vadd.xlane.f32.xlu0 %v7218
      %v7220 = vpop.xlane.xlu0 %7219
      %v7221 = vsel %vm5426, %v6889, 0.0
      %7222 = vadd.xlane.f32.xlu0 %v7221
      %v7223 = vpop.xlane.xlu0 %7222
      %v7224 = vsel %vm5426, %v6890, 0.0
      %7225 = vadd.xlane.f32.xlu0 %v7224
      %v7226 = vpop.xlane.xlu0 %7225
      %v7227 = vsel %vm5426, %v6891, 0.0
      %7228 = vadd.xlane.f32.xlu0 %v7227
      %v7229 = vpop.xlane.xlu0 %7228
      %v7230 = vsel %vm5426, %v6892, 0.0
      %7231 = vadd.xlane.f32.xlu0 %v7230
      %v7232 = vpop.xlane.xlu0 %7231
      %v7233 = vsel %vm5426, %v6893, 0.0
      %7234 = vadd.xlane.f32.xlu0 %v7233
      %v7235 = vpop.xlane.xlu0 %7234
      %v7236 = vsel %vm5426, %v6894, 0.0
      %7237 = vadd.xlane.f32.xlu0 %v7236
      %v7238 = vpop.xlane.xlu0 %7237
      %v7239 = vsel %vm5426, %v6895, 0.0
      %7240 = vadd.xlane.f32.xlu0 %v7239
      %v7241 = vpop.xlane.xlu0 %7240
      %v7242 = vsel %vm5426, %v6896, 0.0
      %7243 = vadd.xlane.f32.xlu0 %v7242
      %v7244 = vpop.xlane.xlu0 %7243
      %v7245 = vsel %vm5426, %v6897, 0.0
      %7246 = vadd.xlane.f32.xlu0 %v7245
      %v7247 = vpop.xlane.xlu0 %7246
      %v7248 = vsel %vm5426, %v6898, 0.0
      %7249 = vadd.xlane.f32.xlu0 %v7248
      %v7250 = vpop.xlane.xlu0 %7249
      %v7251 = vsel %vm5426, %v6899, 0.0
      %7252 = vadd.xlane.f32.xlu0 %v7251
      %v7253 = vpop.xlane.xlu0 %7252
      %v7254 = vsel %vm5426, %v6900, 0.0
      %7255 = vadd.xlane.f32.xlu0 %v7254
      %v7256 = vpop.xlane.xlu0 %7255
      %v7257 = vsel %vm5426, %v6901, 0.0
      %7258 = vadd.xlane.f32.xlu0 %v7257
      %v7259 = vpop.xlane.xlu0 %7258
      %v7260 = vsel %vm5426, %v6902, 0.0
      %7261 = vadd.xlane.f32.xlu0 %v7260
      %v7262 = vpop.xlane.xlu0 %7261
      %v7263 = vsel %vm5426, %v6903, 0.0
      %7264 = vadd.xlane.f32.xlu0 %v7263
      %v7265 = vpop.xlane.xlu0 %7264
      %v7266 = vsel %vm5426, %v6904, 0.0
      %7267 = vadd.xlane.f32.xlu0 %v7266
      %v7268 = vpop.xlane.xlu0 %7267
      %v7269 = vsel %vm5426, %v6905, 0.0
      %7270 = vadd.xlane.f32.xlu0 %v7269
      %v7271 = vpop.xlane.xlu0 %7270
      %v7272 = vsel %vm5426, %v6906, 0.0
      %7273 = vadd.xlane.f32.xlu0 %v7272
      %v7274 = vpop.xlane.xlu0 %7273
      %v7275 = vsel %vm5426, %v6907, 0.0
      %7276 = vadd.xlane.f32.xlu0 %v7275
      %v7277 = vpop.xlane.xlu0 %7276
      %v7278 = vsel %vm5426, %v6908, 0.0
      %7279 = vadd.xlane.f32.xlu0 %v7278
      %v7280 = vpop.xlane.xlu0 %7279
      %v7281 = vsel %vm5426, %v6909, 0.0
      %7282 = vadd.xlane.f32.xlu0 %v7281
      %v7283 = vpop.xlane.xlu0 %7282
      %v7284 = vsel %vm5426, %v6910, 0.0
      %7285 = vadd.xlane.f32.xlu0 %v7284
      %v7286 = vpop.xlane.xlu0 %7285
      %v7287 = vsel %vm5426, %v6911, 0.0
      %7288 = vadd.xlane.f32.xlu0 %v7287
      %v7289 = vpop.xlane.xlu0 %7288
      %v7290 = vsel %vm5426, %v6912, 0.0
      %7291 = vadd.xlane.f32.xlu0 %v7290
      %v7292 = vpop.xlane.xlu0 %7291
      %v7293 = vsel %vm5426, %v6913, 0.0
      %7294 = vadd.xlane.f32.xlu0 %v7293
      %v7295 = vpop.xlane.xlu0 %7294
      %v7296 = vsel %vm5426, %v6914, 0.0
      %7297 = vadd.xlane.f32.xlu0 %v7296
      %v7298 = vpop.xlane.xlu0 %7297
      %v7299 = vsel %vm5426, %v6915, 0.0
      %7300 = vadd.xlane.f32.xlu0 %v7299
      %v7301 = vpop.xlane.xlu0 %7300
      %v7302 = vsel %vm5426, %v6916, 0.0
      %7303 = vadd.xlane.f32.xlu0 %v7302
      %v7304 = vpop.xlane.xlu0 %7303
      %v7305 = vsel %vm5426, %v6917, 0.0
      %7306 = vadd.xlane.f32.xlu0 %v7305
      %v7307 = vpop.xlane.xlu0 %7306
      %v7308 = vsel %vm5426, %v6918, 0.0
      %7309 = vadd.xlane.f32.xlu0 %v7308
      %v7310 = vpop.xlane.xlu0 %7309
      %v7311 = vsel %vm5426, %v6919, 0.0
      %7312 = vadd.xlane.f32.xlu0 %v7311
      %v7313 = vpop.xlane.xlu0 %7312
      %v7314 = vsel %vm5426, %v6920, 0.0
      %7315 = vadd.xlane.f32.xlu0 %v7314
      %v7316 = vpop.xlane.xlu0 %7315
      %v7317 = vsel %vm5426, %v6921, 0.0
      %7318 = vadd.xlane.f32.xlu0 %v7317
      %v7319 = vpop.xlane.xlu0 %7318
      %v7320 = vsel %vm5426, %v6922, 0.0
      %7321 = vadd.xlane.f32.xlu0 %v7320
      %v7322 = vpop.xlane.xlu0 %7321
      %v7323 = vsel %vm5426, %v6923, 0.0
      %7324 = vadd.xlane.f32.xlu0 %v7323
      %v7325 = vpop.xlane.xlu0 %7324
      %v7326 = vsel %vm5426, %v6924, 0.0
      %7327 = vadd.xlane.f32.xlu0 %v7326
      %v7328 = vpop.xlane.xlu0 %7327
      %v7329 = vsel %vm5426, %v6925, 0.0
      %7330 = vadd.xlane.f32.xlu0 %v7329
      %v7331 = vpop.xlane.xlu0 %7330
      %v7332 = vsel %vm5426, %v6926, 0.0
      %7333 = vadd.xlane.f32.xlu0 %v7332
      %v7334 = vpop.xlane.xlu0 %7333
      %v7335 = vsel %vm5426, %v6927, 0.0
      %7336 = vadd.xlane.f32.xlu0 %v7335
      %v7337 = vpop.xlane.xlu0 %7336
      %v7338 = vsel %vm5426, %v6928, 0.0
      %7339 = vadd.xlane.f32.xlu0 %v7338
      %v7340 = vpop.xlane.xlu0 %7339
      %v7341 = vsel %vm5426, %v6929, 0.0
      %7342 = vadd.xlane.f32.xlu0 %v7341
      %v7343 = vpop.xlane.xlu0 %7342
      %v7344 = vsel %vm5426, %v6930, 0.0
      %7345 = vadd.xlane.f32.xlu0 %v7344
      %v7346 = vpop.xlane.xlu0 %7345
      %v7347 = vsel %vm5426, %v6931, 0.0
      %7348 = vadd.xlane.f32.xlu0 %v7347
      %v7349 = vpop.xlane.xlu0 %7348
      %v7350 = vsel %vm5426, %v6932, 0.0
      %7351 = vadd.xlane.f32.xlu0 %v7350
      %v7352 = vpop.xlane.xlu0 %7351
      %v7353 = vsel %vm5426, %v6933, 0.0
      %7354 = vadd.xlane.f32.xlu0 %v7353
      %v7355 = vpop.xlane.xlu0 %7354
      %v7356 = vsel %vm5426, %v6934, 0.0
      %7357 = vadd.xlane.f32.xlu0 %v7356
      %v7358 = vpop.xlane.xlu0 %7357
      %v7359 = vsel %vm5426, %v6935, 0.0
      %7360 = vadd.xlane.f32.xlu0 %v7359
      %v7361 = vpop.xlane.xlu0 %7360
      %v7362 = vsel %vm5426, %v6936, 0.0
      %7363 = vadd.xlane.f32.xlu0 %v7362
      %v7364 = vpop.xlane.xlu0 %7363
      %v7365 = vsel %vm5426, %v6937, 0.0
      %7366 = vadd.xlane.f32.xlu0 %v7365
      %v7367 = vpop.xlane.xlu0 %7366
      %v7368 = vsel %vm5426, %v6938, 0.0
      %7369 = vadd.xlane.f32.xlu0 %v7368
      %v7370 = vpop.xlane.xlu0 %7369
      %v7371 = vsel %vm5426, %v6939, 0.0
      %7372 = vadd.xlane.f32.xlu0 %v7371
      %v7373 = vpop.xlane.xlu0 %7372
      %v7374 = vsel %vm5426, %v6940, 0.0
      %7375 = vadd.xlane.f32.xlu0 %v7374
      %v7376 = vpop.xlane.xlu0 %7375
      %v7377 = vsel %vm5426, %v6941, 0.0
      %7378 = vadd.xlane.f32.xlu0 %v7377
      %v7379 = vpop.xlane.xlu0 %7378
      %v7380 = vsel %vm5426, %v6942, 0.0
      %7381 = vadd.xlane.f32.xlu0 %v7380
      %v7382 = vpop.xlane.xlu0 %7381
      %v7383 = vsel %vm5426, %v6943, 0.0
      %7384 = vadd.xlane.f32.xlu0 %v7383
      %v7385 = vpop.xlane.xlu0 %7384
      %v7386 = vsel %vm5426, %v6944, 0.0
      %7387 = vadd.xlane.f32.xlu0 %v7386
      %v7388 = vpop.xlane.xlu0 %7387
      %v7389 = vsel %vm5426, %v6945, 0.0
      %7390 = vadd.xlane.f32.xlu0 %v7389
      %v7391 = vpop.xlane.xlu0 %7390
      %v7392 = vsel %vm5426, %v6946, 0.0
      %7393 = vadd.xlane.f32.xlu0 %v7392
      %v7394 = vpop.xlane.xlu0 %7393
      %v7395 = vsel %vm5426, %v6947, 0.0
      %7396 = vadd.xlane.f32.xlu0 %v7395
      %v7397 = vpop.xlane.xlu0 %7396
      %v7398 = vsel %vm5426, %v6948, 0.0
      %7399 = vadd.xlane.f32.xlu0 %v7398
      %v7400 = vpop.xlane.xlu0 %7399
      %v7401 = vsel %vm5426, %v6949, 0.0
      %7402 = vadd.xlane.f32.xlu0 %v7401
      %v7403 = vpop.xlane.xlu0 %7402
      %v7404 = vsel %vm5426, %v6950, 0.0
      %7405 = vadd.xlane.f32.xlu0 %v7404
      %v7406 = vpop.xlane.xlu0 %7405
      %v7407 = vsel %vm5426, %v6951, 0.0
      %7408 = vadd.xlane.f32.xlu0 %v7407
      %v7409 = vpop.xlane.xlu0 %7408
      %v7410 = vsel %vm5426, %v6952, 0.0
      %7411 = vadd.xlane.f32.xlu0 %v7410
      %v7412 = vpop.xlane.xlu0 %7411
      %v7413 = vsel %vm5426, %v6953, 0.0
      %7414 = vadd.xlane.f32.xlu0 %v7413
      %v7415 = vpop.xlane.xlu0 %7414
      %v7416 = vsel %vm5426, %v6954, 0.0
      %7417 = vadd.xlane.f32.xlu0 %v7416
      %v7418 = vpop.xlane.xlu0 %7417
      %v7419 = vsel %vm5426, %v6955, 0.0
      %7420 = vadd.xlane.f32.xlu0 %v7419
      %v7421 = vpop.xlane.xlu0 %7420
      %v7422 = vsel %vm5426, %v6956, 0.0
      %7423 = vadd.xlane.f32.xlu0 %v7422
      %v7424 = vpop.xlane.xlu0 %7423
      %v7425 = vsel %vm5426, %v6957, 0.0
      %7426 = vadd.xlane.f32.xlu0 %v7425
      %v7427 = vpop.xlane.xlu0 %7426
      %v7428 = vsel %vm5426, %v6958, 0.0
      %7429 = vadd.xlane.f32.xlu0 %v7428
      %v7430 = vpop.xlane.xlu0 %7429
      %v7431 = vsel %vm5426, %v6959, 0.0
      %7432 = vadd.xlane.f32.xlu0 %v7431
      %v7433 = vpop.xlane.xlu0 %7432
      %v7434 = vsel %vm5426, %v6960, 0.0
      %7435 = vadd.xlane.f32.xlu0 %v7434
      %v7436 = vpop.xlane.xlu0 %7435
      %v7437 = vsel %vm5426, %v6961, 0.0
      %7438 = vadd.xlane.f32.xlu0 %v7437
      %v7439 = vpop.xlane.xlu0 %7438
      %v7440 = vsel %vm5426, %v6962, 0.0
      %7441 = vadd.xlane.f32.xlu0 %v7440
      %v7442 = vpop.xlane.xlu0 %7441
      %v7443 = vsel %vm5426, %v6963, 0.0
      %7444 = vadd.xlane.f32.xlu0 %v7443
      %v7445 = vpop.xlane.xlu0 %7444
      %v7446 = vsel %vm5426, %v6964, 0.0
      %7447 = vadd.xlane.f32.xlu0 %v7446
      %v7448 = vpop.xlane.xlu0 %7447
      %v7449 = vsel %vm5426, %v6965, 0.0
      %7450 = vadd.xlane.f32.xlu0 %v7449
      %v7451 = vpop.xlane.xlu0 %7450
      %v7452 = vsel %vm5426, %v6966, 0.0
      %7453 = vadd.xlane.f32.xlu0 %v7452
      %v7454 = vpop.xlane.xlu0 %7453
      %v7455 = vsel %vm5426, %v6967, 0.0
      %7456 = vadd.xlane.f32.xlu0 %v7455
      %v7457 = vpop.xlane.xlu0 %7456
      %v7458 = vsel %vm5426, %v6968, 0.0
      %7459 = vadd.xlane.f32.xlu0 %v7458
      %v7460 = vpop.xlane.xlu0 %7459
      %v7461 = vsel %vm5426, %v6969, 0.0
      %7462 = vadd.xlane.f32.xlu0 %v7461
      %v7463 = vpop.xlane.xlu0 %7462
      %v7464 = vsel %vm5426, %v6970, 0.0
      %7465 = vadd.xlane.f32.xlu0 %v7464
      %v7466 = vpop.xlane.xlu0 %7465
      %v7467 = vsel %vm5426, %v6971, 0.0
      %7468 = vadd.xlane.f32.xlu0 %v7467
      %v7469 = vpop.xlane.xlu0 %7468
      %v7470 = vsel %vm5426, %v6972, 0.0
      %7471 = vadd.xlane.f32.xlu0 %v7470
      %v7472 = vpop.xlane.xlu0 %7471
      %v7473 = vsel %vm5426, %v6973, 0.0
      %7474 = vadd.xlane.f32.xlu0 %v7473
      %v7475 = vpop.xlane.xlu0 %7474
      %v7476 = vsel %vm5426, %v6974, 0.0
      %7477 = vadd.xlane.f32.xlu0 %v7476
      %v7478 = vpop.xlane.xlu0 %7477
      %v7479 = vsel %vm5426, %v6975, 0.0
      %7480 = vadd.xlane.f32.xlu0 %v7479
      %v7481 = vpop.xlane.xlu0 %7480
      %v7482 = vsel %vm5426, %v6976, 0.0
      %7483 = vadd.xlane.f32.xlu0 %v7482
      %v7484 = vpop.xlane.xlu0 %7483
      %v7485 = vsel %vm5426, %v6977, 0.0
      %7486 = vadd.xlane.f32.xlu0 %v7485
      %v7487 = vpop.xlane.xlu0 %7486
      %v7488 = vsel %vm5426, %v6978, 0.0
      %7489 = vadd.xlane.f32.xlu0 %v7488
      %v7490 = vpop.xlane.xlu0 %7489
      %v7491 = vsel %vm5426, %v6979, 0.0
      %7492 = vadd.xlane.f32.xlu0 %v7491
      %v7493 = vpop.xlane.xlu0 %7492
      %v7494 = vsel %vm5426, %v6980, 0.0
      %7495 = vadd.xlane.f32.xlu0 %v7494
      %v7496 = vpop.xlane.xlu0 %7495
      %v7497 = vsel %vm5426, %v6981, 0.0
      %7498 = vadd.xlane.f32.xlu0 %v7497
      %v7499 = vpop.xlane.xlu0 %7498
      %v7500 = vsel %vm5426, %v6982, 0.0
      %7501 = vadd.xlane.f32.xlu0 %v7500
      %v7502 = vpop.xlane.xlu0 %7501
      %v7503 = vsel %vm5426, %v6983, 0.0
      %7504 = vadd.xlane.f32.xlu0 %v7503
      %v7505 = vpop.xlane.xlu0 %7504
      %v7506 = vsel %vm5426, %v6984, 0.0
      %7507 = vadd.xlane.f32.xlu0 %v7506
      %v7508 = vpop.xlane.xlu0 %7507
      %v7509 = vsel %vm5426, %v6985, 0.0
      %7510 = vadd.xlane.f32.xlu0 %v7509
      %v7511 = vpop.xlane.xlu0 %7510
      %v7512 = vsel %vm5426, %v6986, 0.0
      %7513 = vadd.xlane.f32.xlu0 %v7512
      %v7514 = vpop.xlane.xlu0 %7513
      %v7515 = vsel %vm5426, %v6987, 0.0
      %7516 = vadd.xlane.f32.xlu0 %v7515
      %v7517 = vpop.xlane.xlu0 %7516
      %v7518 = vsel %vm5426, %v6988, 0.0
      %7519 = vadd.xlane.f32.xlu0 %v7518
      %v7520 = vpop.xlane.xlu0 %7519
      %v7521 = vsel %vm5426, %v6989, 0.0
      %7522 = vadd.xlane.f32.xlu0 %v7521
      %v7523 = vpop.xlane.xlu0 %7522
      %v7524 = vsel %vm5426, %v6990, 0.0
      %7525 = vadd.xlane.f32.xlu0 %v7524
      %v7526 = vpop.xlane.xlu0 %7525
      %v7527 = vsel %vm5426, %v6991, 0.0
      %7528 = vadd.xlane.f32.xlu0 %v7527
      %v7529 = vpop.xlane.xlu0 %7528
      %v7530 = vsel %vm5426, %v6992, 0.0
      %7531 = vadd.xlane.f32.xlu0 %v7530
      %v7532 = vpop.xlane.xlu0 %7531
      %v7533 = vsel %vm5426, %v6993, 0.0
      %7534 = vadd.xlane.f32.xlu0 %v7533
      %v7535 = vpop.xlane.xlu0 %7534
      %v7536 = vsel %vm5426, %v6994, 0.0
      %7537 = vadd.xlane.f32.xlu0 %v7536
      %v7538 = vpop.xlane.xlu0 %7537
      %v7539 = vsel %vm5426, %v6995, 0.0
      %7540 = vadd.xlane.f32.xlu0 %v7539
      %v7541 = vpop.xlane.xlu0 %7540
      %v7542 = vsel %vm5426, %v6996, 0.0
      %7543 = vadd.xlane.f32.xlu0 %v7542
      %v7544 = vpop.xlane.xlu0 %7543
      %v7545 = vsel %vm5426, %v6997, 0.0
      %7546 = vadd.xlane.f32.xlu0 %v7545
      %v7547 = vpop.xlane.xlu0 %7546
      %v7548 = vsel %vm5426, %v6998, 0.0
      %7549 = vadd.xlane.f32.xlu0 %v7548
      %v7550 = vpop.xlane.xlu0 %7549
      %v7551 = vsel %vm5426, %v6999, 0.0
      %7552 = vadd.xlane.f32.xlu0 %v7551
      %v7553 = vpop.xlane.xlu0 %7552
      %v7554 = vsel %vm5426, %v7000, 0.0
      %7555 = vadd.xlane.f32.xlu0 %v7554
      %v7556 = vpop.xlane.xlu0 %7555
      %v7557 = vsel %vm5426, %v7001, 0.0
      %7558 = vadd.xlane.f32.xlu0 %v7557
      %v7559 = vpop.xlane.xlu0 %7558
      %v7560 = vsel %vm5426, %v7002, 0.0
      %7561 = vadd.xlane.f32.xlu0 %v7560
      %v7562 = vpop.xlane.xlu0 %7561
      %v7563 = vsel %vm5426, %v7003, 0.0
      %7564 = vadd.xlane.f32.xlu0 %v7563
      %v7565 = vpop.xlane.xlu0 %7564
      %v7566 = vsel %vm5426, %v7004, 0.0
      %7567 = vadd.xlane.f32.xlu0 %v7566
      %v7568 = vpop.xlane.xlu0 %7567
      %v7569 = vsel %vm5426, %v7005, 0.0
      %7570 = vadd.xlane.f32.xlu0 %v7569
      %v7571 = vpop.xlane.xlu0 %7570
      %v7572 = vsel %vm5426, %v7006, 0.0
      %7573 = vadd.xlane.f32.xlu0 %v7572
      %v7574 = vpop.xlane.xlu0 %7573
      %v7575 = vsel %vm5426, %v7007, 0.0
      %7576 = vadd.xlane.f32.xlu0 %v7575
      %v7577 = vpop.xlane.xlu0 %7576
      %v7578 = vsel %vm5426, %v7008, 0.0
      %7579 = vadd.xlane.f32.xlu0 %v7578
      %v7580 = vpop.xlane.xlu0 %7579
      %v7581 = vsel %vm5426, %v7009, 0.0
      %7582 = vadd.xlane.f32.xlu0 %v7581
      %v7583 = vpop.xlane.xlu0 %7582
      %v7584 = vsel %vm5426, %v7010, 0.0
      %7585 = vadd.xlane.f32.xlu0 %v7584
      %v7586 = vpop.xlane.xlu0 %7585
      %v7587 = vsel %vm5426, %v7011, 0.0
      %7588 = vadd.xlane.f32.xlu0 %v7587
      %v7589 = vpop.xlane.xlu0 %7588
      %v7590 = vsel %vm5426, %v7012, 0.0
      %7591 = vadd.xlane.f32.xlu0 %v7590
      %v7592 = vpop.xlane.xlu0 %7591
      %v7593 = vsel %vm5426, %v7013, 0.0
      %7594 = vadd.xlane.f32.xlu0 %v7593
      %v7595 = vpop.xlane.xlu0 %7594
      %v7596 = vsel %vm5426, %v7014, 0.0
      %7597 = vadd.xlane.f32.xlu0 %v7596
      %v7598 = vpop.xlane.xlu0 %7597
      %v7599 = vsel %vm5426, %v7015, 0.0
      %7600 = vadd.xlane.f32.xlu0 %v7599
      %v7601 = vpop.xlane.xlu0 %7600
      %v7602 = vsel %vm5426, %v7016, 0.0
      %7603 = vadd.xlane.f32.xlu0 %v7602
      %v7604 = vpop.xlane.xlu0 %7603
      %v7605 = vsel %vm5426, %v7017, 0.0
      %7606 = vadd.xlane.f32.xlu0 %v7605
      %v7607 = vpop.xlane.xlu0 %7606
      %v7608 = vsel %vm5426, %v7018, 0.0
      %7609 = vadd.xlane.f32.xlu0 %v7608
      %v7610 = vpop.xlane.xlu0 %7609
      %v7611 = vsel %vm5426, %v7019, 0.0
      %7612 = vadd.xlane.f32.xlu0 %v7611
      %v7613 = vpop.xlane.xlu0 %7612
      %v7614 = vsel %vm5426, %v7020, 0.0
      %7615 = vadd.xlane.f32.xlu0 %v7614
      %v7616 = vpop.xlane.xlu0 %7615
      %v7617 = vsel %vm5426, %v7021, 0.0
      %7618 = vadd.xlane.f32.xlu0 %v7617
      %v7619 = vpop.xlane.xlu0 %7618
      %v7620 = vsel %vm5426, %v7022, 0.0
      %7621 = vadd.xlane.f32.xlu0 %v7620
      %v7622 = vpop.xlane.xlu0 %7621
      %v7623 = vsel %vm5426, %v7023, 0.0
      %7624 = vadd.xlane.f32.xlu0 %v7623
      %v7625 = vpop.xlane.xlu0 %7624
      %v7626 = vsel %vm5426, %v7024, 0.0
      %7627 = vadd.xlane.f32.xlu0 %v7626
      %v7628 = vpop.xlane.xlu0 %7627
      %v7629 = vsel %vm5426, %v7025, 0.0
      %7630 = vadd.xlane.f32.xlu0 %v7629
      %v7631 = vpop.xlane.xlu0 %7630
      %v7632 = vsel %vm5426, %v7026, 0.0
      %7633 = vadd.xlane.f32.xlu0 %v7632
      %v7634 = vpop.xlane.xlu0 %7633
      %v7635 = vsel %vm5426, %v7027, 0.0
      %7636 = vadd.xlane.f32.xlu0 %v7635
      %v7637 = vpop.xlane.xlu0 %7636
      %v7638 = vsel %vm5426, %v7028, 0.0
      %7639 = vadd.xlane.f32.xlu0 %v7638
      %v7640 = vpop.xlane.xlu0 %7639
      %v7641 = vsel %vm5426, %v7029, 0.0
      %7642 = vadd.xlane.f32.xlu0 %v7641
      %v7643 = vpop.xlane.xlu0 %7642
      %v7644 = vsel %vm5426, %v7030, 0.0
      %7645 = vadd.xlane.f32.xlu0 %v7644
      %v7646 = vpop.xlane.xlu0 %7645
      %v7647 = vsel %vm5426, %v7031, 0.0
      %7648 = vadd.xlane.f32.xlu0 %v7647
      %v7649 = vpop.xlane.xlu0 %7648
      %v7650 = vsel %vm5426, %v7032, 0.0
      %7651 = vadd.xlane.f32.xlu0 %v7650
      %v7652 = vpop.xlane.xlu0 %7651
      %v7653 = vsel %vm5426, %v7033, 0.0
      %7654 = vadd.xlane.f32.xlu0 %v7653
      %v7655 = vpop.xlane.xlu0 %7654
      %v7656 = vsel %vm5426, %v7034, 0.0
      %7657 = vadd.xlane.f32.xlu0 %v7656
      %v7658 = vpop.xlane.xlu0 %7657
      %v7659 = vsel %vm5426, %v7035, 0.0
      %7660 = vadd.xlane.f32.xlu0 %v7659
      %v7661 = vpop.xlane.xlu0 %7660
      %v7662 = vsel %vm5426, %v7036, 0.0
      %7663 = vadd.xlane.f32.xlu0 %v7662
      %v7664 = vpop.xlane.xlu0 %7663
      %v7665 = vsel %vm5426, %v7037, 0.0
      %7666 = vadd.xlane.f32.xlu0 %v7665
      %v7667 = vpop.xlane.xlu0 %7666
      %v7668 = vsel %vm5426, %v7038, 0.0
      %7669 = vadd.xlane.f32.xlu0 %v7668
      %v7670 = vpop.xlane.xlu0 %7669
      %v7671 = vsel %vm5426, %v7039, 0.0
      %7672 = vadd.xlane.f32.xlu0 %v7671
      %v7673 = vpop.xlane.xlu0 %7672
      %v7674 = vsel %vm5426, %v7040, 0.0
      %7675 = vadd.xlane.f32.xlu0 %v7674
      %v7676 = vpop.xlane.xlu0 %7675
      %v7677 = vsel %vm5426, %v7041, 0.0
      %7678 = vadd.xlane.f32.xlu0 %v7677
      %v7679 = vpop.xlane.xlu0 %7678
      %v7680 = vsel %vm5426, %v7042, 0.0
      %7681 = vadd.xlane.f32.xlu0 %v7680
      %v7682 = vpop.xlane.xlu0 %7681
      %v7683 = vsel %vm5426, %v7043, 0.0
      %7684 = vadd.xlane.f32.xlu0 %v7683
      %v7685 = vpop.xlane.xlu0 %7684
      %v7686 = vsel %vm5426, %v7044, 0.0
      %7687 = vadd.xlane.f32.xlu0 %v7686
      %v7688 = vpop.xlane.xlu0 %7687
      %v7689 = vsel %vm5426, %v7045, 0.0
      %7690 = vadd.xlane.f32.xlu0 %v7689
      %v7691 = vpop.xlane.xlu0 %7690
      %v7692 = vsel %vm5426, %v7046, 0.0
      %7693 = vadd.xlane.f32.xlu0 %v7692
      %v7694 = vpop.xlane.xlu0 %7693
      %v7695 = vsel %vm5426, %v7047, 0.0
      %7696 = vadd.xlane.f32.xlu0 %v7695
      %v7697 = vpop.xlane.xlu0 %7696
      %v7698 = vsel %vm5426, %v7048, 0.0
      %7699 = vadd.xlane.f32.xlu0 %v7698
      %v7700 = vpop.xlane.xlu0 %7699
      %v7701 = vsel %vm5426, %v7049, 0.0
      %7702 = vadd.xlane.f32.xlu0 %v7701
      %v7703 = vpop.xlane.xlu0 %7702
      %v7704 = vsel %vm5426, %v7050, 0.0
      %7705 = vadd.xlane.f32.xlu0 %v7704
      %v7706 = vpop.xlane.xlu0 %7705
      %v7707 = vsel %vm5426, %v7051, 0.0
      %7708 = vadd.xlane.f32.xlu0 %v7707
      %v7709 = vpop.xlane.xlu0 %7708
      %v7710 = vsel %vm5426, %v7052, 0.0
      %7711 = vadd.xlane.f32.xlu0 %v7710
      %v7712 = vpop.xlane.xlu0 %7711
      %v7713 = vsel %vm5426, %v7053, 0.0
      %7714 = vadd.xlane.f32.xlu0 %v7713
      %v7715 = vpop.xlane.xlu0 %7714
      %v7716 = vsel %vm5426, %v7054, 0.0
      %7717 = vadd.xlane.f32.xlu0 %v7716
      %v7718 = vpop.xlane.xlu0 %7717
      %v7719 = vsel %vm5426, %v7055, 0.0
      %7720 = vadd.xlane.f32.xlu0 %v7719
      %v7721 = vpop.xlane.xlu0 %7720
      %v7722 = vsel %vm5426, %v7056, 0.0
      %7723 = vadd.xlane.f32.xlu0 %v7722
      %v7724 = vpop.xlane.xlu0 %7723
      %v7725 = vsel %vm5426, %v7057, 0.0
      %7726 = vadd.xlane.f32.xlu0 %v7725
      %v7727 = vpop.xlane.xlu0 %7726
      %v7728 = vsel %vm5426, %v7058, 0.0
      %7729 = vadd.xlane.f32.xlu0 %v7728
      %v7730 = vpop.xlane.xlu0 %7729
      %v7731 = vpack.c.b16 %v1498, %v1497
      %v7732 = vpack.c.b16 %v1500, %v1499
      %v7733 = vpack.c.b16 %v1502, %v1501
      %v7734 = vpack.c.b16 %v1503, %v1503
      %v7739 = vsel %vm5426, %v6453, 0
      %v7742 = vsel %vm5426, %v6456, 0
      %v7745 = vsel %vm5426, %v6459, 0
      %v7748 = vsel %vm5426, %v6462, 0
      %vm7750 = vcmask 1043456
      %v7752 = vsel %vm7750, %v7734, 0
      %7754 = vmatprep.subr.bf16.mxu0 0
      %7755 = vmatpush1.bf16.msra.mxu0 %v7731
      %7756 = vmatprep.subr.bf16.mxu0 0
      %7757 = vmatpush1.bf16.msra.mxu0 %v7732
      %7758 = vmatprep.subr.bf16.mxu0 0
      %7759 = vmatpush1.bf16.msra.mxu0 %v7733
      %7760 = vmatprep.subr.bf16.mxu0 0
      %7761 = vmatpush1.bf16.msra.mxu0 %v7752
      %7762 = vmatprep.subr.bf16.mxu0 0
      %7763 = vmatpush1.bf16.msra.mxu0 0
      %7764 = vmatprep.subr.bf16.mxu0 0
      %7765 = vmatpush1.bf16.msra.mxu0 0
      %7766 = vmatprep.subr.bf16.mxu0 0
      %7767 = vmatpush1.bf16.msra.mxu0 0
      %7768 = vmatprep.subr.bf16.mxu0 0
      %7769 = vmatpush1.bf16.msra.mxu0 0
      %7770 = vmatprep.subr.bf16.mxu0 0
      %7771 = vmatpush1.bf16.msra.mxu0 0
      %7772 = vmatprep.subr.bf16.mxu0 0
      %7773 = vmatpush1.bf16.msra.mxu0 0
      %7774 = vmatprep.subr.bf16.mxu0 0
      %7775 = vmatpush1.bf16.msra.mxu0 0
      %7776 = vmatprep.subr.bf16.mxu0 0
      %7777 = vmatpush1.bf16.msra.mxu0 0
      %7778 = vmatprep.subr.bf16.mxu0 0
      %7779 = vmatpush1.bf16.msra.mxu0 0
      %7780 = vmatprep.subr.bf16.mxu0 0
      %7781 = vmatpush1.bf16.msra.mxu0 0
      %7782 = vmatprep.subr.bf16.mxu0 0
      %7783 = vmatpush1.bf16.msra.mxu0 0
      %7784 = vmatprep.subr.bf16.mxu0 0
      %7785 = vmatpush1.bf16.msra.mxu0 0
      %7786 = vmatprep.mubr.bf16.mxu0 0
      %7787 = vmatmul.mubr.bf16.gmra.mrb[0].mxu0 %v7739
      %v7788 = vpop.f32.mrb[0].mxu0
      %v7789 = vadd.f32 0.0, %v7788
      %v7790 = vpop.f32.mrb[0].mxu0
      %v7791 = vpop.f32.mrb[0].mxu0
      %v7792 = vadd.f32 0.0, %v7791
      %v7793 = vpop.f32.mrb[0].mxu0
      %7794 = vmatprep.mubr.bf16.mxu0 0
      %7795 = vmatmul.mubr.bf16.gmra.mrb[0].mxu0 %v7742
      %v7796 = vpop.f32.mrb[0].mxu0
      %v7797 = vadd.f32 0.0, %v7796
      %v7798 = vpop.f32.mrb[0].mxu0
      %v7799 = vpop.f32.mrb[0].mxu0
      %v7800 = vadd.f32 0.0, %v7799
      %v7801 = vpop.f32.mrb[0].mxu0
      %7802 = vmatprep.mubr.bf16.mxu0 0
      %7803 = vmatmul.mubr.bf16.gmra.mrb[0].mxu0 %v7745
      %v7804 = vpop.f32.mrb[0].mxu0
      %v7805 = vadd.f32 0.0, %v7804
      %v7806 = vpop.f32.mrb[0].mxu0
      %v7807 = vpop.f32.mrb[0].mxu0
      %v7808 = vadd.f32 0.0, %v7807
      %v7809 = vpop.f32.mrb[0].mxu0
      %7810 = vmatprep.mubr.bf16.mxu0 0
      %7811 = vmatmul.mubr.bf16.gmra.mrb[0].mxu0 %v7748
      %v7812 = vpop.f32.mrb[0].mxu0
      %v7813 = vadd.f32 0.0, %v7812
      %v7814 = vpop.f32.mrb[0].mxu0
      %v7815 = vpop.f32.mrb[0].mxu0
      %v7816 = vpop.f32.mrb[0].mxu0
      %7817 = vdwg.mxu0
      %v7818 = vpack.c.b16 %v1505, %v1504
      %v7819 = vpack.c.b16 %v1507, %v1506
      %v7820 = vpack.c.b16 %v1509, %v1508
      %v7821 = vpack.c.b16 %v1510, %v1510
      %v7826 = vsel %vm5426, %v6465, 0
      %v7829 = vsel %vm5426, %v6468, 0
      %v7832 = vsel %vm5426, %v6471, 0
      %v7835 = vsel %vm5426, %v6474, 0
      %v7838 = vsel %vm7750, %v7821, 0
      %7840 = vmatprep.subr.bf16.mxu0 0
      %7841 = vmatpush1.bf16.msra.mxu0 %v7818
      %7842 = vmatprep.subr.bf16.mxu0 0
      %7843 = vmatpush1.bf16.msra.mxu0 %v7819
      %7844 = vmatprep.subr.bf16.mxu0 0
      %7845 = vmatpush1.bf16.msra.mxu0 %v7820
      %7846 = vmatprep.subr.bf16.mxu0 0
      %7847 = vmatpush1.bf16.msra.mxu0 %v7838
      %7848 = vmatprep.subr.bf16.mxu0 0
      %7849 = vmatpush1.bf16.msra.mxu0 0
      %7850 = vmatprep.subr.bf16.mxu0 0
      %7851 = vmatpush1.bf16.msra.mxu0 0
      %7852 = vmatprep.subr.bf16.mxu0 0
      %7853 = vmatpush1.bf16.msra.mxu0 0
      %7854 = vmatprep.subr.bf16.mxu0 0
      %7855 = vmatpush1.bf16.msra.mxu0 0
      %7856 = vmatprep.subr.bf16.mxu0 0
      %7857 = vmatpush1.bf16.msra.mxu0 0
      %7858 = vmatprep.subr.bf16.mxu0 0
      %7859 = vmatpush1.bf16.msra.mxu0 0
      %7860 = vmatprep.subr.bf16.mxu0 0
      %7861 = vmatpush1.bf16.msra.mxu0 0
      %7862 = vmatprep.subr.bf16.mxu0 0
      %7863 = vmatpush1.bf16.msra.mxu0 0
      %7864 = vmatprep.subr.bf16.mxu0 0
      %7865 = vmatpush1.bf16.msra.mxu0 0
      %7866 = vmatprep.subr.bf16.mxu0 0
      %7867 = vmatpush1.bf16.msra.mxu0 0
      %7868 = vmatprep.subr.bf16.mxu0 0
      %7869 = vmatpush1.bf16.msra.mxu0 0
      %7870 = vmatprep.subr.bf16.mxu0 0
      %7871 = vmatpush1.bf16.msra.mxu0 0
      %7872 = vmatprep.mubr.bf16.mxu0 0
      %7873 = vmatmul.mubr.bf16.gmra.mrb[0].mxu0 %v7826
      %v7874 = vpop.f32.mrb[0].mxu0
      %v7875 = vadd.f32 0.0, %v7874
      %v7876 = vpop.f32.mrb[0].mxu0
      %v7877 = vpop.f32.mrb[0].mxu0
      %v7878 = vadd.f32 0.0, %v7877
      %v7879 = vpop.f32.mrb[0].mxu0
      %7880 = vmatprep.mubr.bf16.mxu0 0
      %7881 = vmatmul.mubr.bf16.gmra.mrb[0].mxu0 %v7829
      %v7882 = vpop.f32.mrb[0].mxu0
      %v7883 = vadd.f32 0.0, %v7882
      %v7884 = vpop.f32.mrb[0].mxu0
      %v7885 = vpop.f32.mrb[0].mxu0
      %v7886 = vadd.f32 0.0, %v7885
      %v7887 = vpop.f32.mrb[0].mxu0
      %7888 = vmatprep.mubr.bf16.mxu0 0
      %7889 = vmatmul.mubr.bf16.gmra.mrb[0].mxu0 %v7832
      %v7890 = vpop.f32.mrb[0].mxu0
      %v7891 = vadd.f32 0.0, %v7890
      %v7892 = vpop.f32.mrb[0].mxu0
      %v7893 = vpop.f32.mrb[0].mxu0
      %v7894 = vadd.f32 0.0, %v7893
      %v7895 = vpop.f32.mrb[0].mxu0
      %7896 = vmatprep.mubr.bf16.mxu0 0
      %7897 = vmatmul.mubr.bf16.gmra.mrb[0].mxu0 %v7835
      %v7898 = vpop.f32.mrb[0].mxu0
      %v7899 = vadd.f32 0.0, %v7898
      %v7900 = vpop.f32.mrb[0].mxu0
      %v7901 = vpop.f32.mrb[0].mxu0
      %v7902 = vpop.f32.mrb[0].mxu0
      %7903 = vdwg.mxu0
      %v7904 = vpack.c.b16 %v1512, %v1511
      %v7905 = vpack.c.b16 %v1514, %v1513
      %v7906 = vpack.c.b16 %v1516, %v1515
      %v7907 = vpack.c.b16 %v1517, %v1517
      %v7912 = vsel %vm5426, %v6477, 0
      %v7915 = vsel %vm5426, %v6480, 0
      %v7918 = vsel %vm5426, %v6483, 0
      %v7921 = vsel %vm5426, %v6486, 0
      %v7924 = vsel %vm7750, %v7907, 0
      %7926 = vmatprep.subr.bf16.mxu0 0
      %7927 = vmatpush1.bf16.msra.mxu0 %v7904
      %7928 = vmatprep.subr.bf16.mxu0 0
      %7929 = vmatpush1.bf16.msra.mxu0 %v7905
      %7930 = vmatprep.subr.bf16.mxu0 0
      %7931 = vmatpush1.bf16.msra.mxu0 %v7906
      %7932 = vmatprep.subr.bf16.mxu0 0
      %7933 = vmatpush1.bf16.msra.mxu0 %v7924
      %7934 = vmatprep.subr.bf16.mxu0 0
      %7935 = vmatpush1.bf16.msra.mxu0 0
      %7936 = vmatprep.subr.bf16.mxu0 0
      %7937 = vmatpush1.bf16.msra.mxu0 0
      %7938 = vmatprep.subr.bf16.mxu0 0
      %7939 = vmatpush1.bf16.msra.mxu0 0
      %7940 = vmatprep.subr.bf16.mxu0 0
      %7941 = vmatpush1.bf16.msra.mxu0 0
      %7942 = vmatprep.subr.bf16.mxu0 0
      %7943 = vmatpush1.bf16.msra.mxu0 0
      %7944 = vmatprep.subr.bf16.mxu0 0
      %7945 = vmatpush1.bf16.msra.mxu0 0
      %7946 = vmatprep.subr.bf16.mxu0 0
      %7947 = vmatpush1.bf16.msra.mxu0 0
      %7948 = vmatprep.subr.bf16.mxu0 0
      %7949 = vmatpush1.bf16.msra.mxu0 0
      %7950 = vmatprep.subr.bf16.mxu0 0
      %7951 = vmatpush1.bf16.msra.mxu0 0
      %7952 = vmatprep.subr.bf16.mxu0 0
      %7953 = vmatpush1.bf16.msra.mxu0 0
      %7954 = vmatprep.subr.bf16.mxu0 0
      %7955 = vmatpush1.bf16.msra.mxu0 0
      %7956 = vmatprep.subr.bf16.mxu0 0
      %7957 = vmatpush1.bf16.msra.mxu0 0
      %7958 = vmatprep.mubr.bf16.mxu0 0
      %7959 = vmatmul.mubr.bf16.gmra.mrb[0].mxu0 %v7912
      %v7960 = vpop.f32.mrb[0].mxu0
      %v7961 = vadd.f32 0.0, %v7960
      %v7962 = vpop.f32.mrb[0].mxu0
      %v7963 = vpop.f32.mrb[0].mxu0
      %v7964 = vadd.f32 0.0, %v7963
      %v7965 = vpop.f32.mrb[0].mxu0
      %7966 = vmatprep.mubr.bf16.mxu0 0
      %7967 = vmatmul.mubr.bf16.gmra.mrb[0].mxu0 %v7915
      %v7968 = vpop.f32.mrb[0].mxu0
      %v7969 = vadd.f32 0.0, %v7968
      %v7970 = vpop.f32.mrb[0].mxu0
      %v7971 = vpop.f32.mrb[0].mxu0
      %v7972 = vadd.f32 0.0, %v7971
      %v7973 = vpop.f32.mrb[0].mxu0
      %7974 = vmatprep.mubr.bf16.mxu0 0
      %7975 = vmatmul.mubr.bf16.gmra.mrb[0].mxu0 %v7918
      %v7976 = vpop.f32.mrb[0].mxu0
      %v7977 = vadd.f32 0.0, %v7976
      %v7978 = vpop.f32.mrb[0].mxu0
      %v7979 = vpop.f32.mrb[0].mxu0
      %v7980 = vadd.f32 0.0, %v7979
      %v7981 = vpop.f32.mrb[0].mxu0
      %7982 = vmatprep.mubr.bf16.mxu0 0
      %7983 = vmatmul.mubr.bf16.gmra.mrb[0].mxu0 %v7921
      %v7984 = vpop.f32.mrb[0].mxu0
      %v7985 = vadd.f32 0.0, %v7984
      %v7986 = vpop.f32.mrb[0].mxu0
      %v7987 = vpop.f32.mrb[0].mxu0
      %v7988 = vpop.f32.mrb[0].mxu0
      %7989 = vdwg.mxu0
      %v7990 = vpack.c.b16 %v1519, %v1518
      %v7991 = vpack.c.b16 %v1521, %v1520
      %v7992 = vpack.c.b16 %v1523, %v1522
      %v7993 = vpack.c.b16 %v1524, %v1524
      %v7998 = vsel %vm5426, %v6489, 0
      %v8001 = vsel %vm5426, %v6492, 0
      %v8004 = vsel %vm5426, %v6495, 0
      %v8007 = vsel %vm5426, %v6498, 0
      %v8010 = vsel %vm7750, %v7993, 0
      %8012 = vmatprep.subr.bf16.mxu0 0
      %8013 = vmatpush1.bf16.msra.mxu0 %v7990
      %8014 = vmatprep.subr.bf16.mxu0 0
      %8015 = vmatpush1.bf16.msra.mxu0 %v7991
      %8016 = vmatprep.subr.bf16.mxu0 0
      %8017 = vmatpush1.bf16.msra.mxu0 %v7992
      %8018 = vmatprep.subr.bf16.mxu0 0
      %8019 = vmatpush1.bf16.msra.mxu0 %v8010
      %8020 = vmatprep.subr.bf16.mxu0 0
      %8021 = vmatpush1.bf16.msra.mxu0 0
      %8022 = vmatprep.subr.bf16.mxu0 0
      %8023 = vmatpush1.bf16.msra.mxu0 0
      %8024 = vmatprep.subr.bf16.mxu0 0
      %8025 = vmatpush1.bf16.msra.mxu0 0
      %8026 = vmatprep.subr.bf16.mxu0 0
      %8027 = vmatpush1.bf16.msra.mxu0 0
      %8028 = vmatprep.subr.bf16.mxu0 0
      %8029 = vmatpush1.bf16.msra.mxu0 0
      %8030 = vmatprep.subr.bf16.mxu0 0
      %8031 = vmatpush1.bf16.msra.mxu0 0
      %8032 = vmatprep.subr.bf16.mxu0 0
      %8033 = vmatpush1.bf16.msra.mxu0 0
      %8034 = vmatprep.subr.bf16.mxu0 0
      %8035 = vmatpush1.bf16.msra.mxu0 0
      %8036 = vmatprep.subr.bf16.mxu0 0
      %8037 = vmatpush1.bf16.msra.mxu0 0
      %8038 = vmatprep.subr.bf16.mxu0 0
      %8039 = vmatpush1.bf16.msra.mxu0 0
      %8040 = vmatprep.subr.bf16.mxu0 0
      %8041 = vmatpush1.bf16.msra.mxu0 0
      %8042 = vmatprep.subr.bf16.mxu0 0
      %8043 = vmatpush1.bf16.msra.mxu0 0
      %8044 = vmatprep.mubr.bf16.mxu0 0
      %8045 = vmatmul.mubr.bf16.gmra.mrb[0].mxu0 %v7998
      %v8046 = vpop.f32.mrb[0].mxu0
      %v8047 = vadd.f32 0.0, %v8046
      %v8048 = vpop.f32.mrb[0].mxu0
      %v8049 = vpop.f32.mrb[0].mxu0
      %v8050 = vadd.f32 0.0, %v8049
      %v8051 = vpop.f32.mrb[0].mxu0
      %8052 = vmatprep.mubr.bf16.mxu0 0
      %8053 = vmatmul.mubr.bf16.gmra.mrb[0].mxu0 %v8001
      %v8054 = vpop.f32.mrb[0].mxu0
      %v8055 = vadd.f32 0.0, %v8054
      %v8056 = vpop.f32.mrb[0].mxu0
      %v8057 = vpop.f32.mrb[0].mxu0
      %v8058 = vadd.f32 0.0, %v8057
      %v8059 = vpop.f32.mrb[0].mxu0
      %8060 = vmatprep.mubr.bf16.mxu0 0
      %8061 = vmatmul.mubr.bf16.gmra.mrb[0].mxu0 %v8004
      %v8062 = vpop.f32.mrb[0].mxu0
      %v8063 = vadd.f32 0.0, %v8062
      %v8064 = vpop.f32.mrb[0].mxu0
      %v8065 = vpop.f32.mrb[0].mxu0
      %v8066 = vadd.f32 0.0, %v8065
      %v8067 = vpop.f32.mrb[0].mxu0
      %8068 = vmatprep.mubr.bf16.mxu0 0
      %8069 = vmatmul.mubr.bf16.gmra.mrb[0].mxu0 %v8007
      %v8070 = vpop.f32.mrb[0].mxu0
      %v8071 = vadd.f32 0.0, %v8070
      %v8072 = vpop.f32.mrb[0].mxu0
      %v8073 = vpop.f32.mrb[0].mxu0
      %v8074 = vpop.f32.mrb[0].mxu0
      %8075 = vdwg.mxu0
      %v8076 = vpack.c.b16 %v1526, %v1525
      %v8077 = vpack.c.b16 %v1528, %v1527
      %v8078 = vpack.c.b16 %v1530, %v1529
      %v8079 = vpack.c.b16 %v1531, %v1531
      %v8084 = vsel %vm5426, %v6501, 0
      %v8087 = vsel %vm5426, %v6504, 0
      %v8090 = vsel %vm5426, %v6507, 0
      %v8093 = vsel %vm5426, %v6510, 0
      %v8096 = vsel %vm7750, %v8079, 0
      %8098 = vmatprep.subr.bf16.mxu0 0
      %8099 = vmatpush1.bf16.msra.mxu0 %v8076
      %8100 = vmatprep.subr.bf16.mxu0 0
      %8101 = vmatpush1.bf16.msra.mxu0 %v8077
      %8102 = vmatprep.subr.bf16.mxu0 0
      %8103 = vmatpush1.bf16.msra.mxu0 %v8078
      %8104 = vmatprep.subr.bf16.mxu0 0
      %8105 = vmatpush1.bf16.msra.mxu0 %v8096
      %8106 = vmatprep.subr.bf16.mxu0 0
      %8107 = vmatpush1.bf16.msra.mxu0 0
      %8108 = vmatprep.subr.bf16.mxu0 0
      %8109 = vmatpush1.bf16.msra.mxu0 0
      %8110 = vmatprep.subr.bf16.mxu0 0
      %8111 = vmatpush1.bf16.msra.mxu0 0
      %8112 = vmatprep.subr.bf16.mxu0 0
      %8113 = vmatpush1.bf16.msra.mxu0 0
      %8114 = vmatprep.subr.bf16.mxu0 0
      %8115 = vmatpush1.bf16.msra.mxu0 0
      %8116 = vmatprep.subr.bf16.mxu0 0
      %8117 = vmatpush1.bf16.msra.mxu0 0
      %8118 = vmatprep.subr.bf16.mxu0 0
      %8119 = vmatpush1.bf16.msra.mxu0 0
      %8120 = vmatprep.subr.bf16.mxu0 0
      %8121 = vmatpush1.bf16.msra.mxu0 0
      %8122 = vmatprep.subr.bf16.mxu0 0
      %8123 = vmatpush1.bf16.msra.mxu0 0
      %8124 = vmatprep.subr.bf16.mxu0 0
      %8125 = vmatpush1.bf16.msra.mxu0 0
      %8126 = vmatprep.subr.bf16.mxu0 0
      %8127 = vmatpush1.bf16.msra.mxu0 0
      %8128 = vmatprep.subr.bf16.mxu0 0
      %8129 = vmatpush1.bf16.msra.mxu0 0
      %8130 = vmatprep.mubr.bf16.mxu0 0
      %8131 = vmatmul.mubr.bf16.gmra.mrb[0].mxu0 %v8084
      %v8132 = vpop.f32.mrb[0].mxu0
      %v8133 = vadd.f32 0.0, %v8132
      %v8134 = vpop.f32.mrb[0].mxu0
      %v8135 = vpop.f32.mrb[0].mxu0
      %v8136 = vadd.f32 0.0, %v8135
      %v8137 = vpop.f32.mrb[0].mxu0
      %8138 = vmatprep.mubr.bf16.mxu0 0
      %8139 = vmatmul.mubr.bf16.gmra.mrb[0].mxu0 %v8087
      %v8140 = vpop.f32.mrb[0].mxu0
      %v8141 = vadd.f32 0.0, %v8140
      %v8142 = vpop.f32.mrb[0].mxu0
      %v8143 = vpop.f32.mrb[0].mxu0
      %v8144 = vadd.f32 0.0, %v8143
      %v8145 = vpop.f32.mrb[0].mxu0
      %8146 = vmatprep.mubr.bf16.mxu0 0
      %8147 = vmatmul.mubr.bf16.gmra.mrb[0].mxu0 %v8090
      %v8148 = vpop.f32.mrb[0].mxu0
      %v8149 = vadd.f32 0.0, %v8148
      %v8150 = vpop.f32.mrb[0].mxu0
      %v8151 = vpop.f32.mrb[0].mxu0
      %v8152 = vadd.f32 0.0, %v8151
      %v8153 = vpop.f32.mrb[0].mxu0
      %8154 = vmatprep.mubr.bf16.mxu0 0
      %8155 = vmatmul.mubr.bf16.gmra.mrb[0].mxu0 %v8093
      %v8156 = vpop.f32.mrb[0].mxu0
      %v8157 = vadd.f32 0.0, %v8156
      %v8158 = vpop.f32.mrb[0].mxu0
      %v8159 = vpop.f32.mrb[0].mxu0
      %v8160 = vpop.f32.mrb[0].mxu0
      %8161 = vdwg.mxu0
      %v8162 = vpack.c.b16 %v1533, %v1532
      %v8163 = vpack.c.b16 %v1535, %v1534
      %v8164 = vpack.c.b16 %v1537, %v1536
      %v8165 = vpack.c.b16 %v1538, %v1538
      %v8170 = vsel %vm5426, %v6513, 0
      %v8173 = vsel %vm5426, %v6516, 0
      %v8176 = vsel %vm5426, %v6519, 0
      %v8179 = vsel %vm5426, %v6522, 0
      %v8182 = vsel %vm7750, %v8165, 0
      %8184 = vmatprep.subr.bf16.mxu0 0
      %8185 = vmatpush1.bf16.msra.mxu0 %v8162
      %8186 = vmatprep.subr.bf16.mxu0 0
      %8187 = vmatpush1.bf16.msra.mxu0 %v8163
      %8188 = vmatprep.subr.bf16.mxu0 0
      %8189 = vmatpush1.bf16.msra.mxu0 %v8164
      %8190 = vmatprep.subr.bf16.mxu0 0
      %8191 = vmatpush1.bf16.msra.mxu0 %v8182
      %8192 = vmatprep.subr.bf16.mxu0 0
      %8193 = vmatpush1.bf16.msra.mxu0 0
      %8194 = vmatprep.subr.bf16.mxu0 0
      %8195 = vmatpush1.bf16.msra.mxu0 0
      %8196 = vmatprep.subr.bf16.mxu0 0
      %8197 = vmatpush1.bf16.msra.mxu0 0
      %8198 = vmatprep.subr.bf16.mxu0 0
      %8199 = vmatpush1.bf16.msra.mxu0 0
      %8200 = vmatprep.subr.bf16.mxu0 0
      %8201 = vmatpush1.bf16.msra.mxu0 0
      %8202 = vmatprep.subr.bf16.mxu0 0
      %8203 = vmatpush1.bf16.msra.mxu0 0
      %8204 = vmatprep.subr.bf16.mxu0 0
      %8205 = vmatpush1.bf16.msra.mxu0 0
      %8206 = vmatprep.subr.bf16.mxu0 0
      %8207 = vmatpush1.bf16.msra.mxu0 0
      %8208 = vmatprep.subr.bf16.mxu0 0
      %8209 = vmatpush1.bf16.msra.mxu0 0
      %8210 = vmatprep.subr.bf16.mxu0 0
      %8211 = vmatpush1.bf16.msra.mxu0 0
      %8212 = vmatprep.subr.bf16.mxu0 0
      %8213 = vmatpush1.bf16.msra.mxu0 0
      %8214 = vmatprep.subr.bf16.mxu0 0
      %8215 = vmatpush1.bf16.msra.mxu0 0
      %8216 = vmatprep.mubr.bf16.mxu0 0
      %8217 = vmatmul.mubr.bf16.gmra.mrb[0].mxu0 %v8170
      %v8218 = vpop.f32.mrb[0].mxu0
      %v8219 = vadd.f32 0.0, %v8218
      %v8220 = vpop.f32.mrb[0].mxu0
      %v8221 = vpop.f32.mrb[0].mxu0
      %v8222 = vadd.f32 0.0, %v8221
      %v8223 = vpop.f32.mrb[0].mxu0
      %8224 = vmatprep.mubr.bf16.mxu0 0
      %8225 = vmatmul.mubr.bf16.gmra.mrb[0].mxu0 %v8173
      %v8226 = vpop.f32.mrb[0].mxu0
      %v8227 = vadd.f32 0.0, %v8226
      %v8228 = vpop.f32.mrb[0].mxu0
      %v8229 = vpop.f32.mrb[0].mxu0
      %v8230 = vadd.f32 0.0, %v8229
      %v8231 = vpop.f32.mrb[0].mxu0
      %8232 = vmatprep.mubr.bf16.mxu0 0
      %8233 = vmatmul.mubr.bf16.gmra.mrb[0].mxu0 %v8176
      %v8234 = vpop.f32.mrb[0].mxu0
      %v8235 = vadd.f32 0.0, %v8234
      %v8236 = vpop.f32.mrb[0].mxu0
      %v8237 = vpop.f32.mrb[0].mxu0
      %v8238 = vadd.f32 0.0, %v8237
      %v8239 = vpop.f32.mrb[0].mxu0
      %8240 = vmatprep.mubr.bf16.mxu0 0
      %8241 = vmatmul.mubr.bf16.gmra.mrb[0].mxu0 %v8179
      %v8242 = vpop.f32.mrb[0].mxu0
      %v8243 = vadd.f32 0.0, %v8242
      %v8244 = vpop.f32.mrb[0].mxu0
      %v8245 = vpop.f32.mrb[0].mxu0
      %v8246 = vpop.f32.mrb[0].mxu0
      %8247 = vdwg.mxu0
      %v8248 = vpack.c.b16 %v1540, %v1539
      %v8249 = vpack.c.b16 %v1542, %v1541
      %v8250 = vpack.c.b16 %v1544, %v1543
      %v8251 = vpack.c.b16 %v1545, %v1545
      %v8256 = vsel %vm5426, %v6525, 0
      %v8259 = vsel %vm5426, %v6528, 0
      %v8262 = vsel %vm5426, %v6531, 0
      %v8265 = vsel %vm5426, %v6534, 0
      %v8268 = vsel %vm7750, %v8251, 0
      %8270 = vmatprep.subr.bf16.mxu0 0
      %8271 = vmatpush1.bf16.msra.mxu0 %v8248
      %8272 = vmatprep.subr.bf16.mxu0 0
      %8273 = vmatpush1.bf16.msra.mxu0 %v8249
      %8274 = vmatprep.subr.bf16.mxu0 0
      %8275 = vmatpush1.bf16.msra.mxu0 %v8250
      %8276 = vmatprep.subr.bf16.mxu0 0
      %8277 = vmatpush1.bf16.msra.mxu0 %v8268
      %8278 = vmatprep.subr.bf16.mxu0 0
      %8279 = vmatpush1.bf16.msra.mxu0 0
      %8280 = vmatprep.subr.bf16.mxu0 0
      %8281 = vmatpush1.bf16.msra.mxu0 0
      %8282 = vmatprep.subr.bf16.mxu0 0
      %8283 = vmatpush1.bf16.msra.mxu0 0
      %8284 = vmatprep.subr.bf16.mxu0 0
      %8285 = vmatpush1.bf16.msra.mxu0 0
      %8286 = vmatprep.subr.bf16.mxu0 0
      %8287 = vmatpush1.bf16.msra.mxu0 0
      %8288 = vmatprep.subr.bf16.mxu0 0
      %8289 = vmatpush1.bf16.msra.mxu0 0
      %8290 = vmatprep.subr.bf16.mxu0 0
      %8291 = vmatpush1.bf16.msra.mxu0 0
      %8292 = vmatprep.subr.bf16.mxu0 0
      %8293 = vmatpush1.bf16.msra.mxu0 0
      %8294 = vmatprep.subr.bf16.mxu0 0
      %8295 = vmatpush1.bf16.msra.mxu0 0
      %8296 = vmatprep.subr.bf16.mxu0 0
      %8297 = vmatpush1.bf16.msra.mxu0 0
      %8298 = vmatprep.subr.bf16.mxu0 0
      %8299 = vmatpush1.bf16.msra.mxu0 0
      %8300 = vmatprep.subr.bf16.mxu0 0
      %8301 = vmatpush1.bf16.msra.mxu0 0
      %8302 = vmatprep.mubr.bf16.mxu0 0
      %8303 = vmatmul.mubr.bf16.gmra.mrb[0].mxu0 %v8256
      %v8304 = vpop.f32.mrb[0].mxu0
      %v8305 = vadd.f32 0.0, %v8304
      %v8306 = vpop.f32.mrb[0].mxu0
      %v8307 = vpop.f32.mrb[0].mxu0
      %v8308 = vadd.f32 0.0, %v8307
      %v8309 = vpop.f32.mrb[0].mxu0
      %8310 = vmatprep.mubr.bf16.mxu0 0
      %8311 = vmatmul.mubr.bf16.gmra.mrb[0].mxu0 %v8259
      %v8312 = vpop.f32.mrb[0].mxu0
      %v8313 = vadd.f32 0.0, %v8312
      %v8314 = vpop.f32.mrb[0].mxu0
      %v8315 = vpop.f32.mrb[0].mxu0
      %v8316 = vadd.f32 0.0, %v8315
      %v8317 = vpop.f32.mrb[0].mxu0
      %8318 = vmatprep.mubr.bf16.mxu0 0
      %8319 = vmatmul.mubr.bf16.gmra.mrb[0].mxu0 %v8262
      %v8320 = vpop.f32.mrb[0].mxu0
      %v8321 = vadd.f32 0.0, %v8320
      %v8322 = vpop.f32.mrb[0].mxu0
      %v8323 = vpop.f32.mrb[0].mxu0
      %v8324 = vadd.f32 0.0, %v8323
      %v8325 = vpop.f32.mrb[0].mxu0
      %8326 = vmatprep.mubr.bf16.mxu0 0
      %8327 = vmatmul.mubr.bf16.gmra.mrb[0].mxu0 %v8265
      %v8328 = vpop.f32.mrb[0].mxu0
      %v8329 = vadd.f32 0.0, %v8328
      %v8330 = vpop.f32.mrb[0].mxu0
      %v8331 = vpop.f32.mrb[0].mxu0
      %v8332 = vpop.f32.mrb[0].mxu0
      %8333 = vdwg.mxu0
      %v8334 = vpack.c.b16 %v1547, %v1546
      %v8335 = vpack.c.b16 %v1549, %v1548
      %v8336 = vpack.c.b16 %v1551, %v1550
      %v8337 = vpack.c.b16 %v1552, %v1552
      %v8342 = vsel %vm5426, %v6537, 0
      %v8345 = vsel %vm5426, %v6540, 0
      %v8348 = vsel %vm5426, %v6543, 0
      %v8351 = vsel %vm5426, %v6546, 0
      %v8354 = vsel %vm7750, %v8337, 0
      %8356 = vmatprep.subr.bf16.mxu0 0
      %8357 = vmatpush1.bf16.msra.mxu0 %v8334
      %8358 = vmatprep.subr.bf16.mxu0 0
      %8359 = vmatpush1.bf16.msra.mxu0 %v8335
      %8360 = vmatprep.subr.bf16.mxu0 0
      %8361 = vmatpush1.bf16.msra.mxu0 %v8336
      %8362 = vmatprep.subr.bf16.mxu0 0
      %8363 = vmatpush1.bf16.msra.mxu0 %v8354
      %8364 = vmatprep.subr.bf16.mxu0 0
      %8365 = vmatpush1.bf16.msra.mxu0 0
      %8366 = vmatprep.subr.bf16.mxu0 0
      %8367 = vmatpush1.bf16.msra.mxu0 0
      %8368 = vmatprep.subr.bf16.mxu0 0
      %8369 = vmatpush1.bf16.msra.mxu0 0
      %8370 = vmatprep.subr.bf16.mxu0 0
      %8371 = vmatpush1.bf16.msra.mxu0 0
      %8372 = vmatprep.subr.bf16.mxu0 0
      %8373 = vmatpush1.bf16.msra.mxu0 0
      %8374 = vmatprep.subr.bf16.mxu0 0
      %8375 = vmatpush1.bf16.msra.mxu0 0
      %8376 = vmatprep.subr.bf16.mxu0 0
      %8377 = vmatpush1.bf16.msra.mxu0 0
      %8378 = vmatprep.subr.bf16.mxu0 0
      %8379 = vmatpush1.bf16.msra.mxu0 0
      %8380 = vmatprep.subr.bf16.mxu0 0
      %8381 = vmatpush1.bf16.msra.mxu0 0
      %8382 = vmatprep.subr.bf16.mxu0 0
      %8383 = vmatpush1.bf16.msra.mxu0 0
      %8384 = vmatprep.subr.bf16.mxu0 0
      %8385 = vmatpush1.bf16.msra.mxu0 0
      %8386 = vmatprep.subr.bf16.mxu0 0
      %8387 = vmatpush1.bf16.msra.mxu0 0
      %8388 = vmatprep.mubr.bf16.mxu0 0
      %8389 = vmatmul.mubr.bf16.gmra.mrb[0].mxu0 %v8342
      %v8390 = vpop.f32.mrb[0].mxu0
      %v8391 = vadd.f32 0.0, %v8390
      %v8392 = vpop.f32.mrb[0].mxu0
      %v8393 = vpop.f32.mrb[0].mxu0
      %v8394 = vadd.f32 0.0, %v8393
      %v8395 = vpop.f32.mrb[0].mxu0
      %8396 = vmatprep.mubr.bf16.mxu0 0
      %8397 = vmatmul.mubr.bf16.gmra.mrb[0].mxu0 %v8345
      %v8398 = vpop.f32.mrb[0].mxu0
      %v8399 = vadd.f32 0.0, %v8398
      %v8400 = vpop.f32.mrb[0].mxu0
      %v8401 = vpop.f32.mrb[0].mxu0
      %v8402 = vadd.f32 0.0, %v8401
      %v8403 = vpop.f32.mrb[0].mxu0
      %8404 = vmatprep.mubr.bf16.mxu0 0
      %8405 = vmatmul.mubr.bf16.gmra.mrb[0].mxu0 %v8348
      %v8406 = vpop.f32.mrb[0].mxu0
      %v8407 = vadd.f32 0.0, %v8406
      %v8408 = vpop.f32.mrb[0].mxu0
      %v8409 = vpop.f32.mrb[0].mxu0
      %v8410 = vadd.f32 0.0, %v8409
      %v8411 = vpop.f32.mrb[0].mxu0
      %8412 = vmatprep.mubr.bf16.mxu0 0
      %8413 = vmatmul.mubr.bf16.gmra.mrb[0].mxu0 %v8351
      %v8414 = vpop.f32.mrb[0].mxu0
      %v8415 = vadd.f32 0.0, %v8414
      %v8416 = vpop.f32.mrb[0].mxu0
      %v8417 = vpop.f32.mrb[0].mxu0
      %v8418 = vpop.f32.mrb[0].mxu0
      %8419 = vdwg.mxu0
      %v8420 = vpack.c.b16 %v1554, %v1553
      %v8421 = vpack.c.b16 %v1556, %v1555
      %v8422 = vpack.c.b16 %v1558, %v1557
      %v8423 = vpack.c.b16 %v1559, %v1559
      %v8428 = vsel %vm5426, %v6549, 0
      %v8431 = vsel %vm5426, %v6552, 0
      %v8434 = vsel %vm5426, %v6555, 0
      %v8437 = vsel %vm5426, %v6558, 0
      %v8440 = vsel %vm7750, %v8423, 0
      %8442 = vmatprep.subr.bf16.mxu0 0
      %8443 = vmatpush1.bf16.msra.mxu0 %v8420
      %8444 = vmatprep.subr.bf16.mxu0 0
      %8445 = vmatpush1.bf16.msra.mxu0 %v8421
      %8446 = vmatprep.subr.bf16.mxu0 0
      %8447 = vmatpush1.bf16.msra.mxu0 %v8422
      %8448 = vmatprep.subr.bf16.mxu0 0
      %8449 = vmatpush1.bf16.msra.mxu0 %v8440
      %8450 = vmatprep.subr.bf16.mxu0 0
      %8451 = vmatpush1.bf16.msra.mxu0 0
      %8452 = vmatprep.subr.bf16.mxu0 0
      %8453 = vmatpush1.bf16.msra.mxu0 0
      %8454 = vmatprep.subr.bf16.mxu0 0
      %8455 = vmatpush1.bf16.msra.mxu0 0
      %8456 = vmatprep.subr.bf16.mxu0 0
      %8457 = vmatpush1.bf16.msra.mxu0 0
      %8458 = vmatprep.subr.bf16.mxu0 0
      %8459 = vmatpush1.bf16.msra.mxu0 0
      %8460 = vmatprep.subr.bf16.mxu0 0
      %8461 = vmatpush1.bf16.msra.mxu0 0
      %8462 = vmatprep.subr.bf16.mxu0 0
      %8463 = vmatpush1.bf16.msra.mxu0 0
      %8464 = vmatprep.subr.bf16.mxu0 0
      %8465 = vmatpush1.bf16.msra.mxu0 0
      %8466 = vmatprep.subr.bf16.mxu0 0
      %8467 = vmatpush1.bf16.msra.mxu0 0
      %8468 = vmatprep.subr.bf16.mxu0 0
      %8469 = vmatpush1.bf16.msra.mxu0 0
      %8470 = vmatprep.subr.bf16.mxu0 0
      %8471 = vmatpush1.bf16.msra.mxu0 0
      %8472 = vmatprep.subr.bf16.mxu0 0
      %8473 = vmatpush1.bf16.msra.mxu0 0
      %8474 = vmatprep.mubr.bf16.mxu0 0
      %8475 = vmatmul.mubr.bf16.gmra.mrb[0].mxu0 %v8428
      %v8476 = vpop.f32.mrb[0].mxu0
      %v8477 = vadd.f32 0.0, %v8476
      %v8478 = vpop.f32.mrb[0].mxu0
      %v8479 = vpop.f32.mrb[0].mxu0
      %v8480 = vadd.f32 0.0, %v8479
      %v8481 = vpop.f32.mrb[0].mxu0
      %8482 = vmatprep.mubr.bf16.mxu0 0
      %8483 = vmatmul.mubr.bf16.gmra.mrb[0].mxu0 %v8431
      %v8484 = vpop.f32.mrb[0].mxu0
      %v8485 = vadd.f32 0.0, %v8484
      %v8486 = vpop.f32.mrb[0].mxu0
      %v8487 = vpop.f32.mrb[0].mxu0
      %v8488 = vadd.f32 0.0, %v8487
      %v8489 = vpop.f32.mrb[0].mxu0
      %8490 = vmatprep.mubr.bf16.mxu0 0
      %8491 = vmatmul.mubr.bf16.gmra.mrb[0].mxu0 %v8434
      %v8492 = vpop.f32.mrb[0].mxu0
      %v8493 = vadd.f32 0.0, %v8492
      %v8494 = vpop.f32.mrb[0].mxu0
      %v8495 = vpop.f32.mrb[0].mxu0
      %v8496 = vadd.f32 0.0, %v8495
      %v8497 = vpop.f32.mrb[0].mxu0
      %8498 = vmatprep.mubr.bf16.mxu0 0
      %8499 = vmatmul.mubr.bf16.gmra.mrb[0].mxu0 %v8437
      %v8500 = vpop.f32.mrb[0].mxu0
      %v8501 = vadd.f32 0.0, %v8500
      %v8502 = vpop.f32.mrb[0].mxu0
      %v8503 = vpop.f32.mrb[0].mxu0
      %v8504 = vpop.f32.mrb[0].mxu0
      %8505 = vdwg.mxu0
      %v8506 = vpack.c.b16 %v1561, %v1560
      %v8507 = vpack.c.b16 %v1563, %v1562
      %v8508 = vpack.c.b16 %v1565, %v1564
      %v8509 = vpack.c.b16 %v1566, %v1566
      %v8514 = vsel %vm5426, %v6561, 0
      %v8517 = vsel %vm5426, %v6564, 0
      %v8520 = vsel %vm5426, %v6567, 0
      %v8523 = vsel %vm5426, %v6570, 0
      %v8526 = vsel %vm7750, %v8509, 0
      %8528 = vmatprep.subr.bf16.mxu0 0
      %8529 = vmatpush1.bf16.msra.mxu0 %v8506
      %8530 = vmatprep.subr.bf16.mxu0 0
      %8531 = vmatpush1.bf16.msra.mxu0 %v8507
      %8532 = vmatprep.subr.bf16.mxu0 0
      %8533 = vmatpush1.bf16.msra.mxu0 %v8508
      %8534 = vmatprep.subr.bf16.mxu0 0
      %8535 = vmatpush1.bf16.msra.mxu0 %v8526
      %8536 = vmatprep.subr.bf16.mxu0 0
      %8537 = vmatpush1.bf16.msra.mxu0 0
      %8538 = vmatprep.subr.bf16.mxu0 0
      %8539 = vmatpush1.bf16.msra.mxu0 0
      %8540 = vmatprep.subr.bf16.mxu0 0
      %8541 = vmatpush1.bf16.msra.mxu0 0
      %8542 = vmatprep.subr.bf16.mxu0 0
      %8543 = vmatpush1.bf16.msra.mxu0 0
      %8544 = vmatprep.subr.bf16.mxu0 0
      %8545 = vmatpush1.bf16.msra.mxu0 0
      %8546 = vmatprep.subr.bf16.mxu0 0
      %8547 = vmatpush1.bf16.msra.mxu0 0
      %8548 = vmatprep.subr.bf16.mxu0 0
      %8549 = vmatpush1.bf16.msra.mxu0 0
      %8550 = vmatprep.subr.bf16.mxu0 0
      %8551 = vmatpush1.bf16.msra.mxu0 0
      %8552 = vmatprep.subr.bf16.mxu0 0
      %8553 = vmatpush1.bf16.msra.mxu0 0
      %8554 = vmatprep.subr.bf16.mxu0 0
      %8555 = vmatpush1.bf16.msra.mxu0 0
      %8556 = vmatprep.subr.bf16.mxu0 0
      %8557 = vmatpush1.bf16.msra.mxu0 0
      %8558 = vmatprep.subr.bf16.mxu0 0
      %8559 = vmatpush1.bf16.msra.mxu0 0
      %8560 = vmatprep.mubr.bf16.mxu0 0
      %8561 = vmatmul.mubr.bf16.gmra.mrb[0].mxu0 %v8514
      %v8562 = vpop.f32.mrb[0].mxu0
      %v8563 = vadd.f32 0.0, %v8562
      %v8564 = vpop.f32.mrb[0].mxu0
      %v8565 = vpop.f32.mrb[0].mxu0
      %v8566 = vadd.f32 0.0, %v8565
      %v8567 = vpop.f32.mrb[0].mxu0
      %8568 = vmatprep.mubr.bf16.mxu0 0
      %8569 = vmatmul.mubr.bf16.gmra.mrb[0].mxu0 %v8517
      %v8570 = vpop.f32.mrb[0].mxu0
      %v8571 = vadd.f32 0.0, %v8570
      %v8572 = vpop.f32.mrb[0].mxu0
      %v8573 = vpop.f32.mrb[0].mxu0
      %v8574 = vadd.f32 0.0, %v8573
      %v8575 = vpop.f32.mrb[0].mxu0
      %8576 = vmatprep.mubr.bf16.mxu0 0
      %8577 = vmatmul.mubr.bf16.gmra.mrb[0].mxu0 %v8520
      %v8578 = vpop.f32.mrb[0].mxu0
      %v8579 = vadd.f32 0.0, %v8578
      %v8580 = vpop.f32.mrb[0].mxu0
      %v8581 = vpop.f32.mrb[0].mxu0
      %v8582 = vadd.f32 0.0, %v8581
      %v8583 = vpop.f32.mrb[0].mxu0
      %8584 = vmatprep.mubr.bf16.mxu0 0
      %8585 = vmatmul.mubr.bf16.gmra.mrb[0].mxu0 %v8523
      %v8586 = vpop.f32.mrb[0].mxu0
      %v8587 = vadd.f32 0.0, %v8586
      %v8588 = vpop.f32.mrb[0].mxu0
      %v8589 = vpop.f32.mrb[0].mxu0
      %v8590 = vpop.f32.mrb[0].mxu0
      %8591 = vdwg.mxu0
      %v8592 = vpack.c.b16 %v1568, %v1567
      %v8593 = vpack.c.b16 %v1570, %v1569
      %v8594 = vpack.c.b16 %v1572, %v1571
      %v8595 = vpack.c.b16 %v1573, %v1573
      %v8600 = vsel %vm5426, %v6573, 0
      %v8603 = vsel %vm5426, %v6576, 0
      %v8606 = vsel %vm5426, %v6579, 0
      %v8609 = vsel %vm5426, %v6582, 0
      %v8612 = vsel %vm7750, %v8595, 0
      %8614 = vmatprep.subr.bf16.mxu0 0
      %8615 = vmatpush1.bf16.msra.mxu0 %v8592
      %8616 = vmatprep.subr.bf16.mxu0 0
      %8617 = vmatpush1.bf16.msra.mxu0 %v8593
      %8618 = vmatprep.subr.bf16.mxu0 0
      %8619 = vmatpush1.bf16.msra.mxu0 %v8594
      %8620 = vmatprep.subr.bf16.mxu0 0
      %8621 = vmatpush1.bf16.msra.mxu0 %v8612
      %8622 = vmatprep.subr.bf16.mxu0 0
      %8623 = vmatpush1.bf16.msra.mxu0 0
      %8624 = vmatprep.subr.bf16.mxu0 0
      %8625 = vmatpush1.bf16.msra.mxu0 0
      %8626 = vmatprep.subr.bf16.mxu0 0
      %8627 = vmatpush1.bf16.msra.mxu0 0
      %8628 = vmatprep.subr.bf16.mxu0 0
      %8629 = vmatpush1.bf16.msra.mxu0 0
      %8630 = vmatprep.subr.bf16.mxu0 0
      %8631 = vmatpush1.bf16.msra.mxu0 0
      %8632 = vmatprep.subr.bf16.mxu0 0
      %8633 = vmatpush1.bf16.msra.mxu0 0
      %8634 = vmatprep.subr.bf16.mxu0 0
      %8635 = vmatpush1.bf16.msra.mxu0 0
      %8636 = vmatprep.subr.bf16.mxu0 0
      %8637 = vmatpush1.bf16.msra.mxu0 0
      %8638 = vmatprep.subr.bf16.mxu0 0
      %8639 = vmatpush1.bf16.msra.mxu0 0
      %8640 = vmatprep.subr.bf16.mxu0 0
      %8641 = vmatpush1.bf16.msra.mxu0 0
      %8642 = vmatprep.subr.bf16.mxu0 0
      %8643 = vmatpush1.bf16.msra.mxu0 0
      %8644 = vmatprep.subr.bf16.mxu0 0
      %8645 = vmatpush1.bf16.msra.mxu0 0
      %8646 = vmatprep.mubr.bf16.mxu0 0
      %8647 = vmatmul.mubr.bf16.gmra.mrb[0].mxu0 %v8600
      %v8648 = vpop.f32.mrb[0].mxu0
      %v8649 = vadd.f32 0.0, %v8648
      %v8650 = vpop.f32.mrb[0].mxu0
      %v8651 = vpop.f32.mrb[0].mxu0
      %v8652 = vadd.f32 0.0, %v8651
      %v8653 = vpop.f32.mrb[0].mxu0
      %8654 = vmatprep.mubr.bf16.mxu0 0
      %8655 = vmatmul.mubr.bf16.gmra.mrb[0].mxu0 %v8603
      %v8656 = vpop.f32.mrb[0].mxu0
      %v8657 = vadd.f32 0.0, %v8656
      %v8658 = vpop.f32.mrb[0].mxu0
      %v8659 = vpop.f32.mrb[0].mxu0
      %v8660 = vadd.f32 0.0, %v8659
      %v8661 = vpop.f32.mrb[0].mxu0
      %8662 = vmatprep.mubr.bf16.mxu0 0
      %8663 = vmatmul.mubr.bf16.gmra.mrb[0].mxu0 %v8606
      %v8664 = vpop.f32.mrb[0].mxu0
      %v8665 = vadd.f32 0.0, %v8664
      %v8666 = vpop.f32.mrb[0].mxu0
      %v8667 = vpop.f32.mrb[0].mxu0
      %v8668 = vadd.f32 0.0, %v8667
      %v8669 = vpop.f32.mrb[0].mxu0
      %8670 = vmatprep.mubr.bf16.mxu0 0
      %8671 = vmatmul.mubr.bf16.gmra.mrb[0].mxu0 %v8609
      %v8672 = vpop.f32.mrb[0].mxu0
      %v8673 = vadd.f32 0.0, %v8672
      %v8674 = vpop.f32.mrb[0].mxu0
      %v8675 = vpop.f32.mrb[0].mxu0
      %v8676 = vpop.f32.mrb[0].mxu0
      %8677 = vdwg.mxu0
      %v8678 = vpack.c.b16 %v1575, %v1574
      %v8679 = vpack.c.b16 %v1577, %v1576
      %v8680 = vpack.c.b16 %v1579, %v1578
      %v8681 = vpack.c.b16 %v1580, %v1580
      %v8686 = vsel %vm5426, %v6585, 0
      %v8689 = vsel %vm5426, %v6588, 0
      %v8692 = vsel %vm5426, %v6591, 0
      %v8695 = vsel %vm5426, %v6594, 0
      %v8698 = vsel %vm7750, %v8681, 0
      %8700 = vmatprep.subr.bf16.mxu0 0
      %8701 = vmatpush1.bf16.msra.mxu0 %v8678
      %8702 = vmatprep.subr.bf16.mxu0 0
      %8703 = vmatpush1.bf16.msra.mxu0 %v8679
      %8704 = vmatprep.subr.bf16.mxu0 0
      %8705 = vmatpush1.bf16.msra.mxu0 %v8680
      %8706 = vmatprep.subr.bf16.mxu0 0
      %8707 = vmatpush1.bf16.msra.mxu0 %v8698
      %8708 = vmatprep.subr.bf16.mxu0 0
      %8709 = vmatpush1.bf16.msra.mxu0 0
      %8710 = vmatprep.subr.bf16.mxu0 0
      %8711 = vmatpush1.bf16.msra.mxu0 0
      %8712 = vmatprep.subr.bf16.mxu0 0
      %8713 = vmatpush1.bf16.msra.mxu0 0
      %8714 = vmatprep.subr.bf16.mxu0 0
      %8715 = vmatpush1.bf16.msra.mxu0 0
      %8716 = vmatprep.subr.bf16.mxu0 0
      %8717 = vmatpush1.bf16.msra.mxu0 0
      %8718 = vmatprep.subr.bf16.mxu0 0
      %8719 = vmatpush1.bf16.msra.mxu0 0
      %8720 = vmatprep.subr.bf16.mxu0 0
      %8721 = vmatpush1.bf16.msra.mxu0 0
      %8722 = vmatprep.subr.bf16.mxu0 0
      %8723 = vmatpush1.bf16.msra.mxu0 0
      %8724 = vmatprep.subr.bf16.mxu0 0
      %8725 = vmatpush1.bf16.msra.mxu0 0
      %8726 = vmatprep.subr.bf16.mxu0 0
      %8727 = vmatpush1.bf16.msra.mxu0 0
      %8728 = vmatprep.subr.bf16.mxu0 0
      %8729 = vmatpush1.bf16.msra.mxu0 0
      %8730 = vmatprep.subr.bf16.mxu0 0
      %8731 = vmatpush1.bf16.msra.mxu0 0
      %8732 = vmatprep.mubr.bf16.mxu0 0
      %8733 = vmatmul.mubr.bf16.gmra.mrb[0].mxu0 %v8686
      %v8734 = vpop.f32.mrb[0].mxu0
      %v8735 = vadd.f32 0.0, %v8734
      %v8736 = vpop.f32.mrb[0].mxu0
      %v8737 = vpop.f32.mrb[0].mxu0
      %v8738 = vadd.f32 0.0, %v8737
      %v8739 = vpop.f32.mrb[0].mxu0
      %8740 = vmatprep.mubr.bf16.mxu0 0
      %8741 = vmatmul.mubr.bf16.gmra.mrb[0].mxu0 %v8689
      %v8742 = vpop.f32.mrb[0].mxu0
      %v8743 = vadd.f32 0.0, %v8742
      %v8744 = vpop.f32.mrb[0].mxu0
      %v8745 = vpop.f32.mrb[0].mxu0
      %v8746 = vadd.f32 0.0, %v8745
      %v8747 = vpop.f32.mrb[0].mxu0
      %8748 = vmatprep.mubr.bf16.mxu0 0
      %8749 = vmatmul.mubr.bf16.gmra.mrb[0].mxu0 %v8692
      %v8750 = vpop.f32.mrb[0].mxu0
      %v8751 = vadd.f32 0.0, %v8750
      %v8752 = vpop.f32.mrb[0].mxu0
      %v8753 = vpop.f32.mrb[0].mxu0
      %v8754 = vadd.f32 0.0, %v8753
      %v8755 = vpop.f32.mrb[0].mxu0
      %8756 = vmatprep.mubr.bf16.mxu0 0
      %8757 = vmatmul.mubr.bf16.gmra.mrb[0].mxu0 %v8695
      %v8758 = vpop.f32.mrb[0].mxu0
      %v8759 = vadd.f32 0.0, %v8758
      %v8760 = vpop.f32.mrb[0].mxu0
      %v8761 = vpop.f32.mrb[0].mxu0
      %v8762 = vpop.f32.mrb[0].mxu0
      %8763 = vdwg.mxu0
      %v8764 = vpack.c.b16 %v1582, %v1581
      %v8765 = vpack.c.b16 %v1584, %v1583
      %v8766 = vpack.c.b16 %v1586, %v1585
      %v8767 = vpack.c.b16 %v1587, %v1587
      %v8772 = vsel %vm5426, %v6597, 0
      %v8775 = vsel %vm5426, %v6600, 0
      %v8778 = vsel %vm5426, %v6603, 0
      %v8781 = vsel %vm5426, %v6606, 0
      %v8784 = vsel %vm7750, %v8767, 0
      %8786 = vmatprep.subr.bf16.mxu0 0
      %8787 = vmatpush1.bf16.msra.mxu0 %v8764
      %8788 = vmatprep.subr.bf16.mxu0 0
      %8789 = vmatpush1.bf16.msra.mxu0 %v8765
      %8790 = vmatprep.subr.bf16.mxu0 0
      %8791 = vmatpush1.bf16.msra.mxu0 %v8766
      %8792 = vmatprep.subr.bf16.mxu0 0
      %8793 = vmatpush1.bf16.msra.mxu0 %v8784
      %8794 = vmatprep.subr.bf16.mxu0 0
      %8795 = vmatpush1.bf16.msra.mxu0 0
      %8796 = vmatprep.subr.bf16.mxu0 0
      %8797 = vmatpush1.bf16.msra.mxu0 0
      %8798 = vmatprep.subr.bf16.mxu0 0
      %8799 = vmatpush1.bf16.msra.mxu0 0
      %8800 = vmatprep.subr.bf16.mxu0 0
      %8801 = vmatpush1.bf16.msra.mxu0 0
      %8802 = vmatprep.subr.bf16.mxu0 0
      %8803 = vmatpush1.bf16.msra.mxu0 0
      %8804 = vmatprep.subr.bf16.mxu0 0
      %8805 = vmatpush1.bf16.msra.mxu0 0
      %8806 = vmatprep.subr.bf16.mxu0 0
      %8807 = vmatpush1.bf16.msra.mxu0 0
      %8808 = vmatprep.subr.bf16.mxu0 0
      %8809 = vmatpush1.bf16.msra.mxu0 0
      %8810 = vmatprep.subr.bf16.mxu0 0
      %8811 = vmatpush1.bf16.msra.mxu0 0
      %8812 = vmatprep.subr.bf16.mxu0 0
      %8813 = vmatpush1.bf16.msra.mxu0 0
      %8814 = vmatprep.subr.bf16.mxu0 0
      %8815 = vmatpush1.bf16.msra.mxu0 0
      %8816 = vmatprep.subr.bf16.mxu0 0
      %8817 = vmatpush1.bf16.msra.mxu0 0
      %8818 = vmatprep.mubr.bf16.mxu0 0
      %8819 = vmatmul.mubr.bf16.gmra.mrb[0].mxu0 %v8772
      %v8820 = vpop.f32.mrb[0].mxu0
      %v8821 = vadd.f32 0.0, %v8820
      %v8822 = vpop.f32.mrb[0].mxu0
      %v8823 = vpop.f32.mrb[0].mxu0
      %v8824 = vadd.f32 0.0, %v8823
      %v8825 = vpop.f32.mrb[0].mxu0
      %8826 = vmatprep.mubr.bf16.mxu0 0
      %8827 = vmatmul.mubr.bf16.gmra.mrb[0].mxu0 %v8775
      %v8828 = vpop.f32.mrb[0].mxu0
      %v8829 = vadd.f32 0.0, %v8828
      %v8830 = vpop.f32.mrb[0].mxu0
      %v8831 = vpop.f32.mrb[0].mxu0
      %v8832 = vadd.f32 0.0, %v8831
      %v8833 = vpop.f32.mrb[0].mxu0
      %8834 = vmatprep.mubr.bf16.mxu0 0
      %8835 = vmatmul.mubr.bf16.gmra.mrb[0].mxu0 %v8778
      %v8836 = vpop.f32.mrb[0].mxu0
      %v8837 = vadd.f32 0.0, %v8836
      %v8838 = vpop.f32.mrb[0].mxu0
      %v8839 = vpop.f32.mrb[0].mxu0
      %v8840 = vadd.f32 0.0, %v8839
      %v8841 = vpop.f32.mrb[0].mxu0
      %8842 = vmatprep.mubr.bf16.mxu0 0
      %8843 = vmatmul.mubr.bf16.gmra.mrb[0].mxu0 %v8781
      %v8844 = vpop.f32.mrb[0].mxu0
      %v8845 = vadd.f32 0.0, %v8844
      %v8846 = vpop.f32.mrb[0].mxu0
      %v8847 = vpop.f32.mrb[0].mxu0
      %v8848 = vpop.f32.mrb[0].mxu0
      %8849 = vdwg.mxu0
      %v8850 = vpack.c.b16 %v1589, %v1588
      %v8851 = vpack.c.b16 %v1591, %v1590
      %v8852 = vpack.c.b16 %v1593, %v1592
      %v8853 = vpack.c.b16 %v1594, %v1594
      %v8858 = vsel %vm5426, %v6609, 0
      %v8861 = vsel %vm5426, %v6612, 0
      %v8864 = vsel %vm5426, %v6615, 0
      %v8867 = vsel %vm5426, %v6618, 0
      %v8870 = vsel %vm7750, %v8853, 0
      %8872 = vmatprep.subr.bf16.mxu0 0
      %8873 = vmatpush1.bf16.msra.mxu0 %v8850
      %8874 = vmatprep.subr.bf16.mxu0 0
      %8875 = vmatpush1.bf16.msra.mxu0 %v8851
      %8876 = vmatprep.subr.bf16.mxu0 0
      %8877 = vmatpush1.bf16.msra.mxu0 %v8852
      %8878 = vmatprep.subr.bf16.mxu0 0
      %8879 = vmatpush1.bf16.msra.mxu0 %v8870
      %8880 = vmatprep.subr.bf16.mxu0 0
      %8881 = vmatpush1.bf16.msra.mxu0 0
      %8882 = vmatprep.subr.bf16.mxu0 0
      %8883 = vmatpush1.bf16.msra.mxu0 0
      %8884 = vmatprep.subr.bf16.mxu0 0
      %8885 = vmatpush1.bf16.msra.mxu0 0
      %8886 = vmatprep.subr.bf16.mxu0 0
      %8887 = vmatpush1.bf16.msra.mxu0 0
      %8888 = vmatprep.subr.bf16.mxu0 0
      %8889 = vmatpush1.bf16.msra.mxu0 0
      %8890 = vmatprep.subr.bf16.mxu0 0
      %8891 = vmatpush1.bf16.msra.mxu0 0
      %8892 = vmatprep.subr.bf16.mxu0 0
      %8893 = vmatpush1.bf16.msra.mxu0 0
      %8894 = vmatprep.subr.bf16.mxu0 0
      %8895 = vmatpush1.bf16.msra.mxu0 0
      %8896 = vmatprep.subr.bf16.mxu0 0
      %8897 = vmatpush1.bf16.msra.mxu0 0
      %8898 = vmatprep.subr.bf16.mxu0 0
      %8899 = vmatpush1.bf16.msra.mxu0 0
      %8900 = vmatprep.subr.bf16.mxu0 0
      %8901 = vmatpush1.bf16.msra.mxu0 0
      %8902 = vmatprep.subr.bf16.mxu0 0
      %8903 = vmatpush1.bf16.msra.mxu0 0
      %8904 = vmatprep.mubr.bf16.mxu0 0
      %8905 = vmatmul.mubr.bf16.gmra.mrb[0].mxu0 %v8858
      %v8906 = vpop.f32.mrb[0].mxu0
      %v8907 = vadd.f32 0.0, %v8906
      %v8908 = vpop.f32.mrb[0].mxu0
      %v8909 = vpop.f32.mrb[0].mxu0
      %v8910 = vadd.f32 0.0, %v8909
      %v8911 = vpop.f32.mrb[0].mxu0
      %8912 = vmatprep.mubr.bf16.mxu0 0
      %8913 = vmatmul.mubr.bf16.gmra.mrb[0].mxu0 %v8861
      %v8914 = vpop.f32.mrb[0].mxu0
      %v8915 = vadd.f32 0.0, %v8914
      %v8916 = vpop.f32.mrb[0].mxu0
      %v8917 = vpop.f32.mrb[0].mxu0
      %v8918 = vadd.f32 0.0, %v8917
      %v8919 = vpop.f32.mrb[0].mxu0
      %8920 = vmatprep.mubr.bf16.mxu0 0
      %8921 = vmatmul.mubr.bf16.gmra.mrb[0].mxu0 %v8864
      %v8922 = vpop.f32.mrb[0].mxu0
      %v8923 = vadd.f32 0.0, %v8922
      %v8924 = vpop.f32.mrb[0].mxu0
      %v8925 = vpop.f32.mrb[0].mxu0
      %v8926 = vadd.f32 0.0, %v8925
      %v8927 = vpop.f32.mrb[0].mxu0
      %8928 = vmatprep.mubr.bf16.mxu0 0
      %8929 = vmatmul.mubr.bf16.gmra.mrb[0].mxu0 %v8867
      %v8930 = vpop.f32.mrb[0].mxu0
      %v8931 = vadd.f32 0.0, %v8930
      %v8932 = vpop.f32.mrb[0].mxu0
      %v8933 = vpop.f32.mrb[0].mxu0
      %v8934 = vpop.f32.mrb[0].mxu0
      %8935 = vdwg.mxu0
      %v8936 = vpack.c.b16 %v1596, %v1595
      %v8937 = vpack.c.b16 %v1598, %v1597
      %v8938 = vpack.c.b16 %v1600, %v1599
      %v8939 = vpack.c.b16 %v1601, %v1601
      %v8944 = vsel %vm5426, %v6621, 0
      %v8947 = vsel %vm5426, %v6624, 0
      %v8950 = vsel %vm5426, %v6627, 0
      %v8953 = vsel %vm5426, %v6630, 0
      %v8956 = vsel %vm7750, %v8939, 0
      %8958 = vmatprep.subr.bf16.mxu0 0
      %8959 = vmatpush1.bf16.msra.mxu0 %v8936
      %8960 = vmatprep.subr.bf16.mxu0 0
      %8961 = vmatpush1.bf16.msra.mxu0 %v8937
      %8962 = vmatprep.subr.bf16.mxu0 0
      %8963 = vmatpush1.bf16.msra.mxu0 %v8938
      %8964 = vmatprep.subr.bf16.mxu0 0
      %8965 = vmatpush1.bf16.msra.mxu0 %v8956
      %8966 = vmatprep.subr.bf16.mxu0 0
      %8967 = vmatpush1.bf16.msra.mxu0 0
      %8968 = vmatprep.subr.bf16.mxu0 0
      %8969 = vmatpush1.bf16.msra.mxu0 0
      %8970 = vmatprep.subr.bf16.mxu0 0
      %8971 = vmatpush1.bf16.msra.mxu0 0
      %8972 = vmatprep.subr.bf16.mxu0 0
      %8973 = vmatpush1.bf16.msra.mxu0 0
      %8974 = vmatprep.subr.bf16.mxu0 0
      %8975 = vmatpush1.bf16.msra.mxu0 0
      %8976 = vmatprep.subr.bf16.mxu0 0
      %8977 = vmatpush1.bf16.msra.mxu0 0
      %8978 = vmatprep.subr.bf16.mxu0 0
      %8979 = vmatpush1.bf16.msra.mxu0 0
      %8980 = vmatprep.subr.bf16.mxu0 0
      %8981 = vmatpush1.bf16.msra.mxu0 0
      %8982 = vmatprep.subr.bf16.mxu0 0
      %8983 = vmatpush1.bf16.msra.mxu0 0
      %8984 = vmatprep.subr.bf16.mxu0 0
      %8985 = vmatpush1.bf16.msra.mxu0 0
      %8986 = vmatprep.subr.bf16.mxu0 0
      %8987 = vmatpush1.bf16.msra.mxu0 0
      %8988 = vmatprep.subr.bf16.mxu0 0
      %8989 = vmatpush1.bf16.msra.mxu0 0
      %8990 = vmatprep.mubr.bf16.mxu0 0
      %8991 = vmatmul.mubr.bf16.gmra.mrb[0].mxu0 %v8944
      %v8992 = vpop.f32.mrb[0].mxu0
      %v8993 = vadd.f32 0.0, %v8992
      %v8994 = vpop.f32.mrb[0].mxu0
      %v8995 = vpop.f32.mrb[0].mxu0
      %v8996 = vadd.f32 0.0, %v8995
      %v8997 = vpop.f32.mrb[0].mxu0
      %8998 = vmatprep.mubr.bf16.mxu0 0
      %8999 = vmatmul.mubr.bf16.gmra.mrb[0].mxu0 %v8947
      %v9000 = vpop.f32.mrb[0].mxu0
      %v9001 = vadd.f32 0.0, %v9000
      %v9002 = vpop.f32.mrb[0].mxu0
      %v9003 = vpop.f32.mrb[0].mxu0
      %v9004 = vadd.f32 0.0, %v9003
      %v9005 = vpop.f32.mrb[0].mxu0
      %9006 = vmatprep.mubr.bf16.mxu0 0
      %9007 = vmatmul.mubr.bf16.gmra.mrb[0].mxu0 %v8950
      %v9008 = vpop.f32.mrb[0].mxu0
      %v9009 = vadd.f32 0.0, %v9008
      %v9010 = vpop.f32.mrb[0].mxu0
      %v9011 = vpop.f32.mrb[0].mxu0
      %v9012 = vadd.f32 0.0, %v9011
      %v9013 = vpop.f32.mrb[0].mxu0
      %9014 = vmatprep.mubr.bf16.mxu0 0
      %9015 = vmatmul.mubr.bf16.gmra.mrb[0].mxu0 %v8953
      %v9016 = vpop.f32.mrb[0].mxu0
      %v9017 = vadd.f32 0.0, %v9016
      %v9018 = vpop.f32.mrb[0].mxu0
      %v9019 = vpop.f32.mrb[0].mxu0
      %v9020 = vpop.f32.mrb[0].mxu0
      %9021 = vdwg.mxu0
      %v9022 = vpack.c.b16 %v1603, %v1602
      %v9023 = vpack.c.b16 %v1605, %v1604
      %v9024 = vpack.c.b16 %v1607, %v1606
      %v9025 = vpack.c.b16 %v1608, %v1608
      %v9030 = vsel %vm5426, %v6633, 0
      %v9033 = vsel %vm5426, %v6636, 0
      %v9036 = vsel %vm5426, %v6639, 0
      %v9039 = vsel %vm5426, %v6642, 0
      %v9042 = vsel %vm7750, %v9025, 0
      %9044 = vmatprep.subr.bf16.mxu0 0
      %9045 = vmatpush1.bf16.msra.mxu0 %v9022
      %9046 = vmatprep.subr.bf16.mxu0 0
      %9047 = vmatpush1.bf16.msra.mxu0 %v9023
      %9048 = vmatprep.subr.bf16.mxu0 0
      %9049 = vmatpush1.bf16.msra.mxu0 %v9024
      %9050 = vmatprep.subr.bf16.mxu0 0
      %9051 = vmatpush1.bf16.msra.mxu0 %v9042
      %9052 = vmatprep.subr.bf16.mxu0 0
      %9053 = vmatpush1.bf16.msra.mxu0 0
      %9054 = vmatprep.subr.bf16.mxu0 0
      %9055 = vmatpush1.bf16.msra.mxu0 0
      %9056 = vmatprep.subr.bf16.mxu0 0
      %9057 = vmatpush1.bf16.msra.mxu0 0
      %9058 = vmatprep.subr.bf16.mxu0 0
      %9059 = vmatpush1.bf16.msra.mxu0 0
      %9060 = vmatprep.subr.bf16.mxu0 0
      %9061 = vmatpush1.bf16.msra.mxu0 0
      %9062 = vmatprep.subr.bf16.mxu0 0
      %9063 = vmatpush1.bf16.msra.mxu0 0
      %9064 = vmatprep.subr.bf16.mxu0 0
      %9065 = vmatpush1.bf16.msra.mxu0 0
      %9066 = vmatprep.subr.bf16.mxu0 0
      %9067 = vmatpush1.bf16.msra.mxu0 0
      %9068 = vmatprep.subr.bf16.mxu0 0
      %9069 = vmatpush1.bf16.msra.mxu0 0
      %9070 = vmatprep.subr.bf16.mxu0 0
      %9071 = vmatpush1.bf16.msra.mxu0 0
      %9072 = vmatprep.subr.bf16.mxu0 0
      %9073 = vmatpush1.bf16.msra.mxu0 0
      %9074 = vmatprep.subr.bf16.mxu0 0
      %9075 = vmatpush1.bf16.msra.mxu0 0
      %9076 = vmatprep.mubr.bf16.mxu0 0
      %9077 = vmatmul.mubr.bf16.gmra.mrb[0].mxu0 %v9030
      %v9078 = vpop.f32.mrb[0].mxu0
      %v9079 = vadd.f32 0.0, %v9078
      %v9080 = vpop.f32.mrb[0].mxu0
      %v9081 = vpop.f32.mrb[0].mxu0
      %v9082 = vadd.f32 0.0, %v9081
      %v9083 = vpop.f32.mrb[0].mxu0
      %9084 = vmatprep.mubr.bf16.mxu0 0
      %9085 = vmatmul.mubr.bf16.gmra.mrb[0].mxu0 %v9033
      %v9086 = vpop.f32.mrb[0].mxu0
      %v9087 = vadd.f32 0.0, %v9086
      %v9088 = vpop.f32.mrb[0].mxu0
      %v9089 = vpop.f32.mrb[0].mxu0
      %v9090 = vadd.f32 0.0, %v9089
      %v9091 = vpop.f32.mrb[0].mxu0
      %9092 = vmatprep.mubr.bf16.mxu0 0
      %9093 = vmatmul.mubr.bf16.gmra.mrb[0].mxu0 %v9036
      %v9094 = vpop.f32.mrb[0].mxu0
      %v9095 = vadd.f32 0.0, %v9094
      %v9096 = vpop.f32.mrb[0].mxu0
      %v9097 = vpop.f32.mrb[0].mxu0
      %v9098 = vadd.f32 0.0, %v9097
      %v9099 = vpop.f32.mrb[0].mxu0
      %9100 = vmatprep.mubr.bf16.mxu0 0
      %9101 = vmatmul.mubr.bf16.gmra.mrb[0].mxu0 %v9039
      %v9102 = vpop.f32.mrb[0].mxu0
      %v9103 = vadd.f32 0.0, %v9102
      %v9104 = vpop.f32.mrb[0].mxu0
      %v9105 = vpop.f32.mrb[0].mxu0
      %v9106 = vpop.f32.mrb[0].mxu0
      %9107 = vdwg.mxu0
      %v9108 = vpack.c.b16 %v1610, %v1609
      %v9109 = vpack.c.b16 %v1612, %v1611
      %v9110 = vpack.c.b16 %v1614, %v1613
      %v9111 = vpack.c.b16 %v1615, %v1615
      %v9116 = vsel %vm5426, %v6645, 0
      %v9119 = vsel %vm5426, %v6648, 0
      %v9122 = vsel %vm5426, %v6651, 0
      %v9125 = vsel %vm5426, %v6654, 0
      %v9128 = vsel %vm7750, %v9111, 0
      %9130 = vmatprep.subr.bf16.mxu0 0
      %9131 = vmatpush1.bf16.msra.mxu0 %v9108
      %9132 = vmatprep.subr.bf16.mxu0 0
      %9133 = vmatpush1.bf16.msra.mxu0 %v9109
      %9134 = vmatprep.subr.bf16.mxu0 0
      %9135 = vmatpush1.bf16.msra.mxu0 %v9110
      %9136 = vmatprep.subr.bf16.mxu0 0
      %9137 = vmatpush1.bf16.msra.mxu0 %v9128
      %9138 = vmatprep.subr.bf16.mxu0 0
      %9139 = vmatpush1.bf16.msra.mxu0 0
      %9140 = vmatprep.subr.bf16.mxu0 0
      %9141 = vmatpush1.bf16.msra.mxu0 0
      %9142 = vmatprep.subr.bf16.mxu0 0
      %9143 = vmatpush1.bf16.msra.mxu0 0
      %9144 = vmatprep.subr.bf16.mxu0 0
      %9145 = vmatpush1.bf16.msra.mxu0 0
      %9146 = vmatprep.subr.bf16.mxu0 0
      %9147 = vmatpush1.bf16.msra.mxu0 0
      %9148 = vmatprep.subr.bf16.mxu0 0
      %9149 = vmatpush1.bf16.msra.mxu0 0
      %9150 = vmatprep.subr.bf16.mxu0 0
      %9151 = vmatpush1.bf16.msra.mxu0 0
      %9152 = vmatprep.subr.bf16.mxu0 0
      %9153 = vmatpush1.bf16.msra.mxu0 0
      %9154 = vmatprep.subr.bf16.mxu0 0
      %9155 = vmatpush1.bf16.msra.mxu0 0
      %9156 = vmatprep.subr.bf16.mxu0 0
      %9157 = vmatpush1.bf16.msra.mxu0 0
      %9158 = vmatprep.subr.bf16.mxu0 0
      %9159 = vmatpush1.bf16.msra.mxu0 0
      %9160 = vmatprep.subr.bf16.mxu0 0
      %9161 = vmatpush1.bf16.msra.mxu0 0
      %9162 = vmatprep.mubr.bf16.mxu0 0
      %9163 = vmatmul.mubr.bf16.gmra.mrb[0].mxu0 %v9116
      %v9164 = vpop.f32.mrb[0].mxu0
      %v9165 = vadd.f32 0.0, %v9164
      %v9166 = vpop.f32.mrb[0].mxu0
      %v9167 = vpop.f32.mrb[0].mxu0
      %v9168 = vadd.f32 0.0, %v9167
      %v9169 = vpop.f32.mrb[0].mxu0
      %9170 = vmatprep.mubr.bf16.mxu0 0
      %9171 = vmatmul.mubr.bf16.gmra.mrb[0].mxu0 %v9119
      %v9172 = vpop.f32.mrb[0].mxu0
      %v9173 = vadd.f32 0.0, %v9172
      %v9174 = vpop.f32.mrb[0].mxu0
      %v9175 = vpop.f32.mrb[0].mxu0
      %v9176 = vadd.f32 0.0, %v9175
      %v9177 = vpop.f32.mrb[0].mxu0
      %9178 = vmatprep.mubr.bf16.mxu0 0
      %9179 = vmatmul.mubr.bf16.gmra.mrb[0].mxu0 %v9122
      %v9180 = vpop.f32.mrb[0].mxu0
      %v9181 = vadd.f32 0.0, %v9180
      %v9182 = vpop.f32.mrb[0].mxu0
      %v9183 = vpop.f32.mrb[0].mxu0
      %v9184 = vadd.f32 0.0, %v9183
      %v9185 = vpop.f32.mrb[0].mxu0
      %9186 = vmatprep.mubr.bf16.mxu0 0
      %9187 = vmatmul.mubr.bf16.gmra.mrb[0].mxu0 %v9125
      %v9188 = vpop.f32.mrb[0].mxu0
      %v9189 = vadd.f32 0.0, %v9188
      %v9190 = vpop.f32.mrb[0].mxu0
      %v9191 = vpop.f32.mrb[0].mxu0
      %v9192 = vpop.f32.mrb[0].mxu0
      %9193 = vdwg.mxu0
      %v9194 = vpack.c.b16 %v1617, %v1616
      %v9195 = vpack.c.b16 %v1619, %v1618
      %v9196 = vpack.c.b16 %v1621, %v1620
      %v9197 = vpack.c.b16 %v1622, %v1622
      %v9202 = vsel %vm5426, %v6657, 0
      %v9205 = vsel %vm5426, %v6660, 0
      %v9208 = vsel %vm5426, %v6663, 0
      %v9211 = vsel %vm5426, %v6666, 0
      %v9214 = vsel %vm7750, %v9197, 0
      %9216 = vmatprep.subr.bf16.mxu0 0
      %9217 = vmatpush1.bf16.msra.mxu0 %v9194
      %9218 = vmatprep.subr.bf16.mxu0 0
      %9219 = vmatpush1.bf16.msra.mxu0 %v9195
      %9220 = vmatprep.subr.bf16.mxu0 0
      %9221 = vmatpush1.bf16.msra.mxu0 %v9196
      %9222 = vmatprep.subr.bf16.mxu0 0
      %9223 = vmatpush1.bf16.msra.mxu0 %v9214
      %9224 = vmatprep.subr.bf16.mxu0 0
      %9225 = vmatpush1.bf16.msra.mxu0 0
      %9226 = vmatprep.subr.bf16.mxu0 0
      %9227 = vmatpush1.bf16.msra.mxu0 0
      %9228 = vmatprep.subr.bf16.mxu0 0
      %9229 = vmatpush1.bf16.msra.mxu0 0
      %9230 = vmatprep.subr.bf16.mxu0 0
      %9231 = vmatpush1.bf16.msra.mxu0 0
      %9232 = vmatprep.subr.bf16.mxu0 0
      %9233 = vmatpush1.bf16.msra.mxu0 0
      %9234 = vmatprep.subr.bf16.mxu0 0
      %9235 = vmatpush1.bf16.msra.mxu0 0
      %9236 = vmatprep.subr.bf16.mxu0 0
      %9237 = vmatpush1.bf16.msra.mxu0 0
      %9238 = vmatprep.subr.bf16.mxu0 0
      %9239 = vmatpush1.bf16.msra.mxu0 0
      %9240 = vmatprep.subr.bf16.mxu0 0
      %9241 = vmatpush1.bf16.msra.mxu0 0
      %9242 = vmatprep.subr.bf16.mxu0 0
      %9243 = vmatpush1.bf16.msra.mxu0 0
      %9244 = vmatprep.subr.bf16.mxu0 0
      %9245 = vmatpush1.bf16.msra.mxu0 0
      %9246 = vmatprep.subr.bf16.mxu0 0
      %9247 = vmatpush1.bf16.msra.mxu0 0
      %9248 = vmatprep.mubr.bf16.mxu0 0
      %9249 = vmatmul.mubr.bf16.gmra.mrb[0].mxu0 %v9202
      %v9250 = vpop.f32.mrb[0].mxu0
      %v9251 = vadd.f32 0.0, %v9250
      %v9252 = vpop.f32.mrb[0].mxu0
      %v9253 = vpop.f32.mrb[0].mxu0
      %v9254 = vadd.f32 0.0, %v9253
      %v9255 = vpop.f32.mrb[0].mxu0
      %9256 = vmatprep.mubr.bf16.mxu0 0
      %9257 = vmatmul.mubr.bf16.gmra.mrb[0].mxu0 %v9205
      %v9258 = vpop.f32.mrb[0].mxu0
      %v9259 = vadd.f32 0.0, %v9258
      %v9260 = vpop.f32.mrb[0].mxu0
      %v9261 = vpop.f32.mrb[0].mxu0
      %v9262 = vadd.f32 0.0, %v9261
      %v9263 = vpop.f32.mrb[0].mxu0
      %9264 = vmatprep.mubr.bf16.mxu0 0
      %9265 = vmatmul.mubr.bf16.gmra.mrb[0].mxu0 %v9208
      %v9266 = vpop.f32.mrb[0].mxu0
      %v9267 = vadd.f32 0.0, %v9266
      %v9268 = vpop.f32.mrb[0].mxu0
      %v9269 = vpop.f32.mrb[0].mxu0
      %v9270 = vadd.f32 0.0, %v9269
      %v9271 = vpop.f32.mrb[0].mxu0
      %9272 = vmatprep.mubr.bf16.mxu0 0
      %9273 = vmatmul.mubr.bf16.gmra.mrb[0].mxu0 %v9211
      %v9274 = vpop.f32.mrb[0].mxu0
      %v9275 = vadd.f32 0.0, %v9274
      %v9276 = vpop.f32.mrb[0].mxu0
      %v9277 = vpop.f32.mrb[0].mxu0
      %v9278 = vpop.f32.mrb[0].mxu0
      %9279 = vdwg.mxu0
      %v9280 = vpack.c.b16 %v1624, %v1623
      %v9281 = vpack.c.b16 %v1626, %v1625
      %v9282 = vpack.c.b16 %v1628, %v1627
      %v9283 = vpack.c.b16 %v1629, %v1629
      %v9288 = vsel %vm5426, %v6669, 0
      %v9291 = vsel %vm5426, %v6672, 0
      %v9294 = vsel %vm5426, %v6675, 0
      %v9297 = vsel %vm5426, %v6678, 0
      %v9300 = vsel %vm7750, %v9283, 0
      %9302 = vmatprep.subr.bf16.mxu0 0
      %9303 = vmatpush1.bf16.msra.mxu0 %v9280
      %9304 = vmatprep.subr.bf16.mxu0 0
      %9305 = vmatpush1.bf16.msra.mxu0 %v9281
      %9306 = vmatprep.subr.bf16.mxu0 0
      %9307 = vmatpush1.bf16.msra.mxu0 %v9282
      %9308 = vmatprep.subr.bf16.mxu0 0
      %9309 = vmatpush1.bf16.msra.mxu0 %v9300
      %9310 = vmatprep.subr.bf16.mxu0 0
      %9311 = vmatpush1.bf16.msra.mxu0 0
      %9312 = vmatprep.subr.bf16.mxu0 0
      %9313 = vmatpush1.bf16.msra.mxu0 0
      %9314 = vmatprep.subr.bf16.mxu0 0
      %9315 = vmatpush1.bf16.msra.mxu0 0
      %9316 = vmatprep.subr.bf16.mxu0 0
      %9317 = vmatpush1.bf16.msra.mxu0 0
      %9318 = vmatprep.subr.bf16.mxu0 0
      %9319 = vmatpush1.bf16.msra.mxu0 0
      %9320 = vmatprep.subr.bf16.mxu0 0
      %9321 = vmatpush1.bf16.msra.mxu0 0
      %9322 = vmatprep.subr.bf16.mxu0 0
      %9323 = vmatpush1.bf16.msra.mxu0 0
      %9324 = vmatprep.subr.bf16.mxu0 0
      %9325 = vmatpush1.bf16.msra.mxu0 0
      %9326 = vmatprep.subr.bf16.mxu0 0
      %9327 = vmatpush1.bf16.msra.mxu0 0
      %9328 = vmatprep.subr.bf16.mxu0 0
      %9329 = vmatpush1.bf16.msra.mxu0 0
      %9330 = vmatprep.subr.bf16.mxu0 0
      %9331 = vmatpush1.bf16.msra.mxu0 0
      %9332 = vmatprep.subr.bf16.mxu0 0
      %9333 = vmatpush1.bf16.msra.mxu0 0
      %9334 = vmatprep.mubr.bf16.mxu0 0
      %9335 = vmatmul.mubr.bf16.gmra.mrb[0].mxu0 %v9288
      %v9336 = vpop.f32.mrb[0].mxu0
      %v9337 = vadd.f32 0.0, %v9336
      %v9338 = vpop.f32.mrb[0].mxu0
      %v9339 = vpop.f32.mrb[0].mxu0
      %v9340 = vadd.f32 0.0, %v9339
      %v9341 = vpop.f32.mrb[0].mxu0
      %9342 = vmatprep.mubr.bf16.mxu0 0
      %9343 = vmatmul.mubr.bf16.gmra.mrb[0].mxu0 %v9291
      %v9344 = vpop.f32.mrb[0].mxu0
      %v9345 = vadd.f32 0.0, %v9344
      %v9346 = vpop.f32.mrb[0].mxu0
      %v9347 = vpop.f32.mrb[0].mxu0
      %v9348 = vadd.f32 0.0, %v9347
      %v9349 = vpop.f32.mrb[0].mxu0
      %9350 = vmatprep.mubr.bf16.mxu0 0
      %9351 = vmatmul.mubr.bf16.gmra.mrb[0].mxu0 %v9294
      %v9352 = vpop.f32.mrb[0].mxu0
      %v9353 = vadd.f32 0.0, %v9352
      %v9354 = vpop.f32.mrb[0].mxu0
      %v9355 = vpop.f32.mrb[0].mxu0
      %v9356 = vadd.f32 0.0, %v9355
      %v9357 = vpop.f32.mrb[0].mxu0
      %9358 = vmatprep.mubr.bf16.mxu0 0
      %9359 = vmatmul.mubr.bf16.gmra.mrb[0].mxu0 %v9297
      %v9360 = vpop.f32.mrb[0].mxu0
      %v9361 = vadd.f32 0.0, %v9360
      %v9362 = vpop.f32.mrb[0].mxu0
      %v9363 = vpop.f32.mrb[0].mxu0
      %v9364 = vpop.f32.mrb[0].mxu0
      %9365 = vdwg.mxu0
      %v9366 = vpack.c.b16 %v1631, %v1630
      %v9367 = vpack.c.b16 %v1633, %v1632
      %v9368 = vpack.c.b16 %v1635, %v1634
      %v9369 = vpack.c.b16 %v1636, %v1636
      %v9374 = vsel %vm5426, %v6681, 0
      %v9377 = vsel %vm5426, %v6684, 0
      %v9380 = vsel %vm5426, %v6687, 0
      %v9383 = vsel %vm5426, %v6690, 0
      %v9386 = vsel %vm7750, %v9369, 0
      %9388 = vmatprep.subr.bf16.mxu0 0
      %9389 = vmatpush1.bf16.msra.mxu0 %v9366
      %9390 = vmatprep.subr.bf16.mxu0 0
      %9391 = vmatpush1.bf16.msra.mxu0 %v9367
      %9392 = vmatprep.subr.bf16.mxu0 0
      %9393 = vmatpush1.bf16.msra.mxu0 %v9368
      %9394 = vmatprep.subr.bf16.mxu0 0
      %9395 = vmatpush1.bf16.msra.mxu0 %v9386
      %9396 = vmatprep.subr.bf16.mxu0 0
      %9397 = vmatpush1.bf16.msra.mxu0 0
      %9398 = vmatprep.subr.bf16.mxu0 0
      %9399 = vmatpush1.bf16.msra.mxu0 0
      %9400 = vmatprep.subr.bf16.mxu0 0
      %9401 = vmatpush1.bf16.msra.mxu0 0
      %9402 = vmatprep.subr.bf16.mxu0 0
      %9403 = vmatpush1.bf16.msra.mxu0 0
      %9404 = vmatprep.subr.bf16.mxu0 0
      %9405 = vmatpush1.bf16.msra.mxu0 0
      %9406 = vmatprep.subr.bf16.mxu0 0
      %9407 = vmatpush1.bf16.msra.mxu0 0
      %9408 = vmatprep.subr.bf16.mxu0 0
      %9409 = vmatpush1.bf16.msra.mxu0 0
      %9410 = vmatprep.subr.bf16.mxu0 0
      %9411 = vmatpush1.bf16.msra.mxu0 0
      %9412 = vmatprep.subr.bf16.mxu0 0
      %9413 = vmatpush1.bf16.msra.mxu0 0
      %9414 = vmatprep.subr.bf16.mxu0 0
      %9415 = vmatpush1.bf16.msra.mxu0 0
      %9416 = vmatprep.subr.bf16.mxu0 0
      %9417 = vmatpush1.bf16.msra.mxu0 0
      %9418 = vmatprep.subr.bf16.mxu0 0
      %9419 = vmatpush1.bf16.msra.mxu0 0
      %9420 = vmatprep.mubr.bf16.mxu0 0
      %9421 = vmatmul.mubr.bf16.gmra.mrb[0].mxu0 %v9374
      %v9422 = vpop.f32.mrb[0].mxu0
      %v9423 = vadd.f32 0.0, %v9422
      %v9424 = vpop.f32.mrb[0].mxu0
      %v9425 = vpop.f32.mrb[0].mxu0
      %v9426 = vadd.f32 0.0, %v9425
      %v9427 = vpop.f32.mrb[0].mxu0
      %9428 = vmatprep.mubr.bf16.mxu0 0
      %9429 = vmatmul.mubr.bf16.gmra.mrb[0].mxu0 %v9377
      %v9430 = vpop.f32.mrb[0].mxu0
      %v9431 = vadd.f32 0.0, %v9430
      %v9432 = vpop.f32.mrb[0].mxu0
      %v9433 = vpop.f32.mrb[0].mxu0
      %v9434 = vadd.f32 0.0, %v9433
      %v9435 = vpop.f32.mrb[0].mxu0
      %9436 = vmatprep.mubr.bf16.mxu0 0
      %9437 = vmatmul.mubr.bf16.gmra.mrb[0].mxu0 %v9380
      %v9438 = vpop.f32.mrb[0].mxu0
      %v9439 = vadd.f32 0.0, %v9438
      %v9440 = vpop.f32.mrb[0].mxu0
      %v9441 = vpop.f32.mrb[0].mxu0
      %v9442 = vadd.f32 0.0, %v9441
      %v9443 = vpop.f32.mrb[0].mxu0
      %9444 = vmatprep.mubr.bf16.mxu0 0
      %9445 = vmatmul.mubr.bf16.gmra.mrb[0].mxu0 %v9383
      %v9446 = vpop.f32.mrb[0].mxu0
      %v9447 = vadd.f32 0.0, %v9446
      %v9448 = vpop.f32.mrb[0].mxu0
      %v9449 = vpop.f32.mrb[0].mxu0
      %v9450 = vpop.f32.mrb[0].mxu0
      %9451 = vdwg.mxu0
      %v9452 = vpack.c.b16 %v1638, %v1637
      %v9453 = vpack.c.b16 %v1640, %v1639
      %v9454 = vpack.c.b16 %v1642, %v1641
      %v9455 = vpack.c.b16 %v1643, %v1643
      %v9460 = vsel %vm5426, %v6693, 0
      %v9463 = vsel %vm5426, %v6696, 0
      %v9466 = vsel %vm5426, %v6699, 0
      %v9469 = vsel %vm5426, %v6702, 0
      %v9472 = vsel %vm7750, %v9455, 0
      %9474 = vmatprep.subr.bf16.mxu0 0
      %9475 = vmatpush1.bf16.msra.mxu0 %v9452
      %9476 = vmatprep.subr.bf16.mxu0 0
      %9477 = vmatpush1.bf16.msra.mxu0 %v9453
      %9478 = vmatprep.subr.bf16.mxu0 0
      %9479 = vmatpush1.bf16.msra.mxu0 %v9454
      %9480 = vmatprep.subr.bf16.mxu0 0
      %9481 = vmatpush1.bf16.msra.mxu0 %v9472
      %9482 = vmatprep.subr.bf16.mxu0 0
      %9483 = vmatpush1.bf16.msra.mxu0 0
      %9484 = vmatprep.subr.bf16.mxu0 0
      %9485 = vmatpush1.bf16.msra.mxu0 0
      %9486 = vmatprep.subr.bf16.mxu0 0
      %9487 = vmatpush1.bf16.msra.mxu0 0
      %9488 = vmatprep.subr.bf16.mxu0 0
      %9489 = vmatpush1.bf16.msra.mxu0 0
      %9490 = vmatprep.subr.bf16.mxu0 0
      %9491 = vmatpush1.bf16.msra.mxu0 0
      %9492 = vmatprep.subr.bf16.mxu0 0
      %9493 = vmatpush1.bf16.msra.mxu0 0
      %9494 = vmatprep.subr.bf16.mxu0 0
      %9495 = vmatpush1.bf16.msra.mxu0 0
      %9496 = vmatprep.subr.bf16.mxu0 0
      %9497 = vmatpush1.bf16.msra.mxu0 0
      %9498 = vmatprep.subr.bf16.mxu0 0
      %9499 = vmatpush1.bf16.msra.mxu0 0
      %9500 = vmatprep.subr.bf16.mxu0 0
      %9501 = vmatpush1.bf16.msra.mxu0 0
      %9502 = vmatprep.subr.bf16.mxu0 0
      %9503 = vmatpush1.bf16.msra.mxu0 0
      %9504 = vmatprep.subr.bf16.mxu0 0
      %9505 = vmatpush1.bf16.msra.mxu0 0
      %9506 = vmatprep.mubr.bf16.mxu0 0
      %9507 = vmatmul.mubr.bf16.gmra.mrb[0].mxu0 %v9460
      %v9508 = vpop.f32.mrb[0].mxu0
      %v9509 = vadd.f32 0.0, %v9508
      %v9510 = vpop.f32.mrb[0].mxu0
      %v9511 = vpop.f32.mrb[0].mxu0
      %v9512 = vadd.f32 0.0, %v9511
      %v9513 = vpop.f32.mrb[0].mxu0
      %9514 = vmatprep.mubr.bf16.mxu0 0
      %9515 = vmatmul.mubr.bf16.gmra.mrb[0].mxu0 %v9463
      %v9516 = vpop.f32.mrb[0].mxu0
      %v9517 = vadd.f32 0.0, %v9516
      %v9518 = vpop.f32.mrb[0].mxu0
      %v9519 = vpop.f32.mrb[0].mxu0
      %v9520 = vadd.f32 0.0, %v9519
      %v9521 = vpop.f32.mrb[0].mxu0
      %9522 = vmatprep.mubr.bf16.mxu0 0
      %9523 = vmatmul.mubr.bf16.gmra.mrb[0].mxu0 %v9466
      %v9524 = vpop.f32.mrb[0].mxu0
      %v9525 = vadd.f32 0.0, %v9524
      %v9526 = vpop.f32.mrb[0].mxu0
      %v9527 = vpop.f32.mrb[0].mxu0
      %v9528 = vadd.f32 0.0, %v9527
      %v9529 = vpop.f32.mrb[0].mxu0
      %9530 = vmatprep.mubr.bf16.mxu0 0
      %9531 = vmatmul.mubr.bf16.gmra.mrb[0].mxu0 %v9469
      %v9532 = vpop.f32.mrb[0].mxu0
      %v9533 = vadd.f32 0.0, %v9532
      %v9534 = vpop.f32.mrb[0].mxu0
      %v9535 = vpop.f32.mrb[0].mxu0
      %v9536 = vpop.f32.mrb[0].mxu0
      %9537 = vdwg.mxu0
      %v9538 = vpack.c.b16 %v1645, %v1644
      %v9539 = vpack.c.b16 %v1647, %v1646
      %v9540 = vpack.c.b16 %v1649, %v1648
      %v9541 = vpack.c.b16 %v1650, %v1650
      %v9546 = vsel %vm5426, %v6705, 0
      %v9549 = vsel %vm5426, %v6708, 0
      %v9552 = vsel %vm5426, %v6711, 0
      %v9555 = vsel %vm5426, %v6714, 0
      %v9558 = vsel %vm7750, %v9541, 0
      %9560 = vmatprep.subr.bf16.mxu0 0
      %9561 = vmatpush1.bf16.msra.mxu0 %v9538
      %9562 = vmatprep.subr.bf16.mxu0 0
      %9563 = vmatpush1.bf16.msra.mxu0 %v9539
      %9564 = vmatprep.subr.bf16.mxu0 0
      %9565 = vmatpush1.bf16.msra.mxu0 %v9540
      %9566 = vmatprep.subr.bf16.mxu0 0
      %9567 = vmatpush1.bf16.msra.mxu0 %v9558
      %9568 = vmatprep.subr.bf16.mxu0 0
      %9569 = vmatpush1.bf16.msra.mxu0 0
      %9570 = vmatprep.subr.bf16.mxu0 0
      %9571 = vmatpush1.bf16.msra.mxu0 0
      %9572 = vmatprep.subr.bf16.mxu0 0
      %9573 = vmatpush1.bf16.msra.mxu0 0
      %9574 = vmatprep.subr.bf16.mxu0 0
      %9575 = vmatpush1.bf16.msra.mxu0 0
      %9576 = vmatprep.subr.bf16.mxu0 0
      %9577 = vmatpush1.bf16.msra.mxu0 0
      %9578 = vmatprep.subr.bf16.mxu0 0
      %9579 = vmatpush1.bf16.msra.mxu0 0
      %9580 = vmatprep.subr.bf16.mxu0 0
      %9581 = vmatpush1.bf16.msra.mxu0 0
      %9582 = vmatprep.subr.bf16.mxu0 0
      %9583 = vmatpush1.bf16.msra.mxu0 0
      %9584 = vmatprep.subr.bf16.mxu0 0
      %9585 = vmatpush1.bf16.msra.mxu0 0
      %9586 = vmatprep.subr.bf16.mxu0 0
      %9587 = vmatpush1.bf16.msra.mxu0 0
      %9588 = vmatprep.subr.bf16.mxu0 0
      %9589 = vmatpush1.bf16.msra.mxu0 0
      %9590 = vmatprep.subr.bf16.mxu0 0
      %9591 = vmatpush1.bf16.msra.mxu0 0
      %9592 = vmatprep.mubr.bf16.mxu0 0
      %9593 = vmatmul.mubr.bf16.gmra.mrb[0].mxu0 %v9546
      %v9594 = vpop.f32.mrb[0].mxu0
      %v9595 = vadd.f32 0.0, %v9594
      %v9596 = vpop.f32.mrb[0].mxu0
      %v9597 = vpop.f32.mrb[0].mxu0
      %v9598 = vadd.f32 0.0, %v9597
      %v9599 = vpop.f32.mrb[0].mxu0
      %9600 = vmatprep.mubr.bf16.mxu0 0
      %9601 = vmatmul.mubr.bf16.gmra.mrb[0].mxu0 %v9549
      %v9602 = vpop.f32.mrb[0].mxu0
      %v9603 = vadd.f32 0.0, %v9602
      %v9604 = vpop.f32.mrb[0].mxu0
      %v9605 = vpop.f32.mrb[0].mxu0
      %v9606 = vadd.f32 0.0, %v9605
      %v9607 = vpop.f32.mrb[0].mxu0
      %9608 = vmatprep.mubr.bf16.mxu0 0
      %9609 = vmatmul.mubr.bf16.gmra.mrb[0].mxu0 %v9552
      %v9610 = vpop.f32.mrb[0].mxu0
      %v9611 = vadd.f32 0.0, %v9610
      %v9612 = vpop.f32.mrb[0].mxu0
      %v9613 = vpop.f32.mrb[0].mxu0
      %v9614 = vadd.f32 0.0, %v9613
      %v9615 = vpop.f32.mrb[0].mxu0
      %9616 = vmatprep.mubr.bf16.mxu0 0
      %9617 = vmatmul.mubr.bf16.gmra.mrb[0].mxu0 %v9555
      %v9618 = vpop.f32.mrb[0].mxu0
      %v9619 = vadd.f32 0.0, %v9618
      %v9620 = vpop.f32.mrb[0].mxu0
      %v9621 = vpop.f32.mrb[0].mxu0
      %v9622 = vpop.f32.mrb[0].mxu0
      %9623 = vdwg.mxu0
      %v9624 = vpack.c.b16 %v1652, %v1651
      %v9625 = vpack.c.b16 %v1654, %v1653
      %v9626 = vpack.c.b16 %v1656, %v1655
      %v9627 = vpack.c.b16 %v1657, %v1657
      %v9632 = vsel %vm5426, %v6717, 0
      %v9635 = vsel %vm5426, %v6720, 0
      %v9638 = vsel %vm5426, %v6723, 0
      %v9641 = vsel %vm5426, %v6726, 0
      %v9644 = vsel %vm7750, %v9627, 0
      %9646 = vmatprep.subr.bf16.mxu0 0
      %9647 = vmatpush1.bf16.msra.mxu0 %v9624
      %9648 = vmatprep.subr.bf16.mxu0 0
      %9649 = vmatpush1.bf16.msra.mxu0 %v9625
      %9650 = vmatprep.subr.bf16.mxu0 0
      %9651 = vmatpush1.bf16.msra.mxu0 %v9626
      %9652 = vmatprep.subr.bf16.mxu0 0
      %9653 = vmatpush1.bf16.msra.mxu0 %v9644
      %9654 = vmatprep.subr.bf16.mxu0 0
      %9655 = vmatpush1.bf16.msra.mxu0 0
      %9656 = vmatprep.subr.bf16.mxu0 0
      %9657 = vmatpush1.bf16.msra.mxu0 0
      %9658 = vmatprep.subr.bf16.mxu0 0
      %9659 = vmatpush1.bf16.msra.mxu0 0
      %9660 = vmatprep.subr.bf16.mxu0 0
      %9661 = vmatpush1.bf16.msra.mxu0 0
      %9662 = vmatprep.subr.bf16.mxu0 0
      %9663 = vmatpush1.bf16.msra.mxu0 0
      %9664 = vmatprep.subr.bf16.mxu0 0
      %9665 = vmatpush1.bf16.msra.mxu0 0
      %9666 = vmatprep.subr.bf16.mxu0 0
      %9667 = vmatpush1.bf16.msra.mxu0 0
      %9668 = vmatprep.subr.bf16.mxu0 0
      %9669 = vmatpush1.bf16.msra.mxu0 0
      %9670 = vmatprep.subr.bf16.mxu0 0
      %9671 = vmatpush1.bf16.msra.mxu0 0
      %9672 = vmatprep.subr.bf16.mxu0 0
      %9673 = vmatpush1.bf16.msra.mxu0 0
      %9674 = vmatprep.subr.bf16.mxu0 0
      %9675 = vmatpush1.bf16.msra.mxu0 0
      %9676 = vmatprep.subr.bf16.mxu0 0
      %9677 = vmatpush1.bf16.msra.mxu0 0
      %9678 = vmatprep.mubr.bf16.mxu0 0
      %9679 = vmatmul.mubr.bf16.gmra.mrb[0].mxu0 %v9632
      %v9680 = vpop.f32.mrb[0].mxu0
      %v9681 = vadd.f32 0.0, %v9680
      %v9682 = vpop.f32.mrb[0].mxu0
      %v9683 = vpop.f32.mrb[0].mxu0
      %v9684 = vadd.f32 0.0, %v9683
      %v9685 = vpop.f32.mrb[0].mxu0
      %9686 = vmatprep.mubr.bf16.mxu0 0
      %9687 = vmatmul.mubr.bf16.gmra.mrb[0].mxu0 %v9635
      %v9688 = vpop.f32.mrb[0].mxu0
      %v9689 = vadd.f32 0.0, %v9688
      %v9690 = vpop.f32.mrb[0].mxu0
      %v9691 = vpop.f32.mrb[0].mxu0
      %v9692 = vadd.f32 0.0, %v9691
      %v9693 = vpop.f32.mrb[0].mxu0
      %9694 = vmatprep.mubr.bf16.mxu0 0
      %9695 = vmatmul.mubr.bf16.gmra.mrb[0].mxu0 %v9638
      %v9696 = vpop.f32.mrb[0].mxu0
      %v9697 = vadd.f32 0.0, %v9696
      %v9698 = vpop.f32.mrb[0].mxu0
      %v9699 = vpop.f32.mrb[0].mxu0
      %v9700 = vadd.f32 0.0, %v9699
      %v9701 = vpop.f32.mrb[0].mxu0
      %9702 = vmatprep.mubr.bf16.mxu0 0
      %9703 = vmatmul.mubr.bf16.gmra.mrb[0].mxu0 %v9641
      %v9704 = vpop.f32.mrb[0].mxu0
      %v9705 = vadd.f32 0.0, %v9704
      %v9706 = vpop.f32.mrb[0].mxu0
      %v9707 = vpop.f32.mrb[0].mxu0
      %v9708 = vpop.f32.mrb[0].mxu0
      %9709 = vdwg.mxu0
      %v9710 = vpack.c.b16 %v1659, %v1658
      %v9711 = vpack.c.b16 %v1661, %v1660
      %v9712 = vpack.c.b16 %v1663, %v1662
      %v9713 = vpack.c.b16 %v1664, %v1664
      %v9718 = vsel %vm5426, %v6729, 0
      %v9721 = vsel %vm5426, %v6732, 0
      %v9724 = vsel %vm5426, %v6735, 0
      %v9727 = vsel %vm5426, %v6738, 0
      %v9730 = vsel %vm7750, %v9713, 0
      %9732 = vmatprep.subr.bf16.mxu0 0
      %9733 = vmatpush1.bf16.msra.mxu0 %v9710
      %9734 = vmatprep.subr.bf16.mxu0 0
      %9735 = vmatpush1.bf16.msra.mxu0 %v9711
      %9736 = vmatprep.subr.bf16.mxu0 0
      %9737 = vmatpush1.bf16.msra.mxu0 %v9712
      %9738 = vmatprep.subr.bf16.mxu0 0
      %9739 = vmatpush1.bf16.msra.mxu0 %v9730
      %9740 = vmatprep.subr.bf16.mxu0 0
      %9741 = vmatpush1.bf16.msra.mxu0 0
      %9742 = vmatprep.subr.bf16.mxu0 0
      %9743 = vmatpush1.bf16.msra.mxu0 0
      %9744 = vmatprep.subr.bf16.mxu0 0
      %9745 = vmatpush1.bf16.msra.mxu0 0
      %9746 = vmatprep.subr.bf16.mxu0 0
      %9747 = vmatpush1.bf16.msra.mxu0 0
      %9748 = vmatprep.subr.bf16.mxu0 0
      %9749 = vmatpush1.bf16.msra.mxu0 0
      %9750 = vmatprep.subr.bf16.mxu0 0
      %9751 = vmatpush1.bf16.msra.mxu0 0
      %9752 = vmatprep.subr.bf16.mxu0 0
      %9753 = vmatpush1.bf16.msra.mxu0 0
      %9754 = vmatprep.subr.bf16.mxu0 0
      %9755 = vmatpush1.bf16.msra.mxu0 0
      %9756 = vmatprep.subr.bf16.mxu0 0
      %9757 = vmatpush1.bf16.msra.mxu0 0
      %9758 = vmatprep.subr.bf16.mxu0 0
      %9759 = vmatpush1.bf16.msra.mxu0 0
      %9760 = vmatprep.subr.bf16.mxu0 0
      %9761 = vmatpush1.bf16.msra.mxu0 0
      %9762 = vmatprep.subr.bf16.mxu0 0
      %9763 = vmatpush1.bf16.msra.mxu0 0
      %9764 = vmatprep.mubr.bf16.mxu0 0
      %9765 = vmatmul.mubr.bf16.gmra.mrb[0].mxu0 %v9718
      %v9766 = vpop.f32.mrb[0].mxu0
      %v9767 = vadd.f32 0.0, %v9766
      %v9768 = vpop.f32.mrb[0].mxu0
      %v9769 = vpop.f32.mrb[0].mxu0
      %v9770 = vadd.f32 0.0, %v9769
      %v9771 = vpop.f32.mrb[0].mxu0
      %9772 = vmatprep.mubr.bf16.mxu0 0
      %9773 = vmatmul.mubr.bf16.gmra.mrb[0].mxu0 %v9721
      %v9774 = vpop.f32.mrb[0].mxu0
      %v9775 = vadd.f32 0.0, %v9774
      %v9776 = vpop.f32.mrb[0].mxu0
      %v9777 = vpop.f32.mrb[0].mxu0
      %v9778 = vadd.f32 0.0, %v9777
      %v9779 = vpop.f32.mrb[0].mxu0
      %9780 = vmatprep.mubr.bf16.mxu0 0
      %9781 = vmatmul.mubr.bf16.gmra.mrb[0].mxu0 %v9724
      %v9782 = vpop.f32.mrb[0].mxu0
      %v9783 = vadd.f32 0.0, %v9782
      %v9784 = vpop.f32.mrb[0].mxu0
      %v9785 = vpop.f32.mrb[0].mxu0
      %v9786 = vadd.f32 0.0, %v9785
      %v9787 = vpop.f32.mrb[0].mxu0
      %9788 = vmatprep.mubr.bf16.mxu0 0
      %9789 = vmatmul.mubr.bf16.gmra.mrb[0].mxu0 %v9727
      %v9790 = vpop.f32.mrb[0].mxu0
      %v9791 = vadd.f32 0.0, %v9790
      %v9792 = vpop.f32.mrb[0].mxu0
      %v9793 = vpop.f32.mrb[0].mxu0
      %v9794 = vpop.f32.mrb[0].mxu0
      %9795 = vdwg.mxu0
      %v9796 = vpack.c.b16 %v1666, %v1665
      %v9797 = vpack.c.b16 %v1668, %v1667
      %v9798 = vpack.c.b16 %v1670, %v1669
      %v9799 = vpack.c.b16 %v1671, %v1671
      %v9804 = vsel %vm5426, %v6741, 0
      %v9807 = vsel %vm5426, %v6744, 0
      %v9810 = vsel %vm5426, %v6747, 0
      %v9813 = vsel %vm5426, %v6750, 0
      %v9816 = vsel %vm7750, %v9799, 0
      %9818 = vmatprep.subr.bf16.mxu0 0
      %9819 = vmatpush1.bf16.msra.mxu0 %v9796
      %9820 = vmatprep.subr.bf16.mxu0 0
      %9821 = vmatpush1.bf16.msra.mxu0 %v9797
      %9822 = vmatprep.subr.bf16.mxu0 0
      %9823 = vmatpush1.bf16.msra.mxu0 %v9798
      %9824 = vmatprep.subr.bf16.mxu0 0
      %9825 = vmatpush1.bf16.msra.mxu0 %v9816
      %9826 = vmatprep.subr.bf16.mxu0 0
      %9827 = vmatpush1.bf16.msra.mxu0 0
      %9828 = vmatprep.subr.bf16.mxu0 0
      %9829 = vmatpush1.bf16.msra.mxu0 0
      %9830 = vmatprep.subr.bf16.mxu0 0
      %9831 = vmatpush1.bf16.msra.mxu0 0
      %9832 = vmatprep.subr.bf16.mxu0 0
      %9833 = vmatpush1.bf16.msra.mxu0 0
      %9834 = vmatprep.subr.bf16.mxu0 0
      %9835 = vmatpush1.bf16.msra.mxu0 0
      %9836 = vmatprep.subr.bf16.mxu0 0
      %9837 = vmatpush1.bf16.msra.mxu0 0
      %9838 = vmatprep.subr.bf16.mxu0 0
      %9839 = vmatpush1.bf16.msra.mxu0 0
      %9840 = vmatprep.subr.bf16.mxu0 0
      %9841 = vmatpush1.bf16.msra.mxu0 0
      %9842 = vmatprep.subr.bf16.mxu0 0
      %9843 = vmatpush1.bf16.msra.mxu0 0
      %9844 = vmatprep.subr.bf16.mxu0 0
      %9845 = vmatpush1.bf16.msra.mxu0 0
      %9846 = vmatprep.subr.bf16.mxu0 0
      %9847 = vmatpush1.bf16.msra.mxu0 0
      %9848 = vmatprep.subr.bf16.mxu0 0
      %9849 = vmatpush1.bf16.msra.mxu0 0
      %9850 = vmatprep.mubr.bf16.mxu0 0
      %9851 = vmatmul.mubr.bf16.gmra.mrb[0].mxu0 %v9804
      %v9852 = vpop.f32.mrb[0].mxu0
      %v9853 = vadd.f32 0.0, %v9852
      %v9854 = vpop.f32.mrb[0].mxu0
      %v9855 = vpop.f32.mrb[0].mxu0
      %v9856 = vadd.f32 0.0, %v9855
      %v9857 = vpop.f32.mrb[0].mxu0
      %9858 = vmatprep.mubr.bf16.mxu0 0
      %9859 = vmatmul.mubr.bf16.gmra.mrb[0].mxu0 %v9807
      %v9860 = vpop.f32.mrb[0].mxu0
      %v9861 = vadd.f32 0.0, %v9860
      %v9862 = vpop.f32.mrb[0].mxu0
      %v9863 = vpop.f32.mrb[0].mxu0
      %v9864 = vadd.f32 0.0, %v9863
      %v9865 = vpop.f32.mrb[0].mxu0
      %9866 = vmatprep.mubr.bf16.mxu0 0
      %9867 = vmatmul.mubr.bf16.gmra.mrb[0].mxu0 %v9810
      %v9868 = vpop.f32.mrb[0].mxu0
      %v9869 = vadd.f32 0.0, %v9868
      %v9870 = vpop.f32.mrb[0].mxu0
      %v9871 = vpop.f32.mrb[0].mxu0
      %v9872 = vadd.f32 0.0, %v9871
      %v9873 = vpop.f32.mrb[0].mxu0
      %9874 = vmatprep.mubr.bf16.mxu0 0
      %9875 = vmatmul.mubr.bf16.gmra.mrb[0].mxu0 %v9813
      %v9876 = vpop.f32.mrb[0].mxu0
      %v9877 = vadd.f32 0.0, %v9876
      %v9878 = vpop.f32.mrb[0].mxu0
      %v9879 = vpop.f32.mrb[0].mxu0
      %v9880 = vpop.f32.mrb[0].mxu0
      %9881 = vdwg.mxu0
      %v9882 = vpack.c.b16 %v1673, %v1672
      %v9883 = vpack.c.b16 %v1675, %v1674
      %v9884 = vpack.c.b16 %v1677, %v1676
      %v9885 = vpack.c.b16 %v1678, %v1678
      %v9890 = vsel %vm5426, %v6753, 0
      %v9893 = vsel %vm5426, %v6756, 0
      %v9896 = vsel %vm5426, %v6759, 0
      %v9899 = vsel %vm5426, %v6762, 0
      %v9902 = vsel %vm7750, %v9885, 0
      %9904 = vmatprep.subr.bf16.mxu0 0
      %9905 = vmatpush1.bf16.msra.mxu0 %v9882
      %9906 = vmatprep.subr.bf16.mxu0 0
      %9907 = vmatpush1.bf16.msra.mxu0 %v9883
      %9908 = vmatprep.subr.bf16.mxu0 0
      %9909 = vmatpush1.bf16.msra.mxu0 %v9884
      %9910 = vmatprep.subr.bf16.mxu0 0
      %9911 = vmatpush1.bf16.msra.mxu0 %v9902
      %9912 = vmatprep.subr.bf16.mxu0 0
      %9913 = vmatpush1.bf16.msra.mxu0 0
      %9914 = vmatprep.subr.bf16.mxu0 0
      %9915 = vmatpush1.bf16.msra.mxu0 0
      %9916 = vmatprep.subr.bf16.mxu0 0
      %9917 = vmatpush1.bf16.msra.mxu0 0
      %9918 = vmatprep.subr.bf16.mxu0 0
      %9919 = vmatpush1.bf16.msra.mxu0 0
      %9920 = vmatprep.subr.bf16.mxu0 0
      %9921 = vmatpush1.bf16.msra.mxu0 0
      %9922 = vmatprep.subr.bf16.mxu0 0
      %9923 = vmatpush1.bf16.msra.mxu0 0
      %9924 = vmatprep.subr.bf16.mxu0 0
      %9925 = vmatpush1.bf16.msra.mxu0 0
      %9926 = vmatprep.subr.bf16.mxu0 0
      %9927 = vmatpush1.bf16.msra.mxu0 0
      %9928 = vmatprep.subr.bf16.mxu0 0
      %9929 = vmatpush1.bf16.msra.mxu0 0
      %9930 = vmatprep.subr.bf16.mxu0 0
      %9931 = vmatpush1.bf16.msra.mxu0 0
      %9932 = vmatprep.subr.bf16.mxu0 0
      %9933 = vmatpush1.bf16.msra.mxu0 0
      %9934 = vmatprep.subr.bf16.mxu0 0
      %9935 = vmatpush1.bf16.msra.mxu0 0
      %9936 = vmatprep.mubr.bf16.mxu0 0
      %9937 = vmatmul.mubr.bf16.gmra.mrb[0].mxu0 %v9890
      %v9938 = vpop.f32.mrb[0].mxu0
      %v9939 = vadd.f32 0.0, %v9938
      %v9940 = vpop.f32.mrb[0].mxu0
      %v9941 = vpop.f32.mrb[0].mxu0
      %v9942 = vadd.f32 0.0, %v9941
      %v9943 = vpop.f32.mrb[0].mxu0
      %9944 = vmatprep.mubr.bf16.mxu0 0
      %9945 = vmatmul.mubr.bf16.gmra.mrb[0].mxu0 %v9893
      %v9946 = vpop.f32.mrb[0].mxu0
      %v9947 = vadd.f32 0.0, %v9946
      %v9948 = vpop.f32.mrb[0].mxu0
      %v9949 = vpop.f32.mrb[0].mxu0
      %v9950 = vadd.f32 0.0, %v9949
      %v9951 = vpop.f32.mrb[0].mxu0
      %9952 = vmatprep.mubr.bf16.mxu0 0
      %9953 = vmatmul.mubr.bf16.gmra.mrb[0].mxu0 %v9896
      %v9954 = vpop.f32.mrb[0].mxu0
      %v9955 = vadd.f32 0.0, %v9954
      %v9956 = vpop.f32.mrb[0].mxu0
      %v9957 = vpop.f32.mrb[0].mxu0
      %v9958 = vadd.f32 0.0, %v9957
      %v9959 = vpop.f32.mrb[0].mxu0
      %9960 = vmatprep.mubr.bf16.mxu0 0
      %9961 = vmatmul.mubr.bf16.gmra.mrb[0].mxu0 %v9899
      %v9962 = vpop.f32.mrb[0].mxu0
      %v9963 = vadd.f32 0.0, %v9962
      %v9964 = vpop.f32.mrb[0].mxu0
      %v9965 = vpop.f32.mrb[0].mxu0
      %v9966 = vpop.f32.mrb[0].mxu0
      %9967 = vdwg.mxu0
      %v9968 = vpack.c.b16 %v1680, %v1679
      %v9969 = vpack.c.b16 %v1682, %v1681
      %v9970 = vpack.c.b16 %v1684, %v1683
      %v9971 = vpack.c.b16 %v1685, %v1685
      %v9976 = vsel %vm5426, %v6765, 0
      %v9979 = vsel %vm5426, %v6768, 0
      %v9982 = vsel %vm5426, %v6771, 0
      %v9985 = vsel %vm5426, %v6774, 0
      %v9988 = vsel %vm7750, %v9971, 0
      %9990 = vmatprep.subr.bf16.mxu0 0
      %9991 = vmatpush1.bf16.msra.mxu0 %v9968
      %9992 = vmatprep.subr.bf16.mxu0 0
      %9993 = vmatpush1.bf16.msra.mxu0 %v9969
      %9994 = vmatprep.subr.bf16.mxu0 0
      %9995 = vmatpush1.bf16.msra.mxu0 %v9970
      %9996 = vmatprep.subr.bf16.mxu0 0
      %9997 = vmatpush1.bf16.msra.mxu0 %v9988
      %9998 = vmatprep.subr.bf16.mxu0 0
      %9999 = vmatpush1.bf16.msra.mxu0 0
      %10000 = vmatprep.subr.bf16.mxu0 0
      %10001 = vmatpush1.bf16.msra.mxu0 0
      %10002 = vmatprep.subr.bf16.mxu0 0
      %10003 = vmatpush1.bf16.msra.mxu0 0
      %10004 = vmatprep.subr.bf16.mxu0 0
      %10005 = vmatpush1.bf16.msra.mxu0 0
      %10006 = vmatprep.subr.bf16.mxu0 0
      %10007 = vmatpush1.bf16.msra.mxu0 0
      %10008 = vmatprep.subr.bf16.mxu0 0
      %10009 = vmatpush1.bf16.msra.mxu0 0
      %10010 = vmatprep.subr.bf16.mxu0 0
      %10011 = vmatpush1.bf16.msra.mxu0 0
      %10012 = vmatprep.subr.bf16.mxu0 0
      %10013 = vmatpush1.bf16.msra.mxu0 0
      %10014 = vmatprep.subr.bf16.mxu0 0
      %10015 = vmatpush1.bf16.msra.mxu0 0
      %10016 = vmatprep.subr.bf16.mxu0 0
      %10017 = vmatpush1.bf16.msra.mxu0 0
      %10018 = vmatprep.subr.bf16.mxu0 0
      %10019 = vmatpush1.bf16.msra.mxu0 0
      %10020 = vmatprep.subr.bf16.mxu0 0
      %10021 = vmatpush1.bf16.msra.mxu0 0
      %10022 = vmatprep.mubr.bf16.mxu0 0
      %10023 = vmatmul.mubr.bf16.gmra.mrb[0].mxu0 %v9976
      %v10024 = vpop.f32.mrb[0].mxu0
      %v10025 = vadd.f32 0.0, %v10024
      %v10026 = vpop.f32.mrb[0].mxu0
      %v10027 = vpop.f32.mrb[0].mxu0
      %v10028 = vadd.f32 0.0, %v10027
      %v10029 = vpop.f32.mrb[0].mxu0
      %10030 = vmatprep.mubr.bf16.mxu0 0
      %10031 = vmatmul.mubr.bf16.gmra.mrb[0].mxu0 %v9979
      %v10032 = vpop.f32.mrb[0].mxu0
      %v10033 = vadd.f32 0.0, %v10032
      %v10034 = vpop.f32.mrb[0].mxu0
      %v10035 = vpop.f32.mrb[0].mxu0
      %v10036 = vadd.f32 0.0, %v10035
      %v10037 = vpop.f32.mrb[0].mxu0
      %10038 = vmatprep.mubr.bf16.mxu0 0
      %10039 = vmatmul.mubr.bf16.gmra.mrb[0].mxu0 %v9982
      %v10040 = vpop.f32.mrb[0].mxu0
      %v10041 = vadd.f32 0.0, %v10040
      %v10042 = vpop.f32.mrb[0].mxu0
      %v10043 = vpop.f32.mrb[0].mxu0
      %v10044 = vadd.f32 0.0, %v10043
      %v10045 = vpop.f32.mrb[0].mxu0
      %10046 = vmatprep.mubr.bf16.mxu0 0
      %10047 = vmatmul.mubr.bf16.gmra.mrb[0].mxu0 %v9985
      %v10048 = vpop.f32.mrb[0].mxu0
      %v10049 = vadd.f32 0.0, %v10048
      %v10050 = vpop.f32.mrb[0].mxu0
      %v10051 = vpop.f32.mrb[0].mxu0
      %v10052 = vpop.f32.mrb[0].mxu0
      %10053 = vdwg.mxu0
      %v10054 = vpack.c.b16 %v1687, %v1686
      %v10055 = vpack.c.b16 %v1689, %v1688
      %v10056 = vpack.c.b16 %v1691, %v1690
      %v10057 = vpack.c.b16 %v1692, %v1692
      %v10062 = vsel %vm5426, %v6777, 0
      %v10065 = vsel %vm5426, %v6780, 0
      %v10068 = vsel %vm5426, %v6783, 0
      %v10071 = vsel %vm5426, %v6786, 0
      %v10074 = vsel %vm7750, %v10057, 0
      %10076 = vmatprep.subr.bf16.mxu0 0
      %10077 = vmatpush1.bf16.msra.mxu0 %v10054
      %10078 = vmatprep.subr.bf16.mxu0 0
      %10079 = vmatpush1.bf16.msra.mxu0 %v10055
      %10080 = vmatprep.subr.bf16.mxu0 0
      %10081 = vmatpush1.bf16.msra.mxu0 %v10056
      %10082 = vmatprep.subr.bf16.mxu0 0
      %10083 = vmatpush1.bf16.msra.mxu0 %v10074
      %10084 = vmatprep.subr.bf16.mxu0 0
      %10085 = vmatpush1.bf16.msra.mxu0 0
      %10086 = vmatprep.subr.bf16.mxu0 0
      %10087 = vmatpush1.bf16.msra.mxu0 0
      %10088 = vmatprep.subr.bf16.mxu0 0
      %10089 = vmatpush1.bf16.msra.mxu0 0
      %10090 = vmatprep.subr.bf16.mxu0 0
      %10091 = vmatpush1.bf16.msra.mxu0 0
      %10092 = vmatprep.subr.bf16.mxu0 0
      %10093 = vmatpush1.bf16.msra.mxu0 0
      %10094 = vmatprep.subr.bf16.mxu0 0
      %10095 = vmatpush1.bf16.msra.mxu0 0
      %10096 = vmatprep.subr.bf16.mxu0 0
      %10097 = vmatpush1.bf16.msra.mxu0 0
      %10098 = vmatprep.subr.bf16.mxu0 0
      %10099 = vmatpush1.bf16.msra.mxu0 0
      %10100 = vmatprep.subr.bf16.mxu0 0
      %10101 = vmatpush1.bf16.msra.mxu0 0
      %10102 = vmatprep.subr.bf16.mxu0 0
      %10103 = vmatpush1.bf16.msra.mxu0 0
      %10104 = vmatprep.subr.bf16.mxu0 0
      %10105 = vmatpush1.bf16.msra.mxu0 0
      %10106 = vmatprep.subr.bf16.mxu0 0
      %10107 = vmatpush1.bf16.msra.mxu0 0
      %10108 = vmatprep.mubr.bf16.mxu0 0
      %10109 = vmatmul.mubr.bf16.gmra.mrb[0].mxu0 %v10062
      %v10110 = vpop.f32.mrb[0].mxu0
      %v10111 = vadd.f32 0.0, %v10110
      %v10112 = vpop.f32.mrb[0].mxu0
      %v10113 = vpop.f32.mrb[0].mxu0
      %v10114 = vadd.f32 0.0, %v10113
      %v10115 = vpop.f32.mrb[0].mxu0
      %10116 = vmatprep.mubr.bf16.mxu0 0
      %10117 = vmatmul.mubr.bf16.gmra.mrb[0].mxu0 %v10065
      %v10118 = vpop.f32.mrb[0].mxu0
      %v10119 = vadd.f32 0.0, %v10118
      %v10120 = vpop.f32.mrb[0].mxu0
      %v10121 = vpop.f32.mrb[0].mxu0
      %v10122 = vadd.f32 0.0, %v10121
      %v10123 = vpop.f32.mrb[0].mxu0
      %10124 = vmatprep.mubr.bf16.mxu0 0
      %10125 = vmatmul.mubr.bf16.gmra.mrb[0].mxu0 %v10068
      %v10126 = vpop.f32.mrb[0].mxu0
      %v10127 = vadd.f32 0.0, %v10126
      %v10128 = vpop.f32.mrb[0].mxu0
      %v10129 = vpop.f32.mrb[0].mxu0
      %v10130 = vadd.f32 0.0, %v10129
      %v10131 = vpop.f32.mrb[0].mxu0
      %10132 = vmatprep.mubr.bf16.mxu0 0
      %10133 = vmatmul.mubr.bf16.gmra.mrb[0].mxu0 %v10071
      %v10134 = vpop.f32.mrb[0].mxu0
      %v10135 = vadd.f32 0.0, %v10134
      %v10136 = vpop.f32.mrb[0].mxu0
      %v10137 = vpop.f32.mrb[0].mxu0
      %v10138 = vpop.f32.mrb[0].mxu0
      %10139 = vdwg.mxu0
      %v10140 = vpack.c.b16 %v1694, %v1693
      %v10141 = vpack.c.b16 %v1696, %v1695
      %v10142 = vpack.c.b16 %v1698, %v1697
      %v10143 = vpack.c.b16 %v1699, %v1699
      %v10148 = vsel %vm5426, %v6789, 0
      %v10151 = vsel %vm5426, %v6792, 0
      %v10154 = vsel %vm5426, %v6795, 0
      %v10157 = vsel %vm5426, %v6798, 0
      %v10160 = vsel %vm7750, %v10143, 0
      %10162 = vmatprep.subr.bf16.mxu0 0
      %10163 = vmatpush1.bf16.msra.mxu0 %v10140
      %10164 = vmatprep.subr.bf16.mxu0 0
      %10165 = vmatpush1.bf16.msra.mxu0 %v10141
      %10166 = vmatprep.subr.bf16.mxu0 0
      %10167 = vmatpush1.bf16.msra.mxu0 %v10142
      %10168 = vmatprep.subr.bf16.mxu0 0
      %10169 = vmatpush1.bf16.msra.mxu0 %v10160
      %10170 = vmatprep.subr.bf16.mxu0 0
      %10171 = vmatpush1.bf16.msra.mxu0 0
      %10172 = vmatprep.subr.bf16.mxu0 0
      %10173 = vmatpush1.bf16.msra.mxu0 0
      %10174 = vmatprep.subr.bf16.mxu0 0
      %10175 = vmatpush1.bf16.msra.mxu0 0
      %10176 = vmatprep.subr.bf16.mxu0 0
      %10177 = vmatpush1.bf16.msra.mxu0 0
      %10178 = vmatprep.subr.bf16.mxu0 0
      %10179 = vmatpush1.bf16.msra.mxu0 0
      %10180 = vmatprep.subr.bf16.mxu0 0
      %10181 = vmatpush1.bf16.msra.mxu0 0
      %10182 = vmatprep.subr.bf16.mxu0 0
      %10183 = vmatpush1.bf16.msra.mxu0 0
      %10184 = vmatprep.subr.bf16.mxu0 0
      %10185 = vmatpush1.bf16.msra.mxu0 0
      %10186 = vmatprep.subr.bf16.mxu0 0
      %10187 = vmatpush1.bf16.msra.mxu0 0
      %10188 = vmatprep.subr.bf16.mxu0 0
      %10189 = vmatpush1.bf16.msra.mxu0 0
      %10190 = vmatprep.subr.bf16.mxu0 0
      %10191 = vmatpush1.bf16.msra.mxu0 0
      %10192 = vmatprep.subr.bf16.mxu0 0
      %10193 = vmatpush1.bf16.msra.mxu0 0
      %10194 = vmatprep.mubr.bf16.mxu0 0
      %10195 = vmatmul.mubr.bf16.gmra.mrb[0].mxu0 %v10148
      %v10196 = vpop.f32.mrb[0].mxu0
      %v10197 = vadd.f32 0.0, %v10196
      %v10198 = vpop.f32.mrb[0].mxu0
      %v10199 = vpop.f32.mrb[0].mxu0
      %v10200 = vadd.f32 0.0, %v10199
      %v10201 = vpop.f32.mrb[0].mxu0
      %10202 = vmatprep.mubr.bf16.mxu0 0
      %10203 = vmatmul.mubr.bf16.gmra.mrb[0].mxu0 %v10151
      %v10204 = vpop.f32.mrb[0].mxu0
      %v10205 = vadd.f32 0.0, %v10204
      %v10206 = vpop.f32.mrb[0].mxu0
      %v10207 = vpop.f32.mrb[0].mxu0
      %v10208 = vadd.f32 0.0, %v10207
      %v10209 = vpop.f32.mrb[0].mxu0
      %10210 = vmatprep.mubr.bf16.mxu0 0
      %10211 = vmatmul.mubr.bf16.gmra.mrb[0].mxu0 %v10154
      %v10212 = vpop.f32.mrb[0].mxu0
      %v10213 = vadd.f32 0.0, %v10212
      %v10214 = vpop.f32.mrb[0].mxu0
      %v10215 = vpop.f32.mrb[0].mxu0
      %v10216 = vadd.f32 0.0, %v10215
      %v10217 = vpop.f32.mrb[0].mxu0
      %10218 = vmatprep.mubr.bf16.mxu0 0
      %10219 = vmatmul.mubr.bf16.gmra.mrb[0].mxu0 %v10157
      %v10220 = vpop.f32.mrb[0].mxu0
      %v10221 = vadd.f32 0.0, %v10220
      %v10222 = vpop.f32.mrb[0].mxu0
      %v10223 = vpop.f32.mrb[0].mxu0
      %v10224 = vpop.f32.mrb[0].mxu0
      %10225 = vdwg.mxu0
      %v10226 = vpack.c.b16 %v1701, %v1700
      %v10227 = vpack.c.b16 %v1703, %v1702
      %v10228 = vpack.c.b16 %v1705, %v1704
      %v10229 = vpack.c.b16 %v1706, %v1706
      %v10234 = vsel %vm5426, %v6801, 0
      %v10237 = vsel %vm5426, %v6804, 0
      %v10240 = vsel %vm5426, %v6807, 0
      %v10243 = vsel %vm5426, %v6810, 0
      %v10246 = vsel %vm7750, %v10229, 0
      %10248 = vmatprep.subr.bf16.mxu0 0
      %10249 = vmatpush1.bf16.msra.mxu0 %v10226
      %10250 = vmatprep.subr.bf16.mxu0 0
      %10251 = vmatpush1.bf16.msra.mxu0 %v10227
      %10252 = vmatprep.subr.bf16.mxu0 0
      %10253 = vmatpush1.bf16.msra.mxu0 %v10228
      %10254 = vmatprep.subr.bf16.mxu0 0
      %10255 = vmatpush1.bf16.msra.mxu0 %v10246
      %10256 = vmatprep.subr.bf16.mxu0 0
      %10257 = vmatpush1.bf16.msra.mxu0 0
      %10258 = vmatprep.subr.bf16.mxu0 0
      %10259 = vmatpush1.bf16.msra.mxu0 0
      %10260 = vmatprep.subr.bf16.mxu0 0
      %10261 = vmatpush1.bf16.msra.mxu0 0
      %10262 = vmatprep.subr.bf16.mxu0 0
      %10263 = vmatpush1.bf16.msra.mxu0 0
      %10264 = vmatprep.subr.bf16.mxu0 0
      %10265 = vmatpush1.bf16.msra.mxu0 0
      %10266 = vmatprep.subr.bf16.mxu0 0
      %10267 = vmatpush1.bf16.msra.mxu0 0
      %10268 = vmatprep.subr.bf16.mxu0 0
      %10269 = vmatpush1.bf16.msra.mxu0 0
      %10270 = vmatprep.subr.bf16.mxu0 0
      %10271 = vmatpush1.bf16.msra.mxu0 0
      %10272 = vmatprep.subr.bf16.mxu0 0
      %10273 = vmatpush1.bf16.msra.mxu0 0
      %10274 = vmatprep.subr.bf16.mxu0 0
      %10275 = vmatpush1.bf16.msra.mxu0 0
      %10276 = vmatprep.subr.bf16.mxu0 0
      %10277 = vmatpush1.bf16.msra.mxu0 0
      %10278 = vmatprep.subr.bf16.mxu0 0
      %10279 = vmatpush1.bf16.msra.mxu0 0
      %10280 = vmatprep.mubr.bf16.mxu0 0
      %10281 = vmatmul.mubr.bf16.gmra.mrb[0].mxu0 %v10234
      %v10282 = vpop.f32.mrb[0].mxu0
      %v10283 = vadd.f32 0.0, %v10282
      %v10284 = vpop.f32.mrb[0].mxu0
      %v10285 = vpop.f32.mrb[0].mxu0
      %v10286 = vadd.f32 0.0, %v10285
      %v10287 = vpop.f32.mrb[0].mxu0
      %10288 = vmatprep.mubr.bf16.mxu0 0
      %10289 = vmatmul.mubr.bf16.gmra.mrb[0].mxu0 %v10237
      %v10290 = vpop.f32.mrb[0].mxu0
      %v10291 = vadd.f32 0.0, %v10290
      %v10292 = vpop.f32.mrb[0].mxu0
      %v10293 = vpop.f32.mrb[0].mxu0
      %v10294 = vadd.f32 0.0, %v10293
      %v10295 = vpop.f32.mrb[0].mxu0
      %10296 = vmatprep.mubr.bf16.mxu0 0
      %10297 = vmatmul.mubr.bf16.gmra.mrb[0].mxu0 %v10240
      %v10298 = vpop.f32.mrb[0].mxu0
      %v10299 = vadd.f32 0.0, %v10298
      %v10300 = vpop.f32.mrb[0].mxu0
      %v10301 = vpop.f32.mrb[0].mxu0
      %v10302 = vadd.f32 0.0, %v10301
      %v10303 = vpop.f32.mrb[0].mxu0
      %10304 = vmatprep.mubr.bf16.mxu0 0
      %10305 = vmatmul.mubr.bf16.gmra.mrb[0].mxu0 %v10243
      %v10306 = vpop.f32.mrb[0].mxu0
      %v10307 = vadd.f32 0.0, %v10306
      %v10308 = vpop.f32.mrb[0].mxu0
      %v10309 = vpop.f32.mrb[0].mxu0
      %v10310 = vpop.f32.mrb[0].mxu0
      %10311 = vdwg.mxu0
      %v10312 = vpack.c.b16 %v1708, %v1707
      %v10313 = vpack.c.b16 %v1710, %v1709
      %v10314 = vpack.c.b16 %v1712, %v1711
      %v10315 = vpack.c.b16 %v1713, %v1713
      %v10320 = vsel %vm5426, %v6813, 0
      %v10323 = vsel %vm5426, %v6816, 0
      %v10326 = vsel %vm5426, %v6819, 0
      %v10329 = vsel %vm5426, %v6822, 0
      %v10332 = vsel %vm7750, %v10315, 0
      %10334 = vmatprep.subr.bf16.mxu0 0
      %10335 = vmatpush1.bf16.msra.mxu0 %v10312
      %10336 = vmatprep.subr.bf16.mxu0 0
      %10337 = vmatpush1.bf16.msra.mxu0 %v10313
      %10338 = vmatprep.subr.bf16.mxu0 0
      %10339 = vmatpush1.bf16.msra.mxu0 %v10314
      %10340 = vmatprep.subr.bf16.mxu0 0
      %10341 = vmatpush1.bf16.msra.mxu0 %v10332
      %10342 = vmatprep.subr.bf16.mxu0 0
      %10343 = vmatpush1.bf16.msra.mxu0 0
      %10344 = vmatprep.subr.bf16.mxu0 0
      %10345 = vmatpush1.bf16.msra.mxu0 0
      %10346 = vmatprep.subr.bf16.mxu0 0
      %10347 = vmatpush1.bf16.msra.mxu0 0
      %10348 = vmatprep.subr.bf16.mxu0 0
      %10349 = vmatpush1.bf16.msra.mxu0 0
      %10350 = vmatprep.subr.bf16.mxu0 0
      %10351 = vmatpush1.bf16.msra.mxu0 0
      %10352 = vmatprep.subr.bf16.mxu0 0
      %10353 = vmatpush1.bf16.msra.mxu0 0
      %10354 = vmatprep.subr.bf16.mxu0 0
      %10355 = vmatpush1.bf16.msra.mxu0 0
      %10356 = vmatprep.subr.bf16.mxu0 0
      %10357 = vmatpush1.bf16.msra.mxu0 0
      %10358 = vmatprep.subr.bf16.mxu0 0
      %10359 = vmatpush1.bf16.msra.mxu0 0
      %10360 = vmatprep.subr.bf16.mxu0 0
      %10361 = vmatpush1.bf16.msra.mxu0 0
      %10362 = vmatprep.subr.bf16.mxu0 0
      %10363 = vmatpush1.bf16.msra.mxu0 0
      %10364 = vmatprep.subr.bf16.mxu0 0
      %10365 = vmatpush1.bf16.msra.mxu0 0
      %10366 = vmatprep.mubr.bf16.mxu0 0
      %10367 = vmatmul.mubr.bf16.gmra.mrb[0].mxu0 %v10320
      %v10368 = vpop.f32.mrb[0].mxu0
      %v10369 = vadd.f32 0.0, %v10368
      %v10370 = vpop.f32.mrb[0].mxu0
      %v10371 = vpop.f32.mrb[0].mxu0
      %v10372 = vadd.f32 0.0, %v10371
      %v10373 = vpop.f32.mrb[0].mxu0
      %10374 = vmatprep.mubr.bf16.mxu0 0
      %10375 = vmatmul.mubr.bf16.gmra.mrb[0].mxu0 %v10323
      %v10376 = vpop.f32.mrb[0].mxu0
      %v10377 = vadd.f32 0.0, %v10376
      %v10378 = vpop.f32.mrb[0].mxu0
      %v10379 = vpop.f32.mrb[0].mxu0
      %v10380 = vadd.f32 0.0, %v10379
      %v10381 = vpop.f32.mrb[0].mxu0
      %10382 = vmatprep.mubr.bf16.mxu0 0
      %10383 = vmatmul.mubr.bf16.gmra.mrb[0].mxu0 %v10326
      %v10384 = vpop.f32.mrb[0].mxu0
      %v10385 = vadd.f32 0.0, %v10384
      %v10386 = vpop.f32.mrb[0].mxu0
      %v10387 = vpop.f32.mrb[0].mxu0
      %v10388 = vadd.f32 0.0, %v10387
      %v10389 = vpop.f32.mrb[0].mxu0
      %10390 = vmatprep.mubr.bf16.mxu0 0
      %10391 = vmatmul.mubr.bf16.gmra.mrb[0].mxu0 %v10329
      %v10392 = vpop.f32.mrb[0].mxu0
      %v10393 = vadd.f32 0.0, %v10392
      %v10394 = vpop.f32.mrb[0].mxu0
      %v10395 = vpop.f32.mrb[0].mxu0
      %v10396 = vpop.f32.mrb[0].mxu0
      %10397 = vdwg.mxu0
      %v10398 = vpack.c.b16 %v1715, %v1714
      %v10399 = vpack.c.b16 %v1717, %v1716
      %v10400 = vpack.c.b16 %v1719, %v1718
      %v10401 = vpack.c.b16 %v1720, %v1720
      %v10406 = vsel %vm5426, %v6825, 0
      %v10409 = vsel %vm5426, %v6828, 0
      %v10412 = vsel %vm5426, %v6831, 0
      %v10415 = vsel %vm5426, %v6834, 0
      %v10418 = vsel %vm7750, %v10401, 0
      %10420 = vmatprep.subr.bf16.mxu0 0
      %10421 = vmatpush1.bf16.msra.mxu0 %v10398
      %10422 = vmatprep.subr.bf16.mxu0 0
      %10423 = vmatpush1.bf16.msra.mxu0 %v10399
      %10424 = vmatprep.subr.bf16.mxu0 0
      %10425 = vmatpush1.bf16.msra.mxu0 %v10400
      %10426 = vmatprep.subr.bf16.mxu0 0
      %10427 = vmatpush1.bf16.msra.mxu0 %v10418
      %10428 = vmatprep.subr.bf16.mxu0 0
      %10429 = vmatpush1.bf16.msra.mxu0 0
      %10430 = vmatprep.subr.bf16.mxu0 0
      %10431 = vmatpush1.bf16.msra.mxu0 0
      %10432 = vmatprep.subr.bf16.mxu0 0
      %10433 = vmatpush1.bf16.msra.mxu0 0
      %10434 = vmatprep.subr.bf16.mxu0 0
      %10435 = vmatpush1.bf16.msra.mxu0 0
      %10436 = vmatprep.subr.bf16.mxu0 0
      %10437 = vmatpush1.bf16.msra.mxu0 0
      %10438 = vmatprep.subr.bf16.mxu0 0
      %10439 = vmatpush1.bf16.msra.mxu0 0
      %10440 = vmatprep.subr.bf16.mxu0 0
      %10441 = vmatpush1.bf16.msra.mxu0 0
      %10442 = vmatprep.subr.bf16.mxu0 0
      %10443 = vmatpush1.bf16.msra.mxu0 0
      %10444 = vmatprep.subr.bf16.mxu0 0
      %10445 = vmatpush1.bf16.msra.mxu0 0
      %10446 = vmatprep.subr.bf16.mxu0 0
      %10447 = vmatpush1.bf16.msra.mxu0 0
      %10448 = vmatprep.subr.bf16.mxu0 0
      %10449 = vmatpush1.bf16.msra.mxu0 0
      %10450 = vmatprep.subr.bf16.mxu0 0
      %10451 = vmatpush1.bf16.msra.mxu0 0
      %10452 = vmatprep.mubr.bf16.mxu0 0
      %10453 = vmatmul.mubr.bf16.gmra.mrb[0].mxu0 %v10406
      %v10454 = vpop.f32.mrb[0].mxu0
      %v10455 = vadd.f32 0.0, %v10454
      %v10456 = vpop.f32.mrb[0].mxu0
      %v10457 = vpop.f32.mrb[0].mxu0
      %v10458 = vadd.f32 0.0, %v10457
      %v10459 = vpop.f32.mrb[0].mxu0
      %10460 = vmatprep.mubr.bf16.mxu0 0
      %10461 = vmatmul.mubr.bf16.gmra.mrb[0].mxu0 %v10409
      %v10462 = vpop.f32.mrb[0].mxu0
      %v10463 = vadd.f32 0.0, %v10462
      %v10464 = vpop.f32.mrb[0].mxu0
      %v10465 = vpop.f32.mrb[0].mxu0
      %v10466 = vadd.f32 0.0, %v10465
      %v10467 = vpop.f32.mrb[0].mxu0
      %10468 = vmatprep.mubr.bf16.mxu0 0
      %10469 = vmatmul.mubr.bf16.gmra.mrb[0].mxu0 %v10412
      %v10470 = vpop.f32.mrb[0].mxu0
      %v10471 = vadd.f32 0.0, %v10470
      %v10472 = vpop.f32.mrb[0].mxu0
      %v10473 = vpop.f32.mrb[0].mxu0
      %v10474 = vadd.f32 0.0, %v10473
      %v10475 = vpop.f32.mrb[0].mxu0
      %10476 = vmatprep.mubr.bf16.mxu0 0
      %10477 = vmatmul.mubr.bf16.gmra.mrb[0].mxu0 %v10415
      %v10478 = vpop.f32.mrb[0].mxu0
      %v10479 = vadd.f32 0.0, %v10478
      %v10480 = vpop.f32.mrb[0].mxu0
      %v10481 = vpop.f32.mrb[0].mxu0
      %v10482 = vpop.f32.mrb[0].mxu0
      %10483 = vdwg.mxu0
      %v10484 = vrcp.pop %v7061
      %v10485 = vrcp.pop %v7064
      %v10486 = vrcp.pop %v7067
      %v10487 = vrcp.pop %v7070
      %v10488 = vrcp.pop %v7073
      %v10489 = vrcp.pop %v7076
      %v10490 = vrcp.pop %v7079
      %v10491 = vrcp.pop %v7082
      %v10492 = vrcp.pop %v7085
      %v10493 = vrcp.pop %v7088
      %v10494 = vrcp.pop %v7091
      %v10495 = vrcp.pop %v7094
      %v10496 = vrcp.pop %v7097
      %v10497 = vrcp.pop %v7100
      %v10498 = vrcp.pop %v7103
      %v10499 = vrcp.pop %v7106
      %v10500 = vrcp.pop %v7109
      %v10501 = vrcp.pop %v7112
      %v10502 = vrcp.pop %v7115
      %v10503 = vrcp.pop %v7118
      %v10504 = vrcp.pop %v7121
      %v10505 = vrcp.pop %v7124
      %v10506 = vrcp.pop %v7127
      %v10507 = vrcp.pop %v7130
      %v10508 = vrcp.pop %v7133
      %v10509 = vrcp.pop %v7136
      %v10510 = vrcp.pop %v7139
      %v10511 = vrcp.pop %v7142
      %v10512 = vrcp.pop %v7145
      %v10513 = vrcp.pop %v7148
      %v10514 = vrcp.pop %v7151
      %v10515 = vrcp.pop %v7154
      %v10516 = vrcp.pop %v7157
      %v10517 = vrcp.pop %v7160
      %v10518 = vrcp.pop %v7163
      %v10519 = vrcp.pop %v7166
      %v10520 = vrcp.pop %v7169
      %v10521 = vrcp.pop %v7172
      %v10522 = vrcp.pop %v7175
      %v10523 = vrcp.pop %v7178
      %v10524 = vrcp.pop %v7181
      %v10525 = vrcp.pop %v7184
      %v10526 = vrcp.pop %v7187
      %v10527 = vrcp.pop %v7190
      %v10528 = vrcp.pop %v7193
      %v10529 = vrcp.pop %v7196
      %v10530 = vrcp.pop %v7199
      %v10531 = vrcp.pop %v7202
      %v10532 = vrcp.pop %v7205
      %v10533 = vrcp.pop %v7208
      %v10534 = vrcp.pop %v7211
      %v10535 = vrcp.pop %v7214
      %v10536 = vrcp.pop %v7217
      %v10537 = vrcp.pop %v7220
      %v10538 = vrcp.pop %v7223
      %v10539 = vrcp.pop %v7226
      %v10540 = vrcp.pop %v7229
      %v10541 = vrcp.pop %v7232
      %v10542 = vrcp.pop %v7235
      %v10543 = vrcp.pop %v7238
      %v10544 = vrcp.pop %v7241
      %v10545 = vrcp.pop %v7244
      %v10546 = vrcp.pop %v7247
      %v10547 = vrcp.pop %v7250
      %v10548 = vrcp.pop %v7253
      %v10549 = vrcp.pop %v7256
      %v10550 = vrcp.pop %v7259
      %v10551 = vrcp.pop %v7262
      %v10552 = vrcp.pop %v7265
      %v10553 = vrcp.pop %v7268
      %v10554 = vrcp.pop %v7271
      %v10555 = vrcp.pop %v7274
      %v10556 = vrcp.pop %v7277
      %v10557 = vrcp.pop %v7280
      %v10558 = vrcp.pop %v7283
      %v10559 = vrcp.pop %v7286
      %v10560 = vrcp.pop %v7289
      %v10561 = vrcp.pop %v7292
      %v10562 = vrcp.pop %v7295
      %v10563 = vrcp.pop %v7298
      %v10564 = vrcp.pop %v7301
      %v10565 = vrcp.pop %v7304
      %v10566 = vrcp.pop %v7307
      %v10567 = vrcp.pop %v7310
      %v10568 = vrcp.pop %v7313
      %v10569 = vrcp.pop %v7316
      %v10570 = vrcp.pop %v7319
      %v10571 = vrcp.pop %v7322
      %v10572 = vrcp.pop %v7325
      %v10573 = vrcp.pop %v7328
      %v10574 = vrcp.pop %v7331
      %v10575 = vrcp.pop %v7334
      %v10576 = vrcp.pop %v7337
      %v10577 = vrcp.pop %v7340
      %v10578 = vrcp.pop %v7343
      %v10579 = vrcp.pop %v7346
      %v10580 = vrcp.pop %v7349
      %v10581 = vrcp.pop %v7352
      %v10582 = vrcp.pop %v7355
      %v10583 = vrcp.pop %v7358
      %v10584 = vrcp.pop %v7361
      %v10585 = vrcp.pop %v7364
      %v10586 = vrcp.pop %v7367
      %v10587 = vrcp.pop %v7370
      %v10588 = vrcp.pop %v7373
      %v10589 = vrcp.pop %v7376
      %v10590 = vrcp.pop %v7379
      %v10591 = vrcp.pop %v7382
      %v10592 = vrcp.pop %v7385
      %v10593 = vrcp.pop %v7388
      %v10594 = vrcp.pop %v7391
      %v10595 = vrcp.pop %v7394
      %v10596 = vrcp.pop %v7397
      %v10597 = vrcp.pop %v7400
      %v10598 = vrcp.pop %v7403
      %v10599 = vrcp.pop %v7406
      %v10600 = vrcp.pop %v7409
      %v10601 = vrcp.pop %v7412
      %v10602 = vrcp.pop %v7415
      %v10603 = vrcp.pop %v7418
      %v10604 = vrcp.pop %v7421
      %v10605 = vrcp.pop %v7424
      %v10606 = vrcp.pop %v7427
      %v10607 = vrcp.pop %v7430
      %v10608 = vrcp.pop %v7433
      %v10609 = vrcp.pop %v7436
      %v10610 = vrcp.pop %v7439
      %v10611 = vrcp.pop %v7442
      %v10612 = vrcp.pop %v7445
      %v10613 = vrcp.pop %v7448
      %v10614 = vrcp.pop %v7451
      %v10615 = vrcp.pop %v7454
      %v10616 = vrcp.pop %v7457
      %v10617 = vrcp.pop %v7460
      %v10618 = vrcp.pop %v7463
      %v10619 = vrcp.pop %v7466
      %v10620 = vrcp.pop %v7469
      %v10621 = vrcp.pop %v7472
      %v10622 = vrcp.pop %v7475
      %v10623 = vrcp.pop %v7478
      %v10624 = vrcp.pop %v7481
      %v10625 = vrcp.pop %v7484
      %v10626 = vrcp.pop %v7487
      %v10627 = vrcp.pop %v7490
      %v10628 = vrcp.pop %v7493
      %v10629 = vrcp.pop %v7496
      %v10630 = vrcp.pop %v7499
      %v10631 = vrcp.pop %v7502
      %v10632 = vrcp.pop %v7505
      %v10633 = vrcp.pop %v7508
      %v10634 = vrcp.pop %v7511
      %v10635 = vrcp.pop %v7514
      %v10636 = vrcp.pop %v7517
      %v10637 = vrcp.pop %v7520
      %v10638 = vrcp.pop %v7523
      %v10639 = vrcp.pop %v7526
      %v10640 = vrcp.pop %v7529
      %v10641 = vrcp.pop %v7532
      %v10642 = vrcp.pop %v7535
      %v10643 = vrcp.pop %v7538
      %v10644 = vrcp.pop %v7541
      %v10645 = vrcp.pop %v7544
      %v10646 = vrcp.pop %v7547
      %v10647 = vrcp.pop %v7550
      %v10648 = vrcp.pop %v7553
      %v10649 = vrcp.pop %v7556
      %v10650 = vrcp.pop %v7559
      %v10651 = vrcp.pop %v7562
      %v10652 = vrcp.pop %v7565
      %v10653 = vrcp.pop %v7568
      %v10654 = vrcp.pop %v7571
      %v10655 = vrcp.pop %v7574
      %v10656 = vrcp.pop %v7577
      %v10657 = vrcp.pop %v7580
      %v10658 = vrcp.pop %v7583
      %v10659 = vrcp.pop %v7586
      %v10660 = vrcp.pop %v7589
      %v10661 = vrcp.pop %v7592
      %v10662 = vrcp.pop %v7595
      %v10663 = vrcp.pop %v7598
      %v10664 = vrcp.pop %v7601
      %v10665 = vrcp.pop %v7604
      %v10666 = vrcp.pop %v7607
      %v10667 = vrcp.pop %v7610
      %v10668 = vrcp.pop %v7613
      %v10669 = vrcp.pop %v7616
      %v10670 = vrcp.pop %v7619
      %v10671 = vrcp.pop %v7622
      %v10672 = vrcp.pop %v7625
      %v10673 = vrcp.pop %v7628
      %v10674 = vrcp.pop %v7631
      %v10675 = vrcp.pop %v7634
      %v10676 = vrcp.pop %v7637
      %v10677 = vrcp.pop %v7640
      %v10678 = vrcp.pop %v7643
      %v10679 = vrcp.pop %v7646
      %v10680 = vrcp.pop %v7649
      %v10681 = vrcp.pop %v7652
      %v10682 = vrcp.pop %v7655
      %v10683 = vrcp.pop %v7658
      %v10684 = vrcp.pop %v7661
      %v10685 = vrcp.pop %v7664
      %v10686 = vrcp.pop %v7667
      %v10687 = vrcp.pop %v7670
      %v10688 = vrcp.pop %v7673
      %v10689 = vrcp.pop %v7676
      %v10690 = vrcp.pop %v7679
      %v10691 = vrcp.pop %v7682
      %v10692 = vrcp.pop %v7685
      %v10693 = vrcp.pop %v7688
      %v10694 = vrcp.pop %v7691
      %v10695 = vrcp.pop %v7694
      %v10696 = vrcp.pop %v7697
      %v10697 = vrcp.pop %v7700
      %v10698 = vrcp.pop %v7703
      %v10699 = vrcp.pop %v7706
      %v10700 = vrcp.pop %v7709
      %v10701 = vrcp.pop %v7712
      %v10702 = vrcp.pop %v7715
      %v10703 = vrcp.pop %v7718
      %v10704 = vrcp.pop %v7721
      %v10705 = vrcp.pop %v7724
      %v10706 = vrcp.pop %v7727
      %v10707 = vrcp.pop %v7730
      %v10708 = vmul.f32 %v7789, %v10484
      %v10709 = vmul.f32 %v7792, %v10485
      %v10710 = vmul.f32 %v7797, %v10486
      %v10711 = vmul.f32 %v7800, %v10487
      %v10712 = vmul.f32 %v7805, %v10488
      %v10713 = vmul.f32 %v7808, %v10489
      %v10714 = vmul.f32 %v7813, %v10490
      %v10715 = vmul.f32 %v7875, %v10491
      %v10716 = vmul.f32 %v7878, %v10492
      %v10717 = vmul.f32 %v7883, %v10493
      %v10718 = vmul.f32 %v7886, %v10494
      %v10719 = vmul.f32 %v7891, %v10495
      %v10720 = vmul.f32 %v7894, %v10496
      %v10721 = vmul.f32 %v7899, %v10497
      %v10722 = vmul.f32 %v7961, %v10498
      %v10723 = vmul.f32 %v7964, %v10499
      %v10724 = vmul.f32 %v7969, %v10500
      %v10725 = vmul.f32 %v7972, %v10501
      %v10726 = vmul.f32 %v7977, %v10502
      %v10727 = vmul.f32 %v7980, %v10503
      %v10728 = vmul.f32 %v7985, %v10504
      %v10729 = vmul.f32 %v8047, %v10505
      %v10730 = vmul.f32 %v8050, %v10506
      %v10731 = vmul.f32 %v8055, %v10507
      %v10732 = vmul.f32 %v8058, %v10508
      %v10733 = vmul.f32 %v8063, %v10509
      %v10734 = vmul.f32 %v8066, %v10510
      %v10735 = vmul.f32 %v8071, %v10511
      %v10736 = vmul.f32 %v8133, %v10512
      %v10737 = vmul.f32 %v8136, %v10513
      %v10738 = vmul.f32 %v8141, %v10514
      %v10739 = vmul.f32 %v8144, %v10515
      %v10740 = vmul.f32 %v8149, %v10516
      %v10741 = vmul.f32 %v8152, %v10517
      %v10742 = vmul.f32 %v8157, %v10518
      %v10743 = vmul.f32 %v8219, %v10519
      %v10744 = vmul.f32 %v8222, %v10520
      %v10745 = vmul.f32 %v8227, %v10521
      %v10746 = vmul.f32 %v8230, %v10522
      %v10747 = vmul.f32 %v8235, %v10523
      %v10748 = vmul.f32 %v8238, %v10524
      %v10749 = vmul.f32 %v8243, %v10525
      %v10750 = vmul.f32 %v8305, %v10526
      %v10751 = vmul.f32 %v8308, %v10527
      %v10752 = vmul.f32 %v8313, %v10528
      %v10753 = vmul.f32 %v8316, %v10529
      %v10754 = vmul.f32 %v8321, %v10530
      %v10755 = vmul.f32 %v8324, %v10531
      %v10756 = vmul.f32 %v8329, %v10532
      %v10757 = vmul.f32 %v8391, %v10533
      %v10758 = vmul.f32 %v8394, %v10534
      %v10759 = vmul.f32 %v8399, %v10535
      %v10760 = vmul.f32 %v8402, %v10536
      %v10761 = vmul.f32 %v8407, %v10537
      %v10762 = vmul.f32 %v8410, %v10538
      %v10763 = vmul.f32 %v8415, %v10539
      %v10764 = vmul.f32 %v8477, %v10540
      %v10765 = vmul.f32 %v8480, %v10541
      %v10766 = vmul.f32 %v8485, %v10542
      %v10767 = vmul.f32 %v8488, %v10543
      %v10768 = vmul.f32 %v8493, %v10544
      %v10769 = vmul.f32 %v8496, %v10545
      %v10770 = vmul.f32 %v8501, %v10546
      %v10771 = vmul.f32 %v8563, %v10547
      %v10772 = vmul.f32 %v8566, %v10548
      %v10773 = vmul.f32 %v8571, %v10549
      %v10774 = vmul.f32 %v8574, %v10550
      %v10775 = vmul.f32 %v8579, %v10551
      %v10776 = vmul.f32 %v8582, %v10552
      %v10777 = vmul.f32 %v8587, %v10553
      %v10778 = vmul.f32 %v8649, %v10554
      %v10779 = vmul.f32 %v8652, %v10555
      %v10780 = vmul.f32 %v8657, %v10556
      %v10781 = vmul.f32 %v8660, %v10557
      %v10782 = vmul.f32 %v8665, %v10558
      %v10783 = vmul.f32 %v8668, %v10559
      %v10784 = vmul.f32 %v8673, %v10560
      %v10785 = vmul.f32 %v8735, %v10561
      %v10786 = vmul.f32 %v8738, %v10562
      %v10787 = vmul.f32 %v8743, %v10563
      %v10788 = vmul.f32 %v8746, %v10564
      %v10789 = vmul.f32 %v8751, %v10565
      %v10790 = vmul.f32 %v8754, %v10566
      %v10791 = vmul.f32 %v8759, %v10567
      %v10792 = vmul.f32 %v8821, %v10568
      %v10793 = vmul.f32 %v8824, %v10569
      %v10794 = vmul.f32 %v8829, %v10570
      %v10795 = vmul.f32 %v8832, %v10571
      %v10796 = vmul.f32 %v8837, %v10572
      %v10797 = vmul.f32 %v8840, %v10573
      %v10798 = vmul.f32 %v8845, %v10574
      %v10799 = vmul.f32 %v8907, %v10575
      %v10800 = vmul.f32 %v8910, %v10576
      %v10801 = vmul.f32 %v8915, %v10577
      %v10802 = vmul.f32 %v8918, %v10578
      %v10803 = vmul.f32 %v8923, %v10579
      %v10804 = vmul.f32 %v8926, %v10580
      %v10805 = vmul.f32 %v8931, %v10581
      %v10806 = vmul.f32 %v8993, %v10582
      %v10807 = vmul.f32 %v8996, %v10583
      %v10808 = vmul.f32 %v9001, %v10584
      %v10809 = vmul.f32 %v9004, %v10585
      %v10810 = vmul.f32 %v9009, %v10586
      %v10811 = vmul.f32 %v9012, %v10587
      %v10812 = vmul.f32 %v9017, %v10588
      %v10813 = vmul.f32 %v9079, %v10589
      %v10814 = vmul.f32 %v9082, %v10590
      %v10815 = vmul.f32 %v9087, %v10591
      %v10816 = vmul.f32 %v9090, %v10592
      %v10817 = vmul.f32 %v9095, %v10593
      %v10818 = vmul.f32 %v9098, %v10594
      %v10819 = vmul.f32 %v9103, %v10595
      %v10820 = vmul.f32 %v9165, %v10596
      %v10821 = vmul.f32 %v9168, %v10597
      %v10822 = vmul.f32 %v9173, %v10598
      %v10823 = vmul.f32 %v9176, %v10599
      %v10824 = vmul.f32 %v9181, %v10600
      %v10825 = vmul.f32 %v9184, %v10601
      %v10826 = vmul.f32 %v9189, %v10602
      %v10827 = vmul.f32 %v9251, %v10603
      %v10828 = vmul.f32 %v9254, %v10604
      %v10829 = vmul.f32 %v9259, %v10605
      %v10830 = vmul.f32 %v9262, %v10606
      %v10831 = vmul.f32 %v9267, %v10607
      %v10832 = vmul.f32 %v9270, %v10608
      %v10833 = vmul.f32 %v9275, %v10609
      %v10834 = vmul.f32 %v9337, %v10610
      %v10835 = vmul.f32 %v9340, %v10611
      %v10836 = vmul.f32 %v9345, %v10612
      %v10837 = vmul.f32 %v9348, %v10613
      %v10838 = vmul.f32 %v9353, %v10614
      %v10839 = vmul.f32 %v9356, %v10615
      %v10840 = vmul.f32 %v9361, %v10616
      %v10841 = vmul.f32 %v9423, %v10617
      %v10842 = vmul.f32 %v9426, %v10618
      %v10843 = vmul.f32 %v9431, %v10619
      %v10844 = vmul.f32 %v9434, %v10620
      %v10845 = vmul.f32 %v9439, %v10621
      %v10846 = vmul.f32 %v9442, %v10622
      %v10847 = vmul.f32 %v9447, %v10623
      %v10848 = vmul.f32 %v9509, %v10624
      %v10849 = vmul.f32 %v9512, %v10625
      %v10850 = vmul.f32 %v9517, %v10626
      %v10851 = vmul.f32 %v9520, %v10627
      %v10852 = vmul.f32 %v9525, %v10628
      %v10853 = vmul.f32 %v9528, %v10629
      %v10854 = vmul.f32 %v9533, %v10630
      %v10855 = vmul.f32 %v9595, %v10631
      %v10856 = vmul.f32 %v9598, %v10632
      %v10857 = vmul.f32 %v9603, %v10633
      %v10858 = vmul.f32 %v9606, %v10634
      %v10859 = vmul.f32 %v9611, %v10635
      %v10860 = vmul.f32 %v9614, %v10636
      %v10861 = vmul.f32 %v9619, %v10637
      %v10862 = vmul.f32 %v9681, %v10638
      %v10863 = vmul.f32 %v9684, %v10639
      %v10864 = vmul.f32 %v9689, %v10640
      %v10865 = vmul.f32 %v9692, %v10641
      %v10866 = vmul.f32 %v9697, %v10642
      %v10867 = vmul.f32 %v9700, %v10643
      %v10868 = vmul.f32 %v9705, %v10644
      %v10869 = vmul.f32 %v9767, %v10645
      %v10870 = vmul.f32 %v9770, %v10646
      %v10871 = vmul.f32 %v9775, %v10647
      %v10872 = vmul.f32 %v9778, %v10648
      %v10873 = vmul.f32 %v9783, %v10649
      %v10874 = vmul.f32 %v9786, %v10650
      %v10875 = vmul.f32 %v9791, %v10651
      %v10876 = vmul.f32 %v9853, %v10652
      %v10877 = vmul.f32 %v9856, %v10653
      %v10878 = vmul.f32 %v9861, %v10654
      %v10879 = vmul.f32 %v9864, %v10655
      %v10880 = vmul.f32 %v9869, %v10656
      %v10881 = vmul.f32 %v9872, %v10657
      %v10882 = vmul.f32 %v9877, %v10658
      %v10883 = vmul.f32 %v9939, %v10659
      %v10884 = vmul.f32 %v9942, %v10660
      %v10885 = vmul.f32 %v9947, %v10661
      %v10886 = vmul.f32 %v9950, %v10662
      %v10887 = vmul.f32 %v9955, %v10663
      %v10888 = vmul.f32 %v9958, %v10664
      %v10889 = vmul.f32 %v9963, %v10665
      %v10890 = vmul.f32 %v10025, %v10666
      %v10891 = vmul.f32 %v10028, %v10667
      %v10892 = vmul.f32 %v10033, %v10668
      %v10893 = vmul.f32 %v10036, %v10669
      %v10894 = vmul.f32 %v10041, %v10670
      %v10895 = vmul.f32 %v10044, %v10671
      %v10896 = vmul.f32 %v10049, %v10672
      %v10897 = vmul.f32 %v10111, %v10673
      %v10898 = vmul.f32 %v10114, %v10674
      %v10899 = vmul.f32 %v10119, %v10675
      %v10900 = vmul.f32 %v10122, %v10676
      %v10901 = vmul.f32 %v10127, %v10677
      %v10902 = vmul.f32 %v10130, %v10678
      %v10903 = vmul.f32 %v10135, %v10679
      %v10904 = vmul.f32 %v10197, %v10680
      %v10905 = vmul.f32 %v10200, %v10681
      %v10906 = vmul.f32 %v10205, %v10682
      %v10907 = vmul.f32 %v10208, %v10683
      %v10908 = vmul.f32 %v10213, %v10684
      %v10909 = vmul.f32 %v10216, %v10685
      %v10910 = vmul.f32 %v10221, %v10686
      %v10911 = vmul.f32 %v10283, %v10687
      %v10912 = vmul.f32 %v10286, %v10688
      %v10913 = vmul.f32 %v10291, %v10689
      %v10914 = vmul.f32 %v10294, %v10690
      %v10915 = vmul.f32 %v10299, %v10691
      %v10916 = vmul.f32 %v10302, %v10692
      %v10917 = vmul.f32 %v10307, %v10693
      %v10918 = vmul.f32 %v10369, %v10694
      %v10919 = vmul.f32 %v10372, %v10695
      %v10920 = vmul.f32 %v10377, %v10696
      %v10921 = vmul.f32 %v10380, %v10697
      %v10922 = vmul.f32 %v10385, %v10698
      %v10923 = vmul.f32 %v10388, %v10699
      %v10924 = vmul.f32 %v10393, %v10700
      %v10925 = vmul.f32 %v10455, %v10701
      %v10926 = vmul.f32 %v10458, %v10702
      %v10927 = vmul.f32 %v10463, %v10703
      %v10928 = vmul.f32 %v10466, %v10704
      %v10929 = vmul.f32 %v10471, %v10705
      %v10930 = vmul.f32 %v10474, %v10706
      %v10931 = vmul.f32 %v10479, %v10707
      %v10932 = vpack.c.bf16 %v10709, %v10708
      %v10933 = vpack.c.bf16 %v10711, %v10710
      %v10934 = vpack.c.bf16 %v10713, %v10712
      %v10935 = vpack.c.bf16 %v10714, %v10714
      %v10936 = vpack.c.bf16 %v10716, %v10715
      %v10937 = vpack.c.bf16 %v10718, %v10717
      %v10938 = vpack.c.bf16 %v10720, %v10719
      %v10939 = vpack.c.bf16 %v10721, %v10721
      %v10940 = vpack.c.bf16 %v10723, %v10722
      %v10941 = vpack.c.bf16 %v10725, %v10724
      %v10942 = vpack.c.bf16 %v10727, %v10726
      %v10943 = vpack.c.bf16 %v10728, %v10728
      %v10944 = vpack.c.bf16 %v10730, %v10729
      %v10945 = vpack.c.bf16 %v10732, %v10731
      %v10946 = vpack.c.bf16 %v10734, %v10733
      %v10947 = vpack.c.bf16 %v10735, %v10735
      %v10948 = vpack.c.bf16 %v10737, %v10736
      %v10949 = vpack.c.bf16 %v10739, %v10738
      %v10950 = vpack.c.bf16 %v10741, %v10740
      %v10951 = vpack.c.bf16 %v10742, %v10742
      %v10952 = vpack.c.bf16 %v10744, %v10743
      %v10953 = vpack.c.bf16 %v10746, %v10745
      %v10954 = vpack.c.bf16 %v10748, %v10747
      %v10955 = vpack.c.bf16 %v10749, %v10749
      %v10956 = vpack.c.bf16 %v10751, %v10750
      %v10957 = vpack.c.bf16 %v10753, %v10752
      %v10958 = vpack.c.bf16 %v10755, %v10754
      %v10959 = vpack.c.bf16 %v10756, %v10756
      %v10960 = vpack.c.bf16 %v10758, %v10757
      %v10961 = vpack.c.bf16 %v10760, %v10759
      %v10962 = vpack.c.bf16 %v10762, %v10761
      %v10963 = vpack.c.bf16 %v10763, %v10763
      %v10964 = vpack.c.bf16 %v10765, %v10764
      %v10965 = vpack.c.bf16 %v10767, %v10766
      %v10966 = vpack.c.bf16 %v10769, %v10768
      %v10967 = vpack.c.bf16 %v10770, %v10770
      %v10968 = vpack.c.bf16 %v10772, %v10771
      %v10969 = vpack.c.bf16 %v10774, %v10773
      %v10970 = vpack.c.bf16 %v10776, %v10775
      %v10971 = vpack.c.bf16 %v10777, %v10777
      %v10972 = vpack.c.bf16 %v10779, %v10778
      %v10973 = vpack.c.bf16 %v10781, %v10780
      %v10974 = vpack.c.bf16 %v10783, %v10782
      %v10975 = vpack.c.bf16 %v10784, %v10784
      %v10976 = vpack.c.bf16 %v10786, %v10785
      %v10977 = vpack.c.bf16 %v10788, %v10787
      %v10978 = vpack.c.bf16 %v10790, %v10789
      %v10979 = vpack.c.bf16 %v10791, %v10791
      %v10980 = vpack.c.bf16 %v10793, %v10792
      %v10981 = vpack.c.bf16 %v10795, %v10794
      %v10982 = vpack.c.bf16 %v10797, %v10796
      %v10983 = vpack.c.bf16 %v10798, %v10798
      %v10984 = vpack.c.bf16 %v10800, %v10799
      %v10985 = vpack.c.bf16 %v10802, %v10801
      %v10986 = vpack.c.bf16 %v10804, %v10803
      %v10987 = vpack.c.bf16 %v10805, %v10805
      %v10988 = vpack.c.bf16 %v10807, %v10806
      %v10989 = vpack.c.bf16 %v10809, %v10808
      %v10990 = vpack.c.bf16 %v10811, %v10810
      %v10991 = vpack.c.bf16 %v10812, %v10812
      %v10992 = vpack.c.bf16 %v10814, %v10813
      %v10993 = vpack.c.bf16 %v10816, %v10815
      %v10994 = vpack.c.bf16 %v10818, %v10817
      %v10995 = vpack.c.bf16 %v10819, %v10819
      %v10996 = vpack.c.bf16 %v10821, %v10820
      %v10997 = vpack.c.bf16 %v10823, %v10822
      %v10998 = vpack.c.bf16 %v10825, %v10824
      %v10999 = vpack.c.bf16 %v10826, %v10826
      %v11000 = vpack.c.bf16 %v10828, %v10827
      %v11001 = vpack.c.bf16 %v10830, %v10829
      %v11002 = vpack.c.bf16 %v10832, %v10831
      %v11003 = vpack.c.bf16 %v10833, %v10833
      %v11004 = vpack.c.bf16 %v10835, %v10834
      %v11005 = vpack.c.bf16 %v10837, %v10836
      %v11006 = vpack.c.bf16 %v10839, %v10838
      %v11007 = vpack.c.bf16 %v10840, %v10840
      %v11008 = vpack.c.bf16 %v10842, %v10841
      %v11009 = vpack.c.bf16 %v10844, %v10843
      %v11010 = vpack.c.bf16 %v10846, %v10845
      %v11011 = vpack.c.bf16 %v10847, %v10847
      %v11012 = vpack.c.bf16 %v10849, %v10848
      %v11013 = vpack.c.bf16 %v10851, %v10850
      %v11014 = vpack.c.bf16 %v10853, %v10852
      %v11015 = vpack.c.bf16 %v10854, %v10854
      %v11016 = vpack.c.bf16 %v10856, %v10855
      %v11017 = vpack.c.bf16 %v10858, %v10857
      %v11018 = vpack.c.bf16 %v10860, %v10859
      %v11019 = vpack.c.bf16 %v10861, %v10861
      %v11020 = vpack.c.bf16 %v10863, %v10862
      %v11021 = vpack.c.bf16 %v10865, %v10864
      %v11022 = vpack.c.bf16 %v10867, %v10866
      %v11023 = vpack.c.bf16 %v10868, %v10868
      %v11024 = vpack.c.bf16 %v10870, %v10869
      %v11025 = vpack.c.bf16 %v10872, %v10871
      %v11026 = vpack.c.bf16 %v10874, %v10873
      %v11027 = vpack.c.bf16 %v10875, %v10875
      %v11028 = vpack.c.bf16 %v10877, %v10876
      %v11029 = vpack.c.bf16 %v10879, %v10878
      %v11030 = vpack.c.bf16 %v10881, %v10880
      %v11031 = vpack.c.bf16 %v10882, %v10882
      %v11032 = vpack.c.bf16 %v10884, %v10883
      %v11033 = vpack.c.bf16 %v10886, %v10885
      %v11034 = vpack.c.bf16 %v10888, %v10887
      %v11035 = vpack.c.bf16 %v10889, %v10889
      %v11036 = vpack.c.bf16 %v10891, %v10890
      %v11037 = vpack.c.bf16 %v10893, %v10892
      %v11038 = vpack.c.bf16 %v10895, %v10894
      %v11039 = vpack.c.bf16 %v10896, %v10896
      %v11040 = vpack.c.bf16 %v10898, %v10897
      %v11041 = vpack.c.bf16 %v10900, %v10899
      %v11042 = vpack.c.bf16 %v10902, %v10901
      %v11043 = vpack.c.bf16 %v10903, %v10903
      %v11044 = vpack.c.bf16 %v10905, %v10904
      %v11045 = vpack.c.bf16 %v10907, %v10906
      %v11046 = vpack.c.bf16 %v10909, %v10908
      %v11047 = vpack.c.bf16 %v10910, %v10910
      %v11048 = vpack.c.bf16 %v10912, %v10911
      %v11049 = vpack.c.bf16 %v10914, %v10913
      %v11050 = vpack.c.bf16 %v10916, %v10915
      %v11051 = vpack.c.bf16 %v10917, %v10917
      %v11052 = vpack.c.bf16 %v10919, %v10918
      %v11053 = vpack.c.bf16 %v10921, %v10920
      %v11054 = vpack.c.bf16 %v10923, %v10922
      %v11055 = vpack.c.bf16 %v10924, %v10924
      %v11056 = vpack.c.bf16 %v10926, %v10925
      %v11057 = vpack.c.bf16 %v10928, %v10927
      %v11058 = vpack.c.bf16 %v10930, %v10929
      %v11059 = vpack.c.bf16 %v10931, %v10931
      %11092 = vrot.lane.b32.xlu0 %v10964, 16
      %v11093 = vpop.permute.xlu0 %11092
      %11094 = vrot.lane.b32.xlu0 %v10965, 16
      %v11095 = vpop.permute.xlu0 %11094
      %11096 = vrot.lane.b32.xlu0 %v10966, 16
      %v11097 = vpop.permute.xlu0 %11096
      %11098 = vrot.lane.b32.xlu0 %v10967, 16
      %v11099 = vpop.permute.xlu0 %11098
      %11100 = vrot.lane.b32.xlu0 %v10968, 16
      %v11101 = vpop.permute.xlu0 %11100
      %11102 = vrot.lane.b32.xlu0 %v10969, 16
      %v11103 = vpop.permute.xlu0 %11102
      %11104 = vrot.lane.b32.xlu0 %v10970, 16
      %v11105 = vpop.permute.xlu0 %11104
      %11106 = vrot.lane.b32.xlu0 %v10971, 16
      %v11107 = vpop.permute.xlu0 %11106
      %11108 = vrot.lane.b32.xlu0 %v10972, 16
      %v11109 = vpop.permute.xlu0 %11108
      %11110 = vrot.lane.b32.xlu0 %v10973, 16
      %v11111 = vpop.permute.xlu0 %11110
      %11112 = vrot.lane.b32.xlu0 %v10974, 16
      %v11113 = vpop.permute.xlu0 %11112
      %11114 = vrot.lane.b32.xlu0 %v10975, 16
      %v11115 = vpop.permute.xlu0 %11114
      %11116 = vrot.lane.b32.xlu0 %v10976, 16
      %v11117 = vpop.permute.xlu0 %11116
      %11118 = vrot.lane.b32.xlu0 %v10977, 16
      %v11119 = vpop.permute.xlu0 %11118
      %11120 = vrot.lane.b32.xlu0 %v10978, 16
      %v11121 = vpop.permute.xlu0 %11120
      %11122 = vrot.lane.b32.xlu0 %v10979, 16
      %v11123 = vpop.permute.xlu0 %11122
      %11124 = vrot.lane.b32.xlu0 %v10980, 16
      %v11125 = vpop.permute.xlu0 %11124
      %11126 = vrot.lane.b32.xlu0 %v10981, 16
      %v11127 = vpop.permute.xlu0 %11126
      %11128 = vrot.lane.b32.xlu0 %v10982, 16
      %v11129 = vpop.permute.xlu0 %11128
      %11130 = vrot.lane.b32.xlu0 %v10983, 16
      %v11131 = vpop.permute.xlu0 %11130
      %11132 = vrot.lane.b32.xlu0 %v10984, 16
      %v11133 = vpop.permute.xlu0 %11132
      %11134 = vrot.lane.b32.xlu0 %v10985, 16
      %v11135 = vpop.permute.xlu0 %11134
      %11136 = vrot.lane.b32.xlu0 %v10986, 16
      %v11137 = vpop.permute.xlu0 %11136
      %11138 = vrot.lane.b32.xlu0 %v10987, 16
      %v11139 = vpop.permute.xlu0 %11138
      %11140 = vrot.lane.b32.xlu0 %v10988, 16
      %v11141 = vpop.permute.xlu0 %11140
      %11142 = vrot.lane.b32.xlu0 %v10989, 16
      %v11143 = vpop.permute.xlu0 %11142
      %11144 = vrot.lane.b32.xlu0 %v10990, 16
      %v11145 = vpop.permute.xlu0 %11144
      %11146 = vrot.lane.b32.xlu0 %v10991, 16
      %v11147 = vpop.permute.xlu0 %11146
      %11148 = vrot.lane.b32.xlu0 %v10992, 16
      %v11149 = vpop.permute.xlu0 %11148
      %11150 = vrot.lane.b32.xlu0 %v10993, 16
      %v11151 = vpop.permute.xlu0 %11150
      %11152 = vrot.lane.b32.xlu0 %v10994, 16
      %v11153 = vpop.permute.xlu0 %11152
      %11154 = vrot.lane.b32.xlu0 %v10995, 16
      %v11155 = vpop.permute.xlu0 %11154
      %11188 = vrot.lane.b32.xlu0 %v10996, 32
      %v11189 = vpop.permute.xlu0 %11188
      %11190 = vrot.lane.b32.xlu0 %v10997, 32
      %v11191 = vpop.permute.xlu0 %11190
      %11192 = vrot.lane.b32.xlu0 %v10998, 32
      %v11193 = vpop.permute.xlu0 %11192
      %11194 = vrot.lane.b32.xlu0 %v10999, 32
      %v11195 = vpop.permute.xlu0 %11194
      %11196 = vrot.lane.b32.xlu0 %v11000, 32
      %v11197 = vpop.permute.xlu0 %11196
      %11198 = vrot.lane.b32.xlu0 %v11001, 32
      %v11199 = vpop.permute.xlu0 %11198
      %11200 = vrot.lane.b32.xlu0 %v11002, 32
      %v11201 = vpop.permute.xlu0 %11200
      %11202 = vrot.lane.b32.xlu0 %v11003, 32
      %v11203 = vpop.permute.xlu0 %11202
      %11204 = vrot.lane.b32.xlu0 %v11004, 32
      %v11205 = vpop.permute.xlu0 %11204
      %11206 = vrot.lane.b32.xlu0 %v11005, 32
      %v11207 = vpop.permute.xlu0 %11206
      %11208 = vrot.lane.b32.xlu0 %v11006, 32
      %v11209 = vpop.permute.xlu0 %11208
      %11210 = vrot.lane.b32.xlu0 %v11007, 32
      %v11211 = vpop.permute.xlu0 %11210
      %11212 = vrot.lane.b32.xlu0 %v11008, 32
      %v11213 = vpop.permute.xlu0 %11212
      %11214 = vrot.lane.b32.xlu0 %v11009, 32
      %v11215 = vpop.permute.xlu0 %11214
      %11216 = vrot.lane.b32.xlu0 %v11010, 32
      %v11217 = vpop.permute.xlu0 %11216
      %11218 = vrot.lane.b32.xlu0 %v11011, 32
      %v11219 = vpop.permute.xlu0 %11218
      %11220 = vrot.lane.b32.xlu0 %v11012, 32
      %v11221 = vpop.permute.xlu0 %11220
      %11222 = vrot.lane.b32.xlu0 %v11013, 32
      %v11223 = vpop.permute.xlu0 %11222
      %11224 = vrot.lane.b32.xlu0 %v11014, 32
      %v11225 = vpop.permute.xlu0 %11224
      %11226 = vrot.lane.b32.xlu0 %v11015, 32
      %v11227 = vpop.permute.xlu0 %11226
      %11228 = vrot.lane.b32.xlu0 %v11016, 32
      %v11229 = vpop.permute.xlu0 %11228
      %11230 = vrot.lane.b32.xlu0 %v11017, 32
      %v11231 = vpop.permute.xlu0 %11230
      %11232 = vrot.lane.b32.xlu0 %v11018, 32
      %v11233 = vpop.permute.xlu0 %11232
      %11234 = vrot.lane.b32.xlu0 %v11019, 32
      %v11235 = vpop.permute.xlu0 %11234
      %11236 = vrot.lane.b32.xlu0 %v11020, 32
      %v11237 = vpop.permute.xlu0 %11236
      %11238 = vrot.lane.b32.xlu0 %v11021, 32
      %v11239 = vpop.permute.xlu0 %11238
      %11240 = vrot.lane.b32.xlu0 %v11022, 32
      %v11241 = vpop.permute.xlu0 %11240
      %11242 = vrot.lane.b32.xlu0 %v11023, 32
      %v11243 = vpop.permute.xlu0 %11242
      %11244 = vrot.lane.b32.xlu0 %v11024, 32
      %v11245 = vpop.permute.xlu0 %11244
      %11246 = vrot.lane.b32.xlu0 %v11025, 32
      %v11247 = vpop.permute.xlu0 %11246
      %11248 = vrot.lane.b32.xlu0 %v11026, 32
      %v11249 = vpop.permute.xlu0 %11248
      %11250 = vrot.lane.b32.xlu0 %v11027, 32
      %v11251 = vpop.permute.xlu0 %11250
      %11284 = vrot.lane.b32.xlu0 %v11028, 48
      %v11285 = vpop.permute.xlu0 %11284
      %11286 = vrot.lane.b32.xlu0 %v11029, 48
      %v11287 = vpop.permute.xlu0 %11286
      %11288 = vrot.lane.b32.xlu0 %v11030, 48
      %v11289 = vpop.permute.xlu0 %11288
      %11290 = vrot.lane.b32.xlu0 %v11031, 48
      %v11291 = vpop.permute.xlu0 %11290
      %11292 = vrot.lane.b32.xlu0 %v11032, 48
      %v11293 = vpop.permute.xlu0 %11292
      %11294 = vrot.lane.b32.xlu0 %v11033, 48
      %v11295 = vpop.permute.xlu0 %11294
      %11296 = vrot.lane.b32.xlu0 %v11034, 48
      %v11297 = vpop.permute.xlu0 %11296
      %11298 = vrot.lane.b32.xlu0 %v11035, 48
      %v11299 = vpop.permute.xlu0 %11298
      %11300 = vrot.lane.b32.xlu0 %v11036, 48
      %v11301 = vpop.permute.xlu0 %11300
      %11302 = vrot.lane.b32.xlu0 %v11037, 48
      %v11303 = vpop.permute.xlu0 %11302
      %11304 = vrot.lane.b32.xlu0 %v11038, 48
      %v11305 = vpop.permute.xlu0 %11304
      %11306 = vrot.lane.b32.xlu0 %v11039, 48
      %v11307 = vpop.permute.xlu0 %11306
      %11308 = vrot.lane.b32.xlu0 %v11040, 48
      %v11309 = vpop.permute.xlu0 %11308
      %11310 = vrot.lane.b32.xlu0 %v11041, 48
      %v11311 = vpop.permute.xlu0 %11310
      %11312 = vrot.lane.b32.xlu0 %v11042, 48
      %v11313 = vpop.permute.xlu0 %11312
      %11314 = vrot.lane.b32.xlu0 %v11043, 48
      %v11315 = vpop.permute.xlu0 %11314
      %11316 = vrot.lane.b32.xlu0 %v11044, 48
      %v11317 = vpop.permute.xlu0 %11316
      %11318 = vrot.lane.b32.xlu0 %v11045, 48
      %v11319 = vpop.permute.xlu0 %11318
      %11320 = vrot.lane.b32.xlu0 %v11046, 48
      %v11321 = vpop.permute.xlu0 %11320
      %11322 = vrot.lane.b32.xlu0 %v11047, 48
      %v11323 = vpop.permute.xlu0 %11322
      %11324 = vrot.lane.b32.xlu0 %v11048, 48
      %v11325 = vpop.permute.xlu0 %11324
      %11326 = vrot.lane.b32.xlu0 %v11049, 48
      %v11327 = vpop.permute.xlu0 %11326
      %11328 = vrot.lane.b32.xlu0 %v11050, 48
      %v11329 = vpop.permute.xlu0 %11328
      %11330 = vrot.lane.b32.xlu0 %v11051, 48
      %v11331 = vpop.permute.xlu0 %11330
      %11332 = vrot.lane.b32.xlu0 %v11052, 48
      %v11333 = vpop.permute.xlu0 %11332
      %11334 = vrot.lane.b32.xlu0 %v11053, 48
      %v11335 = vpop.permute.xlu0 %11334
      %11336 = vrot.lane.b32.xlu0 %v11054, 48
      %v11337 = vpop.permute.xlu0 %11336
      %11338 = vrot.lane.b32.xlu0 %v11055, 48
      %v11339 = vpop.permute.xlu0 %11338
      %11340 = vrot.lane.b32.xlu0 %v11056, 48
      %v11341 = vpop.permute.xlu0 %11340
      %11342 = vrot.lane.b32.xlu0 %v11057, 48
      %v11343 = vpop.permute.xlu0 %11342
      %11344 = vrot.lane.b32.xlu0 %v11058, 48
      %v11345 = vpop.permute.xlu0 %11344
      %11346 = vrot.lane.b32.xlu0 %v11059, 48
      %v11347 = vpop.permute.xlu0 %11346
      %v11350 = vsel %vm1733, %v10932, %v11093
      %v11353 = vsel %vm1733, %v10933, %v11095
      %v11356 = vsel %vm1733, %v10934, %v11097
      %v11359 = vsel %vm1733, %v10935, %v11099
      %v11362 = vsel %vm1733, %v10936, %v11101
      %v11365 = vsel %vm1733, %v10937, %v11103
      %v11368 = vsel %vm1733, %v10938, %v11105
      %v11371 = vsel %vm1733, %v10939, %v11107
      %v11374 = vsel %vm1733, %v10940, %v11109
      %v11377 = vsel %vm1733, %v10941, %v11111
      %v11380 = vsel %vm1733, %v10942, %v11113
      %v11383 = vsel %vm1733, %v10943, %v11115
      %v11386 = vsel %vm1733, %v10944, %v11117
      %v11389 = vsel %vm1733, %v10945, %v11119
      %v11392 = vsel %vm1733, %v10946, %v11121
      %v11395 = vsel %vm1733, %v10947, %v11123
      %v11398 = vsel %vm1733, %v10948, %v11125
      %v11401 = vsel %vm1733, %v10949, %v11127
      %v11404 = vsel %vm1733, %v10950, %v11129
      %v11407 = vsel %vm1733, %v10951, %v11131
      %v11410 = vsel %vm1733, %v10952, %v11133
      %v11413 = vsel %vm1733, %v10953, %v11135
      %v11416 = vsel %vm1733, %v10954, %v11137
      %v11419 = vsel %vm1733, %v10955, %v11139
      %v11422 = vsel %vm1733, %v10956, %v11141
      %v11425 = vsel %vm1733, %v10957, %v11143
      %v11428 = vsel %vm1733, %v10958, %v11145
      %v11431 = vsel %vm1733, %v10959, %v11147
      %v11434 = vsel %vm1733, %v10960, %v11149
      %v11437 = vsel %vm1733, %v10961, %v11151
      %v11440 = vsel %vm1733, %v10962, %v11153
      %v11443 = vsel %vm1733, %v10963, %v11155
      %vm11444 = vcmask 261120
      %v11446 = vsel %vm11444, %v11350, %v11189
      %v11448 = vsel %vm11444, %v11353, %v11191
      %v11450 = vsel %vm11444, %v11356, %v11193
      %v11452 = vsel %vm11444, %v11359, %v11195
      %v11454 = vsel %vm11444, %v11362, %v11197
      %v11456 = vsel %vm11444, %v11365, %v11199
      %v11458 = vsel %vm11444, %v11368, %v11201
      %v11460 = vsel %vm11444, %v11371, %v11203
      %v11462 = vsel %vm11444, %v11374, %v11205
      %v11464 = vsel %vm11444, %v11377, %v11207
      %v11466 = vsel %vm11444, %v11380, %v11209
      %v11468 = vsel %vm11444, %v11383, %v11211
      %v11470 = vsel %vm11444, %v11386, %v11213
      %v11472 = vsel %vm11444, %v11389, %v11215
      %v11474 = vsel %vm11444, %v11392, %v11217
      %v11476 = vsel %vm11444, %v11395, %v11219
      %v11478 = vsel %vm11444, %v11398, %v11221
      %v11480 = vsel %vm11444, %v11401, %v11223
      %v11482 = vsel %vm11444, %v11404, %v11225
      %v11484 = vsel %vm11444, %v11407, %v11227
      %v11486 = vsel %vm11444, %v11410, %v11229
      %v11488 = vsel %vm11444, %v11413, %v11231
      %v11490 = vsel %vm11444, %v11416, %v11233
      %v11492 = vsel %vm11444, %v11419, %v11235
      %v11494 = vsel %vm11444, %v11422, %v11237
      %v11496 = vsel %vm11444, %v11425, %v11239
      %v11498 = vsel %vm11444, %v11428, %v11241
      %v11500 = vsel %vm11444, %v11431, %v11243
      %v11502 = vsel %vm11444, %v11434, %v11245
      %v11504 = vsel %vm11444, %v11437, %v11247
      %v11506 = vsel %vm11444, %v11440, %v11249
      %v11508 = vsel %vm11444, %v11443, %v11251
      %vm11509 = vcmask 392192
      %v11511 = vsel %vm11509, %v11446, %v11285
      %v11513 = vsel %vm11509, %v11448, %v11287
      %v11515 = vsel %vm11509, %v11450, %v11289
      %v11517 = vsel %vm11509, %v11452, %v11291
      %v11519 = vsel %vm11509, %v11454, %v11293
      %v11521 = vsel %vm11509, %v11456, %v11295
      %v11523 = vsel %vm11509, %v11458, %v11297
      %v11525 = vsel %vm11509, %v11460, %v11299
      %v11527 = vsel %vm11509, %v11462, %v11301
      %v11529 = vsel %vm11509, %v11464, %v11303
      %v11531 = vsel %vm11509, %v11466, %v11305
      %v11533 = vsel %vm11509, %v11468, %v11307
      %v11535 = vsel %vm11509, %v11470, %v11309
      %v11537 = vsel %vm11509, %v11472, %v11311
      %v11539 = vsel %vm11509, %v11474, %v11313
      %v11541 = vsel %vm11509, %v11476, %v11315
      %v11543 = vsel %vm11509, %v11478, %v11317
      %v11545 = vsel %vm11509, %v11480, %v11319
      %v11547 = vsel %vm11509, %v11482, %v11321
      %v11549 = vsel %vm11509, %v11484, %v11323
      %v11551 = vsel %vm11509, %v11486, %v11325
      %v11553 = vsel %vm11509, %v11488, %v11327
      %v11555 = vsel %vm11509, %v11490, %v11329
      %v11557 = vsel %vm11509, %v11492, %v11331
      %v11559 = vsel %vm11509, %v11494, %v11333
      %v11561 = vsel %vm11509, %v11496, %v11335
      %v11563 = vsel %vm11509, %v11498, %v11337
      %v11565 = vsel %vm11509, %v11500, %v11339
      %v11567 = vsel %vm11509, %v11502, %v11341
      %v11569 = vsel %vm11509, %v11504, %v11343
      %v11571 = vsel %vm11509, %v11506, %v11345
      %v11573 = vsel %vm11509, %v11508, %v11347
      %v11606 = vunpack.c.l.b16 %v11511
      %v11607 = vunpack.c.h.b16 %v11511
      %v11608 = vunpack.c.l.b16 %v11513
      %v11609 = vunpack.c.h.b16 %v11513
      %v11610 = vunpack.c.l.b16 %v11515
      %v11611 = vunpack.c.h.b16 %v11515
      %v11612 = vunpack.c.l.b16 %v11517
      %v11613 = vunpack.c.l.b16 %v11519
      %v11614 = vunpack.c.h.b16 %v11519
      %v11615 = vunpack.c.l.b16 %v11521
      %v11616 = vunpack.c.h.b16 %v11521
      %v11617 = vunpack.c.l.b16 %v11523
      %v11618 = vunpack.c.h.b16 %v11523
      %v11619 = vunpack.c.l.b16 %v11525
      %v11620 = vunpack.c.l.b16 %v11527
      %v11621 = vunpack.c.h.b16 %v11527
      %v11622 = vunpack.c.l.b16 %v11529
      %v11623 = vunpack.c.h.b16 %v11529
      %v11624 = vunpack.c.l.b16 %v11531
      %v11625 = vunpack.c.h.b16 %v11531
      %v11626 = vunpack.c.l.b16 %v11533
      %v11627 = vunpack.c.l.b16 %v11535
      %v11628 = vunpack.c.h.b16 %v11535
      %v11629 = vunpack.c.l.b16 %v11537
      %v11630 = vunpack.c.h.b16 %v11537
      %v11631 = vunpack.c.l.b16 %v11539
      %v11632 = vunpack.c.h.b16 %v11539
      %v11633 = vunpack.c.l.b16 %v11541
      %v11634 = vunpack.c.l.b16 %v11543
      %v11635 = vunpack.c.h.b16 %v11543
      %v11636 = vunpack.c.l.b16 %v11545
      %v11637 = vunpack.c.h.b16 %v11545
      %v11638 = vunpack.c.l.b16 %v11547
      %v11639 = vunpack.c.h.b16 %v11547
      %v11640 = vunpack.c.l.b16 %v11549
      %v11641 = vunpack.c.l.b16 %v11551
      %v11642 = vunpack.c.h.b16 %v11551
      %v11643 = vunpack.c.l.b16 %v11553
      %v11644 = vunpack.c.h.b16 %v11553
      %v11645 = vunpack.c.l.b16 %v11555
      %v11646 = vunpack.c.h.b16 %v11555
      %v11647 = vunpack.c.l.b16 %v11557
      %v11648 = vunpack.c.l.b16 %v11559
      %v11649 = vunpack.c.h.b16 %v11559
      %v11650 = vunpack.c.l.b16 %v11561
      %v11651 = vunpack.c.h.b16 %v11561
      %v11652 = vunpack.c.l.b16 %v11563
      %v11653 = vunpack.c.h.b16 %v11563
      %v11654 = vunpack.c.l.b16 %v11565
      %v11655 = vunpack.c.l.b16 %v11567
      %v11656 = vunpack.c.h.b16 %v11567
      %v11657 = vunpack.c.l.b16 %v11569
      %v11658 = vunpack.c.h.b16 %v11569
      %v11659 = vunpack.c.l.b16 %v11571
      %v11660 = vunpack.c.h.b16 %v11571
      %v11661 = vunpack.c.l.b16 %v11573
      %v11662 = vld [vmem:[%s5] sm:$0xf]
      %v11663 = vld [vmem:[%s5 + $0x4] sm:$0xf]
      %v11664 = vld [vmem:[%s5 + $0x8] sm:$0xf]
      %v11665 = vld [vmem:[%s5 + $0xc] sm:$0xf]
      %v11666 = vld [vmem:[%s5 + $0x10] sm:$0xf]
      %v11667 = vld [vmem:[%s5 + $0x14] sm:$0xf]
      %v11668 = vld [vmem:[%s5 + $0x18] sm:$0xf]
      %v11669 = vld [vmem:[%s5 + $0x1c] sm:$0xf]
      %v11670 = vld [vmem:[%s6] sm:$0x1]
      %v11672 = vlaneseq
      %v11673 = vshrl.u32 %v11672, 7
      %v11674 = vsub.s32 0, %v11673
      %v11675 = vrot.slane %v11670, %v11674
      %v11677 = vpack.c.b16 %v11607, %v11606
      %v11678 = vpack.c.b16 %v11609, %v11608
      %v11679 = vpack.c.b16 %v11611, %v11610
      %v11680 = vpack.c.b16 %v11613, %v11612
      %v11681 = vpack.c.b16 %v11615, %v11614
      %v11682 = vpack.c.b16 %v11617, %v11616
      %v11683 = vpack.c.b16 %v11619, %v11618
      %v11684 = vpack.c.b16 %v11621, %v11620
      %v11685 = vpack.c.b16 %v11623, %v11622
      %v11686 = vpack.c.b16 %v11625, %v11624
      %v11687 = vpack.c.b16 %v11627, %v11626
      %v11688 = vpack.c.b16 %v11629, %v11628
      %v11689 = vpack.c.b16 %v11631, %v11630
      %v11690 = vpack.c.b16 %v11633, %v11632
      %v11691 = vpack.c.b16 %v11635, %v11634
      %v11692 = vpack.c.b16 %v11637, %v11636
      %v11693 = vpack.c.b16 %v11639, %v11638
      %v11694 = vpack.c.b16 %v11641, %v11640
      %v11695 = vpack.c.b16 %v11643, %v11642
      %v11696 = vpack.c.b16 %v11645, %v11644
      %v11697 = vpack.c.b16 %v11647, %v11646
      %v11698 = vpack.c.b16 %v11649, %v11648
      %v11699 = vpack.c.b16 %v11651, %v11650
      %v11700 = vpack.c.b16 %v11653, %v11652
      %v11701 = vpack.c.b16 %v11655, %v11654
      %v11702 = vpack.c.b16 %v11657, %v11656
      %v11703 = vpack.c.b16 %v11659, %v11658
      %v11704 = vpack.c.b16 %v11661, %v11660
      %v11713 = vunpack.c.l.b16 %v11662
      %v11714 = vunpack.c.l.b16 %v11663
      %v11715 = vunpack.c.l.b16 %v11664
      %v11716 = vunpack.c.l.b16 %v11665
      %v11717 = vunpack.c.l.b16 %v11666
      %v11718 = vunpack.c.l.b16 %v11667
      %v11719 = vunpack.c.l.b16 %v11668
      %v11720 = vunpack.c.l.b16 %v11669
      %v11721 = vpack.c.b16 %v11714, %v11713
      %v11722 = vpack.c.b16 %v11716, %v11715
      %v11723 = vpack.c.b16 %v11718, %v11717
      %v11724 = vpack.c.b16 %v11720, %v11719
      %v11730 = vsel %vm427, %v11677, 0
      %v11733 = vsel %vm427, %v11678, 0
      %v11736 = vsel %vm427, %v11679, 0
      %v11739 = vsel %vm427, %v11680, 0
      %v11742 = vsel %vm427, %v11681, 0
      %v11745 = vsel %vm427, %v11682, 0
      %v11748 = vsel %vm427, %v11683, 0
      %v11751 = vsel %vm427, %v11684, 0
      %v11754 = vsel %vm427, %v11685, 0
      %v11757 = vsel %vm427, %v11686, 0
      %v11760 = vsel %vm427, %v11687, 0
      %v11763 = vsel %vm427, %v11688, 0
      %v11766 = vsel %vm427, %v11689, 0
      %v11769 = vsel %vm427, %v11690, 0
      %v11772 = vsel %vm427, %v11691, 0
      %v11775 = vsel %vm427, %v11692, 0
      %v11778 = vsel %vm427, %v11693, 0
      %v11781 = vsel %vm427, %v11694, 0
      %v11784 = vsel %vm427, %v11695, 0
      %v11787 = vsel %vm427, %v11696, 0
      %v11790 = vsel %vm427, %v11697, 0
      %v11793 = vsel %vm427, %v11698, 0
      %v11796 = vsel %vm427, %v11699, 0
      %v11799 = vsel %vm427, %v11700, 0
      %v11802 = vsel %vm427, %v11701, 0
      %v11805 = vsel %vm427, %v11702, 0
      %v11808 = vsel %vm427, %v11703, 0
      %v11811 = vsel %vm427, %v11704, 0
      %11813 = vmatprep.subr.bf16.mxu0 0
      %11814 = vmatpush1.bf16.msra.mxu0 %v11721
      %11815 = vmatprep.subr.bf16.mxu0 0
      %11816 = vmatpush1.bf16.msra.mxu0 %v11722
      %11817 = vmatprep.subr.bf16.mxu0 0
      %11818 = vmatpush1.bf16.msra.mxu0 %v11723
      %11819 = vmatprep.subr.bf16.mxu0 0
      %11820 = vmatpush1.bf16.msra.mxu0 %v11724
      %11821 = vmatprep.subr.bf16.mxu0 0
      %11822 = vmatpush1.bf16.msra.mxu0 0
      %11823 = vmatprep.subr.bf16.mxu0 0
      %11824 = vmatpush1.bf16.msra.mxu0 0
      %11825 = vmatprep.subr.bf16.mxu0 0
      %11826 = vmatpush1.bf16.msra.mxu0 0
      %11827 = vmatprep.subr.bf16.mxu0 0
      %11828 = vmatpush1.bf16.msra.mxu0 0
      %11829 = vmatprep.subr.bf16.mxu0 0
      %11830 = vmatpush1.bf16.msra.mxu0 0
      %11831 = vmatprep.subr.bf16.mxu0 0
      %11832 = vmatpush1.bf16.msra.mxu0 0
      %11833 = vmatprep.subr.bf16.mxu0 0
      %11834 = vmatpush1.bf16.msra.mxu0 0
      %11835 = vmatprep.subr.bf16.mxu0 0
      %11836 = vmatpush1.bf16.msra.mxu0 0
      %11837 = vmatprep.subr.bf16.mxu0 0
      %11838 = vmatpush1.bf16.msra.mxu0 0
      %11839 = vmatprep.subr.bf16.mxu0 0
      %11840 = vmatpush1.bf16.msra.mxu0 0
      %11841 = vmatprep.subr.bf16.mxu0 0
      %11842 = vmatpush1.bf16.msra.mxu0 0
      %11843 = vmatprep.subr.bf16.mxu0 0
      %11844 = vmatpush1.bf16.msra.mxu0 0
      %11845 = vmatprep.mubr.bf16.mxu0 0
      %11846 = vmatmul.mubr.bf16.gmra.mrb[0].mxu0 %v11730
      %v11847 = vpop.f32.mrb[0].mxu0
      %v11848 = vadd.f32 %v11675, %v11847
      %v11849 = vpop.f32.mrb[0].mxu0
      %v11850 = vpop.f32.mrb[0].mxu0
      %v11851 = vadd.f32 %v11675, %v11850
      %v11852 = vpop.f32.mrb[0].mxu0
      %11853 = vmatprep.mubr.bf16.mxu0 0
      %11854 = vmatmul.mubr.bf16.gmra.mrb[0].mxu0 %v11733
      %v11855 = vpop.f32.mrb[0].mxu0
      %v11856 = vadd.f32 %v11675, %v11855
      %v11857 = vpop.f32.mrb[0].mxu0
      %v11858 = vpop.f32.mrb[0].mxu0
      %v11859 = vadd.f32 %v11675, %v11858
      %v11860 = vpop.f32.mrb[0].mxu0
      %11861 = vmatprep.mubr.bf16.mxu0 0
      %11862 = vmatmul.mubr.bf16.gmra.mrb[0].mxu0 %v11736
      %v11863 = vpop.f32.mrb[0].mxu0
      %v11864 = vadd.f32 %v11675, %v11863
      %v11865 = vpop.f32.mrb[0].mxu0
      %v11866 = vpop.f32.mrb[0].mxu0
      %v11867 = vadd.f32 %v11675, %v11866
      %v11868 = vpop.f32.mrb[0].mxu0
      %11869 = vmatprep.mubr.bf16.mxu0 0
      %11870 = vmatmul.mubr.bf16.gmra.mrb[0].mxu0 %v11739
      %v11871 = vpop.f32.mrb[0].mxu0
      %v11872 = vadd.f32 %v11675, %v11871
      %v11873 = vpop.f32.mrb[0].mxu0
      %v11874 = vpop.f32.mrb[0].mxu0
      %v11875 = vadd.f32 %v11675, %v11874
      %v11876 = vpop.f32.mrb[0].mxu0
      %11877 = vmatprep.mubr.bf16.mxu0 0
      %11878 = vmatmul.mubr.bf16.gmra.mrb[0].mxu0 %v11742
      %v11879 = vpop.f32.mrb[0].mxu0
      %v11880 = vadd.f32 %v11675, %v11879
      %v11881 = vpop.f32.mrb[0].mxu0
      %v11882 = vpop.f32.mrb[0].mxu0
      %v11883 = vadd.f32 %v11675, %v11882
      %v11884 = vpop.f32.mrb[0].mxu0
      %11885 = vmatprep.mubr.bf16.mxu0 0
      %11886 = vmatmul.mubr.bf16.gmra.mrb[0].mxu0 %v11745
      %v11887 = vpop.f32.mrb[0].mxu0
      %v11888 = vadd.f32 %v11675, %v11887
      %v11889 = vpop.f32.mrb[0].mxu0
      %v11890 = vpop.f32.mrb[0].mxu0
      %v11891 = vadd.f32 %v11675, %v11890
      %v11892 = vpop.f32.mrb[0].mxu0
      %11893 = vmatprep.mubr.bf16.mxu0 0
      %11894 = vmatmul.mubr.bf16.gmra.mrb[0].mxu0 %v11748
      %v11895 = vpop.f32.mrb[0].mxu0
      %v11896 = vadd.f32 %v11675, %v11895
      %v11897 = vpop.f32.mrb[0].mxu0
      %v11898 = vpop.f32.mrb[0].mxu0
      %v11899 = vadd.f32 %v11675, %v11898
      %v11900 = vpop.f32.mrb[0].mxu0
      %11901 = vmatprep.mubr.bf16.mxu0 0
      %11902 = vmatmul.mubr.bf16.gmra.mrb[0].mxu0 %v11751
      %v11903 = vpop.f32.mrb[0].mxu0
      %v11904 = vadd.f32 %v11675, %v11903
      %v11905 = vpop.f32.mrb[0].mxu0
      %v11906 = vpop.f32.mrb[0].mxu0
      %v11907 = vadd.f32 %v11675, %v11906
      %v11908 = vpop.f32.mrb[0].mxu0
      %11909 = vmatprep.mubr.bf16.mxu0 0
      %11910 = vmatmul.mubr.bf16.gmra.mrb[0].mxu0 %v11754
      %v11911 = vpop.f32.mrb[0].mxu0
      %v11912 = vadd.f32 %v11675, %v11911
      %v11913 = vpop.f32.mrb[0].mxu0
      %v11914 = vpop.f32.mrb[0].mxu0
      %v11915 = vadd.f32 %v11675, %v11914
      %v11916 = vpop.f32.mrb[0].mxu0
      %11917 = vmatprep.mubr.bf16.mxu0 0
      %11918 = vmatmul.mubr.bf16.gmra.mrb[0].mxu0 %v11757
      %v11919 = vpop.f32.mrb[0].mxu0
      %v11920 = vadd.f32 %v11675, %v11919
      %v11921 = vpop.f32.mrb[0].mxu0
      %v11922 = vpop.f32.mrb[0].mxu0
      %v11923 = vadd.f32 %v11675, %v11922
      %v11924 = vpop.f32.mrb[0].mxu0
      %11925 = vmatprep.mubr.bf16.mxu0 0
      %11926 = vmatmul.mubr.bf16.gmra.mrb[0].mxu0 %v11760
      %v11927 = vpop.f32.mrb[0].mxu0
      %v11928 = vadd.f32 %v11675, %v11927
      %v11929 = vpop.f32.mrb[0].mxu0
      %v11930 = vpop.f32.mrb[0].mxu0
      %v11931 = vadd.f32 %v11675, %v11930
      %v11932 = vpop.f32.mrb[0].mxu0
      %11933 = vmatprep.mubr.bf16.mxu0 0
      %11934 = vmatmul.mubr.bf16.gmra.mrb[0].mxu0 %v11763
      %v11935 = vpop.f32.mrb[0].mxu0
      %v11936 = vadd.f32 %v11675, %v11935
      %v11937 = vpop.f32.mrb[0].mxu0
      %v11938 = vpop.f32.mrb[0].mxu0
      %v11939 = vadd.f32 %v11675, %v11938
      %v11940 = vpop.f32.mrb[0].mxu0
      %11941 = vmatprep.mubr.bf16.mxu0 0
      %11942 = vmatmul.mubr.bf16.gmra.mrb[0].mxu0 %v11766
      %v11943 = vpop.f32.mrb[0].mxu0
      %v11944 = vadd.f32 %v11675, %v11943
      %v11945 = vpop.f32.mrb[0].mxu0
      %v11946 = vpop.f32.mrb[0].mxu0
      %v11947 = vadd.f32 %v11675, %v11946
      %v11948 = vpop.f32.mrb[0].mxu0
      %11949 = vmatprep.mubr.bf16.mxu0 0
      %11950 = vmatmul.mubr.bf16.gmra.mrb[0].mxu0 %v11769
      %v11951 = vpop.f32.mrb[0].mxu0
      %v11952 = vadd.f32 %v11675, %v11951
      %v11953 = vpop.f32.mrb[0].mxu0
      %v11954 = vpop.f32.mrb[0].mxu0
      %v11955 = vadd.f32 %v11675, %v11954
      %v11956 = vpop.f32.mrb[0].mxu0
      %11957 = vmatprep.mubr.bf16.mxu0 0
      %11958 = vmatmul.mubr.bf16.gmra.mrb[0].mxu0 %v11772
      %v11959 = vpop.f32.mrb[0].mxu0
      %v11960 = vadd.f32 %v11675, %v11959
      %v11961 = vpop.f32.mrb[0].mxu0
      %v11962 = vpop.f32.mrb[0].mxu0
      %v11963 = vadd.f32 %v11675, %v11962
      %v11964 = vpop.f32.mrb[0].mxu0
      %11965 = vmatprep.mubr.bf16.mxu0 0
      %11966 = vmatmul.mubr.bf16.gmra.mrb[0].mxu0 %v11775
      %v11967 = vpop.f32.mrb[0].mxu0
      %v11968 = vadd.f32 %v11675, %v11967
      %v11969 = vpop.f32.mrb[0].mxu0
      %v11970 = vpop.f32.mrb[0].mxu0
      %v11971 = vadd.f32 %v11675, %v11970
      %v11972 = vpop.f32.mrb[0].mxu0
      %11973 = vmatprep.mubr.bf16.mxu0 0
      %11974 = vmatmul.mubr.bf16.gmra.mrb[0].mxu0 %v11778
      %v11975 = vpop.f32.mrb[0].mxu0
      %v11976 = vadd.f32 %v11675, %v11975
      %v11977 = vpop.f32.mrb[0].mxu0
      %v11978 = vpop.f32.mrb[0].mxu0
      %v11979 = vadd.f32 %v11675, %v11978
      %v11980 = vpop.f32.mrb[0].mxu0
      %11981 = vmatprep.mubr.bf16.mxu0 0
      %11982 = vmatmul.mubr.bf16.gmra.mrb[0].mxu0 %v11781
      %v11983 = vpop.f32.mrb[0].mxu0
      %v11984 = vadd.f32 %v11675, %v11983
      %v11985 = vpop.f32.mrb[0].mxu0
      %v11986 = vpop.f32.mrb[0].mxu0
      %v11987 = vadd.f32 %v11675, %v11986
      %v11988 = vpop.f32.mrb[0].mxu0
      %11989 = vmatprep.mubr.bf16.mxu0 0
      %11990 = vmatmul.mubr.bf16.gmra.mrb[0].mxu0 %v11784
      %v11991 = vpop.f32.mrb[0].mxu0
      %v11992 = vadd.f32 %v11675, %v11991
      %v11993 = vpop.f32.mrb[0].mxu0
      %v11994 = vpop.f32.mrb[0].mxu0
      %v11995 = vadd.f32 %v11675, %v11994
      %v11996 = vpop.f32.mrb[0].mxu0
      %11997 = vmatprep.mubr.bf16.mxu0 0
      %11998 = vmatmul.mubr.bf16.gmra.mrb[0].mxu0 %v11787
      %v11999 = vpop.f32.mrb[0].mxu0
      %v12000 = vadd.f32 %v11675, %v11999
      %v12001 = vpop.f32.mrb[0].mxu0
      %v12002 = vpop.f32.mrb[0].mxu0
      %v12003 = vadd.f32 %v11675, %v12002
      %v12004 = vpop.f32.mrb[0].mxu0
      %12005 = vmatprep.mubr.bf16.mxu0 0
      %12006 = vmatmul.mubr.bf16.gmra.mrb[0].mxu0 %v11790
      %v12007 = vpop.f32.mrb[0].mxu0
      %v12008 = vadd.f32 %v11675, %v12007
      %v12009 = vpop.f32.mrb[0].mxu0
      %v12010 = vpop.f32.mrb[0].mxu0
      %v12011 = vadd.f32 %v11675, %v12010
      %v12012 = vpop.f32.mrb[0].mxu0
      %12013 = vmatprep.mubr.bf16.mxu0 0
      %12014 = vmatmul.mubr.bf16.gmra.mrb[0].mxu0 %v11793
      %v12015 = vpop.f32.mrb[0].mxu0
      %v12016 = vadd.f32 %v11675, %v12015
      %v12017 = vpop.f32.mrb[0].mxu0
      %v12018 = vpop.f32.mrb[0].mxu0
      %v12019 = vadd.f32 %v11675, %v12018
      %v12020 = vpop.f32.mrb[0].mxu0
      %12021 = vmatprep.mubr.bf16.mxu0 0
      %12022 = vmatmul.mubr.bf16.gmra.mrb[0].mxu0 %v11796
      %v12023 = vpop.f32.mrb[0].mxu0
      %v12024 = vadd.f32 %v11675, %v12023
      %v12025 = vpop.f32.mrb[0].mxu0
      %v12026 = vpop.f32.mrb[0].mxu0
      %v12027 = vadd.f32 %v11675, %v12026
      %v12028 = vpop.f32.mrb[0].mxu0
      %12029 = vmatprep.mubr.bf16.mxu0 0
      %12030 = vmatmul.mubr.bf16.gmra.mrb[0].mxu0 %v11799
      %v12031 = vpop.f32.mrb[0].mxu0
      %v12032 = vadd.f32 %v11675, %v12031
      %v12033 = vpop.f32.mrb[0].mxu0
      %v12034 = vpop.f32.mrb[0].mxu0
      %v12035 = vadd.f32 %v11675, %v12034
      %v12036 = vpop.f32.mrb[0].mxu0
      %12037 = vmatprep.mubr.bf16.mxu0 0
      %12038 = vmatmul.mubr.bf16.gmra.mrb[0].mxu0 %v11802
      %v12039 = vpop.f32.mrb[0].mxu0
      %v12040 = vadd.f32 %v11675, %v12039
      %v12041 = vpop.f32.mrb[0].mxu0
      %v12042 = vpop.f32.mrb[0].mxu0
      %v12043 = vadd.f32 %v11675, %v12042
      %v12044 = vpop.f32.mrb[0].mxu0
      %12045 = vmatprep.mubr.bf16.mxu0 0
      %12046 = vmatmul.mubr.bf16.gmra.mrb[0].mxu0 %v11805
      %v12047 = vpop.f32.mrb[0].mxu0
      %v12048 = vadd.f32 %v11675, %v12047
      %v12049 = vpop.f32.mrb[0].mxu0
      %v12050 = vpop.f32.mrb[0].mxu0
      %v12051 = vadd.f32 %v11675, %v12050
      %v12052 = vpop.f32.mrb[0].mxu0
      %12053 = vmatprep.mubr.bf16.mxu0 0
      %12054 = vmatmul.mubr.bf16.gmra.mrb[0].mxu0 %v11808
      %v12055 = vpop.f32.mrb[0].mxu0
      %v12056 = vadd.f32 %v11675, %v12055
      %v12057 = vpop.f32.mrb[0].mxu0
      %v12058 = vpop.f32.mrb[0].mxu0
      %v12059 = vadd.f32 %v11675, %v12058
      %v12060 = vpop.f32.mrb[0].mxu0
      %12061 = vmatprep.mubr.bf16.mxu0 0
      %12062 = vmatmul.mubr.bf16.gmra.mrb[0].mxu0 %v11811
      %v12063 = vpop.f32.mrb[0].mxu0
      %v12064 = vadd.f32 %v11675, %v12063
      %v12065 = vpop.f32.mrb[0].mxu0
      %v12066 = vpop.f32.mrb[0].mxu0
      %v12067 = vadd.f32 %v11675, %v12066
      %v12068 = vpop.f32.mrb[0].mxu0
      %12069 = vdwg.mxu0
      %12070 = vst.msk [vmem:[%s280] sm:$0xff] %vm427, %v11848
      %12071 = vst.msk [vmem:[%s280 + $0x8] sm:$0xff] %vm427, %v11851
      %12072 = vst.msk [vmem:[%s280 + $0x10] sm:$0xff] %vm427, %v11856
      %12073 = vst.msk [vmem:[%s280 + $0x18] sm:$0xff] %vm427, %v11859
      %12074 = vst.msk [vmem:[%s280 + $0x20] sm:$0xff] %vm427, %v11864
      %12075 = vst.msk [vmem:[%s280 + $0x28] sm:$0xff] %vm427, %v11867
      %12076 = vst.msk [vmem:[%s280 + $0x30] sm:$0xff] %vm427, %v11872
      %12077 = vst.msk [vmem:[%s280 + $0x38] sm:$0xff] %vm427, %v11875
      %12078 = vst.msk [vmem:[%s280 + $0x40] sm:$0xff] %vm427, %v11880
      %12079 = vst.msk [vmem:[%s280 + $0x48] sm:$0xff] %vm427, %v11883
      %12080 = vst.msk [vmem:[%s280 + $0x50] sm:$0xff] %vm427, %v11888
      %12081 = vst.msk [vmem:[%s280 + $0x58] sm:$0xff] %vm427, %v11891
      %12082 = vst.msk [vmem:[%s280 + $0x60] sm:$0xff] %vm427, %v11896
      %12083 = vst.msk [vmem:[%s280 + $0x68] sm:$0xff] %vm427, %v11899
      %12084 = vst.msk [vmem:[%s280 + $0x70] sm:$0xff] %vm427, %v11904
      %12085 = vst.msk [vmem:[%s280 + $0x78] sm:$0xff] %vm427, %v11907
      %12086 = vst.msk [vmem:[%s280 + $0x80] sm:$0xff] %vm427, %v11912
      %12087 = vst.msk [vmem:[%s280 + $0x88] sm:$0xff] %vm427, %v11915
      %12088 = vst.msk [vmem:[%s280 + $0x90] sm:$0xff] %vm427, %v11920
      %12089 = vst.msk [vmem:[%s280 + $0x98] sm:$0xff] %vm427, %v11923
      %12090 = vst.msk [vmem:[%s280 + $0xa0] sm:$0xff] %vm427, %v11928
      %12091 = vst.msk [vmem:[%s280 + $0xa8] sm:$0xff] %vm427, %v11931
      %12092 = vst.msk [vmem:[%s280 + $0xb0] sm:$0xff] %vm427, %v11936
      %12093 = vst.msk [vmem:[%s280 + $0xb8] sm:$0xff] %vm427, %v11939
      %12094 = vst.msk [vmem:[%s280 + $0xc0] sm:$0xff] %vm427, %v11944
      %12095 = vst.msk [vmem:[%s280 + $0xc8] sm:$0xff] %vm427, %v11947
      %12096 = vst.msk [vmem:[%s280 + $0xd0] sm:$0xff] %vm427, %v11952
      %12097 = vst.msk [vmem:[%s280 + $0xd8] sm:$0xff] %vm427, %v11955
      %12098 = vst.msk [vmem:[%s280 + $0xe0] sm:$0xff] %vm427, %v11960
      %12099 = vst.msk [vmem:[%s280 + $0xe8] sm:$0xff] %vm427, %v11963
      %12100 = vst.msk [vmem:[%s280 + $0xf0] sm:$0xff] %vm427, %v11968
      %12101 = vst.msk [vmem:[%s280 + $0xf8] sm:$0xff] %vm427, %v11971
      %12102 = vst.msk [vmem:[%s280 + $0x100] sm:$0xff] %vm427, %v11976
      %12103 = vst.msk [vmem:[%s280 + $0x108] sm:$0xff] %vm427, %v11979
      %12104 = vst.msk [vmem:[%s280 + $0x110] sm:$0xff] %vm427, %v11984
      %12105 = vst.msk [vmem:[%s280 + $0x118] sm:$0xff] %vm427, %v11987
      %12106 = vst.msk [vmem:[%s280 + $0x120] sm:$0xff] %vm427, %v11992
      %12107 = vst.msk [vmem:[%s280 + $0x128] sm:$0xff] %vm427, %v11995
      %12108 = vst.msk [vmem:[%s280 + $0x130] sm:$0xff] %vm427, %v12000
      %12109 = vst.msk [vmem:[%s280 + $0x138] sm:$0xff] %vm427, %v12003
      %12110 = vst.msk [vmem:[%s280 + $0x140] sm:$0xff] %vm427, %v12008
      %12111 = vst.msk [vmem:[%s280 + $0x148] sm:$0xff] %vm427, %v12011
      %12112 = vst.msk [vmem:[%s280 + $0x150] sm:$0xff] %vm427, %v12016
      %12113 = vst.msk [vmem:[%s280 + $0x158] sm:$0xff] %vm427, %v12019
      %12114 = vst.msk [vmem:[%s280 + $0x160] sm:$0xff] %vm427, %v12024
      %12115 = vst.msk [vmem:[%s280 + $0x168] sm:$0xff] %vm427, %v12027
      %12116 = vst.msk [vmem:[%s280 + $0x170] sm:$0xff] %vm427, %v12032
      %12117 = vst.msk [vmem:[%s280 + $0x178] sm:$0xff] %vm427, %v12035
      %12118 = vst.msk [vmem:[%s280 + $0x180] sm:$0xff] %vm427, %v12040
      %12119 = vst.msk [vmem:[%s280 + $0x188] sm:$0xff] %vm427, %v12043
      %12120 = vst.msk [vmem:[%s280 + $0x190] sm:$0xff] %vm427, %v12048
      %12121 = vst.msk [vmem:[%s280 + $0x198] sm:$0xff] %vm427, %v12051
      %12122 = vst.msk [vmem:[%s280 + $0x1a0] sm:$0xff] %vm427, %v12056
      %12123 = vst.msk [vmem:[%s280 + $0x1a8] sm:$0xff] %vm427, %v12059
      %12124 = vst.msk [vmem:[%s280 + $0x1b0] sm:$0xff] %vm427, %v12064
      %12125 = vst.msk [vmem:[%s280 + $0x1b8] sm:$0xff] %vm427, %v12067
      %s12126 = smul.u32 56, %s18
      %p12127 = scmp.lt.s32.totalorder %s12126, 111
      %s12128 = scalar_select %p12127, %s12126, 111
      %s12129 = smul.addr %s12128, 8
      %s12130 = scalar_lea.vmem %s7, %s12129
      // Predicated region
      $region49: #{tpu_custom_call.1} parent=47 // pred_check
        %p12131 = pneg %p188
      $region50: #{tpu_custom_call.1} parent=47 // pred_check_branch
        %12133 = sbr.rel (%p12131) target = $region52
      $region51: #{tpu_custom_call.1} parent=47 // pred_region
        %s12134 = smul.u32 56, %s18
      $region52: #{tpu_custom_call.1} parent=47 // pred_fallthru
        _
    $region48: #{tpu_custom_call.1} parent=5 // pred_fallthru
      _
    %p12135 = scmp.le.s32.totalorder 2, %s13
    // Predicated region
    $region53: #{tpu_custom_call.1} parent=5 // pred_check
      %p12136 = pneg %p12135
    $region54: #{tpu_custom_call.1} parent=5 // pred_check_branch
      %12138 = sbr.rel (%p12136) target = $region56
    $region55: #{tpu_custom_call.1} parent=5 // pred_region
      %s12139 = ssub.s32 %s13, 2
      // Predicated region
      $region57: #{tpu_custom_call.1} parent=55 // pred_check
        %p12140 = pneg %p194
      $region58: #{tpu_custom_call.1} parent=55 // pred_check_branch
        %12142 = sbr.rel (%p12140) target = $region60
      $region59: #{tpu_custom_call.1} parent=55 // pred_region
        %s12143 = smul.u32 56, %s19
        %p12144 = scmp.lt.s32.totalorder %s12143, 111
        %s12145 = scalar_select %p12144, %s12143, 111
        %s12146 = smul.addr %s12145, 8
        %s12147 = scalar_lea.vmem %s7, %s12146
      $region60: #{tpu_custom_call.1} parent=55 // pred_fallthru
        _
    $region56: #{tpu_custom_call.1} parent=5 // pred_fallthru
      _
  $region6: #{tpu_custom_call.1} parent=0 // loop_footer
    %s17 = sadd.s32 1, %s13
  $region7: #{tpu_custom_call.1} parent=0 // loop_footer_branch
    %12 = sbr.rel target = $region3
  $region8: #{tpu_custom_call.1} parent=0 // loop_exit
    _

</llo_original>
